<compile_context>
chip_gen: v5e
topology: v5e:2x2
jax: 0.10.0
libtpu: 0.0.40
codegen_flags: <defaults>
</compile_context>

<pallas_src>
import functools

import jax
import jax.numpy as jnp
import numpy as np
from jax.experimental import pallas as pl
from jax.experimental.pallas import tpu as pltpu

BN_EPS = 1e-3          # Visual_Block uses BatchNorm3d(..., eps=0.001)
_PAD = 2               # spatial halo for the k=5 branch (k=3 embedded at +1)
_LANE = 128


def _round_up(x, m):
    return (x + m - 1) // m * m


@functools.lru_cache(maxsize=1)
def _vmem_limit_bytes():
    cap = 64 * 1024 * 1024
    try:
        cap = int(pltpu.get_tpu_info().vmem_capacity_bytes)
    except Exception:
        pass
    lim = int(min(cap * 0.9, 100 * 1024 * 1024))
    return max(lim, 32 * 1024 * 1024)


def _pick_fb(t, max_fb=4):
    """Frames per spatial grid step: largest divisor of T up to max_fb."""
    for fb in range(min(t, max_fb), 0, -1):
        if t % fb == 0:
            return fb
    return 1


# ---------------------------------------------------------------------------
# Pallas kernels
# ---------------------------------------------------------------------------
def _spatial_kernel(x_ref, w_ref, shift_ref, o_ref, *, fb, wp, p):
    """Fused (1,3,3)+(1,5,5) convs + folded BN + ReLU for `fb` frames.

    x_ref:     (fb, Cin, F)        bf16  zero-padded flattened frames
    w_ref:     (5, 2*Cout, 5*Cin)  bf16  per-dh tap groups, rows=[branch3;branch5],
                                         BN scale folded in
    shift_ref: (2*Cout, 1)         f32   folded BN shifts [branch3; branch5]
    o_ref:     (2*Cout, fb*P)      bf16  frame f occupies lanes [f*P, (f+1)*P)
    """
    for f in range(fb):                       # small static unroll (fb <= 4)
        xf = x_ref[f]                          # (Cin, F)
        acc = None
        for dh in range(5):                    # per-dh tap group -> accumulating matmul
            base = dh * wp
            grp = jnp.concatenate(
                [xf[:, base + dw: base + dw + p] for dw in range(5)], axis=0)
            part = jnp.dot(w_ref[dh], grp, preferred_element_type=jnp.float32)
            acc = part if acc is None else acc + part
        res = jnp.maximum(acc + shift_ref[...], 0.0)
        o_ref[:, f * p:(f + 1) * p] = res.astype(o_ref.dtype)


def _temporal_kernel(ys_ref, wt3_ref, wt5_ref, wl_ref, sh3_ref, sh5_ref, shl_ref,
                     o_ref, acc3_ref, acc5_ref, *, c, n_t, p):
    """Fused (3,1,1)/(5,1,1) temporal convs + BN + ReLU, branch add, 1x1x1+BN+ReLU.

    ys_ref: (2C, T*P) bf16 -- rows [0:C]=branch-3, [C:2C]=branch-5 spatial outputs,
            frame t on lanes [t*P, (t+1)*P).
    wt3/wt5: (3/5, C, C) bf16 (scale folded), wl: (C, C) bf16 (scale folded).
    sh*:   (C,1) f32 shifts.  o_ref: (C, T*P) bf16.  acc*: (C, T*P) f32 scratch.
    Temporal halo handled in-kernel via lane-aligned sub-range accumulation.
    """
    f32 = jnp.float32
    tp = n_t * p
    y3 = ys_ref[:c, :]
    y5 = ys_ref[c:, :]

    # branch 3: out[t] = sum_d W3[d] @ y3[t + d - 1]    (tap-major, big-N matmuls)
    acc3_ref[...] = jnp.dot(wt3_ref[1], y3, preferred_element_type=f32)
    if n_t >= 2:
        acc3_ref[:, p:] += jnp.dot(wt3_ref[0], y3[:, :tp - p],
                                   preferred_element_type=f32)
        acc3_ref[:, :tp - p] += jnp.dot(wt3_ref[2], y3[:, p:],
                                        preferred_element_type=f32)

    # branch 5: out[t] = sum_d W5[d] @ y5[t + d - 2]
    acc5_ref[...] = jnp.dot(wt5_ref[2], y5, preferred_element_type=f32)
    if n_t >= 2:
        acc5_ref[:, p:] += jnp.dot(wt5_ref[1], y5[:, :tp - p],
                                   preferred_element_type=f32)
        acc5_ref[:, :tp - p] += jnp.dot(wt5_ref[3], y5[:, p:],
                                        preferred_element_type=f32)
    if n_t >= 3:
        acc5_ref[:, 2 * p:] += jnp.dot(wt5_ref[0], y5[:, :tp - 2 * p],
                                       preferred_element_type=f32)
        acc5_ref[:, :tp - 2 * p] += jnp.dot(wt5_ref[4], y5[:, 2 * p:],
                                            preferred_element_type=f32)

    z3 = jnp.maximum(acc3_ref[...] + sh3_ref[...], 0.0)
    z5 = jnp.maximum(acc5_ref[...] + sh5_ref[...], 0.0)
    s = (z3 + z5).astype(jnp.bfloat16)
    y = jnp.dot(wl_ref[...], s, preferred_element_type=f32)
    o_ref[...] = jnp.maximum(y + shl_ref[...], 0.0).astype(o_ref.dtype)


# ---------------------------------------------------------------------------
# Pallas wrappers
# ---------------------------------------------------------------------------
def fused_spatial_conv(xflat, ws, sh_s, *, fb, wp, p):
    b, t, cin, f_len = xflat.shape
    c2 = ws.shape[1]
    n_t = t // fb
    kern = functools.partial(_spatial_kernel, fb=fb, wp=wp, p=p)
    return pl.pallas_call(
        kern,
        out_shape=jax.ShapeDtypeStruct((b, c2, t * p), jnp.bfloat16),
        grid=(b, n_t),
        in_specs=[
            pl.BlockSpec((pl.Squeezed(), fb, cin, f_len), lambda i, j: (i, j, 0, 0)),
            pl.BlockSpec((5, c2, ws.shape[2]), lambda i, j: (0, 0, 0)),
            pl.BlockSpec((c2, 1), lambda i, j: (0, 0)),
        ],
        out_specs=pl.BlockSpec((pl.Squeezed(), c2, fb * p), lambda i, j: (i, 0, j)),
        compiler_params=pltpu.CompilerParams(
            dimension_semantics=("parallel", "parallel"),
            vmem_limit_bytes=_vmem_limit_bytes()),
    )(xflat, ws, sh_s)


def fused_temporal_pointwise(ys, wt3, wt5, wl, sh3, sh5, shl, *, t, p):
    b, c2, tp = ys.shape
    c = c2 // 2
    kern = functools.partial(_temporal_kernel, c=c, n_t=t, p=p)
    const3 = lambda i: (0, 0, 0)
    const2 = lambda i: (0, 0)
    # TODO(synk): with B == 1 this grid has a single block; split T (with halo)
    #             to shard across v7x's two TensorCores in that case.
    return pl.pallas_call(
        kern,
        out_shape=jax.ShapeDtypeStruct((b, c, tp), jnp.bfloat16),
        grid=(b,),
        in_specs=[
            pl.BlockSpec((pl.Squeezed(), c2, tp), lambda i: (i, 0, 0)),
            pl.BlockSpec((3, c, c), const3),
            pl.BlockSpec((5, c, c), const3),
            pl.BlockSpec((c, c), const2),
            pl.BlockSpec((c, 1), const2),
            pl.BlockSpec((c, 1), const2),
            pl.BlockSpec((c, 1), const2),
        ],
        out_specs=pl.BlockSpec((pl.Squeezed(), c, tp), lambda i: (i, 0, 0)),
        scratch_shapes=[pltpu.VMEM((c, tp), jnp.float32),
                        pltpu.VMEM((c, tp), jnp.float32)],
        compiler_params=pltpu.CompilerParams(
            dimension_semantics=("parallel",),
            vmem_limit_bytes=_vmem_limit_bytes()),
    )(ys, wt3, wt5, wl, sh3, sh5, shl)


# ---------------------------------------------------------------------------
# Parameter preparation (BN folding + weight re-layout) -- hoisted out of kernels
# ---------------------------------------------------------------------------
def prepare_params(params):
    f32, bf16 = jnp.float32, jnp.bfloat16

    def fold(bn):
        scale = (bn["gamma"] / jnp.sqrt(bn["var"] + BN_EPS)).astype(f32)
        shift = (bn["beta"] - bn["mean"] * scale).astype(f32)
        return scale, shift

    sc_s3, sh_s3 = fold(params["bn_s3"])
    sc_s5, sh_s5 = fold(params["bn_s5"])
    sc_t3, sh_t3 = fold(params["bn_t3"])
    sc_t5, sh_t5 = fold(params["bn_t5"])
    sc_l, sh_l = fold(params["bn_last"])

    w3 = params["w_s3"][:, :, 0].astype(f32)          # (C, Cin, 3, 3)
    w5 = params["w_s5"][:, :, 0].astype(f32)          # (C, Cin, 5, 5)
    cout, cin = w5.shape[0], w5.shape[1]
    # Embed 3x3 taps (pad=1) into the 5x5 tap grid (pad=2 => offset +1), fold scale.
    w3e = jnp.zeros((cout, cin, 5, 5), f32).at[:, :, 1:4, 1:4].set(w3)
    w3e = w3e * sc_s3[:, None, None, None]
    w5s = w5 * sc_s5[:, None, None, None]
    ws = jnp.concatenate([w3e, w5s], axis=0)          # (2C, Cin, 5, 5): (o,ci,dh,dw)
    # Per-dh tap groups (5, 2C, 5*Cin); column order (dw, ci) matches the kernel.
    ws = jnp.transpose(ws, (2, 0, 3, 1)).reshape(5, 2 * cout, 5 * cin).astype(bf16)
    sh_s = jnp.concatenate([sh_s3, sh_s5]).reshape(2 * cout, 1)

    def temporal_w(w, scale):
        # (C, C, k, 1, 1) -> (k, C, C), BN scale folded into output rows.
        wt = jnp.transpose(w[:, :, :, 0, 0].astype(f32), (2, 0, 1))
        return (wt * scale[None, :, None]).astype(bf16)

    wt3 = temporal_w(params["w_t3"], sc_t3)
    wt5 = temporal_w(params["w_t5"], sc_t5)
    wl = (params["w_last"][:, :, 0, 0, 0].astype(f32) * sc_l[:, None]).astype(bf16)

    return dict(ws=ws, sh_s=sh_s, wt3=wt3, wt5=wt5, wl=wl,
                sh_t3=sh_t3.reshape(-1, 1), sh_t5=sh_t5.reshape(-1, 1),
                sh_l=sh_l.reshape(-1, 1))


# ---------------------------------------------------------------------------
# Forward pass
# ---------------------------------------------------------------------------
def visual_block_forward(x_ncdhw, params):
    """Pallas implementation of Visual_Block.forward (is_down=False), NCDHW in/out."""
    b, cin, t, h, w = x_ncdhw.shape
    cout = params["w_s3"].shape[0]
    prep = prepare_params(params)

    wp, hp = w + 2 * _PAD, h + 2 * _PAD
    n_out = h * wp                            # valid output cols/frame (incl. W-wrap junk)
    p = _round_up(n_out, _LANE)               # lane-aligned per-frame stride
    f_len = _round_up(4 * wp + 4 + p, _LANE)  # flat padded-frame length (tail-zeroed)

    # (B,Cin,T,H,W) f32 -> bf16 first (halves pre-kernel HBM traffic) -> (B,T,Cin,F).
    xb = jnp.transpose(x_ncdhw.astype(jnp.bfloat16), (0, 2, 1, 3, 4))
    xpad = jnp.pad(xb, ((0, 0), (0, 0), (0, 0), (_PAD, _PAD), (_PAD, _PAD)))
    xflat = jnp.pad(xpad.reshape(b, t, cin, hp * wp),
                    ((0, 0), (0, 0), (0, 0), (0, f_len - hp * wp)))

    fb = _pick_fb(t)
    # Both spatial branches in one kernel -> (B, 2*Cout, T*P) bf16.
    ys = fused_spatial_conv(xflat, prep["ws"], prep["sh_s"], fb=fb, wp=wp, p=p)

    # Temporal convs + add + 1x1x1 conv, halo handled in-kernel -> (B, Cout, T*P) bf16.
    out = fused_temporal_pointwise(ys, prep["wt3"], prep["wt5"], prep["wl"],
                                   prep["sh_t3"], prep["sh_t5"], prep["sh_l"],
                                   t=t, p=p)

    # Drop per-frame lane padding + W-wrap junk columns; layout is already NCDHW.
    out = out.reshape(b, cout, t, p)[..., :n_out]
    out = out.reshape(b, cout, t, h, wp)[..., :w]
    return out.astype(jnp.float32)


# ---------------------------------------------------------------------------
# Pure-JAX reference (for correctness checking)
# ---------------------------------------------------------------------------
def _ref_forward(x, params, eps=BN_EPS):
    def conv(inp, wt, pad):
        return jax.lax.conv_general_dilated(
            inp, wt, window_strides=(1, 1, 1), padding=pad,
            dimension_numbers=("NCDHW", "OIDHW", "NCDHW"),
            precision=jax.lax.Precision.HIGHEST)

    def bn(inp, prm):
        sh = (1, -1, 1, 1, 1)
        return ((inp - prm["mean"].reshape(sh)) / jnp.sqrt(prm["var"].reshape(sh) + eps)
                * prm["gamma"].reshape(sh) + prm["beta"].reshape(sh))

    relu = lambda z: jnp.maximum(z, 0.0)
    x3 = relu(bn(conv(x, params["w_s3"], [(0, 0), (1, 1), (1, 1)]), params["bn_s3"]))
    x3 = relu(bn(conv(x3, params["w_t3"], [(1, 1), (0, 0), (0, 0)]), params["bn_t3"]))
    x5 = relu(bn(conv(x, params["w_s5"], [(0, 0), (2, 2), (2, 2)]), params["bn_s5"]))
    x5 = relu(bn(conv(x5, params["w_t5"], [(2, 2), (0, 0), (0, 0)]), params["bn_t5"]))
    s = x3 + x5
    return relu(bn(conv(s, params["w_last"], [(0, 0), (0, 0), (0, 0)]), params["bn_last"]))


# ---------------------------------------------------------------------------
# Deterministic parameter init (shapes from Visual_Block.__init__)
# ---------------------------------------------------------------------------
def init_params(key, cin, cout):
    keys = jax.random.split(key, 10)

    def conv_w(k, shape):
        fan_in = float(np.prod(shape[1:]))
        return jax.random.normal(k, shape, jnp.float32) / np.sqrt(fan_in)

    def bn_p(k):
        k1, k2, k3, k4 = jax.random.split(k, 4)
        return dict(
            gamma=1.0 + 0.1 * jax.random.normal(k1, (cout,), jnp.float32),
            beta=0.1 * jax.random.normal(k2, (cout,), jnp.float32),
            mean=0.1 * jax.random.normal(k3, (cout,), jnp.float32),
            var=1.0 + 0.1 * jax.random.uniform(k4, (cout,), jnp.float32),
        )

    return {
        "w_s3": conv_w(keys[0], (cout, cin, 1, 3, 3)), "bn_s3": bn_p(keys[1]),
        "w_t3": conv_w(keys[2], (cout, cout, 3, 1, 1)), "bn_t3": bn_p(keys[3]),
        "w_s5": conv_w(keys[4], (cout, cin, 1, 5, 5)), "bn_s5": bn_p(keys[5]),
        "w_t5": conv_w(keys[6], (cout, cout, 5, 1, 1)), "bn_t5": bn_p(keys[7]),
        "w_last": conv_w(keys[8], (cout, cout, 1, 1, 1)), "bn_last": bn_p(keys[9]),
    }


if __name__ == "__main__":
    key = jax.random.PRNGKey(0)
    kx, kp = jax.random.split(key)

    B, Cin, Cout, T, H, W = 2, 4, 8, 8, 16, 16
    x = jax.random.normal(kx, (B, Cin, T, H, W), jnp.float32)
    params = init_params(kp, Cin, Cout)

    fwd = jax.jit(visual_block_forward)
    out = jax.block_until_ready(fwd(x, params))
    assert out.shape == (B, Cout, T, H, W), out.shape

    ref = jax.block_until_ready(_ref_forward(x, params))
    # bf16 MXU inputs/weights + bf16 intermediates & output vs f32 HIGHEST reference.
    np.testing.assert_allclose(np.asarray(out), np.asarray(ref), rtol=2e-2, atol=5e-2)

    print("KERNEL_OK")
</pallas_src>

<mosaic_0001>
module attributes {stable_mosaic.version = 11 : i64} {
  func.func @_spatial_kernel(%arg0: i32, %arg1: i32, %arg2: memref<1x4x4x512xbf16, #tpu.memory_space<vmem>>, %arg3: memref<5x16x20xbf16, #tpu.memory_space<vmem>>, %arg4: memref<16x1xf32, #tpu.memory_space<vmem>>, %arg5: memref<1x16x1536xbf16, #tpu.memory_space<vmem>>) attributes {dimension_semantics = [#tpu.dimension_semantics<parallel>, #tpu.dimension_semantics<parallel>], iteration_bounds = array<i64: 2, 2>, scalar_prefetch = 0 : i64, scratch_operands = 0 : i64, tpu.core_type = #tpu.core_type<tc>, window_params = [{transform_indices = @transform_0, window_bounds = array<i64: 1, 4, 4, 512>}, {pipeline_mode = #tpu.pipeline_mode<synchronous>, transform_indices = @transform_1, window_bounds = array<i64: 5, 16, 20>}, {pipeline_mode = #tpu.pipeline_mode<synchronous>, transform_indices = @transform_2, window_bounds = array<i64: 16, 1>}, {transform_indices = @transform_3, window_bounds = array<i64: 1, 16, 1536>}]} {
    %c0 = arith.constant 0 : index
    %c0_0 = arith.constant 0 : index
    %c0_1 = arith.constant 0 : index
    %c0_2 = arith.constant 0 : index
    %0 = vector.load %arg2[%c0, %c0_0, %c0_1, %c0_2] : memref<1x4x4x512xbf16, #tpu.memory_space<vmem>>, vector<1x1x4x512xbf16>
    %1 = vector.shape_cast %0 : vector<1x1x4x512xbf16> to vector<4x512xbf16>
    %2 = vector.extract_strided_slice %1 {offsets = [0, 0], sizes = [4, 384], strides = [1, 1]} : vector<4x512xbf16> to vector<4x384xbf16>
    %3 = vector.extract_strided_slice %1 {offsets = [0, 1], sizes = [4, 384], strides = [1, 1]} : vector<4x512xbf16> to vector<4x384xbf16>
    %4 = vector.extract_strided_slice %1 {offsets = [0, 2], sizes = [4, 384], strides = [1, 1]} : vector<4x512xbf16> to vector<4x384xbf16>
    %5 = vector.extract_strided_slice %1 {offsets = [0, 3], sizes = [4, 384], strides = [1, 1]} : vector<4x512xbf16> to vector<4x384xbf16>
    %6 = vector.extract_strided_slice %1 {offsets = [0, 4], sizes = [4, 384], strides = [1, 1]} : vector<4x512xbf16> to vector<4x384xbf16>
    %7 = tpu.concatenate %2, %3, %4, %5, %6 in 0 : vector<4x384xbf16>, vector<4x384xbf16>, vector<4x384xbf16>, vector<4x384xbf16>, vector<4x384xbf16> -> vector<20x384xbf16>
    %c0_3 = arith.constant 0 : index
    %c0_4 = arith.constant 0 : index
    %c0_5 = arith.constant 0 : index
    %8 = vector.load %arg3[%c0_3, %c0_4, %c0_5] : memref<5x16x20xbf16, #tpu.memory_space<vmem>>, vector<1x16x20xbf16>
    %9 = vector.shape_cast %8 : vector<1x16x20xbf16> to vector<16x20xbf16>
    %cst = arith.constant dense<0.000000e+00> : vector<16x384xf32>
    %10 = tpu.matmul %9, %7, %cst {dimension_numbers = #tpu.dot_dimension_numbers<[1], [0], [0], [1], [0, 0, 1, 1], [], []>} : vector<16x20xbf16>, vector<20x384xbf16>, vector<16x384xf32> -> vector<16x384xf32>
    %11 = vector.extract_strided_slice %1 {offsets = [0, 20], sizes = [4, 384], strides = [1, 1]} : vector<4x512xbf16> to vector<4x384xbf16>
    %12 = vector.extract_strided_slice %1 {offsets = [0, 21], sizes = [4, 384], strides = [1, 1]} : vector<4x512xbf16> to vector<4x384xbf16>
    %13 = vector.extract_strided_slice %1 {offsets = [0, 22], sizes = [4, 384], strides = [1, 1]} : vector<4x512xbf16> to vector<4x384xbf16>
    %14 = vector.extract_strided_slice %1 {offsets = [0, 23], sizes = [4, 384], strides = [1, 1]} : vector<4x512xbf16> to vector<4x384xbf16>
    %15 = vector.extract_strided_slice %1 {offsets = [0, 24], sizes = [4, 384], strides = [1, 1]} : vector<4x512xbf16> to vector<4x384xbf16>
    %16 = tpu.concatenate %11, %12, %13, %14, %15 in 0 : vector<4x384xbf16>, vector<4x384xbf16>, vector<4x384xbf16>, vector<4x384xbf16>, vector<4x384xbf16> -> vector<20x384xbf16>
    %c1 = arith.constant 1 : index
    %c0_6 = arith.constant 0 : index
    %c0_7 = arith.constant 0 : index
    %17 = vector.load %arg3[%c1, %c0_6, %c0_7] : memref<5x16x20xbf16, #tpu.memory_space<vmem>>, vector<1x16x20xbf16>
    %18 = vector.shape_cast %17 : vector<1x16x20xbf16> to vector<16x20xbf16>
    %cst_8 = arith.constant dense<0.000000e+00> : vector<16x384xf32>
    %19 = tpu.matmul %18, %16, %cst_8 {dimension_numbers = #tpu.dot_dimension_numbers<[1], [0], [0], [1], [0, 0, 1, 1], [], []>} : vector<16x20xbf16>, vector<20x384xbf16>, vector<16x384xf32> -> vector<16x384xf32>
    %20 = arith.addf %10, %19 : vector<16x384xf32>
    %21 = vector.extract_strided_slice %1 {offsets = [0, 40], sizes = [4, 384], strides = [1, 1]} : vector<4x512xbf16> to vector<4x384xbf16>
    %22 = vector.extract_strided_slice %1 {offsets = [0, 41], sizes = [4, 384], strides = [1, 1]} : vector<4x512xbf16> to vector<4x384xbf16>
    %23 = vector.extract_strided_slice %1 {offsets = [0, 42], sizes = [4, 384], strides = [1, 1]} : vector<4x512xbf16> to vector<4x384xbf16>
    %24 = vector.extract_strided_slice %1 {offsets = [0, 43], sizes = [4, 384], strides = [1, 1]} : vector<4x512xbf16> to vector<4x384xbf16>
    %25 = vector.extract_strided_slice %1 {offsets = [0, 44], sizes = [4, 384], strides = [1, 1]} : vector<4x512xbf16> to vector<4x384xbf16>
    %26 = tpu.concatenate %21, %22, %23, %24, %25 in 0 : vector<4x384xbf16>, vector<4x384xbf16>, vector<4x384xbf16>, vector<4x384xbf16>, vector<4x384xbf16> -> vector<20x384xbf16>
    %c2 = arith.constant 2 : index
    %c0_9 = arith.constant 0 : index
    %c0_10 = arith.constant 0 : index
    %27 = vector.load %arg3[%c2, %c0_9, %c0_10] : memref<5x16x20xbf16, #tpu.memory_space<vmem>>, vector<1x16x20xbf16>
    %28 = vector.shape_cast %27 : vector<1x16x20xbf16> to vector<16x20xbf16>
    %cst_11 = arith.constant dense<0.000000e+00> : vector<16x384xf32>
    %29 = tpu.matmul %28, %26, %cst_11 {dimension_numbers = #tpu.dot_dimension_numbers<[1], [0], [0], [1], [0, 0, 1, 1], [], []>} : vector<16x20xbf16>, vector<20x384xbf16>, vector<16x384xf32> -> vector<16x384xf32>
    %30 = arith.addf %20, %29 : vector<16x384xf32>
    %31 = vector.extract_strided_slice %1 {offsets = [0, 60], sizes = [4, 384], strides = [1, 1]} : vector<4x512xbf16> to vector<4x384xbf16>
    %32 = vector.extract_strided_slice %1 {offsets = [0, 61], sizes = [4, 384], strides = [1, 1]} : vector<4x512xbf16> to vector<4x384xbf16>
    %33 = vector.extract_strided_slice %1 {offsets = [0, 62], sizes = [4, 384], strides = [1, 1]} : vector<4x512xbf16> to vector<4x384xbf16>
    %34 = vector.extract_strided_slice %1 {offsets = [0, 63], sizes = [4, 384], strides = [1, 1]} : vector<4x512xbf16> to vector<4x384xbf16>
    %35 = vector.extract_strided_slice %1 {offsets = [0, 64], sizes = [4, 384], strides = [1, 1]} : vector<4x512xbf16> to vector<4x384xbf16>
    %36 = tpu.concatenate %31, %32, %33, %34, %35 in 0 : vector<4x384xbf16>, vector<4x384xbf16>, vector<4x384xbf16>, vector<4x384xbf16>, vector<4x384xbf16> -> vector<20x384xbf16>
    %c3 = arith.constant 3 : index
    %c0_12 = arith.constant 0 : index
    %c0_13 = arith.constant 0 : index
    %37 = vector.load %arg3[%c3, %c0_12, %c0_13] : memref<5x16x20xbf16, #tpu.memory_space<vmem>>, vector<1x16x20xbf16>
    %38 = vector.shape_cast %37 : vector<1x16x20xbf16> to vector<16x20xbf16>
    %cst_14 = arith.constant dense<0.000000e+00> : vector<16x384xf32>
    %39 = tpu.matmul %38, %36, %cst_14 {dimension_numbers = #tpu.dot_dimension_numbers<[1], [0], [0], [1], [0, 0, 1, 1], [], []>} : vector<16x20xbf16>, vector<20x384xbf16>, vector<16x384xf32> -> vector<16x384xf32>
    %40 = arith.addf %30, %39 : vector<16x384xf32>
    %41 = vector.extract_strided_slice %1 {offsets = [0, 80], sizes = [4, 384], strides = [1, 1]} : vector<4x512xbf16> to vector<4x384xbf16>
    %42 = vector.extract_strided_slice %1 {offsets = [0, 81], sizes = [4, 384], strides = [1, 1]} : vector<4x512xbf16> to vector<4x384xbf16>
    %43 = vector.extract_strided_slice %1 {offsets = [0, 82], sizes = [4, 384], strides = [1, 1]} : vector<4x512xbf16> to vector<4x384xbf16>
    %44 = vector.extract_strided_slice %1 {offsets = [0, 83], sizes = [4, 384], strides = [1, 1]} : vector<4x512xbf16> to vector<4x384xbf16>
    %45 = vector.extract_strided_slice %1 {offsets = [0, 84], sizes = [4, 384], strides = [1, 1]} : vector<4x512xbf16> to vector<4x384xbf16>
    %46 = tpu.concatenate %41, %42, %43, %44, %45 in 0 : vector<4x384xbf16>, vector<4x384xbf16>, vector<4x384xbf16>, vector<4x384xbf16>, vector<4x384xbf16> -> vector<20x384xbf16>
    %c4 = arith.constant 4 : index
    %c0_15 = arith.constant 0 : index
    %c0_16 = arith.constant 0 : index
    %47 = vector.load %arg3[%c4, %c0_15, %c0_16] : memref<5x16x20xbf16, #tpu.memory_space<vmem>>, vector<1x16x20xbf16>
    %48 = vector.shape_cast %47 : vector<1x16x20xbf16> to vector<16x20xbf16>
    %cst_17 = arith.constant dense<0.000000e+00> : vector<16x384xf32>
    %49 = tpu.matmul %48, %46, %cst_17 {dimension_numbers = #tpu.dot_dimension_numbers<[1], [0], [0], [1], [0, 0, 1, 1], [], []>} : vector<16x20xbf16>, vector<20x384xbf16>, vector<16x384xf32> -> vector<16x384xf32>
    %50 = arith.addf %40, %49 : vector<16x384xf32>
    %c0_18 = arith.constant 0 : index
    %c0_19 = arith.constant 0 : index
    %51 = vector.load %arg4[%c0_18, %c0_19] : memref<16x1xf32, #tpu.memory_space<vmem>>, vector<16x1xf32>
    %52 = vector.broadcast %51 : vector<16x1xf32> to vector<16x384xf32>
    %53 = arith.addf %50, %52 : vector<16x384xf32>
    %cst_20 = arith.constant 0.000000e+00 : f32
    %54 = vector.broadcast %cst_20 : f32 to vector<16x384xf32>
    %55 = arith.maximumf %53, %54 : vector<16x384xf32>
    %56 = arith.truncf %55 : vector<16x384xf32> to vector<16x384xbf16>
    %c0_21 = arith.constant 0 : index
    %c0_22 = arith.constant 0 : index
    %c0_23 = arith.constant 0 : index
    %57 = vector.load %arg5[%c0_21, %c0_22, %c0_23] : memref<1x16x1536xbf16, #tpu.memory_space<vmem>>, vector<1x16x384xbf16>
    %58 = vector.shape_cast %57 : vector<1x16x384xbf16> to vector<16x384xbf16>
    %59 = vector.shape_cast %56 : vector<16x384xbf16> to vector<1x16x384xbf16>
    tpu.vector_store %arg5[%c0_21, %c0_22, %c0_23], %59 {strides = array<i32>} : memref<1x16x1536xbf16, #tpu.memory_space<vmem>>, vector<1x16x384xbf16>,
    %c0_24 = arith.constant 0 : index
    %c1_25 = arith.constant 1 : index
    %c0_26 = arith.constant 0 : index
    %c0_27 = arith.constant 0 : index
    %60 = vector.load %arg2[%c0_24, %c1_25, %c0_26, %c0_27] : memref<1x4x4x512xbf16, #tpu.memory_space<vmem>>, vector<1x1x4x512xbf16>
    %61 = vector.shape_cast %60 : vector<1x1x4x512xbf16> to vector<4x512xbf16>
    %62 = vector.extract_strided_slice %61 {offsets = [0, 0], sizes = [4, 384], strides = [1, 1]} : vector<4x512xbf16> to vector<4x384xbf16>
    %63 = vector.extract_strided_slice %61 {offsets = [0, 1], sizes = [4, 384], strides = [1, 1]} : vector<4x512xbf16> to vector<4x384xbf16>
    %64 = vector.extract_strided_slice %61 {offsets = [0, 2], sizes = [4, 384], strides = [1, 1]} : vector<4x512xbf16> to vector<4x384xbf16>
    %65 = vector.extract_strided_slice %61 {offsets = [0, 3], sizes = [4, 384], strides = [1, 1]} : vector<4x512xbf16> to vector<4x384xbf16>
    %66 = vector.extract_strided_slice %61 {offsets = [0, 4], sizes = [4, 384], strides = [1, 1]} : vector<4x512xbf16> to vector<4x384xbf16>
    %67 = tpu.concatenate %62, %63, %64, %65, %66 in 0 : vector<4x384xbf16>, vector<4x384xbf16>, vector<4x384xbf16>, vector<4x384xbf16>, vector<4x384xbf16> -> vector<20x384xbf16>
    %c0_28 = arith.constant 0 : index
    %c0_29 = arith.constant 0 : index
    %c0_30 = arith.constant 0 : index
    %68 = vector.load %arg3[%c0_28, %c0_29, %c0_30] : memref<5x16x20xbf16, #tpu.memory_space<vmem>>, vector<1x16x20xbf16>
    %69 = vector.shape_cast %68 : vector<1x16x20xbf16> to vector<16x20xbf16>
    %cst_31 = arith.constant dense<0.000000e+00> : vector<16x384xf32>
    %70 = tpu.matmul %69, %67, %cst_31 {dimension_numbers = #tpu.dot_dimension_numbers<[1], [0], [0], [1], [0, 0, 1, 1], [], []>} : vector<16x20xbf16>, vector<20x384xbf16>, vector<16x384xf32> -> vector<16x384xf32>
    %71 = vector.extract_strided_slice %61 {offsets = [0, 20], sizes = [4, 384], strides = [1, 1]} : vector<4x512xbf16> to vector<4x384xbf16>
    %72 = vector.extract_strided_slice %61 {offsets = [0, 21], sizes = [4, 384], strides = [1, 1]} : vector<4x512xbf16> to vector<4x384xbf16>
    %73 = vector.extract_strided_slice %61 {offsets = [0, 22], sizes = [4, 384], strides = [1, 1]} : vector<4x512xbf16> to vector<4x384xbf16>
    %74 = vector.extract_strided_slice %61 {offsets = [0, 23], sizes = [4, 384], strides = [1, 1]} : vector<4x512xbf16> to vector<4x384xbf16>
    %75 = vector.extract_strided_slice %61 {offsets = [0, 24], sizes = [4, 384], strides = [1, 1]} : vector<4x512xbf16> to vector<4x384xbf16>
    %76 = tpu.concatenate %71, %72, %73, %74, %75 in 0 : vector<4x384xbf16>, vector<4x384xbf16>, vector<4x384xbf16>, vector<4x384xbf16>, vector<4x384xbf16> -> vector<20x384xbf16>
    %c1_32 = arith.constant 1 : index
    %c0_33 = arith.constant 0 : index
    %c0_34 = arith.constant 0 : index
    %77 = vector.load %arg3[%c1_32, %c0_33, %c0_34] : memref<5x16x20xbf16, #tpu.memory_space<vmem>>, vector<1x16x20xbf16>
    %78 = vector.shape_cast %77 : vector<1x16x20xbf16> to vector<16x20xbf16>
    %cst_35 = arith.constant dense<0.000000e+00> : vector<16x384xf32>
    %79 = tpu.matmul %78, %76, %cst_35 {dimension_numbers = #tpu.dot_dimension_numbers<[1], [0], [0], [1], [0, 0, 1, 1], [], []>} : vector<16x20xbf16>, vector<20x384xbf16>, vector<16x384xf32> -> vector<16x384xf32>
    %80 = arith.addf %70, %79 : vector<16x384xf32>
    %81 = vector.extract_strided_slice %61 {offsets = [0, 40], sizes = [4, 384], strides = [1, 1]} : vector<4x512xbf16> to vector<4x384xbf16>
    %82 = vector.extract_strided_slice %61 {offsets = [0, 41], sizes = [4, 384], strides = [1, 1]} : vector<4x512xbf16> to vector<4x384xbf16>
    %83 = vector.extract_strided_slice %61 {offsets = [0, 42], sizes = [4, 384], strides = [1, 1]} : vector<4x512xbf16> to vector<4x384xbf16>
    %84 = vector.extract_strided_slice %61 {offsets = [0, 43], sizes = [4, 384], strides = [1, 1]} : vector<4x512xbf16> to vector<4x384xbf16>
    %85 = vector.extract_strided_slice %61 {offsets = [0, 44], sizes = [4, 384], strides = [1, 1]} : vector<4x512xbf16> to vector<4x384xbf16>
    %86 = tpu.concatenate %81, %82, %83, %84, %85 in 0 : vector<4x384xbf16>, vector<4x384xbf16>, vector<4x384xbf16>, vector<4x384xbf16>, vector<4x384xbf16> -> vector<20x384xbf16>
    %c2_36 = arith.constant 2 : index
    %c0_37 = arith.constant 0 : index
    %c0_38 = arith.constant 0 : index
    %87 = vector.load %arg3[%c2_36, %c0_37, %c0_38] : memref<5x16x20xbf16, #tpu.memory_space<vmem>>, vector<1x16x20xbf16>
    %88 = vector.shape_cast %87 : vector<1x16x20xbf16> to vector<16x20xbf16>
    %cst_39 = arith.constant dense<0.000000e+00> : vector<16x384xf32>
    %89 = tpu.matmul %88, %86, %cst_39 {dimension_numbers = #tpu.dot_dimension_numbers<[1], [0], [0], [1], [0, 0, 1, 1], [], []>} : vector<16x20xbf16>, vector<20x384xbf16>, vector<16x384xf32> -> vector<16x384xf32>
    %90 = arith.addf %80, %89 : vector<16x384xf32>
    %91 = vector.extract_strided_slice %61 {offsets = [0, 60], sizes = [4, 384], strides = [1, 1]} : vector<4x512xbf16> to vector<4x384xbf16>
    %92 = vector.extract_strided_slice %61 {offsets = [0, 61], sizes = [4, 384], strides = [1, 1]} : vector<4x512xbf16> to vector<4x384xbf16>
    %93 = vector.extract_strided_slice %61 {offsets = [0, 62], sizes = [4, 384], strides = [1, 1]} : vector<4x512xbf16> to vector<4x384xbf16>
    %94 = vector.extract_strided_slice %61 {offsets = [0, 63], sizes = [4, 384], strides = [1, 1]} : vector<4x512xbf16> to vector<4x384xbf16>
    %95 = vector.extract_strided_slice %61 {offsets = [0, 64], sizes = [4, 384], strides = [1, 1]} : vector<4x512xbf16> to vector<4x384xbf16>
    %96 = tpu.concatenate %91, %92, %93, %94, %95 in 0 : vector<4x384xbf16>, vector<4x384xbf16>, vector<4x384xbf16>, vector<4x384xbf16>, vector<4x384xbf16> -> vector<20x384xbf16>
    %c3_40 = arith.constant 3 : index
    %c0_41 = arith.constant 0 : index
    %c0_42 = arith.constant 0 : index
    %97 = vector.load %arg3[%c3_40, %c0_41, %c0_42] : memref<5x16x20xbf16, #tpu.memory_space<vmem>>, vector<1x16x20xbf16>
    %98 = vector.shape_cast %97 : vector<1x16x20xbf16> to vector<16x20xbf16>
    %cst_43 = arith.constant dense<0.000000e+00> : vector<16x384xf32>
    %99 = tpu.matmul %98, %96, %cst_43 {dimension_numbers = #tpu.dot_dimension_numbers<[1], [0], [0], [1], [0, 0, 1, 1], [], []>} : vector<16x20xbf16>, vector<20x384xbf16>, vector<16x384xf32> -> vector<16x384xf32>
    %100 = arith.addf %90, %99 : vector<16x384xf32>
    %101 = vector.extract_strided_slice %61 {offsets = [0, 80], sizes = [4, 384], strides = [1, 1]} : vector<4x512xbf16> to vector<4x384xbf16>
    %102 = vector.extract_strided_slice %61 {offsets = [0, 81], sizes = [4, 384], strides = [1, 1]} : vector<4x512xbf16> to vector<4x384xbf16>
    %103 = vector.extract_strided_slice %61 {offsets = [0, 82], sizes = [4, 384], strides = [1, 1]} : vector<4x512xbf16> to vector<4x384xbf16>
    %104 = vector.extract_strided_slice %61 {offsets = [0, 83], sizes = [4, 384], strides = [1, 1]} : vector<4x512xbf16> to vector<4x384xbf16>
    %105 = vector.extract_strided_slice %61 {offsets = [0, 84], sizes = [4, 384], strides = [1, 1]} : vector<4x512xbf16> to vector<4x384xbf16>
    %106 = tpu.concatenate %101, %102, %103, %104, %105 in 0 : vector<4x384xbf16>, vector<4x384xbf16>, vector<4x384xbf16>, vector<4x384xbf16>, vector<4x384xbf16> -> vector<20x384xbf16>
    %c4_44 = arith.constant 4 : index
    %c0_45 = arith.constant 0 : index
    %c0_46 = arith.constant 0 : index
    %107 = vector.load %arg3[%c4_44, %c0_45, %c0_46] : memref<5x16x20xbf16, #tpu.memory_space<vmem>>, vector<1x16x20xbf16>
    %108 = vector.shape_cast %107 : vector<1x16x20xbf16> to vector<16x20xbf16>
    %cst_47 = arith.constant dense<0.000000e+00> : vector<16x384xf32>
    %109 = tpu.matmul %108, %106, %cst_47 {dimension_numbers = #tpu.dot_dimension_numbers<[1], [0], [0], [1], [0, 0, 1, 1], [], []>} : vector<16x20xbf16>, vector<20x384xbf16>, vector<16x384xf32> -> vector<16x384xf32>
    %110 = arith.addf %100, %109 : vector<16x384xf32>
    %c0_48 = arith.constant 0 : index
    %c0_49 = arith.constant 0 : index
    %111 = vector.load %arg4[%c0_48, %c0_49] : memref<16x1xf32, #tpu.memory_space<vmem>>, vector<16x1xf32>
    %112 = vector.broadcast %111 : vector<16x1xf32> to vector<16x384xf32>
    %113 = arith.addf %110, %112 : vector<16x384xf32>
    %cst_50 = arith.constant 0.000000e+00 : f32
    %114 = vector.broadcast %cst_50 : f32 to vector<16x384xf32>
    %115 = arith.maximumf %113, %114 : vector<16x384xf32>
    %116 = arith.truncf %115 : vector<16x384xf32> to vector<16x384xbf16>
    %c0_51 = arith.constant 0 : index
    %c0_52 = arith.constant 0 : index
    %c384 = arith.constant 384 : index
    %117 = vector.load %arg5[%c0_51, %c0_52, %c384] : memref<1x16x1536xbf16, #tpu.memory_space<vmem>>, vector<1x16x384xbf16>
    %118 = vector.shape_cast %117 : vector<1x16x384xbf16> to vector<16x384xbf16>
    %119 = vector.shape_cast %116 : vector<16x384xbf16> to vector<1x16x384xbf16>
    tpu.vector_store %arg5[%c0_51, %c0_52, %c384], %119 {strides = array<i32>} : memref<1x16x1536xbf16, #tpu.memory_space<vmem>>, vector<1x16x384xbf16>,
    %c0_53 = arith.constant 0 : index
    %c2_54 = arith.constant 2 : index
    %c0_55 = arith.constant 0 : index
    %c0_56 = arith.constant 0 : index
    %120 = vector.load %arg2[%c0_53, %c2_54, %c0_55, %c0_56] : memref<1x4x4x512xbf16, #tpu.memory_space<vmem>>, vector<1x1x4x512xbf16>
    %121 = vector.shape_cast %120 : vector<1x1x4x512xbf16> to vector<4x512xbf16>
    %122 = vector.extract_strided_slice %121 {offsets = [0, 0], sizes = [4, 384], strides = [1, 1]} : vector<4x512xbf16> to vector<4x384xbf16>
    %123 = vector.extract_strided_slice %121 {offsets = [0, 1], sizes = [4, 384], strides = [1, 1]} : vector<4x512xbf16> to vector<4x384xbf16>
    %124 = vector.extract_strided_slice %121 {offsets = [0, 2], sizes = [4, 384], strides = [1, 1]} : vector<4x512xbf16> to vector<4x384xbf16>
    %125 = vector.extract_strided_slice %121 {offsets = [0, 3], sizes = [4, 384], strides = [1, 1]} : vector<4x512xbf16> to vector<4x384xbf16>
    %126 = vector.extract_strided_slice %121 {offsets = [0, 4], sizes = [4, 384], strides = [1, 1]} : vector<4x512xbf16> to vector<4x384xbf16>
    %127 = tpu.concatenate %122, %123, %124, %125, %126 in 0 : vector<4x384xbf16>, vector<4x384xbf16>, vector<4x384xbf16>, vector<4x384xbf16>, vector<4x384xbf16> -> vector<20x384xbf16>
    %c0_57 = arith.constant 0 : index
    %c0_58 = arith.constant 0 : index
    %c0_59 = arith.constant 0 : index
    %128 = vector.load %arg3[%c0_57, %c0_58, %c0_59] : memref<5x16x20xbf16, #tpu.memory_space<vmem>>, vector<1x16x20xbf16>
    %129 = vector.shape_cast %128 : vector<1x16x20xbf16> to vector<16x20xbf16>
    %cst_60 = arith.constant dense<0.000000e+00> : vector<16x384xf32>
    %130 = tpu.matmul %129, %127, %cst_60 {dimension_numbers = #tpu.dot_dimension_numbers<[1], [0], [0], [1], [0, 0, 1, 1], [], []>} : vector<16x20xbf16>, vector<20x384xbf16>, vector<16x384xf32> -> vector<16x384xf32>
    %131 = vector.extract_strided_slice %121 {offsets = [0, 20], sizes = [4, 384], strides = [1, 1]} : vector<4x512xbf16> to vector<4x384xbf16>
    %132 = vector.extract_strided_slice %121 {offsets = [0, 21], sizes = [4, 384], strides = [1, 1]} : vector<4x512xbf16> to vector<4x384xbf16>
    %133 = vector.extract_strided_slice %121 {offsets = [0, 22], sizes = [4, 384], strides = [1, 1]} : vector<4x512xbf16> to vector<4x384xbf16>
    %134 = vector.extract_strided_slice %121 {offsets = [0, 23], sizes = [4, 384], strides = [1, 1]} : vector<4x512xbf16> to vector<4x384xbf16>
    %135 = vector.extract_strided_slice %121 {offsets = [0, 24], sizes = [4, 384], strides = [1, 1]} : vector<4x512xbf16> to vector<4x384xbf16>
    %136 = tpu.concatenate %131, %132, %133, %134, %135 in 0 : vector<4x384xbf16>, vector<4x384xbf16>, vector<4x384xbf16>, vector<4x384xbf16>, vector<4x384xbf16> -> vector<20x384xbf16>
    %c1_61 = arith.constant 1 : index
    %c0_62 = arith.constant 0 : index
    %c0_63 = arith.constant 0 : index
    %137 = vector.load %arg3[%c1_61, %c0_62, %c0_63] : memref<5x16x20xbf16, #tpu.memory_space<vmem>>, vector<1x16x20xbf16>
    %138 = vector.shape_cast %137 : vector<1x16x20xbf16> to vector<16x20xbf16>
    %cst_64 = arith.constant dense<0.000000e+00> : vector<16x384xf32>
    %139 = tpu.matmul %138, %136, %cst_64 {dimension_numbers = #tpu.dot_dimension_numbers<[1], [0], [0], [1], [0, 0, 1, 1], [], []>} : vector<16x20xbf16>, vector<20x384xbf16>, vector<16x384xf32> -> vector<16x384xf32>
    %140 = arith.addf %130, %139 : vector<16x384xf32>
    %141 = vector.extract_strided_slice %121 {offsets = [0, 40], sizes = [4, 384], strides = [1, 1]} : vector<4x512xbf16> to vector<4x384xbf16>
    %142 = vector.extract_strided_slice %121 {offsets = [0, 41], sizes = [4, 384], strides = [1, 1]} : vector<4x512xbf16> to vector<4x384xbf16>
    %143 = vector.extract_strided_slice %121 {offsets = [0, 42], sizes = [4, 384], strides = [1, 1]} : vector<4x512xbf16> to vector<4x384xbf16>
    %144 = vector.extract_strided_slice %121 {offsets = [0, 43], sizes = [4, 384], strides = [1, 1]} : vector<4x512xbf16> to vector<4x384xbf16>
    %145 = vector.extract_strided_slice %121 {offsets = [0, 44], sizes = [4, 384], strides = [1, 1]} : vector<4x512xbf16> to vector<4x384xbf16>
    %146 = tpu.concatenate %141, %142, %143, %144, %145 in 0 : vector<4x384xbf16>, vector<4x384xbf16>, vector<4x384xbf16>, vector<4x384xbf16>, vector<4x384xbf16> -> vector<20x384xbf16>
    %c2_65 = arith.constant 2 : index
    %c0_66 = arith.constant 0 : index
    %c0_67 = arith.constant 0 : index
    %147 = vector.load %arg3[%c2_65, %c0_66, %c0_67] : memref<5x16x20xbf16, #tpu.memory_space<vmem>>, vector<1x16x20xbf16>
    %148 = vector.shape_cast %147 : vector<1x16x20xbf16> to vector<16x20xbf16>
    %cst_68 = arith.constant dense<0.000000e+00> : vector<16x384xf32>
    %149 = tpu.matmul %148, %146, %cst_68 {dimension_numbers = #tpu.dot_dimension_numbers<[1], [0], [0], [1], [0, 0, 1, 1], [], []>} : vector<16x20xbf16>, vector<20x384xbf16>, vector<16x384xf32> -> vector<16x384xf32>
    %150 = arith.addf %140, %149 : vector<16x384xf32>
    %151 = vector.extract_strided_slice %121 {offsets = [0, 60], sizes = [4, 384], strides = [1, 1]} : vector<4x512xbf16> to vector<4x384xbf16>
    %152 = vector.extract_strided_slice %121 {offsets = [0, 61], sizes = [4, 384], strides = [1, 1]} : vector<4x512xbf16> to vector<4x384xbf16>
    %153 = vector.extract_strided_slice %121 {offsets = [0, 62], sizes = [4, 384], strides = [1, 1]} : vector<4x512xbf16> to vector<4x384xbf16>
    %154 = vector.extract_strided_slice %121 {offsets = [0, 63], sizes = [4, 384], strides = [1, 1]} : vector<4x512xbf16> to vector<4x384xbf16>
    %155 = vector.extract_strided_slice %121 {offsets = [0, 64], sizes = [4, 384], strides = [1, 1]} : vector<4x512xbf16> to vector<4x384xbf16>
    %156 = tpu.concatenate %151, %152, %153, %154, %155 in 0 : vector<4x384xbf16>, vector<4x384xbf16>, vector<4x384xbf16>, vector<4x384xbf16>, vector<4x384xbf16> -> vector<20x384xbf16>
    %c3_69 = arith.constant 3 : index
    %c0_70 = arith.constant 0 : index
    %c0_71 = arith.constant 0 : index
    %157 = vector.load %arg3[%c3_69, %c0_70, %c0_71] : memref<5x16x20xbf16, #tpu.memory_space<vmem>>, vector<1x16x20xbf16>
    %158 = vector.shape_cast %157 : vector<1x16x20xbf16> to vector<16x20xbf16>
    %cst_72 = arith.constant dense<0.000000e+00> : vector<16x384xf32>
    %159 = tpu.matmul %158, %156, %cst_72 {dimension_numbers = #tpu.dot_dimension_numbers<[1], [0], [0], [1], [0, 0, 1, 1], [], []>} : vector<16x20xbf16>, vector<20x384xbf16>, vector<16x384xf32> -> vector<16x384xf32>
    %160 = arith.addf %150, %159 : vector<16x384xf32>
    %161 = vector.extract_strided_slice %121 {offsets = [0, 80], sizes = [4, 384], strides = [1, 1]} : vector<4x512xbf16> to vector<4x384xbf16>
    %162 = vector.extract_strided_slice %121 {offsets = [0, 81], sizes = [4, 384], strides = [1, 1]} : vector<4x512xbf16> to vector<4x384xbf16>
    %163 = vector.extract_strided_slice %121 {offsets = [0, 82], sizes = [4, 384], strides = [1, 1]} : vector<4x512xbf16> to vector<4x384xbf16>
    %164 = vector.extract_strided_slice %121 {offsets = [0, 83], sizes = [4, 384], strides = [1, 1]} : vector<4x512xbf16> to vector<4x384xbf16>
    %165 = vector.extract_strided_slice %121 {offsets = [0, 84], sizes = [4, 384], strides = [1, 1]} : vector<4x512xbf16> to vector<4x384xbf16>
    %166 = tpu.concatenate %161, %162, %163, %164, %165 in 0 : vector<4x384xbf16>, vector<4x384xbf16>, vector<4x384xbf16>, vector<4x384xbf16>, vector<4x384xbf16> -> vector<20x384xbf16>
    %c4_73 = arith.constant 4 : index
    %c0_74 = arith.constant 0 : index
    %c0_75 = arith.constant 0 : index
    %167 = vector.load %arg3[%c4_73, %c0_74, %c0_75] : memref<5x16x20xbf16, #tpu.memory_space<vmem>>, vector<1x16x20xbf16>
    %168 = vector.shape_cast %167 : vector<1x16x20xbf16> to vector<16x20xbf16>
    %cst_76 = arith.constant dense<0.000000e+00> : vector<16x384xf32>
    %169 = tpu.matmul %168, %166, %cst_76 {dimension_numbers = #tpu.dot_dimension_numbers<[1], [0], [0], [1], [0, 0, 1, 1], [], []>} : vector<16x20xbf16>, vector<20x384xbf16>, vector<16x384xf32> -> vector<16x384xf32>
    %170 = arith.addf %160, %169 : vector<16x384xf32>
    %c0_77 = arith.constant 0 : index
    %c0_78 = arith.constant 0 : index
    %171 = vector.load %arg4[%c0_77, %c0_78] : memref<16x1xf32, #tpu.memory_space<vmem>>, vector<16x1xf32>
    %172 = vector.broadcast %171 : vector<16x1xf32> to vector<16x384xf32>
    %173 = arith.addf %170, %172 : vector<16x384xf32>
    %cst_79 = arith.constant 0.000000e+00 : f32
    %174 = vector.broadcast %cst_79 : f32 to vector<16x384xf32>
    %175 = arith.maximumf %173, %174 : vector<16x384xf32>
    %176 = arith.truncf %175 : vector<16x384xf32> to vector<16x384xbf16>
    %c0_80 = arith.constant 0 : index
    %c0_81 = arith.constant 0 : index
    %c768 = arith.constant 768 : index
    %177 = vector.load %arg5[%c0_80, %c0_81, %c768] : memref<1x16x1536xbf16, #tpu.memory_space<vmem>>, vector<1x16x384xbf16>
    %178 = vector.shape_cast %177 : vector<1x16x384xbf16> to vector<16x384xbf16>
    %179 = vector.shape_cast %176 : vector<16x384xbf16> to vector<1x16x384xbf16>
    tpu.vector_store %arg5[%c0_80, %c0_81, %c768], %179 {strides = array<i32>} : memref<1x16x1536xbf16, #tpu.memory_space<vmem>>, vector<1x16x384xbf16>,
    %c0_82 = arith.constant 0 : index
    %c3_83 = arith.constant 3 : index
    %c0_84 = arith.constant 0 : index
    %c0_85 = arith.constant 0 : index
    %180 = vector.load %arg2[%c0_82, %c3_83, %c0_84, %c0_85] : memref<1x4x4x512xbf16, #tpu.memory_space<vmem>>, vector<1x1x4x512xbf16>
    %181 = vector.shape_cast %180 : vector<1x1x4x512xbf16> to vector<4x512xbf16>
    %182 = vector.extract_strided_slice %181 {offsets = [0, 0], sizes = [4, 384], strides = [1, 1]} : vector<4x512xbf16> to vector<4x384xbf16>
    %183 = vector.extract_strided_slice %181 {offsets = [0, 1], sizes = [4, 384], strides = [1, 1]} : vector<4x512xbf16> to vector<4x384xbf16>
    %184 = vector.extract_strided_slice %181 {offsets = [0, 2], sizes = [4, 384], strides = [1, 1]} : vector<4x512xbf16> to vector<4x384xbf16>
    %185 = vector.extract_strided_slice %181 {offsets = [0, 3], sizes = [4, 384], strides = [1, 1]} : vector<4x512xbf16> to vector<4x384xbf16>
    %186 = vector.extract_strided_slice %181 {offsets = [0, 4], sizes = [4, 384], strides = [1, 1]} : vector<4x512xbf16> to vector<4x384xbf16>
    %187 = tpu.concatenate %182, %183, %184, %185, %186 in 0 : vector<4x384xbf16>, vector<4x384xbf16>, vector<4x384xbf16>, vector<4x384xbf16>, vector<4x384xbf16> -> vector<20x384xbf16>
    %c0_86 = arith.constant 0 : index
    %c0_87 = arith.constant 0 : index
    %c0_88 = arith.constant 0 : index
    %188 = vector.load %arg3[%c0_86, %c0_87, %c0_88] : memref<5x16x20xbf16, #tpu.memory_space<vmem>>, vector<1x16x20xbf16>
    %189 = vector.shape_cast %188 : vector<1x16x20xbf16> to vector<16x20xbf16>
    %cst_89 = arith.constant dense<0.000000e+00> : vector<16x384xf32>
    %190 = tpu.matmul %189, %187, %cst_89 {dimension_numbers = #tpu.dot_dimension_numbers<[1], [0], [0], [1], [0, 0, 1, 1], [], []>} : vector<16x20xbf16>, vector<20x384xbf16>, vector<16x384xf32> -> vector<16x384xf32>
    %191 = vector.extract_strided_slice %181 {offsets = [0, 20], sizes = [4, 384], strides = [1, 1]} : vector<4x512xbf16> to vector<4x384xbf16>
    %192 = vector.extract_strided_slice %181 {offsets = [0, 21], sizes = [4, 384], strides = [1, 1]} : vector<4x512xbf16> to vector<4x384xbf16>
    %193 = vector.extract_strided_slice %181 {offsets = [0, 22], sizes = [4, 384], strides = [1, 1]} : vector<4x512xbf16> to vector<4x384xbf16>
    %194 = vector.extract_strided_slice %181 {offsets = [0, 23], sizes = [4, 384], strides = [1, 1]} : vector<4x512xbf16> to vector<4x384xbf16>
    %195 = vector.extract_strided_slice %181 {offsets = [0, 24], sizes = [4, 384], strides = [1, 1]} : vector<4x512xbf16> to vector<4x384xbf16>
    %196 = tpu.concatenate %191, %192, %193, %194, %195 in 0 : vector<4x384xbf16>, vector<4x384xbf16>, vector<4x384xbf16>, vector<4x384xbf16>, vector<4x384xbf16> -> vector<20x384xbf16>
    %c1_90 = arith.constant 1 : index
    %c0_91 = arith.constant 0 : index
    %c0_92 = arith.constant 0 : index
    %197 = vector.load %arg3[%c1_90, %c0_91, %c0_92] : memref<5x16x20xbf16, #tpu.memory_space<vmem>>, vector<1x16x20xbf16>
    %198 = vector.shape_cast %197 : vector<1x16x20xbf16> to vector<16x20xbf16>
    %cst_93 = arith.constant dense<0.000000e+00> : vector<16x384xf32>
    %199 = tpu.matmul %198, %196, %cst_93 {dimension_numbers = #tpu.dot_dimension_numbers<[1], [0], [0], [1], [0, 0, 1, 1], [], []>} : vector<16x20xbf16>, vector<20x384xbf16>, vector<16x384xf32> -> vector<16x384xf32>
    %200 = arith.addf %190, %199 : vector<16x384xf32>
    %201 = vector.extract_strided_slice %181 {offsets = [0, 40], sizes = [4, 384], strides = [1, 1]} : vector<4x512xbf16> to vector<4x384xbf16>
    %202 = vector.extract_strided_slice %181 {offsets = [0, 41], sizes = [4, 384], strides = [1, 1]} : vector<4x512xbf16> to vector<4x384xbf16>
    %203 = vector.extract_strided_slice %181 {offsets = [0, 42], sizes = [4, 384], strides = [1, 1]} : vector<4x512xbf16> to vector<4x384xbf16>
    %204 = vector.extract_strided_slice %181 {offsets = [0, 43], sizes = [4, 384], strides = [1, 1]} : vector<4x512xbf16> to vector<4x384xbf16>
    %205 = vector.extract_strided_slice %181 {offsets = [0, 44], sizes = [4, 384], strides = [1, 1]} : vector<4x512xbf16> to vector<4x384xbf16>
    %206 = tpu.concatenate %201, %202, %203, %204, %205 in 0 : vector<4x384xbf16>, vector<4x384xbf16>, vector<4x384xbf16>, vector<4x384xbf16>, vector<4x384xbf16> -> vector<20x384xbf16>
    %c2_94 = arith.constant 2 : index
    %c0_95 = arith.constant 0 : index
    %c0_96 = arith.constant 0 : index
    %207 = vector.load %arg3[%c2_94, %c0_95, %c0_96] : memref<5x16x20xbf16, #tpu.memory_space<vmem>>, vector<1x16x20xbf16>
    %208 = vector.shape_cast %207 : vector<1x16x20xbf16> to vector<16x20xbf16>
    %cst_97 = arith.constant dense<0.000000e+00> : vector<16x384xf32>
    %209 = tpu.matmul %208, %206, %cst_97 {dimension_numbers = #tpu.dot_dimension_numbers<[1], [0], [0], [1], [0, 0, 1, 1], [], []>} : vector<16x20xbf16>, vector<20x384xbf16>, vector<16x384xf32> -> vector<16x384xf32>
    %210 = arith.addf %200, %209 : vector<16x384xf32>
    %211 = vector.extract_strided_slice %181 {offsets = [0, 60], sizes = [4, 384], strides = [1, 1]} : vector<4x512xbf16> to vector<4x384xbf16>
    %212 = vector.extract_strided_slice %181 {offsets = [0, 61], sizes = [4, 384], strides = [1, 1]} : vector<4x512xbf16> to vector<4x384xbf16>
    %213 = vector.extract_strided_slice %181 {offsets = [0, 62], sizes = [4, 384], strides = [1, 1]} : vector<4x512xbf16> to vector<4x384xbf16>
    %214 = vector.extract_strided_slice %181 {offsets = [0, 63], sizes = [4, 384], strides = [1, 1]} : vector<4x512xbf16> to vector<4x384xbf16>
    %215 = vector.extract_strided_slice %181 {offsets = [0, 64], sizes = [4, 384], strides = [1, 1]} : vector<4x512xbf16> to vector<4x384xbf16>
    %216 = tpu.concatenate %211, %212, %213, %214, %215 in 0 : vector<4x384xbf16>, vector<4x384xbf16>, vector<4x384xbf16>, vector<4x384xbf16>, vector<4x384xbf16> -> vector<20x384xbf16>
    %c3_98 = arith.constant 3 : index
    %c0_99 = arith.constant 0 : index
    %c0_100 = arith.constant 0 : index
    %217 = vector.load %arg3[%c3_98, %c0_99, %c0_100] : memref<5x16x20xbf16, #tpu.memory_space<vmem>>, vector<1x16x20xbf16>
    %218 = vector.shape_cast %217 : vector<1x16x20xbf16> to vector<16x20xbf16>
    %cst_101 = arith.constant dense<0.000000e+00> : vector<16x384xf32>
    %219 = tpu.matmul %218, %216, %cst_101 {dimension_numbers = #tpu.dot_dimension_numbers<[1], [0], [0], [1], [0, 0, 1, 1], [], []>} : vector<16x20xbf16>, vector<20x384xbf16>, vector<16x384xf32> -> vector<16x384xf32>
    %220 = arith.addf %210, %219 : vector<16x384xf32>
    %221 = vector.extract_strided_slice %181 {offsets = [0, 80], sizes = [4, 384], strides = [1, 1]} : vector<4x512xbf16> to vector<4x384xbf16>
    %222 = vector.extract_strided_slice %181 {offsets = [0, 81], sizes = [4, 384], strides = [1, 1]} : vector<4x512xbf16> to vector<4x384xbf16>
    %223 = vector.extract_strided_slice %181 {offsets = [0, 82], sizes = [4, 384], strides = [1, 1]} : vector<4x512xbf16> to vector<4x384xbf16>
    %224 = vector.extract_strided_slice %181 {offsets = [0, 83], sizes = [4, 384], strides = [1, 1]} : vector<4x512xbf16> to vector<4x384xbf16>
    %225 = vector.extract_strided_slice %181 {offsets = [0, 84], sizes = [4, 384], strides = [1, 1]} : vector<4x512xbf16> to vector<4x384xbf16>
    %226 = tpu.concatenate %221, %222, %223, %224, %225 in 0 : vector<4x384xbf16>, vector<4x384xbf16>, vector<4x384xbf16>, vector<4x384xbf16>, vector<4x384xbf16> -> vector<20x384xbf16>
    %c4_102 = arith.constant 4 : index
    %c0_103 = arith.constant 0 : index
    %c0_104 = arith.constant 0 : index
    %227 = vector.load %arg3[%c4_102, %c0_103, %c0_104] : memref<5x16x20xbf16, #tpu.memory_space<vmem>>, vector<1x16x20xbf16>
    %228 = vector.shape_cast %227 : vector<1x16x20xbf16> to vector<16x20xbf16>
    %cst_105 = arith.constant dense<0.000000e+00> : vector<16x384xf32>
    %229 = tpu.matmul %228, %226, %cst_105 {dimension_numbers = #tpu.dot_dimension_numbers<[1], [0], [0], [1], [0, 0, 1, 1], [], []>} : vector<16x20xbf16>, vector<20x384xbf16>, vector<16x384xf32> -> vector<16x384xf32>
    %230 = arith.addf %220, %229 : vector<16x384xf32>
    %c0_106 = arith.constant 0 : index
    %c0_107 = arith.constant 0 : index
    %231 = vector.load %arg4[%c0_106, %c0_107] : memref<16x1xf32, #tpu.memory_space<vmem>>, vector<16x1xf32>
    %232 = vector.broadcast %231 : vector<16x1xf32> to vector<16x384xf32>
    %233 = arith.addf %230, %232 : vector<16x384xf32>
    %cst_108 = arith.constant 0.000000e+00 : f32
    %234 = vector.broadcast %cst_108 : f32 to vector<16x384xf32>
    %235 = arith.maximumf %233, %234 : vector<16x384xf32>
    %236 = arith.truncf %235 : vector<16x384xf32> to vector<16x384xbf16>
    %c0_109 = arith.constant 0 : index
    %c0_110 = arith.constant 0 : index
    %c1152 = arith.constant 1152 : index
    %237 = vector.load %arg5[%c0_109, %c0_110, %c1152] : memref<1x16x1536xbf16, #tpu.memory_space<vmem>>, vector<1x16x384xbf16>
    %238 = vector.shape_cast %237 : vector<1x16x384xbf16> to vector<16x384xbf16>
    %239 = vector.shape_cast %236 : vector<16x384xbf16> to vector<1x16x384xbf16>
    tpu.vector_store %arg5[%c0_109, %c0_110, %c1152], %239 {strides = array<i32>} : memref<1x16x1536xbf16, #tpu.memory_space<vmem>>, vector<1x16x384xbf16>,
    return
  }
  func.func @transform_0(%arg0: i32, %arg1: i32) -> (i32, i32, i32, i32) {
    %c0_i32 = arith.constant 0 : i32
    %c0_i32_0 = arith.constant 0 : i32
    %c0_i32_1 = arith.constant 0 : i32
    return %arg0, %arg1, %c0_i32, %c0_i32_0 : i32, i32, i32, i32
  }
  func.func @transform_1(%arg0: i32, %arg1: i32) -> (i32, i32, i32) {
    %c0_i32 = arith.constant 0 : i32
    %c0_i32_0 = arith.constant 0 : i32
    %c0_i32_1 = arith.constant 0 : i32
    %c0_i32_2 = arith.constant 0 : i32
    return %c0_i32, %c0_i32_0, %c0_i32_1 : i32, i32, i32
  }
  func.func @transform_2(%arg0: i32, %arg1: i32) -> (i32, i32) {
    %c0_i32 = arith.constant 0 : i32
    %c0_i32_0 = arith.constant 0 : i32
    %c0_i32_1 = arith.constant 0 : i32
    return %c0_i32, %c0_i32_0 : i32, i32
  }
  func.func @transform_3(%arg0: i32, %arg1: i32) -> (i32, i32, i32) {
    %c0_i32 = arith.constant 0 : i32
    %c0_i32_0 = arith.constant 0 : i32
    return %arg0, %c0_i32, %arg1 : i32, i32, i32
  }
}

module attributes {stable_mosaic.version = 11 : i64} {
  func.func @_temporal_kernel(%arg0: i32, %arg1: memref<1x16x3072xbf16, #tpu.memory_space<vmem>>, %arg2: memref<3x8x8xbf16, #tpu.memory_space<vmem>>, %arg3: memref<5x8x8xbf16, #tpu.memory_space<vmem>>, %arg4: memref<8x8xbf16, #tpu.memory_space<vmem>>, %arg5: memref<8x1xf32, #tpu.memory_space<vmem>>, %arg6: memref<8x1xf32, #tpu.memory_space<vmem>>, %arg7: memref<8x1xf32, #tpu.memory_space<vmem>>, %arg8: memref<1x8x3072xbf16, #tpu.memory_space<vmem>>, %arg9: memref<8x3072xf32, #tpu.memory_space<vmem>>, %arg10: memref<8x3072xf32, #tpu.memory_space<vmem>>) attributes {dimension_semantics = [#tpu.dimension_semantics<parallel>], iteration_bounds = array<i64: 2>, scalar_prefetch = 0 : i64, scratch_operands = 2 : i64, tpu.core_type = #tpu.core_type<tc>, window_params = [{transform_indices = @transform_0, window_bounds = array<i64: 1, 16, 3072>}, {pipeline_mode = #tpu.pipeline_mode<synchronous>, transform_indices = @transform_1, window_bounds = array<i64: 3, 8, 8>}, {pipeline_mode = #tpu.pipeline_mode<synchronous>, transform_indices = @transform_2, window_bounds = array<i64: 5, 8, 8>}, {pipeline_mode = #tpu.pipeline_mode<synchronous>, transform_indices = @transform_3, window_bounds = array<i64: 8, 8>}, {pipeline_mode = #tpu.pipeline_mode<synchronous>, transform_indices = @transform_4, window_bounds = array<i64: 8, 1>}, {pipeline_mode = #tpu.pipeline_mode<synchronous>, transform_indices = @transform_5, window_bounds = array<i64: 8, 1>}, {pipeline_mode = #tpu.pipeline_mode<synchronous>, transform_indices = @transform_6, window_bounds = array<i64: 8, 1>}, {transform_indices = @transform_7, window_bounds = array<i64: 1, 8, 3072>}]} {
    %c0 = arith.constant 0 : index
    %c0_0 = arith.constant 0 : index
    %c0_1 = arith.constant 0 : index
    %0 = vector.load %arg1[%c0, %c0_0, %c0_1] : memref<1x16x3072xbf16, #tpu.memory_space<vmem>>, vector<1x8x3072xbf16>
    %1 = vector.shape_cast %0 : vector<1x8x3072xbf16> to vector<8x3072xbf16>
    %c0_2 = arith.constant 0 : index
    %c8 = arith.constant 8 : index
    %c0_3 = arith.constant 0 : index
    %2 = vector.load %arg1[%c0_2, %c8, %c0_3] : memref<1x16x3072xbf16, #tpu.memory_space<vmem>>, vector<1x8x3072xbf16>
    %3 = vector.shape_cast %2 : vector<1x8x3072xbf16> to vector<8x3072xbf16>
    %c1 = arith.constant 1 : index
    %c0_4 = arith.constant 0 : index
    %c0_5 = arith.constant 0 : index
    %4 = vector.load %arg2[%c1, %c0_4, %c0_5] : memref<3x8x8xbf16, #tpu.memory_space<vmem>>, vector<1x8x8xbf16>
    %5 = vector.shape_cast %4 : vector<1x8x8xbf16> to vector<8x8xbf16>
    %cst = arith.constant dense<0.000000e+00> : vector<8x3072xf32>
    %6 = tpu.matmul %5, %1, %cst {dimension_numbers = #tpu.dot_dimension_numbers<[1], [0], [0], [1], [0, 0, 1, 1], [], []>} : vector<8x8xbf16>, vector<8x3072xbf16>, vector<8x3072xf32> -> vector<8x3072xf32>
    %c0_6 = arith.constant 0 : index
    %c0_7 = arith.constant 0 : index
    %7 = vector.load %arg9[%c0_6, %c0_7] : memref<8x3072xf32, #tpu.memory_space<vmem>>, vector<8x3072xf32>
    tpu.vector_store %arg9[%c0_6, %c0_7], %6 {strides = array<i32>} : memref<8x3072xf32, #tpu.memory_space<vmem>>, vector<8x3072xf32>,
    %c0_8 = arith.constant 0 : index
    %c384 = arith.constant 384 : index
    %8 = vector.load %arg9[%c0_8, %c384] : memref<8x3072xf32, #tpu.memory_space<vmem>>, vector<8x2688xf32>
    %c0_9 = arith.constant 0 : index
    %c0_10 = arith.constant 0 : index
    %c0_11 = arith.constant 0 : index
    %9 = vector.load %arg2[%c0_9, %c0_10, %c0_11] : memref<3x8x8xbf16, #tpu.memory_space<vmem>>, vector<1x8x8xbf16>
    %10 = vector.shape_cast %9 : vector<1x8x8xbf16> to vector<8x8xbf16>
    %11 = vector.extract_strided_slice %1 {offsets = [0, 0], sizes = [8, 2688], strides = [1, 1]} : vector<8x3072xbf16> to vector<8x2688xbf16>
    %cst_12 = arith.constant dense<0.000000e+00> : vector<8x2688xf32>
    %12 = tpu.matmul %10, %11, %cst_12 {dimension_numbers = #tpu.dot_dimension_numbers<[1], [0], [0], [1], [0, 0, 1, 1], [], []>} : vector<8x8xbf16>, vector<8x2688xbf16>, vector<8x2688xf32> -> vector<8x2688xf32>
    %13 = arith.addf %8, %12 : vector<8x2688xf32>
    %c0_13 = arith.constant 0 : index
    %c384_14 = arith.constant 384 : index
    %14 = vector.load %arg9[%c0_13, %c384_14] : memref<8x3072xf32, #tpu.memory_space<vmem>>, vector<8x2688xf32>
    tpu.vector_store %arg9[%c0_13, %c384_14], %13 {strides = array<i32>} : memref<8x3072xf32, #tpu.memory_space<vmem>>, vector<8x2688xf32>,
    %c0_15 = arith.constant 0 : index
    %c0_16 = arith.constant 0 : index
    %15 = vector.load %arg9[%c0_15, %c0_16] : memref<8x3072xf32, #tpu.memory_space<vmem>>, vector<8x2688xf32>
    %c2 = arith.constant 2 : index
    %c0_17 = arith.constant 0 : index
    %c0_18 = arith.constant 0 : index
    %16 = vector.load %arg2[%c2, %c0_17, %c0_18] : memref<3x8x8xbf16, #tpu.memory_space<vmem>>, vector<1x8x8xbf16>
    %17 = vector.shape_cast %16 : vector<1x8x8xbf16> to vector<8x8xbf16>
    %18 = vector.extract_strided_slice %1 {offsets = [0, 384], sizes = [8, 2688], strides = [1, 1]} : vector<8x3072xbf16> to vector<8x2688xbf16>
    %cst_19 = arith.constant dense<0.000000e+00> : vector<8x2688xf32>
    %19 = tpu.matmul %17, %18, %cst_19 {dimension_numbers = #tpu.dot_dimension_numbers<[1], [0], [0], [1], [0, 0, 1, 1], [], []>} : vector<8x8xbf16>, vector<8x2688xbf16>, vector<8x2688xf32> -> vector<8x2688xf32>
    %20 = arith.addf %15, %19 : vector<8x2688xf32>
    %c0_20 = arith.constant 0 : index
    %c0_21 = arith.constant 0 : index
    %21 = vector.load %arg9[%c0_20, %c0_21] : memref<8x3072xf32, #tpu.memory_space<vmem>>, vector<8x2688xf32>
    tpu.vector_store %arg9[%c0_20, %c0_21], %20 {strides = array<i32>} : memref<8x3072xf32, #tpu.memory_space<vmem>>, vector<8x2688xf32>,
    %c2_22 = arith.constant 2 : index
    %c0_23 = arith.constant 0 : index
    %c0_24 = arith.constant 0 : index
    %22 = vector.load %arg3[%c2_22, %c0_23, %c0_24] : memref<5x8x8xbf16, #tpu.memory_space<vmem>>, vector<1x8x8xbf16>
    %23 = vector.shape_cast %22 : vector<1x8x8xbf16> to vector<8x8xbf16>
    %cst_25 = arith.constant dense<0.000000e+00> : vector<8x3072xf32>
    %24 = tpu.matmul %23, %3, %cst_25 {dimension_numbers = #tpu.dot_dimension_numbers<[1], [0], [0], [1], [0, 0, 1, 1], [], []>} : vector<8x8xbf16>, vector<8x3072xbf16>, vector<8x3072xf32> -> vector<8x3072xf32>
    %c0_26 = arith.constant 0 : index
    %c0_27 = arith.constant 0 : index
    %25 = vector.load %arg10[%c0_26, %c0_27] : memref<8x3072xf32, #tpu.memory_space<vmem>>, vector<8x3072xf32>
    tpu.vector_store %arg10[%c0_26, %c0_27], %24 {strides = array<i32>} : memref<8x3072xf32, #tpu.memory_space<vmem>>, vector<8x3072xf32>,
    %c0_28 = arith.constant 0 : index
    %c384_29 = arith.constant 384 : index
    %26 = vector.load %arg10[%c0_28, %c384_29] : memref<8x3072xf32, #tpu.memory_space<vmem>>, vector<8x2688xf32>
    %c1_30 = arith.constant 1 : index
    %c0_31 = arith.constant 0 : index
    %c0_32 = arith.constant 0 : index
    %27 = vector.load %arg3[%c1_30, %c0_31, %c0_32] : memref<5x8x8xbf16, #tpu.memory_space<vmem>>, vector<1x8x8xbf16>
    %28 = vector.shape_cast %27 : vector<1x8x8xbf16> to vector<8x8xbf16>
    %29 = vector.extract_strided_slice %3 {offsets = [0, 0], sizes = [8, 2688], strides = [1, 1]} : vector<8x3072xbf16> to vector<8x2688xbf16>
    %cst_33 = arith.constant dense<0.000000e+00> : vector<8x2688xf32>
    %30 = tpu.matmul %28, %29, %cst_33 {dimension_numbers = #tpu.dot_dimension_numbers<[1], [0], [0], [1], [0, 0, 1, 1], [], []>} : vector<8x8xbf16>, vector<8x2688xbf16>, vector<8x2688xf32> -> vector<8x2688xf32>
    %31 = arith.addf %26, %30 : vector<8x2688xf32>
    %c0_34 = arith.constant 0 : index
    %c384_35 = arith.constant 384 : index
    %32 = vector.load %arg10[%c0_34, %c384_35] : memref<8x3072xf32, #tpu.memory_space<vmem>>, vector<8x2688xf32>
    tpu.vector_store %arg10[%c0_34, %c384_35], %31 {strides = array<i32>} : memref<8x3072xf32, #tpu.memory_space<vmem>>, vector<8x2688xf32>,
    %c0_36 = arith.constant 0 : index
    %c0_37 = arith.constant 0 : index
    %33 = vector.load %arg10[%c0_36, %c0_37] : memref<8x3072xf32, #tpu.memory_space<vmem>>, vector<8x2688xf32>
    %c3 = arith.constant 3 : index
    %c0_38 = arith.constant 0 : index
    %c0_39 = arith.constant 0 : index
    %34 = vector.load %arg3[%c3, %c0_38, %c0_39] : memref<5x8x8xbf16, #tpu.memory_space<vmem>>, vector<1x8x8xbf16>
    %35 = vector.shape_cast %34 : vector<1x8x8xbf16> to vector<8x8xbf16>
    %36 = vector.extract_strided_slice %3 {offsets = [0, 384], sizes = [8, 2688], strides = [1, 1]} : vector<8x3072xbf16> to vector<8x2688xbf16>
    %cst_40 = arith.constant dense<0.000000e+00> : vector<8x2688xf32>
    %37 = tpu.matmul %35, %36, %cst_40 {dimension_numbers = #tpu.dot_dimension_numbers<[1], [0], [0], [1], [0, 0, 1, 1], [], []>} : vector<8x8xbf16>, vector<8x2688xbf16>, vector<8x2688xf32> -> vector<8x2688xf32>
    %38 = arith.addf %33, %37 : vector<8x2688xf32>
    %c0_41 = arith.constant 0 : index
    %c0_42 = arith.constant 0 : index
    %39 = vector.load %arg10[%c0_41, %c0_42] : memref<8x3072xf32, #tpu.memory_space<vmem>>, vector<8x2688xf32>
    tpu.vector_store %arg10[%c0_41, %c0_42], %38 {strides = array<i32>} : memref<8x3072xf32, #tpu.memory_space<vmem>>, vector<8x2688xf32>,
    %c0_43 = arith.constant 0 : index
    %c768 = arith.constant 768 : index
    %40 = vector.load %arg10[%c0_43, %c768] : memref<8x3072xf32, #tpu.memory_space<vmem>>, vector<8x2304xf32>
    %c0_44 = arith.constant 0 : index
    %c0_45 = arith.constant 0 : index
    %c0_46 = arith.constant 0 : index
    %41 = vector.load %arg3[%c0_44, %c0_45, %c0_46] : memref<5x8x8xbf16, #tpu.memory_space<vmem>>, vector<1x8x8xbf16>
    %42 = vector.shape_cast %41 : vector<1x8x8xbf16> to vector<8x8xbf16>
    %43 = vector.extract_strided_slice %3 {offsets = [0, 0], sizes = [8, 2304], strides = [1, 1]} : vector<8x3072xbf16> to vector<8x2304xbf16>
    %cst_47 = arith.constant dense<0.000000e+00> : vector<8x2304xf32>
    %44 = tpu.matmul %42, %43, %cst_47 {dimension_numbers = #tpu.dot_dimension_numbers<[1], [0], [0], [1], [0, 0, 1, 1], [], []>} : vector<8x8xbf16>, vector<8x2304xbf16>, vector<8x2304xf32> -> vector<8x2304xf32>
    %45 = arith.addf %40, %44 : vector<8x2304xf32>
    %c0_48 = arith.constant 0 : index
    %c768_49 = arith.constant 768 : index
    %46 = vector.load %arg10[%c0_48, %c768_49] : memref<8x3072xf32, #tpu.memory_space<vmem>>, vector<8x2304xf32>
    tpu.vector_store %arg10[%c0_48, %c768_49], %45 {strides = array<i32>} : memref<8x3072xf32, #tpu.memory_space<vmem>>, vector<8x2304xf32>,
    %c0_50 = arith.constant 0 : index
    %c0_51 = arith.constant 0 : index
    %47 = vector.load %arg10[%c0_50, %c0_51] : memref<8x3072xf32, #tpu.memory_space<vmem>>, vector<8x2304xf32>
    %c4 = arith.constant 4 : index
    %c0_52 = arith.constant 0 : index
    %c0_53 = arith.constant 0 : index
    %48 = vector.load %arg3[%c4, %c0_52, %c0_53] : memref<5x8x8xbf16, #tpu.memory_space<vmem>>, vector<1x8x8xbf16>
    %49 = vector.shape_cast %48 : vector<1x8x8xbf16> to vector<8x8xbf16>
    %50 = vector.extract_strided_slice %3 {offsets = [0, 768], sizes = [8, 2304], strides = [1, 1]} : vector<8x3072xbf16> to vector<8x2304xbf16>
    %cst_54 = arith.constant dense<0.000000e+00> : vector<8x2304xf32>
    %51 = tpu.matmul %49, %50, %cst_54 {dimension_numbers = #tpu.dot_dimension_numbers<[1], [0], [0], [1], [0, 0, 1, 1], [], []>} : vector<8x8xbf16>, vector<8x2304xbf16>, vector<8x2304xf32> -> vector<8x2304xf32>
    %52 = arith.addf %47, %51 : vector<8x2304xf32>
    %c0_55 = arith.constant 0 : index
    %c0_56 = arith.constant 0 : index
    %53 = vector.load %arg10[%c0_55, %c0_56] : memref<8x3072xf32, #tpu.memory_space<vmem>>, vector<8x2304xf32>
    tpu.vector_store %arg10[%c0_55, %c0_56], %52 {strides = array<i32>} : memref<8x3072xf32, #tpu.memory_space<vmem>>, vector<8x2304xf32>,
    %c0_57 = arith.constant 0 : index
    %c0_58 = arith.constant 0 : index
    %54 = vector.load %arg9[%c0_57, %c0_58] : memref<8x3072xf32, #tpu.memory_space<vmem>>, vector<8x3072xf32>
    %c0_59 = arith.constant 0 : index
    %c0_60 = arith.constant 0 : index
    %55 = vector.load %arg5[%c0_59, %c0_60] : memref<8x1xf32, #tpu.memory_space<vmem>>, vector<8x1xf32>
    %56 = vector.broadcast %55 : vector<8x1xf32> to vector<8x3072xf32>
    %57 = arith.addf %54, %56 : vector<8x3072xf32>
    %cst_61 = arith.constant 0.000000e+00 : f32
    %58 = vector.broadcast %cst_61 : f32 to vector<8x3072xf32>
    %59 = arith.maximumf %57, %58 : vector<8x3072xf32>
    %c0_62 = arith.constant 0 : index
    %c0_63 = arith.constant 0 : index
    %60 = vector.load %arg10[%c0_62, %c0_63] : memref<8x3072xf32, #tpu.memory_space<vmem>>, vector<8x3072xf32>
    %c0_64 = arith.constant 0 : index
    %c0_65 = arith.constant 0 : index
    %61 = vector.load %arg6[%c0_64, %c0_65] : memref<8x1xf32, #tpu.memory_space<vmem>>, vector<8x1xf32>
    %62 = vector.broadcast %61 : vector<8x1xf32> to vector<8x3072xf32>
    %63 = arith.addf %60, %62 : vector<8x3072xf32>
    %cst_66 = arith.constant 0.000000e+00 : f32
    %64 = vector.broadcast %cst_66 : f32 to vector<8x3072xf32>
    %65 = arith.maximumf %63, %64 : vector<8x3072xf32>
    %66 = arith.addf %59, %65 : vector<8x3072xf32>
    %67 = arith.truncf %66 : vector<8x3072xf32> to vector<8x3072xbf16>
    %c0_67 = arith.constant 0 : index
    %c0_68 = arith.constant 0 : index
    %68 = vector.load %arg4[%c0_67, %c0_68] : memref<8x8xbf16, #tpu.memory_space<vmem>>, vector<8x8xbf16>
    %cst_69 = arith.constant dense<0.000000e+00> : vector<8x3072xf32>
    %69 = tpu.matmul %68, %67, %cst_69 {dimension_numbers = #tpu.dot_dimension_numbers<[1], [0], [0], [1], [0, 0, 1, 1], [], []>} : vector<8x8xbf16>, vector<8x3072xbf16>, vector<8x3072xf32> -> vector<8x3072xf32>
    %c0_70 = arith.constant 0 : index
    %c0_71 = arith.constant 0 : index
    %70 = vector.load %arg7[%c0_70, %c0_71] : memref<8x1xf32, #tpu.memory_space<vmem>>, vector<8x1xf32>
    %71 = vector.broadcast %70 : vector<8x1xf32> to vector<8x3072xf32>
    %72 = arith.addf %69, %71 : vector<8x3072xf32>
    %cst_72 = arith.constant 0.000000e+00 : f32
    %73 = vector.broadcast %cst_72 : f32 to vector<8x3072xf32>
    %74 = arith.maximumf %72, %73 : vector<8x3072xf32>
    %75 = arith.truncf %74 : vector<8x3072xf32> to vector<8x3072xbf16>
    %c0_73 = arith.constant 0 : index
    %c0_74 = arith.constant 0 : index
    %c0_75 = arith.constant 0 : index
    %76 = vector.load %arg8[%c0_73, %c0_74, %c0_75] : memref<1x8x3072xbf16, #tpu.memory_space<vmem>>, vector<1x8x3072xbf16>
    %77 = vector.shape_cast %76 : vector<1x8x3072xbf16> to vector<8x3072xbf16>
    %78 = vector.shape_cast %75 : vector<8x3072xbf16> to vector<1x8x3072xbf16>
    tpu.vector_store %arg8[%c0_73, %c0_74, %c0_75], %78 {strides = array<i32>} : memref<1x8x3072xbf16, #tpu.memory_space<vmem>>, vector<1x8x3072xbf16>,
    return
  }
  func.func @transform_0(%arg0: i32) -> (i32, i32, i32) {
    %c0_i32 = arith.constant 0 : i32
    %c0_i32_0 = arith.constant 0 : i32
    %c0_i32_1 = arith.constant 0 : i32
    return %arg0, %c0_i32, %c0_i32_0 : i32, i32, i32
  }
  func.func @transform_1(%arg0: i32) -> (i32, i32, i32) {
    %c0_i32 = arith.constant 0 : i32
    %c0_i32_0 = arith.constant 0 : i32
    %c0_i32_1 = arith.constant 0 : i32
    %c0_i32_2 = arith.constant 0 : i32
    return %c0_i32, %c0_i32_0, %c0_i32_1 : i32, i32, i32
  }
  func.func @transform_2(%arg0: i32) -> (i32, i32, i32) {
    %c0_i32 = arith.constant 0 : i32
    %c0_i32_0 = arith.constant 0 : i32
    %c0_i32_1 = arith.constant 0 : i32
    %c0_i32_2 = arith.constant 0 : i32
    return %c0_i32, %c0_i32_0, %c0_i32_1 : i32, i32, i32
  }
  func.func @transform_3(%arg0: i32) -> (i32, i32) {
    %c0_i32 = arith.constant 0 : i32
    %c0_i32_0 = arith.constant 0 : i32
    %c0_i32_1 = arith.constant 0 : i32
    return %c0_i32, %c0_i32_0 : i32, i32
  }
  func.func @transform_4(%arg0: i32) -> (i32, i32) {
    %c0_i32 = arith.constant 0 : i32
    %c0_i32_0 = arith.constant 0 : i32
    %c0_i32_1 = arith.constant 0 : i32
    return %c0_i32, %c0_i32_0 : i32, i32
  }
  func.func @transform_5(%arg0: i32) -> (i32, i32) {
    %c0_i32 = arith.constant 0 : i32
    %c0_i32_0 = arith.constant 0 : i32
    %c0_i32_1 = arith.constant 0 : i32
    return %c0_i32, %c0_i32_0 : i32, i32
  }
  func.func @transform_6(%arg0: i32) -> (i32, i32) {
    %c0_i32 = arith.constant 0 : i32
    %c0_i32_0 = arith.constant 0 : i32
    %c0_i32_1 = arith.constant 0 : i32
    return %c0_i32, %c0_i32_0 : i32, i32
  }
  func.func @transform_7(%arg0: i32) -> (i32, i32, i32) {
    %c0_i32 = arith.constant 0 : i32
    %c0_i32_0 = arith.constant 0 : i32
    %c0_i32_1 = arith.constant 0 : i32
    return %arg0, %c0_i32, %c0_i32_0 : i32, i32, i32
  }
}

</mosaic_0001>

<llo_original>
// kernel: visual_block_forward.3
$region0: #{visual_block_forward.3}
  #allocation0 [shape = 'u32[]', space=smem, size = 0x4, offset = 0x4, fixed_abs, tag = 'smem constant byte address 0x4 - core index']
  #allocation1 [shape = 'u32[72,128]{1,0:T(1,128)}', space=vmem, size = 0x9000, scoped, tag = 'internal scratch']
  #allocation2 [shape = 'f32[8,3072]{1,0:T(8,128)}', space=vmem, size = 0x18000, scoped, tag = 'scratch operand']
  #allocation3 [shape = 'f32[8,3072]{1,0:T(8,128)}', space=vmem, size = 0x18000, scoped, tag = 'scratch operand']
  %s0 = inlined_call_operand.vmem [shape: bf16[2,16,3072], index: 0, kind: input, shape index: {}]
  %s1 = inlined_call_operand.vmem [shape: bf16[3,8,8], index: 1, kind: input, shape index: {}]
  %s2 = inlined_call_operand.vmem [shape: bf16[5,8,8], index: 2, kind: input, shape index: {}]
  %s3 = inlined_call_operand.vmem [shape: bf16[8,8], index: 3, kind: input, shape index: {}]
  %s4 = inlined_call_operand.vmem [shape: f32[8,1], index: 4, kind: input, shape index: {}]
  %s5 = inlined_call_operand.vmem [shape: f32[8,1], index: 5, kind: input, shape index: {}]
  %s6 = inlined_call_operand.vmem [shape: f32[8,1], index: 6, kind: input, shape index: {}]
  %s7 = inlined_call_operand.vmem [shape: bf16[2,8,3072], index: 7, kind: output, shape index: {}]
  %s8 = sld [smem:[#allocation0]]
  $region61: #{visual_block_forward.3} parent=0
    _
  %s10 = ssub.s32 1, %s8
  %s11 = scalar_select 0, %s10, %s8
  loop: start=0, step=1, limit=4
  $region2: #{visual_block_forward.3} parent=0 // loop_pre_header
    _
  $region3: #{visual_block_forward.3} parent=0 // loop_header
    %s13 = sphi 0, %s17
    %p14 = scmp.ge.s32.totalorder %s13, 4
    %s23 = sphi 0, %s25
    %s26 = sphi 0, %s23
    %s27 = sphi 0, %s26
    %s43 = sphi 0, %s27
    %s47 = sphi 0, %s47
    %s49 = sphi 0, %s47
    %s50 = sphi 0, %s49
    %s64 = sphi 0, %s50
    %s68 = sphi 0, %s68
    %s70 = sphi 0, %s68
    %s71 = sphi 0, %s70
    %s85 = sphi 0, %s71
    %s89 = sphi 0, %s89
    %s91 = sphi 0, %s89
    %s92 = sphi 0, %s91
    %s106 = sphi 0, %s92
    %s110 = sphi 0, %s110
    %s112 = sphi 0, %s110
    %s113 = sphi 0, %s112
    %s127 = sphi 0, %s113
    %s131 = sphi 0, %s131
    %s133 = sphi 0, %s131
    %s134 = sphi 0, %s133
    %s148 = sphi 0, %s134
    %s152 = sphi 0, %s152
    %s154 = sphi 0, %s152
    %s155 = sphi 0, %s154
    %s169 = sphi 0, %s155
    %s175 = sphi 0, %s177
    %s178 = sphi 0, %s175
    %s179 = sphi 0, %s178
    %s195 = sphi 0, %s179
  $region4: #{visual_block_forward.3} parent=0 // loop_header_branch
    %16 = sbr.rel (%p14) target = $region8
  $region5: #{visual_block_forward.3} parent=0 // loop_body
    %s18 = ssub.s32 %s13, 1
    %s19 = ssub.s32 %s13, 2
    %s20 = sadd.s32 %s13, 1
    %s21 = ssub.s32 %s13, %s20
    %p22 = scmp.eq.s32.totalorder %s21, 0
    %s24 = sadd.s32 %s23, 1
    %s25 = scalar_select %p22, %s23, %s24
    %p28 = pneg %p22
    %p29 = scmp.eq.s32.totalorder %s13, 1
    %p30 = por %p28, %p29
    %p31 = scmp.ne.s32.totalorder %s23, %s26
    %p32 = scmp.eq.s32.totalorder %s13, 0
    %p33 = por %p31, %p32
    %p34 = scmp.ne.s32.totalorder %s23, %s26
    %p35 = scmp.eq.s32.totalorder %s18, 1
    %p36 = por %p34, %p35
    %p37 = scmp.ne.s32.totalorder %s26, %s27
    %p38 = scmp.eq.s32.totalorder %s18, 0
    %p39 = por %p37, %p38
    %p40 = scmp.ne.s32.totalorder %s26, %s27
    %p41 = scmp.eq.s32.totalorder %s19, 1
    %p42 = por %p40, %p41
    %p44 = scmp.ne.s32.totalorder %s27, %s43
    %p45 = scmp.eq.s32.totalorder %s19, 0
    %p46 = por %p44, %p45
    %s48 = sadd.s32 %s47, 1
    %p51 = scmp.eq.s32.totalorder %s13, 1
    %p52 = scmp.ne.s32.totalorder %s47, %s49
    %p53 = scmp.eq.s32.totalorder %s13, 0
    %p54 = por %p52, %p53
    %p55 = scmp.ne.s32.totalorder %s47, %s49
    %p56 = scmp.eq.s32.totalorder %s18, 1
    %p57 = por %p55, %p56
    %p58 = scmp.ne.s32.totalorder %s49, %s50
    %p59 = scmp.eq.s32.totalorder %s18, 0
    %p60 = por %p58, %p59
    %p61 = scmp.ne.s32.totalorder %s49, %s50
    %p62 = scmp.eq.s32.totalorder %s19, 1
    %p63 = por %p61, %p62
    %p65 = scmp.ne.s32.totalorder %s50, %s64
    %p66 = scmp.eq.s32.totalorder %s19, 0
    %p67 = por %p65, %p66
    %s69 = sadd.s32 %s68, 1
    %p72 = scmp.eq.s32.totalorder %s13, 1
    %p73 = scmp.ne.s32.totalorder %s68, %s70
    %p74 = scmp.eq.s32.totalorder %s13, 0
    %p75 = por %p73, %p74
    %p76 = scmp.ne.s32.totalorder %s68, %s70
    %p77 = scmp.eq.s32.totalorder %s18, 1
    %p78 = por %p76, %p77
    %p79 = scmp.ne.s32.totalorder %s70, %s71
    %p80 = scmp.eq.s32.totalorder %s18, 0
    %p81 = por %p79, %p80
    %p82 = scmp.ne.s32.totalorder %s70, %s71
    %p83 = scmp.eq.s32.totalorder %s19, 1
    %p84 = por %p82, %p83
    %p86 = scmp.ne.s32.totalorder %s71, %s85
    %p87 = scmp.eq.s32.totalorder %s19, 0
    %p88 = por %p86, %p87
    %s90 = sadd.s32 %s89, 1
    %p93 = scmp.eq.s32.totalorder %s13, 1
    %p94 = scmp.ne.s32.totalorder %s89, %s91
    %p95 = scmp.eq.s32.totalorder %s13, 0
    %p96 = por %p94, %p95
    %p97 = scmp.ne.s32.totalorder %s89, %s91
    %p98 = scmp.eq.s32.totalorder %s18, 1
    %p99 = por %p97, %p98
    %p100 = scmp.ne.s32.totalorder %s91, %s92
    %p101 = scmp.eq.s32.totalorder %s18, 0
    %p102 = por %p100, %p101
    %p103 = scmp.ne.s32.totalorder %s91, %s92
    %p104 = scmp.eq.s32.totalorder %s19, 1
    %p105 = por %p103, %p104
    %p107 = scmp.ne.s32.totalorder %s92, %s106
    %p108 = scmp.eq.s32.totalorder %s19, 0
    %p109 = por %p107, %p108
    %s111 = sadd.s32 %s110, 1
    %p114 = scmp.eq.s32.totalorder %s13, 1
    %p115 = scmp.ne.s32.totalorder %s110, %s112
    %p116 = scmp.eq.s32.totalorder %s13, 0
    %p117 = por %p115, %p116
    %p118 = scmp.ne.s32.totalorder %s110, %s112
    %p119 = scmp.eq.s32.totalorder %s18, 1
    %p120 = por %p118, %p119
    %p121 = scmp.ne.s32.totalorder %s112, %s113
    %p122 = scmp.eq.s32.totalorder %s18, 0
    %p123 = por %p121, %p122
    %p124 = scmp.ne.s32.totalorder %s112, %s113
    %p125 = scmp.eq.s32.totalorder %s19, 1
    %p126 = por %p124, %p125
    %p128 = scmp.ne.s32.totalorder %s113, %s127
    %p129 = scmp.eq.s32.totalorder %s19, 0
    %p130 = por %p128, %p129
    %s132 = sadd.s32 %s131, 1
    %p135 = scmp.eq.s32.totalorder %s13, 1
    %p136 = scmp.ne.s32.totalorder %s131, %s133
    %p137 = scmp.eq.s32.totalorder %s13, 0
    %p138 = por %p136, %p137
    %p139 = scmp.ne.s32.totalorder %s131, %s133
    %p140 = scmp.eq.s32.totalorder %s18, 1
    %p141 = por %p139, %p140
    %p142 = scmp.ne.s32.totalorder %s133, %s134
    %p143 = scmp.eq.s32.totalorder %s18, 0
    %p144 = por %p142, %p143
    %p145 = scmp.ne.s32.totalorder %s133, %s134
    %p146 = scmp.eq.s32.totalorder %s19, 1
    %p147 = por %p145, %p146
    %p149 = scmp.ne.s32.totalorder %s134, %s148
    %p150 = scmp.eq.s32.totalorder %s19, 0
    %p151 = por %p149, %p150
    %s153 = sadd.s32 %s152, 1
    %p156 = scmp.eq.s32.totalorder %s13, 1
    %p157 = scmp.ne.s32.totalorder %s152, %s154
    %p158 = scmp.eq.s32.totalorder %s13, 0
    %p159 = por %p157, %p158
    %p160 = scmp.ne.s32.totalorder %s152, %s154
    %p161 = scmp.eq.s32.totalorder %s18, 1
    %p162 = por %p160, %p161
    %p163 = scmp.ne.s32.totalorder %s154, %s155
    %p164 = scmp.eq.s32.totalorder %s18, 0
    %p165 = por %p163, %p164
    %p166 = scmp.ne.s32.totalorder %s154, %s155
    %p167 = scmp.eq.s32.totalorder %s19, 1
    %p168 = por %p166, %p167
    %p170 = scmp.ne.s32.totalorder %s155, %s169
    %p171 = scmp.eq.s32.totalorder %s19, 0
    %p172 = por %p170, %p171
    %s173 = ssub.s32 %s13, %s20
    %p174 = scmp.eq.s32.totalorder %s173, 0
    %s176 = sadd.s32 %s175, 1
    %s177 = scalar_select %p174, %s175, %s176
    %p180 = pneg %p174
    %p181 = scmp.eq.s32.totalorder %s13, 1
    %p182 = por %p180, %p181
    %p183 = scmp.ne.s32.totalorder %s175, %s178
    %p184 = scmp.eq.s32.totalorder %s13, 0
    %p185 = por %p183, %p184
    %p186 = scmp.ne.s32.totalorder %s175, %s178
    %p187 = scmp.eq.s32.totalorder %s18, 1
    %p188 = por %p186, %p187
    %p189 = scmp.ne.s32.totalorder %s178, %s179
    %p190 = scmp.eq.s32.totalorder %s18, 0
    %p191 = por %p189, %p190
    %p192 = scmp.ne.s32.totalorder %s178, %s179
    %p193 = scmp.eq.s32.totalorder %s19, 1
    %p194 = por %p192, %p193
    %p196 = scmp.ne.s32.totalorder %s179, %s195
    %p197 = scmp.eq.s32.totalorder %s19, 0
    %p198 = por %p196, %p197
    %p199 = scmp.le.s32.totalorder 1, %s13
    %p200 = scmp.lt.s32.totalorder %s13, 3
    %p201 = pnand %p199, %p200
    %p202 = pneg %p201
    // Predicated region
    $region9: #{visual_block_forward.3} parent=5 // pred_check
      _
    $region10: #{visual_block_forward.3} parent=5 // pred_check_branch
      %204 = sbr.rel (%p201) target = $region12
    $region11: #{visual_block_forward.3} parent=5 // pred_region
      %s205 = ssub.s32 %s13, 1
      // Predicated region
      $region13: #{visual_block_forward.3} parent=11 // pred_check
        %p206 = pneg %p60
      $region14: #{visual_block_forward.3} parent=11 // pred_check_branch
        %208 = sbr.rel (%p206) target = $region16
      $region15: #{visual_block_forward.3} parent=11 // pred_region
        _
      $region16: #{visual_block_forward.3} parent=11 // pred_fallthru
        _
      // Predicated region
      $region17: #{visual_block_forward.3} parent=11 // pred_check
        %p209 = pneg %p81
      $region18: #{visual_block_forward.3} parent=11 // pred_check_branch
        %211 = sbr.rel (%p209) target = $region20
      $region19: #{visual_block_forward.3} parent=11 // pred_region
        _
      $region20: #{visual_block_forward.3} parent=11 // pred_fallthru
        _
      // Predicated region
      $region21: #{visual_block_forward.3} parent=11 // pred_check
        %p212 = pneg %p102
      $region22: #{visual_block_forward.3} parent=11 // pred_check_branch
        %214 = sbr.rel (%p212) target = $region24
      $region23: #{visual_block_forward.3} parent=11 // pred_region
        _
      $region24: #{visual_block_forward.3} parent=11 // pred_fallthru
        _
      // Predicated region
      $region25: #{visual_block_forward.3} parent=11 // pred_check
        %p215 = pneg %p123
      $region26: #{visual_block_forward.3} parent=11 // pred_check_branch
        %217 = sbr.rel (%p215) target = $region28
      $region27: #{visual_block_forward.3} parent=11 // pred_region
        _
      $region28: #{visual_block_forward.3} parent=11 // pred_fallthru
        _
      // Predicated region
      $region29: #{visual_block_forward.3} parent=11 // pred_check
        %p218 = pneg %p144
      $region30: #{visual_block_forward.3} parent=11 // pred_check_branch
        %220 = sbr.rel (%p218) target = $region32
      $region31: #{visual_block_forward.3} parent=11 // pred_region
        _
      $region32: #{visual_block_forward.3} parent=11 // pred_fallthru
        _
      // Predicated region
      $region33: #{visual_block_forward.3} parent=11 // pred_check
        %p221 = pneg %p165
      $region34: #{visual_block_forward.3} parent=11 // pred_check_branch
        %223 = sbr.rel (%p221) target = $region36
      $region35: #{visual_block_forward.3} parent=11 // pred_region
        _
      $region36: #{visual_block_forward.3} parent=11 // pred_fallthru
        _
    $region12: #{visual_block_forward.3} parent=5 // pred_fallthru
      _
    %p224 = scmp.lt.s32.totalorder %s13, 2
    // Predicated region
    $region37: #{visual_block_forward.3} parent=5 // pred_check
      %p225 = pneg %p224
    $region38: #{visual_block_forward.3} parent=5 // pred_check_branch
      %227 = sbr.rel (%p225) target = $region40
    $region39: #{visual_block_forward.3} parent=5 // pred_region
      // Predicated region
      $region41: #{visual_block_forward.3} parent=39 // pred_check
        %p228 = pneg %p33
      $region42: #{visual_block_forward.3} parent=39 // pred_check_branch
        %230 = sbr.rel (%p228) target = $region44
      $region43: #{visual_block_forward.3} parent=39 // pred_region
        %p231 = scmp.lt.s32.totalorder %s13, 1
        %s232 = scalar_select %p231, %s13, 1
        %s233 = smul.addr %s232, 48
        %s234 = smul.addr %s233, 4
        %s235 = scalar_lea.vmem %s0, %s234
      $region44: #{visual_block_forward.3} parent=39 // pred_fallthru
        _
    $region40: #{visual_block_forward.3} parent=5 // pred_fallthru
      _
    %p236 = scmp.le.s32.totalorder 1, %s13
    %p237 = scmp.lt.s32.totalorder %s13, 3
    %p238 = pnand %p236, %p237
    %p239 = pneg %p238
    // Predicated region
    $region45: #{visual_block_forward.3} parent=5 // pred_check
      _
    $region46: #{visual_block_forward.3} parent=5 // pred_check_branch
      %241 = sbr.rel (%p238) target = $region48
    $region47: #{visual_block_forward.3} parent=5 // pred_region
      %s242 = ssub.s32 %s13, 1
      %p243 = scmp.lt.s32.totalorder %s18, 1
      %s244 = scalar_select %p243, %s18, 1
      %s245 = smul.addr %s244, 48
      %s246 = smul.addr %s245, 4
      %s247 = scalar_lea.vmem %s0, %s246
      %p248 = pneg %p39
      %p249 = pneg %p36
      %p250 = pneg %p60
      %p251 = pneg %p57
      %p252 = pneg %p81
      %p253 = pneg %p78
      %p254 = pneg %p102
      %p255 = pneg %p99
      %p256 = pneg %p123
      %p257 = pneg %p120
      %p258 = pneg %p144
      %p259 = pneg %p141
      %p260 = pneg %p165
      %p261 = pneg %p162
      %p262 = pneg %p191
      %p263 = pneg %p188
      %p264 = scmp.lt.s32.totalorder %s18, 1
      %s265 = scalar_select %p264, %s18, 1
      %s266 = smul.addr %s265, 24
      %s267 = smul.addr %s266, 4
      %s268 = scalar_lea.vmem %s7, %s267
      %p269 = scmp.lt.s32.totalorder %s18, 1
      %s270 = scalar_select %p269, %s18, 1
      %s271 = smul.addr %s270, 48
      %s272 = smul.addr %s271, 4
      %s273 = scalar_lea.vmem %s0, %s272
      %p274 = scmp.lt.s32.totalorder %s18, 1
      %s275 = scalar_select %p274, %s18, 1
      %s276 = smul.addr %s275, 24
      %s277 = smul.addr %s276, 4
      %s278 = scalar_lea.vmem %s7, %s277
      %v280 = vld [vmem:[%s273] sm:$0xff]
      %v281 = vld [vmem:[%s273 + $0x8] sm:$0xff]
      %v282 = vld [vmem:[%s273 + $0x10] sm:$0xff]
      %v283 = vld [vmem:[%s273 + $0x18] sm:$0xff]
      %v284 = vld [vmem:[%s273 + $0x20] sm:$0xff]
      %v285 = vld [vmem:[%s273 + $0x28] sm:$0xff]
      %v286 = vld [vmem:[%s273 + $0x30] sm:$0xff]
      %v287 = vld [vmem:[%s273 + $0x38] sm:$0xff]
      %v288 = vld [vmem:[%s273 + $0x40] sm:$0xff]
      %v289 = vld [vmem:[%s273 + $0x48] sm:$0xff]
      %v290 = vld [vmem:[%s273 + $0x50] sm:$0xff]
      %v291 = vld [vmem:[%s273 + $0x58] sm:$0xff]
      %v292 = vld [vmem:[%s273 + $0x60] sm:$0xff]
      %v293 = vld [vmem:[%s273 + $0x68] sm:$0xff]
      %v294 = vld [vmem:[%s273 + $0x70] sm:$0xff]
      %v295 = vld [vmem:[%s273 + $0x78] sm:$0xff]
      %v296 = vld [vmem:[%s273 + $0x80] sm:$0xff]
      %v297 = vld [vmem:[%s273 + $0x88] sm:$0xff]
      %v298 = vld [vmem:[%s273 + $0x90] sm:$0xff]
      %v299 = vld [vmem:[%s273 + $0x98] sm:$0xff]
      %v300 = vld [vmem:[%s273 + $0xa0] sm:$0xff]
      %v301 = vld [vmem:[%s273 + $0xa8] sm:$0xff]
      %v302 = vld [vmem:[%s273 + $0xb0] sm:$0xff]
      %v303 = vld [vmem:[%s273 + $0xb8] sm:$0xff]
      %s304 = scalar_lea.vmem %s1, 4
      %v305 = vld [vmem:[%s304] sm:$0xf]
      %v318 = vunpack.c.l.b16 %v280
      %v319 = vunpack.c.h.b16 %v280
      %v320 = vunpack.c.l.b16 %v281
      %v321 = vunpack.c.h.b16 %v281
      %v322 = vunpack.c.l.b16 %v282
      %v323 = vunpack.c.h.b16 %v282
      %v324 = vunpack.c.l.b16 %v283
      %v325 = vunpack.c.h.b16 %v283
      %v326 = vunpack.c.l.b16 %v284
      %v327 = vunpack.c.h.b16 %v284
      %v328 = vunpack.c.l.b16 %v285
      %v329 = vunpack.c.h.b16 %v285
      %v330 = vunpack.c.l.b16 %v286
      %v331 = vunpack.c.h.b16 %v286
      %v332 = vunpack.c.l.b16 %v287
      %v333 = vunpack.c.h.b16 %v287
      %v334 = vunpack.c.l.b16 %v288
      %v335 = vunpack.c.h.b16 %v288
      %v336 = vunpack.c.l.b16 %v289
      %v337 = vunpack.c.h.b16 %v289
      %v338 = vunpack.c.l.b16 %v290
      %v339 = vunpack.c.h.b16 %v290
      %v340 = vunpack.c.l.b16 %v291
      %v341 = vunpack.c.h.b16 %v291
      %v342 = vpack.c.b16 %v318, %v318
      %v343 = vpack.c.b16 %v319, %v319
      %v344 = vpack.c.b16 %v320, %v320
      %v345 = vpack.c.b16 %v321, %v321
      %v346 = vpack.c.b16 %v322, %v322
      %v347 = vpack.c.b16 %v323, %v323
      %v348 = vpack.c.b16 %v324, %v324
      %v349 = vpack.c.b16 %v325, %v325
      %v350 = vpack.c.b16 %v326, %v326
      %v351 = vpack.c.b16 %v327, %v327
      %v352 = vpack.c.b16 %v328, %v328
      %v353 = vpack.c.b16 %v329, %v329
      %v354 = vpack.c.b16 %v330, %v330
      %v355 = vpack.c.b16 %v331, %v331
      %v356 = vpack.c.b16 %v332, %v332
      %v357 = vpack.c.b16 %v333, %v333
      %v358 = vpack.c.b16 %v334, %v334
      %v359 = vpack.c.b16 %v335, %v335
      %v360 = vpack.c.b16 %v336, %v336
      %v361 = vpack.c.b16 %v337, %v337
      %v362 = vpack.c.b16 %v338, %v338
      %v363 = vpack.c.b16 %v339, %v339
      %v364 = vpack.c.b16 %v340, %v340
      %v365 = vpack.c.b16 %v341, %v341
      %vm366 = vcmask 64512
      %v368 = vsel %vm366, %v305, 0
      %vm370 = vcmask 1043456
      %v372 = vsel %vm370, %v342, 0
      %v375 = vsel %vm370, %v343, 0
      %v378 = vsel %vm370, %v344, 0
      %v381 = vsel %vm370, %v345, 0
      %v384 = vsel %vm370, %v346, 0
      %v387 = vsel %vm370, %v347, 0
      %v390 = vsel %vm370, %v348, 0
      %v393 = vsel %vm370, %v349, 0
      %v396 = vsel %vm370, %v350, 0
      %v399 = vsel %vm370, %v351, 0
      %v402 = vsel %vm370, %v352, 0
      %v405 = vsel %vm370, %v353, 0
      %v408 = vsel %vm370, %v354, 0
      %v411 = vsel %vm370, %v355, 0
      %v414 = vsel %vm370, %v356, 0
      %v417 = vsel %vm370, %v357, 0
      %v420 = vsel %vm370, %v358, 0
      %v423 = vsel %vm370, %v359, 0
      %v426 = vsel %vm370, %v360, 0
      %v429 = vsel %vm370, %v361, 0
      %v432 = vsel %vm370, %v362, 0
      %v435 = vsel %vm370, %v363, 0
      %v438 = vsel %vm370, %v364, 0
      %v441 = vsel %vm370, %v365, 0
      %443 = vmatpush.bf16.msra.mxu0 0
      %444 = vmatpush.bf16.msra.mxu0 0
      %445 = vmatpush.bf16.msra.mxu0 0
      %446 = vmatpush.bf16.msra.mxu0 0
      %447 = vmatpush.bf16.msra.mxu0 0
      %448 = vmatpush.bf16.msra.mxu0 0
      %449 = vmatpush.bf16.msra.mxu0 0
      %450 = vmatpush.bf16.msra.mxu0 %v372
      %451 = vmatmul.bf16.gmra.mxu0 %v368
      %v452 = vpop.f32.mrf.mxu0
      %v453 = vadd.f32 0.0, %v452
      %v454 = vpop.f32.mrf.mxu0
      %455 = vdwg.mxu0
      %456 = vmatpush.bf16.msra.mxu0 0
      %457 = vmatpush.bf16.msra.mxu0 0
      %458 = vmatpush.bf16.msra.mxu0 0
      %459 = vmatpush.bf16.msra.mxu0 0
      %460 = vmatpush.bf16.msra.mxu0 0
      %461 = vmatpush.bf16.msra.mxu0 0
      %462 = vmatpush.bf16.msra.mxu0 0
      %463 = vmatpush.bf16.msra.mxu0 %v375
      %464 = vmatmul.bf16.gmra.mxu0 %v368
      %v465 = vpop.f32.mrf.mxu0
      %v466 = vadd.f32 0.0, %v465
      %v467 = vpop.f32.mrf.mxu0
      %468 = vdwg.mxu0
      %469 = vmatpush.bf16.msra.mxu0 0
      %470 = vmatpush.bf16.msra.mxu0 0
      %471 = vmatpush.bf16.msra.mxu0 0
      %472 = vmatpush.bf16.msra.mxu0 0
      %473 = vmatpush.bf16.msra.mxu0 0
      %474 = vmatpush.bf16.msra.mxu0 0
      %475 = vmatpush.bf16.msra.mxu0 0
      %476 = vmatpush.bf16.msra.mxu0 %v378
      %477 = vmatmul.bf16.gmra.mxu0 %v368
      %v478 = vpop.f32.mrf.mxu0
      %v479 = vadd.f32 0.0, %v478
      %v480 = vpop.f32.mrf.mxu0
      %481 = vdwg.mxu0
      %482 = vmatpush.bf16.msra.mxu0 0
      %483 = vmatpush.bf16.msra.mxu0 0
      %484 = vmatpush.bf16.msra.mxu0 0
      %485 = vmatpush.bf16.msra.mxu0 0
      %486 = vmatpush.bf16.msra.mxu0 0
      %487 = vmatpush.bf16.msra.mxu0 0
      %488 = vmatpush.bf16.msra.mxu0 0
      %489 = vmatpush.bf16.msra.mxu0 %v381
      %490 = vmatmul.bf16.gmra.mxu0 %v368
      %v491 = vpop.f32.mrf.mxu0
      %v492 = vadd.f32 0.0, %v491
      %v493 = vpop.f32.mrf.mxu0
      %494 = vdwg.mxu0
      %495 = vmatpush.bf16.msra.mxu0 0
      %496 = vmatpush.bf16.msra.mxu0 0
      %497 = vmatpush.bf16.msra.mxu0 0
      %498 = vmatpush.bf16.msra.mxu0 0
      %499 = vmatpush.bf16.msra.mxu0 0
      %500 = vmatpush.bf16.msra.mxu0 0
      %501 = vmatpush.bf16.msra.mxu0 0
      %502 = vmatpush.bf16.msra.mxu0 %v384
      %503 = vmatmul.bf16.gmra.mxu0 %v368
      %v504 = vpop.f32.mrf.mxu0
      %v505 = vadd.f32 0.0, %v504
      %v506 = vpop.f32.mrf.mxu0
      %507 = vdwg.mxu0
      %508 = vmatpush.bf16.msra.mxu0 0
      %509 = vmatpush.bf16.msra.mxu0 0
      %510 = vmatpush.bf16.msra.mxu0 0
      %511 = vmatpush.bf16.msra.mxu0 0
      %512 = vmatpush.bf16.msra.mxu0 0
      %513 = vmatpush.bf16.msra.mxu0 0
      %514 = vmatpush.bf16.msra.mxu0 0
      %515 = vmatpush.bf16.msra.mxu0 %v387
      %516 = vmatmul.bf16.gmra.mxu0 %v368
      %v517 = vpop.f32.mrf.mxu0
      %v518 = vadd.f32 0.0, %v517
      %v519 = vpop.f32.mrf.mxu0
      %520 = vdwg.mxu0
      %521 = vmatpush.bf16.msra.mxu0 0
      %522 = vmatpush.bf16.msra.mxu0 0
      %523 = vmatpush.bf16.msra.mxu0 0
      %524 = vmatpush.bf16.msra.mxu0 0
      %525 = vmatpush.bf16.msra.mxu0 0
      %526 = vmatpush.bf16.msra.mxu0 0
      %527 = vmatpush.bf16.msra.mxu0 0
      %528 = vmatpush.bf16.msra.mxu0 %v390
      %529 = vmatmul.bf16.gmra.mxu0 %v368
      %v530 = vpop.f32.mrf.mxu0
      %v531 = vadd.f32 0.0, %v530
      %v532 = vpop.f32.mrf.mxu0
      %533 = vdwg.mxu0
      %534 = vmatpush.bf16.msra.mxu0 0
      %535 = vmatpush.bf16.msra.mxu0 0
      %536 = vmatpush.bf16.msra.mxu0 0
      %537 = vmatpush.bf16.msra.mxu0 0
      %538 = vmatpush.bf16.msra.mxu0 0
      %539 = vmatpush.bf16.msra.mxu0 0
      %540 = vmatpush.bf16.msra.mxu0 0
      %541 = vmatpush.bf16.msra.mxu0 %v393
      %542 = vmatmul.bf16.gmra.mxu0 %v368
      %v543 = vpop.f32.mrf.mxu0
      %v544 = vadd.f32 0.0, %v543
      %v545 = vpop.f32.mrf.mxu0
      %546 = vdwg.mxu0
      %547 = vmatpush.bf16.msra.mxu0 0
      %548 = vmatpush.bf16.msra.mxu0 0
      %549 = vmatpush.bf16.msra.mxu0 0
      %550 = vmatpush.bf16.msra.mxu0 0
      %551 = vmatpush.bf16.msra.mxu0 0
      %552 = vmatpush.bf16.msra.mxu0 0
      %553 = vmatpush.bf16.msra.mxu0 0
      %554 = vmatpush.bf16.msra.mxu0 %v396
      %555 = vmatmul.bf16.gmra.mxu0 %v368
      %v556 = vpop.f32.mrf.mxu0
      %v557 = vadd.f32 0.0, %v556
      %v558 = vpop.f32.mrf.mxu0
      %559 = vdwg.mxu0
      %560 = vmatpush.bf16.msra.mxu0 0
      %561 = vmatpush.bf16.msra.mxu0 0
      %562 = vmatpush.bf16.msra.mxu0 0
      %563 = vmatpush.bf16.msra.mxu0 0
      %564 = vmatpush.bf16.msra.mxu0 0
      %565 = vmatpush.bf16.msra.mxu0 0
      %566 = vmatpush.bf16.msra.mxu0 0
      %567 = vmatpush.bf16.msra.mxu0 %v399
      %568 = vmatmul.bf16.gmra.mxu0 %v368
      %v569 = vpop.f32.mrf.mxu0
      %v570 = vadd.f32 0.0, %v569
      %v571 = vpop.f32.mrf.mxu0
      %572 = vdwg.mxu0
      %573 = vmatpush.bf16.msra.mxu0 0
      %574 = vmatpush.bf16.msra.mxu0 0
      %575 = vmatpush.bf16.msra.mxu0 0
      %576 = vmatpush.bf16.msra.mxu0 0
      %577 = vmatpush.bf16.msra.mxu0 0
      %578 = vmatpush.bf16.msra.mxu0 0
      %579 = vmatpush.bf16.msra.mxu0 0
      %580 = vmatpush.bf16.msra.mxu0 %v402
      %581 = vmatmul.bf16.gmra.mxu0 %v368
      %v582 = vpop.f32.mrf.mxu0
      %v583 = vadd.f32 0.0, %v582
      %v584 = vpop.f32.mrf.mxu0
      %585 = vdwg.mxu0
      %586 = vmatpush.bf16.msra.mxu0 0
      %587 = vmatpush.bf16.msra.mxu0 0
      %588 = vmatpush.bf16.msra.mxu0 0
      %589 = vmatpush.bf16.msra.mxu0 0
      %590 = vmatpush.bf16.msra.mxu0 0
      %591 = vmatpush.bf16.msra.mxu0 0
      %592 = vmatpush.bf16.msra.mxu0 0
      %593 = vmatpush.bf16.msra.mxu0 %v405
      %594 = vmatmul.bf16.gmra.mxu0 %v368
      %v595 = vpop.f32.mrf.mxu0
      %v596 = vadd.f32 0.0, %v595
      %v597 = vpop.f32.mrf.mxu0
      %598 = vdwg.mxu0
      %599 = vmatpush.bf16.msra.mxu0 0
      %600 = vmatpush.bf16.msra.mxu0 0
      %601 = vmatpush.bf16.msra.mxu0 0
      %602 = vmatpush.bf16.msra.mxu0 0
      %603 = vmatpush.bf16.msra.mxu0 0
      %604 = vmatpush.bf16.msra.mxu0 0
      %605 = vmatpush.bf16.msra.mxu0 0
      %606 = vmatpush.bf16.msra.mxu0 %v408
      %607 = vmatmul.bf16.gmra.mxu0 %v368
      %v608 = vpop.f32.mrf.mxu0
      %v609 = vadd.f32 0.0, %v608
      %v610 = vpop.f32.mrf.mxu0
      %611 = vdwg.mxu0
      %612 = vmatpush.bf16.msra.mxu0 0
      %613 = vmatpush.bf16.msra.mxu0 0
      %614 = vmatpush.bf16.msra.mxu0 0
      %615 = vmatpush.bf16.msra.mxu0 0
      %616 = vmatpush.bf16.msra.mxu0 0
      %617 = vmatpush.bf16.msra.mxu0 0
      %618 = vmatpush.bf16.msra.mxu0 0
      %619 = vmatpush.bf16.msra.mxu0 %v411
      %620 = vmatmul.bf16.gmra.mxu0 %v368
      %v621 = vpop.f32.mrf.mxu0
      %v622 = vadd.f32 0.0, %v621
      %v623 = vpop.f32.mrf.mxu0
      %624 = vdwg.mxu0
      %625 = vmatpush.bf16.msra.mxu0 0
      %626 = vmatpush.bf16.msra.mxu0 0
      %627 = vmatpush.bf16.msra.mxu0 0
      %628 = vmatpush.bf16.msra.mxu0 0
      %629 = vmatpush.bf16.msra.mxu0 0
      %630 = vmatpush.bf16.msra.mxu0 0
      %631 = vmatpush.bf16.msra.mxu0 0
      %632 = vmatpush.bf16.msra.mxu0 %v414
      %633 = vmatmul.bf16.gmra.mxu0 %v368
      %v634 = vpop.f32.mrf.mxu0
      %v635 = vadd.f32 0.0, %v634
      %v636 = vpop.f32.mrf.mxu0
      %637 = vdwg.mxu0
      %638 = vmatpush.bf16.msra.mxu0 0
      %639 = vmatpush.bf16.msra.mxu0 0
      %640 = vmatpush.bf16.msra.mxu0 0
      %641 = vmatpush.bf16.msra.mxu0 0
      %642 = vmatpush.bf16.msra.mxu0 0
      %643 = vmatpush.bf16.msra.mxu0 0
      %644 = vmatpush.bf16.msra.mxu0 0
      %645 = vmatpush.bf16.msra.mxu0 %v417
      %646 = vmatmul.bf16.gmra.mxu0 %v368
      %v647 = vpop.f32.mrf.mxu0
      %v648 = vadd.f32 0.0, %v647
      %v649 = vpop.f32.mrf.mxu0
      %650 = vdwg.mxu0
      %651 = vmatpush.bf16.msra.mxu0 0
      %652 = vmatpush.bf16.msra.mxu0 0
      %653 = vmatpush.bf16.msra.mxu0 0
      %654 = vmatpush.bf16.msra.mxu0 0
      %655 = vmatpush.bf16.msra.mxu0 0
      %656 = vmatpush.bf16.msra.mxu0 0
      %657 = vmatpush.bf16.msra.mxu0 0
      %658 = vmatpush.bf16.msra.mxu0 %v420
      %659 = vmatmul.bf16.gmra.mxu0 %v368
      %v660 = vpop.f32.mrf.mxu0
      %v661 = vadd.f32 0.0, %v660
      %v662 = vpop.f32.mrf.mxu0
      %663 = vdwg.mxu0
      %664 = vmatpush.bf16.msra.mxu0 0
      %665 = vmatpush.bf16.msra.mxu0 0
      %666 = vmatpush.bf16.msra.mxu0 0
      %667 = vmatpush.bf16.msra.mxu0 0
      %668 = vmatpush.bf16.msra.mxu0 0
      %669 = vmatpush.bf16.msra.mxu0 0
      %670 = vmatpush.bf16.msra.mxu0 0
      %671 = vmatpush.bf16.msra.mxu0 %v423
      %672 = vmatmul.bf16.gmra.mxu0 %v368
      %v673 = vpop.f32.mrf.mxu0
      %v674 = vadd.f32 0.0, %v673
      %v675 = vpop.f32.mrf.mxu0
      %676 = vdwg.mxu0
      %677 = vmatpush.bf16.msra.mxu0 0
      %678 = vmatpush.bf16.msra.mxu0 0
      %679 = vmatpush.bf16.msra.mxu0 0
      %680 = vmatpush.bf16.msra.mxu0 0
      %681 = vmatpush.bf16.msra.mxu0 0
      %682 = vmatpush.bf16.msra.mxu0 0
      %683 = vmatpush.bf16.msra.mxu0 0
      %684 = vmatpush.bf16.msra.mxu0 %v426
      %685 = vmatmul.bf16.gmra.mxu0 %v368
      %v686 = vpop.f32.mrf.mxu0
      %v687 = vadd.f32 0.0, %v686
      %v688 = vpop.f32.mrf.mxu0
      %689 = vdwg.mxu0
      %690 = vmatpush.bf16.msra.mxu0 0
      %691 = vmatpush.bf16.msra.mxu0 0
      %692 = vmatpush.bf16.msra.mxu0 0
      %693 = vmatpush.bf16.msra.mxu0 0
      %694 = vmatpush.bf16.msra.mxu0 0
      %695 = vmatpush.bf16.msra.mxu0 0
      %696 = vmatpush.bf16.msra.mxu0 0
      %697 = vmatpush.bf16.msra.mxu0 %v429
      %698 = vmatmul.bf16.gmra.mxu0 %v368
      %v699 = vpop.f32.mrf.mxu0
      %v700 = vadd.f32 0.0, %v699
      %v701 = vpop.f32.mrf.mxu0
      %702 = vdwg.mxu0
      %703 = vmatpush.bf16.msra.mxu0 0
      %704 = vmatpush.bf16.msra.mxu0 0
      %705 = vmatpush.bf16.msra.mxu0 0
      %706 = vmatpush.bf16.msra.mxu0 0
      %707 = vmatpush.bf16.msra.mxu0 0
      %708 = vmatpush.bf16.msra.mxu0 0
      %709 = vmatpush.bf16.msra.mxu0 0
      %710 = vmatpush.bf16.msra.mxu0 %v432
      %711 = vmatmul.bf16.gmra.mxu0 %v368
      %v712 = vpop.f32.mrf.mxu0
      %v713 = vadd.f32 0.0, %v712
      %v714 = vpop.f32.mrf.mxu0
      %715 = vdwg.mxu0
      %716 = vmatpush.bf16.msra.mxu0 0
      %717 = vmatpush.bf16.msra.mxu0 0
      %718 = vmatpush.bf16.msra.mxu0 0
      %719 = vmatpush.bf16.msra.mxu0 0
      %720 = vmatpush.bf16.msra.mxu0 0
      %721 = vmatpush.bf16.msra.mxu0 0
      %722 = vmatpush.bf16.msra.mxu0 0
      %723 = vmatpush.bf16.msra.mxu0 %v435
      %724 = vmatmul.bf16.gmra.mxu0 %v368
      %v725 = vpop.f32.mrf.mxu0
      %v726 = vadd.f32 0.0, %v725
      %v727 = vpop.f32.mrf.mxu0
      %728 = vdwg.mxu0
      %729 = vmatpush.bf16.msra.mxu0 0
      %730 = vmatpush.bf16.msra.mxu0 0
      %731 = vmatpush.bf16.msra.mxu0 0
      %732 = vmatpush.bf16.msra.mxu0 0
      %733 = vmatpush.bf16.msra.mxu0 0
      %734 = vmatpush.bf16.msra.mxu0 0
      %735 = vmatpush.bf16.msra.mxu0 0
      %736 = vmatpush.bf16.msra.mxu0 %v438
      %737 = vmatmul.bf16.gmra.mxu0 %v368
      %v738 = vpop.f32.mrf.mxu0
      %v739 = vadd.f32 0.0, %v738
      %v740 = vpop.f32.mrf.mxu0
      %741 = vdwg.mxu0
      %742 = vmatpush.bf16.msra.mxu0 0
      %743 = vmatpush.bf16.msra.mxu0 0
      %744 = vmatpush.bf16.msra.mxu0 0
      %745 = vmatpush.bf16.msra.mxu0 0
      %746 = vmatpush.bf16.msra.mxu0 0
      %747 = vmatpush.bf16.msra.mxu0 0
      %748 = vmatpush.bf16.msra.mxu0 0
      %749 = vmatpush.bf16.msra.mxu0 %v441
      %750 = vmatmul.bf16.gmra.mxu0 %v368
      %v751 = vpop.f32.mrf.mxu0
      %v752 = vadd.f32 0.0, %v751
      %v753 = vpop.f32.mrf.mxu0
      %754 = vdwg.mxu0
      %755 = vst [vmem:[#allocation2] sm:$0xff] %v453
      %756 = vst [vmem:[#allocation2 + $0x8] sm:$0xff] %v466
      %757 = vst [vmem:[#allocation2 + $0x10] sm:$0xff] %v479
      %758 = vst [vmem:[#allocation2 + $0x18] sm:$0xff] %v492
      %759 = vst [vmem:[#allocation2 + $0x20] sm:$0xff] %v505
      %760 = vst [vmem:[#allocation2 + $0x28] sm:$0xff] %v518
      %761 = vst [vmem:[#allocation2 + $0x30] sm:$0xff] %v531
      %762 = vst [vmem:[#allocation2 + $0x38] sm:$0xff] %v544
      %763 = vst [vmem:[#allocation2 + $0x40] sm:$0xff] %v557
      %764 = vst [vmem:[#allocation2 + $0x48] sm:$0xff] %v570
      %765 = vst [vmem:[#allocation2 + $0x50] sm:$0xff] %v583
      %766 = vst [vmem:[#allocation2 + $0x58] sm:$0xff] %v596
      %767 = vst [vmem:[#allocation2 + $0x60] sm:$0xff] %v609
      %768 = vst [vmem:[#allocation2 + $0x68] sm:$0xff] %v622
      %769 = vst [vmem:[#allocation2 + $0x70] sm:$0xff] %v635
      %770 = vst [vmem:[#allocation2 + $0x78] sm:$0xff] %v648
      %771 = vst [vmem:[#allocation2 + $0x80] sm:$0xff] %v661
      %772 = vst [vmem:[#allocation2 + $0x88] sm:$0xff] %v674
      %773 = vst [vmem:[#allocation2 + $0x90] sm:$0xff] %v687
      %774 = vst [vmem:[#allocation2 + $0x98] sm:$0xff] %v700
      %775 = vst [vmem:[#allocation2 + $0xa0] sm:$0xff] %v713
      %776 = vst [vmem:[#allocation2 + $0xa8] sm:$0xff] %v726
      %777 = vst [vmem:[#allocation2 + $0xb0] sm:$0xff] %v739
      %778 = vst [vmem:[#allocation2 + $0xb8] sm:$0xff] %v752
      %v779 = vld [vmem:[#allocation2 + $0x18] sm:$0xff]
      %v780 = vld [vmem:[#allocation2 + $0x20] sm:$0xff]
      %v781 = vld [vmem:[#allocation2 + $0x28] sm:$0xff]
      %v782 = vld [vmem:[#allocation2 + $0x30] sm:$0xff]
      %v783 = vld [vmem:[#allocation2 + $0x38] sm:$0xff]
      %v784 = vld [vmem:[#allocation2 + $0x40] sm:$0xff]
      %v785 = vld [vmem:[#allocation2 + $0x48] sm:$0xff]
      %v786 = vld [vmem:[#allocation2 + $0x50] sm:$0xff]
      %v787 = vld [vmem:[#allocation2 + $0x58] sm:$0xff]
      %v788 = vld [vmem:[#allocation2 + $0x60] sm:$0xff]
      %v789 = vld [vmem:[#allocation2 + $0x68] sm:$0xff]
      %v790 = vld [vmem:[#allocation2 + $0x70] sm:$0xff]
      %v791 = vld [vmem:[#allocation2 + $0x78] sm:$0xff]
      %v792 = vld [vmem:[#allocation2 + $0x80] sm:$0xff]
      %v793 = vld [vmem:[#allocation2 + $0x88] sm:$0xff]
      %v794 = vld [vmem:[#allocation2 + $0x90] sm:$0xff]
      %v795 = vld [vmem:[#allocation2 + $0x98] sm:$0xff]
      %v796 = vld [vmem:[#allocation2 + $0xa0] sm:$0xff]
      %v797 = vld [vmem:[#allocation2 + $0xa8] sm:$0xff]
      %v798 = vld [vmem:[#allocation2 + $0xb0] sm:$0xff]
      %v799 = vld [vmem:[#allocation2 + $0xb8] sm:$0xff]
      %v800 = vld [vmem:[%s1] sm:$0xf]
      %v802 = vsel %vm366, %v800, 0
      %804 = vmatpush.bf16.msra.mxu0 0
      %805 = vmatpush.bf16.msra.mxu0 0
      %806 = vmatpush.bf16.msra.mxu0 0
      %807 = vmatpush.bf16.msra.mxu0 0
      %808 = vmatpush.bf16.msra.mxu0 0
      %809 = vmatpush.bf16.msra.mxu0 0
      %810 = vmatpush.bf16.msra.mxu0 0
      %811 = vmatpush.bf16.msra.mxu0 %v372
      %812 = vmatmul.bf16.gmra.mxu0 %v802
      %v813 = vpop.f32.mrf.mxu0
      %v814 = vadd.f32 0.0, %v813
      %v815 = vpop.f32.mrf.mxu0
      %816 = vdwg.mxu0
      %817 = vmatpush.bf16.msra.mxu0 0
      %818 = vmatpush.bf16.msra.mxu0 0
      %819 = vmatpush.bf16.msra.mxu0 0
      %820 = vmatpush.bf16.msra.mxu0 0
      %821 = vmatpush.bf16.msra.mxu0 0
      %822 = vmatpush.bf16.msra.mxu0 0
      %823 = vmatpush.bf16.msra.mxu0 0
      %824 = vmatpush.bf16.msra.mxu0 %v375
      %825 = vmatmul.bf16.gmra.mxu0 %v802
      %v826 = vpop.f32.mrf.mxu0
      %v827 = vadd.f32 0.0, %v826
      %v828 = vpop.f32.mrf.mxu0
      %829 = vdwg.mxu0
      %830 = vmatpush.bf16.msra.mxu0 0
      %831 = vmatpush.bf16.msra.mxu0 0
      %832 = vmatpush.bf16.msra.mxu0 0
      %833 = vmatpush.bf16.msra.mxu0 0
      %834 = vmatpush.bf16.msra.mxu0 0
      %835 = vmatpush.bf16.msra.mxu0 0
      %836 = vmatpush.bf16.msra.mxu0 0
      %837 = vmatpush.bf16.msra.mxu0 %v378
      %838 = vmatmul.bf16.gmra.mxu0 %v802
      %v839 = vpop.f32.mrf.mxu0
      %v840 = vadd.f32 0.0, %v839
      %v841 = vpop.f32.mrf.mxu0
      %842 = vdwg.mxu0
      %843 = vmatpush.bf16.msra.mxu0 0
      %844 = vmatpush.bf16.msra.mxu0 0
      %845 = vmatpush.bf16.msra.mxu0 0
      %846 = vmatpush.bf16.msra.mxu0 0
      %847 = vmatpush.bf16.msra.mxu0 0
      %848 = vmatpush.bf16.msra.mxu0 0
      %849 = vmatpush.bf16.msra.mxu0 0
      %850 = vmatpush.bf16.msra.mxu0 %v381
      %851 = vmatmul.bf16.gmra.mxu0 %v802
      %v852 = vpop.f32.mrf.mxu0
      %v853 = vadd.f32 0.0, %v852
      %v854 = vpop.f32.mrf.mxu0
      %855 = vdwg.mxu0
      %856 = vmatpush.bf16.msra.mxu0 0
      %857 = vmatpush.bf16.msra.mxu0 0
      %858 = vmatpush.bf16.msra.mxu0 0
      %859 = vmatpush.bf16.msra.mxu0 0
      %860 = vmatpush.bf16.msra.mxu0 0
      %861 = vmatpush.bf16.msra.mxu0 0
      %862 = vmatpush.bf16.msra.mxu0 0
      %863 = vmatpush.bf16.msra.mxu0 %v384
      %864 = vmatmul.bf16.gmra.mxu0 %v802
      %v865 = vpop.f32.mrf.mxu0
      %v866 = vadd.f32 0.0, %v865
      %v867 = vpop.f32.mrf.mxu0
      %868 = vdwg.mxu0
      %869 = vmatpush.bf16.msra.mxu0 0
      %870 = vmatpush.bf16.msra.mxu0 0
      %871 = vmatpush.bf16.msra.mxu0 0
      %872 = vmatpush.bf16.msra.mxu0 0
      %873 = vmatpush.bf16.msra.mxu0 0
      %874 = vmatpush.bf16.msra.mxu0 0
      %875 = vmatpush.bf16.msra.mxu0 0
      %876 = vmatpush.bf16.msra.mxu0 %v387
      %877 = vmatmul.bf16.gmra.mxu0 %v802
      %v878 = vpop.f32.mrf.mxu0
      %v879 = vadd.f32 0.0, %v878
      %v880 = vpop.f32.mrf.mxu0
      %881 = vdwg.mxu0
      %882 = vmatpush.bf16.msra.mxu0 0
      %883 = vmatpush.bf16.msra.mxu0 0
      %884 = vmatpush.bf16.msra.mxu0 0
      %885 = vmatpush.bf16.msra.mxu0 0
      %886 = vmatpush.bf16.msra.mxu0 0
      %887 = vmatpush.bf16.msra.mxu0 0
      %888 = vmatpush.bf16.msra.mxu0 0
      %889 = vmatpush.bf16.msra.mxu0 %v390
      %890 = vmatmul.bf16.gmra.mxu0 %v802
      %v891 = vpop.f32.mrf.mxu0
      %v892 = vadd.f32 0.0, %v891
      %v893 = vpop.f32.mrf.mxu0
      %894 = vdwg.mxu0
      %895 = vmatpush.bf16.msra.mxu0 0
      %896 = vmatpush.bf16.msra.mxu0 0
      %897 = vmatpush.bf16.msra.mxu0 0
      %898 = vmatpush.bf16.msra.mxu0 0
      %899 = vmatpush.bf16.msra.mxu0 0
      %900 = vmatpush.bf16.msra.mxu0 0
      %901 = vmatpush.bf16.msra.mxu0 0
      %902 = vmatpush.bf16.msra.mxu0 %v393
      %903 = vmatmul.bf16.gmra.mxu0 %v802
      %v904 = vpop.f32.mrf.mxu0
      %v905 = vadd.f32 0.0, %v904
      %v906 = vpop.f32.mrf.mxu0
      %907 = vdwg.mxu0
      %908 = vmatpush.bf16.msra.mxu0 0
      %909 = vmatpush.bf16.msra.mxu0 0
      %910 = vmatpush.bf16.msra.mxu0 0
      %911 = vmatpush.bf16.msra.mxu0 0
      %912 = vmatpush.bf16.msra.mxu0 0
      %913 = vmatpush.bf16.msra.mxu0 0
      %914 = vmatpush.bf16.msra.mxu0 0
      %915 = vmatpush.bf16.msra.mxu0 %v396
      %916 = vmatmul.bf16.gmra.mxu0 %v802
      %v917 = vpop.f32.mrf.mxu0
      %v918 = vadd.f32 0.0, %v917
      %v919 = vpop.f32.mrf.mxu0
      %920 = vdwg.mxu0
      %921 = vmatpush.bf16.msra.mxu0 0
      %922 = vmatpush.bf16.msra.mxu0 0
      %923 = vmatpush.bf16.msra.mxu0 0
      %924 = vmatpush.bf16.msra.mxu0 0
      %925 = vmatpush.bf16.msra.mxu0 0
      %926 = vmatpush.bf16.msra.mxu0 0
      %927 = vmatpush.bf16.msra.mxu0 0
      %928 = vmatpush.bf16.msra.mxu0 %v399
      %929 = vmatmul.bf16.gmra.mxu0 %v802
      %v930 = vpop.f32.mrf.mxu0
      %v931 = vadd.f32 0.0, %v930
      %v932 = vpop.f32.mrf.mxu0
      %933 = vdwg.mxu0
      %934 = vmatpush.bf16.msra.mxu0 0
      %935 = vmatpush.bf16.msra.mxu0 0
      %936 = vmatpush.bf16.msra.mxu0 0
      %937 = vmatpush.bf16.msra.mxu0 0
      %938 = vmatpush.bf16.msra.mxu0 0
      %939 = vmatpush.bf16.msra.mxu0 0
      %940 = vmatpush.bf16.msra.mxu0 0
      %941 = vmatpush.bf16.msra.mxu0 %v402
      %942 = vmatmul.bf16.gmra.mxu0 %v802
      %v943 = vpop.f32.mrf.mxu0
      %v944 = vadd.f32 0.0, %v943
      %v945 = vpop.f32.mrf.mxu0
      %946 = vdwg.mxu0
      %947 = vmatpush.bf16.msra.mxu0 0
      %948 = vmatpush.bf16.msra.mxu0 0
      %949 = vmatpush.bf16.msra.mxu0 0
      %950 = vmatpush.bf16.msra.mxu0 0
      %951 = vmatpush.bf16.msra.mxu0 0
      %952 = vmatpush.bf16.msra.mxu0 0
      %953 = vmatpush.bf16.msra.mxu0 0
      %954 = vmatpush.bf16.msra.mxu0 %v405
      %955 = vmatmul.bf16.gmra.mxu0 %v802
      %v956 = vpop.f32.mrf.mxu0
      %v957 = vadd.f32 0.0, %v956
      %v958 = vpop.f32.mrf.mxu0
      %959 = vdwg.mxu0
      %960 = vmatpush.bf16.msra.mxu0 0
      %961 = vmatpush.bf16.msra.mxu0 0
      %962 = vmatpush.bf16.msra.mxu0 0
      %963 = vmatpush.bf16.msra.mxu0 0
      %964 = vmatpush.bf16.msra.mxu0 0
      %965 = vmatpush.bf16.msra.mxu0 0
      %966 = vmatpush.bf16.msra.mxu0 0
      %967 = vmatpush.bf16.msra.mxu0 %v408
      %968 = vmatmul.bf16.gmra.mxu0 %v802
      %v969 = vpop.f32.mrf.mxu0
      %v970 = vadd.f32 0.0, %v969
      %v971 = vpop.f32.mrf.mxu0
      %972 = vdwg.mxu0
      %973 = vmatpush.bf16.msra.mxu0 0
      %974 = vmatpush.bf16.msra.mxu0 0
      %975 = vmatpush.bf16.msra.mxu0 0
      %976 = vmatpush.bf16.msra.mxu0 0
      %977 = vmatpush.bf16.msra.mxu0 0
      %978 = vmatpush.bf16.msra.mxu0 0
      %979 = vmatpush.bf16.msra.mxu0 0
      %980 = vmatpush.bf16.msra.mxu0 %v411
      %981 = vmatmul.bf16.gmra.mxu0 %v802
      %v982 = vpop.f32.mrf.mxu0
      %v983 = vadd.f32 0.0, %v982
      %v984 = vpop.f32.mrf.mxu0
      %985 = vdwg.mxu0
      %986 = vmatpush.bf16.msra.mxu0 0
      %987 = vmatpush.bf16.msra.mxu0 0
      %988 = vmatpush.bf16.msra.mxu0 0
      %989 = vmatpush.bf16.msra.mxu0 0
      %990 = vmatpush.bf16.msra.mxu0 0
      %991 = vmatpush.bf16.msra.mxu0 0
      %992 = vmatpush.bf16.msra.mxu0 0
      %993 = vmatpush.bf16.msra.mxu0 %v414
      %994 = vmatmul.bf16.gmra.mxu0 %v802
      %v995 = vpop.f32.mrf.mxu0
      %v996 = vadd.f32 0.0, %v995
      %v997 = vpop.f32.mrf.mxu0
      %998 = vdwg.mxu0
      %999 = vmatpush.bf16.msra.mxu0 0
      %1000 = vmatpush.bf16.msra.mxu0 0
      %1001 = vmatpush.bf16.msra.mxu0 0
      %1002 = vmatpush.bf16.msra.mxu0 0
      %1003 = vmatpush.bf16.msra.mxu0 0
      %1004 = vmatpush.bf16.msra.mxu0 0
      %1005 = vmatpush.bf16.msra.mxu0 0
      %1006 = vmatpush.bf16.msra.mxu0 %v417
      %1007 = vmatmul.bf16.gmra.mxu0 %v802
      %v1008 = vpop.f32.mrf.mxu0
      %v1009 = vadd.f32 0.0, %v1008
      %v1010 = vpop.f32.mrf.mxu0
      %1011 = vdwg.mxu0
      %1012 = vmatpush.bf16.msra.mxu0 0
      %1013 = vmatpush.bf16.msra.mxu0 0
      %1014 = vmatpush.bf16.msra.mxu0 0
      %1015 = vmatpush.bf16.msra.mxu0 0
      %1016 = vmatpush.bf16.msra.mxu0 0
      %1017 = vmatpush.bf16.msra.mxu0 0
      %1018 = vmatpush.bf16.msra.mxu0 0
      %1019 = vmatpush.bf16.msra.mxu0 %v420
      %1020 = vmatmul.bf16.gmra.mxu0 %v802
      %v1021 = vpop.f32.mrf.mxu0
      %v1022 = vadd.f32 0.0, %v1021
      %v1023 = vpop.f32.mrf.mxu0
      %1024 = vdwg.mxu0
      %1025 = vmatpush.bf16.msra.mxu0 0
      %1026 = vmatpush.bf16.msra.mxu0 0
      %1027 = vmatpush.bf16.msra.mxu0 0
      %1028 = vmatpush.bf16.msra.mxu0 0
      %1029 = vmatpush.bf16.msra.mxu0 0
      %1030 = vmatpush.bf16.msra.mxu0 0
      %1031 = vmatpush.bf16.msra.mxu0 0
      %1032 = vmatpush.bf16.msra.mxu0 %v423
      %1033 = vmatmul.bf16.gmra.mxu0 %v802
      %v1034 = vpop.f32.mrf.mxu0
      %v1035 = vadd.f32 0.0, %v1034
      %v1036 = vpop.f32.mrf.mxu0
      %1037 = vdwg.mxu0
      %1038 = vmatpush.bf16.msra.mxu0 0
      %1039 = vmatpush.bf16.msra.mxu0 0
      %1040 = vmatpush.bf16.msra.mxu0 0
      %1041 = vmatpush.bf16.msra.mxu0 0
      %1042 = vmatpush.bf16.msra.mxu0 0
      %1043 = vmatpush.bf16.msra.mxu0 0
      %1044 = vmatpush.bf16.msra.mxu0 0
      %1045 = vmatpush.bf16.msra.mxu0 %v426
      %1046 = vmatmul.bf16.gmra.mxu0 %v802
      %v1047 = vpop.f32.mrf.mxu0
      %v1048 = vadd.f32 0.0, %v1047
      %v1049 = vpop.f32.mrf.mxu0
      %1050 = vdwg.mxu0
      %1051 = vmatpush.bf16.msra.mxu0 0
      %1052 = vmatpush.bf16.msra.mxu0 0
      %1053 = vmatpush.bf16.msra.mxu0 0
      %1054 = vmatpush.bf16.msra.mxu0 0
      %1055 = vmatpush.bf16.msra.mxu0 0
      %1056 = vmatpush.bf16.msra.mxu0 0
      %1057 = vmatpush.bf16.msra.mxu0 0
      %1058 = vmatpush.bf16.msra.mxu0 %v429
      %1059 = vmatmul.bf16.gmra.mxu0 %v802
      %v1060 = vpop.f32.mrf.mxu0
      %v1061 = vadd.f32 0.0, %v1060
      %v1062 = vpop.f32.mrf.mxu0
      %1063 = vdwg.mxu0
      %1064 = vmatpush.bf16.msra.mxu0 0
      %1065 = vmatpush.bf16.msra.mxu0 0
      %1066 = vmatpush.bf16.msra.mxu0 0
      %1067 = vmatpush.bf16.msra.mxu0 0
      %1068 = vmatpush.bf16.msra.mxu0 0
      %1069 = vmatpush.bf16.msra.mxu0 0
      %1070 = vmatpush.bf16.msra.mxu0 0
      %1071 = vmatpush.bf16.msra.mxu0 %v432
      %1072 = vmatmul.bf16.gmra.mxu0 %v802
      %v1073 = vpop.f32.mrf.mxu0
      %v1074 = vadd.f32 0.0, %v1073
      %v1075 = vpop.f32.mrf.mxu0
      %1076 = vdwg.mxu0
      %v1077 = vadd.f32 %v779, %v814
      %v1078 = vadd.f32 %v780, %v827
      %v1079 = vadd.f32 %v781, %v840
      %v1080 = vadd.f32 %v782, %v853
      %v1081 = vadd.f32 %v783, %v866
      %v1082 = vadd.f32 %v784, %v879
      %v1083 = vadd.f32 %v785, %v892
      %v1084 = vadd.f32 %v786, %v905
      %v1085 = vadd.f32 %v787, %v918
      %v1086 = vadd.f32 %v788, %v931
      %v1087 = vadd.f32 %v789, %v944
      %v1088 = vadd.f32 %v790, %v957
      %v1089 = vadd.f32 %v791, %v970
      %v1090 = vadd.f32 %v792, %v983
      %v1091 = vadd.f32 %v793, %v996
      %v1092 = vadd.f32 %v794, %v1009
      %v1093 = vadd.f32 %v795, %v1022
      %v1094 = vadd.f32 %v796, %v1035
      %v1095 = vadd.f32 %v797, %v1048
      %v1096 = vadd.f32 %v798, %v1061
      %v1097 = vadd.f32 %v799, %v1074
      %1098 = vst [vmem:[#allocation2 + $0x18] sm:$0xff] %v1077
      %1099 = vst [vmem:[#allocation2 + $0x20] sm:$0xff] %v1078
      %1100 = vst [vmem:[#allocation2 + $0x28] sm:$0xff] %v1079
      %1101 = vst [vmem:[#allocation2 + $0x30] sm:$0xff] %v1080
      %1102 = vst [vmem:[#allocation2 + $0x38] sm:$0xff] %v1081
      %1103 = vst [vmem:[#allocation2 + $0x40] sm:$0xff] %v1082
      %1104 = vst [vmem:[#allocation2 + $0x48] sm:$0xff] %v1083
      %1105 = vst [vmem:[#allocation2 + $0x50] sm:$0xff] %v1084
      %1106 = vst [vmem:[#allocation2 + $0x58] sm:$0xff] %v1085
      %1107 = vst [vmem:[#allocation2 + $0x60] sm:$0xff] %v1086
      %1108 = vst [vmem:[#allocation2 + $0x68] sm:$0xff] %v1087
      %1109 = vst [vmem:[#allocation2 + $0x70] sm:$0xff] %v1088
      %1110 = vst [vmem:[#allocation2 + $0x78] sm:$0xff] %v1089
      %1111 = vst [vmem:[#allocation2 + $0x80] sm:$0xff] %v1090
      %1112 = vst [vmem:[#allocation2 + $0x88] sm:$0xff] %v1091
      %1113 = vst [vmem:[#allocation2 + $0x90] sm:$0xff] %v1092
      %1114 = vst [vmem:[#allocation2 + $0x98] sm:$0xff] %v1093
      %1115 = vst [vmem:[#allocation2 + $0xa0] sm:$0xff] %v1094
      %1116 = vst [vmem:[#allocation2 + $0xa8] sm:$0xff] %v1095
      %1117 = vst [vmem:[#allocation2 + $0xb0] sm:$0xff] %v1096
      %1118 = vst [vmem:[#allocation2 + $0xb8] sm:$0xff] %v1097
      %v1119 = vld [vmem:[#allocation2] sm:$0xff]
      %v1120 = vld [vmem:[#allocation2 + $0x8] sm:$0xff]
      %v1121 = vld [vmem:[#allocation2 + $0x10] sm:$0xff]
      %v1122 = vld [vmem:[#allocation2 + $0x18] sm:$0xff]
      %v1123 = vld [vmem:[#allocation2 + $0x20] sm:$0xff]
      %v1124 = vld [vmem:[#allocation2 + $0x28] sm:$0xff]
      %v1125 = vld [vmem:[#allocation2 + $0x30] sm:$0xff]
      %v1126 = vld [vmem:[#allocation2 + $0x38] sm:$0xff]
      %v1127 = vld [vmem:[#allocation2 + $0x40] sm:$0xff]
      %v1128 = vld [vmem:[#allocation2 + $0x48] sm:$0xff]
      %v1129 = vld [vmem:[#allocation2 + $0x50] sm:$0xff]
      %v1130 = vld [vmem:[#allocation2 + $0x58] sm:$0xff]
      %v1131 = vld [vmem:[#allocation2 + $0x60] sm:$0xff]
      %v1132 = vld [vmem:[#allocation2 + $0x68] sm:$0xff]
      %v1133 = vld [vmem:[#allocation2 + $0x70] sm:$0xff]
      %v1134 = vld [vmem:[#allocation2 + $0x78] sm:$0xff]
      %v1135 = vld [vmem:[#allocation2 + $0x80] sm:$0xff]
      %v1136 = vld [vmem:[#allocation2 + $0x88] sm:$0xff]
      %v1137 = vld [vmem:[#allocation2 + $0x90] sm:$0xff]
      %v1138 = vld [vmem:[#allocation2 + $0x98] sm:$0xff]
      %v1139 = vld [vmem:[#allocation2 + $0xa0] sm:$0xff]
      %s1140 = scalar_lea.vmem %s1, 8
      %v1141 = vld [vmem:[%s1140] sm:$0xf]
      %v1143 = vsel %vm366, %v1141, 0
      %1145 = vmatpush.bf16.msra.mxu0 0
      %1146 = vmatpush.bf16.msra.mxu0 0
      %1147 = vmatpush.bf16.msra.mxu0 0
      %1148 = vmatpush.bf16.msra.mxu0 0
      %1149 = vmatpush.bf16.msra.mxu0 0
      %1150 = vmatpush.bf16.msra.mxu0 0
      %1151 = vmatpush.bf16.msra.mxu0 0
      %1152 = vmatpush.bf16.msra.mxu0 %v381
      %1153 = vmatmul.bf16.gmra.mxu0 %v1143
      %v1154 = vpop.f32.mrf.mxu0
      %v1155 = vadd.f32 0.0, %v1154
      %v1156 = vpop.f32.mrf.mxu0
      %1157 = vdwg.mxu0
      %1158 = vmatpush.bf16.msra.mxu0 0
      %1159 = vmatpush.bf16.msra.mxu0 0
      %1160 = vmatpush.bf16.msra.mxu0 0
      %1161 = vmatpush.bf16.msra.mxu0 0
      %1162 = vmatpush.bf16.msra.mxu0 0
      %1163 = vmatpush.bf16.msra.mxu0 0
      %1164 = vmatpush.bf16.msra.mxu0 0
      %1165 = vmatpush.bf16.msra.mxu0 %v384
      %1166 = vmatmul.bf16.gmra.mxu0 %v1143
      %v1167 = vpop.f32.mrf.mxu0
      %v1168 = vadd.f32 0.0, %v1167
      %v1169 = vpop.f32.mrf.mxu0
      %1170 = vdwg.mxu0
      %1171 = vmatpush.bf16.msra.mxu0 0
      %1172 = vmatpush.bf16.msra.mxu0 0
      %1173 = vmatpush.bf16.msra.mxu0 0
      %1174 = vmatpush.bf16.msra.mxu0 0
      %1175 = vmatpush.bf16.msra.mxu0 0
      %1176 = vmatpush.bf16.msra.mxu0 0
      %1177 = vmatpush.bf16.msra.mxu0 0
      %1178 = vmatpush.bf16.msra.mxu0 %v387
      %1179 = vmatmul.bf16.gmra.mxu0 %v1143
      %v1180 = vpop.f32.mrf.mxu0
      %v1181 = vadd.f32 0.0, %v1180
      %v1182 = vpop.f32.mrf.mxu0
      %1183 = vdwg.mxu0
      %1184 = vmatpush.bf16.msra.mxu0 0
      %1185 = vmatpush.bf16.msra.mxu0 0
      %1186 = vmatpush.bf16.msra.mxu0 0
      %1187 = vmatpush.bf16.msra.mxu0 0
      %1188 = vmatpush.bf16.msra.mxu0 0
      %1189 = vmatpush.bf16.msra.mxu0 0
      %1190 = vmatpush.bf16.msra.mxu0 0
      %1191 = vmatpush.bf16.msra.mxu0 %v390
      %1192 = vmatmul.bf16.gmra.mxu0 %v1143
      %v1193 = vpop.f32.mrf.mxu0
      %v1194 = vadd.f32 0.0, %v1193
      %v1195 = vpop.f32.mrf.mxu0
      %1196 = vdwg.mxu0
      %1197 = vmatpush.bf16.msra.mxu0 0
      %1198 = vmatpush.bf16.msra.mxu0 0
      %1199 = vmatpush.bf16.msra.mxu0 0
      %1200 = vmatpush.bf16.msra.mxu0 0
      %1201 = vmatpush.bf16.msra.mxu0 0
      %1202 = vmatpush.bf16.msra.mxu0 0
      %1203 = vmatpush.bf16.msra.mxu0 0
      %1204 = vmatpush.bf16.msra.mxu0 %v393
      %1205 = vmatmul.bf16.gmra.mxu0 %v1143
      %v1206 = vpop.f32.mrf.mxu0
      %v1207 = vadd.f32 0.0, %v1206
      %v1208 = vpop.f32.mrf.mxu0
      %1209 = vdwg.mxu0
      %1210 = vmatpush.bf16.msra.mxu0 0
      %1211 = vmatpush.bf16.msra.mxu0 0
      %1212 = vmatpush.bf16.msra.mxu0 0
      %1213 = vmatpush.bf16.msra.mxu0 0
      %1214 = vmatpush.bf16.msra.mxu0 0
      %1215 = vmatpush.bf16.msra.mxu0 0
      %1216 = vmatpush.bf16.msra.mxu0 0
      %1217 = vmatpush.bf16.msra.mxu0 %v396
      %1218 = vmatmul.bf16.gmra.mxu0 %v1143
      %v1219 = vpop.f32.mrf.mxu0
      %v1220 = vadd.f32 0.0, %v1219
      %v1221 = vpop.f32.mrf.mxu0
      %1222 = vdwg.mxu0
      %1223 = vmatpush.bf16.msra.mxu0 0
      %1224 = vmatpush.bf16.msra.mxu0 0
      %1225 = vmatpush.bf16.msra.mxu0 0
      %1226 = vmatpush.bf16.msra.mxu0 0
      %1227 = vmatpush.bf16.msra.mxu0 0
      %1228 = vmatpush.bf16.msra.mxu0 0
      %1229 = vmatpush.bf16.msra.mxu0 0
      %1230 = vmatpush.bf16.msra.mxu0 %v399
      %1231 = vmatmul.bf16.gmra.mxu0 %v1143
      %v1232 = vpop.f32.mrf.mxu0
      %v1233 = vadd.f32 0.0, %v1232
      %v1234 = vpop.f32.mrf.mxu0
      %1235 = vdwg.mxu0
      %1236 = vmatpush.bf16.msra.mxu0 0
      %1237 = vmatpush.bf16.msra.mxu0 0
      %1238 = vmatpush.bf16.msra.mxu0 0
      %1239 = vmatpush.bf16.msra.mxu0 0
      %1240 = vmatpush.bf16.msra.mxu0 0
      %1241 = vmatpush.bf16.msra.mxu0 0
      %1242 = vmatpush.bf16.msra.mxu0 0
      %1243 = vmatpush.bf16.msra.mxu0 %v402
      %1244 = vmatmul.bf16.gmra.mxu0 %v1143
      %v1245 = vpop.f32.mrf.mxu0
      %v1246 = vadd.f32 0.0, %v1245
      %v1247 = vpop.f32.mrf.mxu0
      %1248 = vdwg.mxu0
      %1249 = vmatpush.bf16.msra.mxu0 0
      %1250 = vmatpush.bf16.msra.mxu0 0
      %1251 = vmatpush.bf16.msra.mxu0 0
      %1252 = vmatpush.bf16.msra.mxu0 0
      %1253 = vmatpush.bf16.msra.mxu0 0
      %1254 = vmatpush.bf16.msra.mxu0 0
      %1255 = vmatpush.bf16.msra.mxu0 0
      %1256 = vmatpush.bf16.msra.mxu0 %v405
      %1257 = vmatmul.bf16.gmra.mxu0 %v1143
      %v1258 = vpop.f32.mrf.mxu0
      %v1259 = vadd.f32 0.0, %v1258
      %v1260 = vpop.f32.mrf.mxu0
      %1261 = vdwg.mxu0
      %1262 = vmatpush.bf16.msra.mxu0 0
      %1263 = vmatpush.bf16.msra.mxu0 0
      %1264 = vmatpush.bf16.msra.mxu0 0
      %1265 = vmatpush.bf16.msra.mxu0 0
      %1266 = vmatpush.bf16.msra.mxu0 0
      %1267 = vmatpush.bf16.msra.mxu0 0
      %1268 = vmatpush.bf16.msra.mxu0 0
      %1269 = vmatpush.bf16.msra.mxu0 %v408
      %1270 = vmatmul.bf16.gmra.mxu0 %v1143
      %v1271 = vpop.f32.mrf.mxu0
      %v1272 = vadd.f32 0.0, %v1271
      %v1273 = vpop.f32.mrf.mxu0
      %1274 = vdwg.mxu0
      %1275 = vmatpush.bf16.msra.mxu0 0
      %1276 = vmatpush.bf16.msra.mxu0 0
      %1277 = vmatpush.bf16.msra.mxu0 0
      %1278 = vmatpush.bf16.msra.mxu0 0
      %1279 = vmatpush.bf16.msra.mxu0 0
      %1280 = vmatpush.bf16.msra.mxu0 0
      %1281 = vmatpush.bf16.msra.mxu0 0
      %1282 = vmatpush.bf16.msra.mxu0 %v411
      %1283 = vmatmul.bf16.gmra.mxu0 %v1143
      %v1284 = vpop.f32.mrf.mxu0
      %v1285 = vadd.f32 0.0, %v1284
      %v1286 = vpop.f32.mrf.mxu0
      %1287 = vdwg.mxu0
      %1288 = vmatpush.bf16.msra.mxu0 0
      %1289 = vmatpush.bf16.msra.mxu0 0
      %1290 = vmatpush.bf16.msra.mxu0 0
      %1291 = vmatpush.bf16.msra.mxu0 0
      %1292 = vmatpush.bf16.msra.mxu0 0
      %1293 = vmatpush.bf16.msra.mxu0 0
      %1294 = vmatpush.bf16.msra.mxu0 0
      %1295 = vmatpush.bf16.msra.mxu0 %v414
      %1296 = vmatmul.bf16.gmra.mxu0 %v1143
      %v1297 = vpop.f32.mrf.mxu0
      %v1298 = vadd.f32 0.0, %v1297
      %v1299 = vpop.f32.mrf.mxu0
      %1300 = vdwg.mxu0
      %1301 = vmatpush.bf16.msra.mxu0 0
      %1302 = vmatpush.bf16.msra.mxu0 0
      %1303 = vmatpush.bf16.msra.mxu0 0
      %1304 = vmatpush.bf16.msra.mxu0 0
      %1305 = vmatpush.bf16.msra.mxu0 0
      %1306 = vmatpush.bf16.msra.mxu0 0
      %1307 = vmatpush.bf16.msra.mxu0 0
      %1308 = vmatpush.bf16.msra.mxu0 %v417
      %1309 = vmatmul.bf16.gmra.mxu0 %v1143
      %v1310 = vpop.f32.mrf.mxu0
      %v1311 = vadd.f32 0.0, %v1310
      %v1312 = vpop.f32.mrf.mxu0
      %1313 = vdwg.mxu0
      %1314 = vmatpush.bf16.msra.mxu0 0
      %1315 = vmatpush.bf16.msra.mxu0 0
      %1316 = vmatpush.bf16.msra.mxu0 0
      %1317 = vmatpush.bf16.msra.mxu0 0
      %1318 = vmatpush.bf16.msra.mxu0 0
      %1319 = vmatpush.bf16.msra.mxu0 0
      %1320 = vmatpush.bf16.msra.mxu0 0
      %1321 = vmatpush.bf16.msra.mxu0 %v420
      %1322 = vmatmul.bf16.gmra.mxu0 %v1143
      %v1323 = vpop.f32.mrf.mxu0
      %v1324 = vadd.f32 0.0, %v1323
      %v1325 = vpop.f32.mrf.mxu0
      %1326 = vdwg.mxu0
      %1327 = vmatpush.bf16.msra.mxu0 0
      %1328 = vmatpush.bf16.msra.mxu0 0
      %1329 = vmatpush.bf16.msra.mxu0 0
      %1330 = vmatpush.bf16.msra.mxu0 0
      %1331 = vmatpush.bf16.msra.mxu0 0
      %1332 = vmatpush.bf16.msra.mxu0 0
      %1333 = vmatpush.bf16.msra.mxu0 0
      %1334 = vmatpush.bf16.msra.mxu0 %v423
      %1335 = vmatmul.bf16.gmra.mxu0 %v1143
      %v1336 = vpop.f32.mrf.mxu0
      %v1337 = vadd.f32 0.0, %v1336
      %v1338 = vpop.f32.mrf.mxu0
      %1339 = vdwg.mxu0
      %1340 = vmatpush.bf16.msra.mxu0 0
      %1341 = vmatpush.bf16.msra.mxu0 0
      %1342 = vmatpush.bf16.msra.mxu0 0
      %1343 = vmatpush.bf16.msra.mxu0 0
      %1344 = vmatpush.bf16.msra.mxu0 0
      %1345 = vmatpush.bf16.msra.mxu0 0
      %1346 = vmatpush.bf16.msra.mxu0 0
      %1347 = vmatpush.bf16.msra.mxu0 %v426
      %1348 = vmatmul.bf16.gmra.mxu0 %v1143
      %v1349 = vpop.f32.mrf.mxu0
      %v1350 = vadd.f32 0.0, %v1349
      %v1351 = vpop.f32.mrf.mxu0
      %1352 = vdwg.mxu0
      %1353 = vmatpush.bf16.msra.mxu0 0
      %1354 = vmatpush.bf16.msra.mxu0 0
      %1355 = vmatpush.bf16.msra.mxu0 0
      %1356 = vmatpush.bf16.msra.mxu0 0
      %1357 = vmatpush.bf16.msra.mxu0 0
      %1358 = vmatpush.bf16.msra.mxu0 0
      %1359 = vmatpush.bf16.msra.mxu0 0
      %1360 = vmatpush.bf16.msra.mxu0 %v429
      %1361 = vmatmul.bf16.gmra.mxu0 %v1143
      %v1362 = vpop.f32.mrf.mxu0
      %v1363 = vadd.f32 0.0, %v1362
      %v1364 = vpop.f32.mrf.mxu0
      %1365 = vdwg.mxu0
      %1366 = vmatpush.bf16.msra.mxu0 0
      %1367 = vmatpush.bf16.msra.mxu0 0
      %1368 = vmatpush.bf16.msra.mxu0 0
      %1369 = vmatpush.bf16.msra.mxu0 0
      %1370 = vmatpush.bf16.msra.mxu0 0
      %1371 = vmatpush.bf16.msra.mxu0 0
      %1372 = vmatpush.bf16.msra.mxu0 0
      %1373 = vmatpush.bf16.msra.mxu0 %v432
      %1374 = vmatmul.bf16.gmra.mxu0 %v1143
      %v1375 = vpop.f32.mrf.mxu0
      %v1376 = vadd.f32 0.0, %v1375
      %v1377 = vpop.f32.mrf.mxu0
      %1378 = vdwg.mxu0
      %1379 = vmatpush.bf16.msra.mxu0 0
      %1380 = vmatpush.bf16.msra.mxu0 0
      %1381 = vmatpush.bf16.msra.mxu0 0
      %1382 = vmatpush.bf16.msra.mxu0 0
      %1383 = vmatpush.bf16.msra.mxu0 0
      %1384 = vmatpush.bf16.msra.mxu0 0
      %1385 = vmatpush.bf16.msra.mxu0 0
      %1386 = vmatpush.bf16.msra.mxu0 %v435
      %1387 = vmatmul.bf16.gmra.mxu0 %v1143
      %v1388 = vpop.f32.mrf.mxu0
      %v1389 = vadd.f32 0.0, %v1388
      %v1390 = vpop.f32.mrf.mxu0
      %1391 = vdwg.mxu0
      %1392 = vmatpush.bf16.msra.mxu0 0
      %1393 = vmatpush.bf16.msra.mxu0 0
      %1394 = vmatpush.bf16.msra.mxu0 0
      %1395 = vmatpush.bf16.msra.mxu0 0
      %1396 = vmatpush.bf16.msra.mxu0 0
      %1397 = vmatpush.bf16.msra.mxu0 0
      %1398 = vmatpush.bf16.msra.mxu0 0
      %1399 = vmatpush.bf16.msra.mxu0 %v438
      %1400 = vmatmul.bf16.gmra.mxu0 %v1143
      %v1401 = vpop.f32.mrf.mxu0
      %v1402 = vadd.f32 0.0, %v1401
      %v1403 = vpop.f32.mrf.mxu0
      %1404 = vdwg.mxu0
      %1405 = vmatpush.bf16.msra.mxu0 0
      %1406 = vmatpush.bf16.msra.mxu0 0
      %1407 = vmatpush.bf16.msra.mxu0 0
      %1408 = vmatpush.bf16.msra.mxu0 0
      %1409 = vmatpush.bf16.msra.mxu0 0
      %1410 = vmatpush.bf16.msra.mxu0 0
      %1411 = vmatpush.bf16.msra.mxu0 0
      %1412 = vmatpush.bf16.msra.mxu0 %v441
      %1413 = vmatmul.bf16.gmra.mxu0 %v1143
      %v1414 = vpop.f32.mrf.mxu0
      %v1415 = vadd.f32 0.0, %v1414
      %v1416 = vpop.f32.mrf.mxu0
      %1417 = vdwg.mxu0
      %v1418 = vadd.f32 %v1119, %v1155
      %v1419 = vadd.f32 %v1120, %v1168
      %v1420 = vadd.f32 %v1121, %v1181
      %v1421 = vadd.f32 %v1122, %v1194
      %v1422 = vadd.f32 %v1123, %v1207
      %v1423 = vadd.f32 %v1124, %v1220
      %v1424 = vadd.f32 %v1125, %v1233
      %v1425 = vadd.f32 %v1126, %v1246
      %v1426 = vadd.f32 %v1127, %v1259
      %v1427 = vadd.f32 %v1128, %v1272
      %v1428 = vadd.f32 %v1129, %v1285
      %v1429 = vadd.f32 %v1130, %v1298
      %v1430 = vadd.f32 %v1131, %v1311
      %v1431 = vadd.f32 %v1132, %v1324
      %v1432 = vadd.f32 %v1133, %v1337
      %v1433 = vadd.f32 %v1134, %v1350
      %v1434 = vadd.f32 %v1135, %v1363
      %v1435 = vadd.f32 %v1136, %v1376
      %v1436 = vadd.f32 %v1137, %v1389
      %v1437 = vadd.f32 %v1138, %v1402
      %v1438 = vadd.f32 %v1139, %v1415
      %1439 = vst [vmem:[#allocation2] sm:$0xff] %v1418
      %1440 = vst [vmem:[#allocation2 + $0x8] sm:$0xff] %v1419
      %1441 = vst [vmem:[#allocation2 + $0x10] sm:$0xff] %v1420
      %1442 = vst [vmem:[#allocation2 + $0x18] sm:$0xff] %v1421
      %1443 = vst [vmem:[#allocation2 + $0x20] sm:$0xff] %v1422
      %1444 = vst [vmem:[#allocation2 + $0x28] sm:$0xff] %v1423
      %1445 = vst [vmem:[#allocation2 + $0x30] sm:$0xff] %v1424
      %1446 = vst [vmem:[#allocation2 + $0x38] sm:$0xff] %v1425
      %1447 = vst [vmem:[#allocation2 + $0x40] sm:$0xff] %v1426
      %1448 = vst [vmem:[#allocation2 + $0x48] sm:$0xff] %v1427
      %1449 = vst [vmem:[#allocation2 + $0x50] sm:$0xff] %v1428
      %1450 = vst [vmem:[#allocation2 + $0x58] sm:$0xff] %v1429
      %1451 = vst [vmem:[#allocation2 + $0x60] sm:$0xff] %v1430
      %1452 = vst [vmem:[#allocation2 + $0x68] sm:$0xff] %v1431
      %1453 = vst [vmem:[#allocation2 + $0x70] sm:$0xff] %v1432
      %1454 = vst [vmem:[#allocation2 + $0x78] sm:$0xff] %v1433
      %1455 = vst [vmem:[#allocation2 + $0x80] sm:$0xff] %v1434
      %1456 = vst [vmem:[#allocation2 + $0x88] sm:$0xff] %v1435
      %1457 = vst [vmem:[#allocation2 + $0x90] sm:$0xff] %v1436
      %1458 = vst [vmem:[#allocation2 + $0x98] sm:$0xff] %v1437
      %1459 = vst [vmem:[#allocation2 + $0xa0] sm:$0xff] %v1438
      %s1460 = scalar_lea.vmem %s2, 8
      %v1461 = vld [vmem:[%s1460] sm:$0xf]
      %v1474 = vunpack.c.l.b16 %v292
      %v1475 = vunpack.c.h.b16 %v292
      %v1476 = vunpack.c.l.b16 %v293
      %v1477 = vunpack.c.h.b16 %v293
      %v1478 = vunpack.c.l.b16 %v294
      %v1479 = vunpack.c.h.b16 %v294
      %v1480 = vunpack.c.l.b16 %v295
      %v1481 = vunpack.c.h.b16 %v295
      %v1482 = vunpack.c.l.b16 %v296
      %v1483 = vunpack.c.h.b16 %v296
      %v1484 = vunpack.c.l.b16 %v297
      %v1485 = vunpack.c.h.b16 %v297
      %v1486 = vunpack.c.l.b16 %v298
      %v1487 = vunpack.c.h.b16 %v298
      %v1488 = vunpack.c.l.b16 %v299
      %v1489 = vunpack.c.h.b16 %v299
      %v1490 = vunpack.c.l.b16 %v300
      %v1491 = vunpack.c.h.b16 %v300
      %v1492 = vunpack.c.l.b16 %v301
      %v1493 = vunpack.c.h.b16 %v301
      %v1494 = vunpack.c.l.b16 %v302
      %v1495 = vunpack.c.h.b16 %v302
      %v1496 = vunpack.c.l.b16 %v303
      %v1497 = vunpack.c.h.b16 %v303
      %v1498 = vpack.c.b16 %v1474, %v1474
      %v1499 = vpack.c.b16 %v1475, %v1475
      %v1500 = vpack.c.b16 %v1476, %v1476
      %v1501 = vpack.c.b16 %v1477, %v1477
      %v1502 = vpack.c.b16 %v1478, %v1478
      %v1503 = vpack.c.b16 %v1479, %v1479
      %v1504 = vpack.c.b16 %v1480, %v1480
      %v1505 = vpack.c.b16 %v1481, %v1481
      %v1506 = vpack.c.b16 %v1482, %v1482
      %v1507 = vpack.c.b16 %v1483, %v1483
      %v1508 = vpack.c.b16 %v1484, %v1484
      %v1509 = vpack.c.b16 %v1485, %v1485
      %v1510 = vpack.c.b16 %v1486, %v1486
      %v1511 = vpack.c.b16 %v1487, %v1487
      %v1512 = vpack.c.b16 %v1488, %v1488
      %v1513 = vpack.c.b16 %v1489, %v1489
      %v1514 = vpack.c.b16 %v1490, %v1490
      %v1515 = vpack.c.b16 %v1491, %v1491
      %v1516 = vpack.c.b16 %v1492, %v1492
      %v1517 = vpack.c.b16 %v1493, %v1493
      %v1518 = vpack.c.b16 %v1494, %v1494
      %v1519 = vpack.c.b16 %v1495, %v1495
      %v1520 = vpack.c.b16 %v1496, %v1496
      %v1521 = vpack.c.b16 %v1497, %v1497
      %v1523 = vsel %vm366, %v1461, 0
      %v1526 = vsel %vm370, %v1498, 0
      %v1529 = vsel %vm370, %v1499, 0
      %v1532 = vsel %vm370, %v1500, 0
      %v1535 = vsel %vm370, %v1501, 0
      %v1538 = vsel %vm370, %v1502, 0
      %v1541 = vsel %vm370, %v1503, 0
      %v1544 = vsel %vm370, %v1504, 0
      %v1547 = vsel %vm370, %v1505, 0
      %v1550 = vsel %vm370, %v1506, 0
      %v1553 = vsel %vm370, %v1507, 0
      %v1556 = vsel %vm370, %v1508, 0
      %v1559 = vsel %vm370, %v1509, 0
      %v1562 = vsel %vm370, %v1510, 0
      %v1565 = vsel %vm370, %v1511, 0
      %v1568 = vsel %vm370, %v1512, 0
      %v1571 = vsel %vm370, %v1513, 0
      %v1574 = vsel %vm370, %v1514, 0
      %v1577 = vsel %vm370, %v1515, 0
      %v1580 = vsel %vm370, %v1516, 0
      %v1583 = vsel %vm370, %v1517, 0
      %v1586 = vsel %vm370, %v1518, 0
      %v1589 = vsel %vm370, %v1519, 0
      %v1592 = vsel %vm370, %v1520, 0
      %v1595 = vsel %vm370, %v1521, 0
      %1597 = vmatpush.bf16.msra.mxu0 0
      %1598 = vmatpush.bf16.msra.mxu0 0
      %1599 = vmatpush.bf16.msra.mxu0 0
      %1600 = vmatpush.bf16.msra.mxu0 0
      %1601 = vmatpush.bf16.msra.mxu0 0
      %1602 = vmatpush.bf16.msra.mxu0 0
      %1603 = vmatpush.bf16.msra.mxu0 0
      %1604 = vmatpush.bf16.msra.mxu0 %v1526
      %1605 = vmatmul.bf16.gmra.mxu0 %v1523
      %v1606 = vpop.f32.mrf.mxu0
      %v1607 = vadd.f32 0.0, %v1606
      %v1608 = vpop.f32.mrf.mxu0
      %1609 = vdwg.mxu0
      %1610 = vmatpush.bf16.msra.mxu0 0
      %1611 = vmatpush.bf16.msra.mxu0 0
      %1612 = vmatpush.bf16.msra.mxu0 0
      %1613 = vmatpush.bf16.msra.mxu0 0
      %1614 = vmatpush.bf16.msra.mxu0 0
      %1615 = vmatpush.bf16.msra.mxu0 0
      %1616 = vmatpush.bf16.msra.mxu0 0
      %1617 = vmatpush.bf16.msra.mxu0 %v1529
      %1618 = vmatmul.bf16.gmra.mxu0 %v1523
      %v1619 = vpop.f32.mrf.mxu0
      %v1620 = vadd.f32 0.0, %v1619
      %v1621 = vpop.f32.mrf.mxu0
      %1622 = vdwg.mxu0
      %1623 = vmatpush.bf16.msra.mxu0 0
      %1624 = vmatpush.bf16.msra.mxu0 0
      %1625 = vmatpush.bf16.msra.mxu0 0
      %1626 = vmatpush.bf16.msra.mxu0 0
      %1627 = vmatpush.bf16.msra.mxu0 0
      %1628 = vmatpush.bf16.msra.mxu0 0
      %1629 = vmatpush.bf16.msra.mxu0 0
      %1630 = vmatpush.bf16.msra.mxu0 %v1532
      %1631 = vmatmul.bf16.gmra.mxu0 %v1523
      %v1632 = vpop.f32.mrf.mxu0
      %v1633 = vadd.f32 0.0, %v1632
      %v1634 = vpop.f32.mrf.mxu0
      %1635 = vdwg.mxu0
      %1636 = vmatpush.bf16.msra.mxu0 0
      %1637 = vmatpush.bf16.msra.mxu0 0
      %1638 = vmatpush.bf16.msra.mxu0 0
      %1639 = vmatpush.bf16.msra.mxu0 0
      %1640 = vmatpush.bf16.msra.mxu0 0
      %1641 = vmatpush.bf16.msra.mxu0 0
      %1642 = vmatpush.bf16.msra.mxu0 0
      %1643 = vmatpush.bf16.msra.mxu0 %v1535
      %1644 = vmatmul.bf16.gmra.mxu0 %v1523
      %v1645 = vpop.f32.mrf.mxu0
      %v1646 = vadd.f32 0.0, %v1645
      %v1647 = vpop.f32.mrf.mxu0
      %1648 = vdwg.mxu0
      %1649 = vmatpush.bf16.msra.mxu0 0
      %1650 = vmatpush.bf16.msra.mxu0 0
      %1651 = vmatpush.bf16.msra.mxu0 0
      %1652 = vmatpush.bf16.msra.mxu0 0
      %1653 = vmatpush.bf16.msra.mxu0 0
      %1654 = vmatpush.bf16.msra.mxu0 0
      %1655 = vmatpush.bf16.msra.mxu0 0
      %1656 = vmatpush.bf16.msra.mxu0 %v1538
      %1657 = vmatmul.bf16.gmra.mxu0 %v1523
      %v1658 = vpop.f32.mrf.mxu0
      %v1659 = vadd.f32 0.0, %v1658
      %v1660 = vpop.f32.mrf.mxu0
      %1661 = vdwg.mxu0
      %1662 = vmatpush.bf16.msra.mxu0 0
      %1663 = vmatpush.bf16.msra.mxu0 0
      %1664 = vmatpush.bf16.msra.mxu0 0
      %1665 = vmatpush.bf16.msra.mxu0 0
      %1666 = vmatpush.bf16.msra.mxu0 0
      %1667 = vmatpush.bf16.msra.mxu0 0
      %1668 = vmatpush.bf16.msra.mxu0 0
      %1669 = vmatpush.bf16.msra.mxu0 %v1541
      %1670 = vmatmul.bf16.gmra.mxu0 %v1523
      %v1671 = vpop.f32.mrf.mxu0
      %v1672 = vadd.f32 0.0, %v1671
      %v1673 = vpop.f32.mrf.mxu0
      %1674 = vdwg.mxu0
      %1675 = vmatpush.bf16.msra.mxu0 0
      %1676 = vmatpush.bf16.msra.mxu0 0
      %1677 = vmatpush.bf16.msra.mxu0 0
      %1678 = vmatpush.bf16.msra.mxu0 0
      %1679 = vmatpush.bf16.msra.mxu0 0
      %1680 = vmatpush.bf16.msra.mxu0 0
      %1681 = vmatpush.bf16.msra.mxu0 0
      %1682 = vmatpush.bf16.msra.mxu0 %v1544
      %1683 = vmatmul.bf16.gmra.mxu0 %v1523
      %v1684 = vpop.f32.mrf.mxu0
      %v1685 = vadd.f32 0.0, %v1684
      %v1686 = vpop.f32.mrf.mxu0
      %1687 = vdwg.mxu0
      %1688 = vmatpush.bf16.msra.mxu0 0
      %1689 = vmatpush.bf16.msra.mxu0 0
      %1690 = vmatpush.bf16.msra.mxu0 0
      %1691 = vmatpush.bf16.msra.mxu0 0
      %1692 = vmatpush.bf16.msra.mxu0 0
      %1693 = vmatpush.bf16.msra.mxu0 0
      %1694 = vmatpush.bf16.msra.mxu0 0
      %1695 = vmatpush.bf16.msra.mxu0 %v1547
      %1696 = vmatmul.bf16.gmra.mxu0 %v1523
      %v1697 = vpop.f32.mrf.mxu0
      %v1698 = vadd.f32 0.0, %v1697
      %v1699 = vpop.f32.mrf.mxu0
      %1700 = vdwg.mxu0
      %1701 = vmatpush.bf16.msra.mxu0 0
      %1702 = vmatpush.bf16.msra.mxu0 0
      %1703 = vmatpush.bf16.msra.mxu0 0
      %1704 = vmatpush.bf16.msra.mxu0 0
      %1705 = vmatpush.bf16.msra.mxu0 0
      %1706 = vmatpush.bf16.msra.mxu0 0
      %1707 = vmatpush.bf16.msra.mxu0 0
      %1708 = vmatpush.bf16.msra.mxu0 %v1550
      %1709 = vmatmul.bf16.gmra.mxu0 %v1523
      %v1710 = vpop.f32.mrf.mxu0
      %v1711 = vadd.f32 0.0, %v1710
      %v1712 = vpop.f32.mrf.mxu0
      %1713 = vdwg.mxu0
      %1714 = vmatpush.bf16.msra.mxu0 0
      %1715 = vmatpush.bf16.msra.mxu0 0
      %1716 = vmatpush.bf16.msra.mxu0 0
      %1717 = vmatpush.bf16.msra.mxu0 0
      %1718 = vmatpush.bf16.msra.mxu0 0
      %1719 = vmatpush.bf16.msra.mxu0 0
      %1720 = vmatpush.bf16.msra.mxu0 0
      %1721 = vmatpush.bf16.msra.mxu0 %v1553
      %1722 = vmatmul.bf16.gmra.mxu0 %v1523
      %v1723 = vpop.f32.mrf.mxu0
      %v1724 = vadd.f32 0.0, %v1723
      %v1725 = vpop.f32.mrf.mxu0
      %1726 = vdwg.mxu0
      %1727 = vmatpush.bf16.msra.mxu0 0
      %1728 = vmatpush.bf16.msra.mxu0 0
      %1729 = vmatpush.bf16.msra.mxu0 0
      %1730 = vmatpush.bf16.msra.mxu0 0
      %1731 = vmatpush.bf16.msra.mxu0 0
      %1732 = vmatpush.bf16.msra.mxu0 0
      %1733 = vmatpush.bf16.msra.mxu0 0
      %1734 = vmatpush.bf16.msra.mxu0 %v1556
      %1735 = vmatmul.bf16.gmra.mxu0 %v1523
      %v1736 = vpop.f32.mrf.mxu0
      %v1737 = vadd.f32 0.0, %v1736
      %v1738 = vpop.f32.mrf.mxu0
      %1739 = vdwg.mxu0
      %1740 = vmatpush.bf16.msra.mxu0 0
      %1741 = vmatpush.bf16.msra.mxu0 0
      %1742 = vmatpush.bf16.msra.mxu0 0
      %1743 = vmatpush.bf16.msra.mxu0 0
      %1744 = vmatpush.bf16.msra.mxu0 0
      %1745 = vmatpush.bf16.msra.mxu0 0
      %1746 = vmatpush.bf16.msra.mxu0 0
      %1747 = vmatpush.bf16.msra.mxu0 %v1559
      %1748 = vmatmul.bf16.gmra.mxu0 %v1523
      %v1749 = vpop.f32.mrf.mxu0
      %v1750 = vadd.f32 0.0, %v1749
      %v1751 = vpop.f32.mrf.mxu0
      %1752 = vdwg.mxu0
      %1753 = vmatpush.bf16.msra.mxu0 0
      %1754 = vmatpush.bf16.msra.mxu0 0
      %1755 = vmatpush.bf16.msra.mxu0 0
      %1756 = vmatpush.bf16.msra.mxu0 0
      %1757 = vmatpush.bf16.msra.mxu0 0
      %1758 = vmatpush.bf16.msra.mxu0 0
      %1759 = vmatpush.bf16.msra.mxu0 0
      %1760 = vmatpush.bf16.msra.mxu0 %v1562
      %1761 = vmatmul.bf16.gmra.mxu0 %v1523
      %v1762 = vpop.f32.mrf.mxu0
      %v1763 = vadd.f32 0.0, %v1762
      %v1764 = vpop.f32.mrf.mxu0
      %1765 = vdwg.mxu0
      %1766 = vmatpush.bf16.msra.mxu0 0
      %1767 = vmatpush.bf16.msra.mxu0 0
      %1768 = vmatpush.bf16.msra.mxu0 0
      %1769 = vmatpush.bf16.msra.mxu0 0
      %1770 = vmatpush.bf16.msra.mxu0 0
      %1771 = vmatpush.bf16.msra.mxu0 0
      %1772 = vmatpush.bf16.msra.mxu0 0
      %1773 = vmatpush.bf16.msra.mxu0 %v1565
      %1774 = vmatmul.bf16.gmra.mxu0 %v1523
      %v1775 = vpop.f32.mrf.mxu0
      %v1776 = vadd.f32 0.0, %v1775
      %v1777 = vpop.f32.mrf.mxu0
      %1778 = vdwg.mxu0
      %1779 = vmatpush.bf16.msra.mxu0 0
      %1780 = vmatpush.bf16.msra.mxu0 0
      %1781 = vmatpush.bf16.msra.mxu0 0
      %1782 = vmatpush.bf16.msra.mxu0 0
      %1783 = vmatpush.bf16.msra.mxu0 0
      %1784 = vmatpush.bf16.msra.mxu0 0
      %1785 = vmatpush.bf16.msra.mxu0 0
      %1786 = vmatpush.bf16.msra.mxu0 %v1568
      %1787 = vmatmul.bf16.gmra.mxu0 %v1523
      %v1788 = vpop.f32.mrf.mxu0
      %v1789 = vadd.f32 0.0, %v1788
      %v1790 = vpop.f32.mrf.mxu0
      %1791 = vdwg.mxu0
      %1792 = vmatpush.bf16.msra.mxu0 0
      %1793 = vmatpush.bf16.msra.mxu0 0
      %1794 = vmatpush.bf16.msra.mxu0 0
      %1795 = vmatpush.bf16.msra.mxu0 0
      %1796 = vmatpush.bf16.msra.mxu0 0
      %1797 = vmatpush.bf16.msra.mxu0 0
      %1798 = vmatpush.bf16.msra.mxu0 0
      %1799 = vmatpush.bf16.msra.mxu0 %v1571
      %1800 = vmatmul.bf16.gmra.mxu0 %v1523
      %v1801 = vpop.f32.mrf.mxu0
      %v1802 = vadd.f32 0.0, %v1801
      %v1803 = vpop.f32.mrf.mxu0
      %1804 = vdwg.mxu0
      %1805 = vmatpush.bf16.msra.mxu0 0
      %1806 = vmatpush.bf16.msra.mxu0 0
      %1807 = vmatpush.bf16.msra.mxu0 0
      %1808 = vmatpush.bf16.msra.mxu0 0
      %1809 = vmatpush.bf16.msra.mxu0 0
      %1810 = vmatpush.bf16.msra.mxu0 0
      %1811 = vmatpush.bf16.msra.mxu0 0
      %1812 = vmatpush.bf16.msra.mxu0 %v1574
      %1813 = vmatmul.bf16.gmra.mxu0 %v1523
      %v1814 = vpop.f32.mrf.mxu0
      %v1815 = vadd.f32 0.0, %v1814
      %v1816 = vpop.f32.mrf.mxu0
      %1817 = vdwg.mxu0
      %1818 = vmatpush.bf16.msra.mxu0 0
      %1819 = vmatpush.bf16.msra.mxu0 0
      %1820 = vmatpush.bf16.msra.mxu0 0
      %1821 = vmatpush.bf16.msra.mxu0 0
      %1822 = vmatpush.bf16.msra.mxu0 0
      %1823 = vmatpush.bf16.msra.mxu0 0
      %1824 = vmatpush.bf16.msra.mxu0 0
      %1825 = vmatpush.bf16.msra.mxu0 %v1577
      %1826 = vmatmul.bf16.gmra.mxu0 %v1523
      %v1827 = vpop.f32.mrf.mxu0
      %v1828 = vadd.f32 0.0, %v1827
      %v1829 = vpop.f32.mrf.mxu0
      %1830 = vdwg.mxu0
      %1831 = vmatpush.bf16.msra.mxu0 0
      %1832 = vmatpush.bf16.msra.mxu0 0
      %1833 = vmatpush.bf16.msra.mxu0 0
      %1834 = vmatpush.bf16.msra.mxu0 0
      %1835 = vmatpush.bf16.msra.mxu0 0
      %1836 = vmatpush.bf16.msra.mxu0 0
      %1837 = vmatpush.bf16.msra.mxu0 0
      %1838 = vmatpush.bf16.msra.mxu0 %v1580
      %1839 = vmatmul.bf16.gmra.mxu0 %v1523
      %v1840 = vpop.f32.mrf.mxu0
      %v1841 = vadd.f32 0.0, %v1840
      %v1842 = vpop.f32.mrf.mxu0
      %1843 = vdwg.mxu0
      %1844 = vmatpush.bf16.msra.mxu0 0
      %1845 = vmatpush.bf16.msra.mxu0 0
      %1846 = vmatpush.bf16.msra.mxu0 0
      %1847 = vmatpush.bf16.msra.mxu0 0
      %1848 = vmatpush.bf16.msra.mxu0 0
      %1849 = vmatpush.bf16.msra.mxu0 0
      %1850 = vmatpush.bf16.msra.mxu0 0
      %1851 = vmatpush.bf16.msra.mxu0 %v1583
      %1852 = vmatmul.bf16.gmra.mxu0 %v1523
      %v1853 = vpop.f32.mrf.mxu0
      %v1854 = vadd.f32 0.0, %v1853
      %v1855 = vpop.f32.mrf.mxu0
      %1856 = vdwg.mxu0
      %1857 = vmatpush.bf16.msra.mxu0 0
      %1858 = vmatpush.bf16.msra.mxu0 0
      %1859 = vmatpush.bf16.msra.mxu0 0
      %1860 = vmatpush.bf16.msra.mxu0 0
      %1861 = vmatpush.bf16.msra.mxu0 0
      %1862 = vmatpush.bf16.msra.mxu0 0
      %1863 = vmatpush.bf16.msra.mxu0 0
      %1864 = vmatpush.bf16.msra.mxu0 %v1586
      %1865 = vmatmul.bf16.gmra.mxu0 %v1523
      %v1866 = vpop.f32.mrf.mxu0
      %v1867 = vadd.f32 0.0, %v1866
      %v1868 = vpop.f32.mrf.mxu0
      %1869 = vdwg.mxu0
      %1870 = vmatpush.bf16.msra.mxu0 0
      %1871 = vmatpush.bf16.msra.mxu0 0
      %1872 = vmatpush.bf16.msra.mxu0 0
      %1873 = vmatpush.bf16.msra.mxu0 0
      %1874 = vmatpush.bf16.msra.mxu0 0
      %1875 = vmatpush.bf16.msra.mxu0 0
      %1876 = vmatpush.bf16.msra.mxu0 0
      %1877 = vmatpush.bf16.msra.mxu0 %v1589
      %1878 = vmatmul.bf16.gmra.mxu0 %v1523
      %v1879 = vpop.f32.mrf.mxu0
      %v1880 = vadd.f32 0.0, %v1879
      %v1881 = vpop.f32.mrf.mxu0
      %1882 = vdwg.mxu0
      %1883 = vmatpush.bf16.msra.mxu0 0
      %1884 = vmatpush.bf16.msra.mxu0 0
      %1885 = vmatpush.bf16.msra.mxu0 0
      %1886 = vmatpush.bf16.msra.mxu0 0
      %1887 = vmatpush.bf16.msra.mxu0 0
      %1888 = vmatpush.bf16.msra.mxu0 0
      %1889 = vmatpush.bf16.msra.mxu0 0
      %1890 = vmatpush.bf16.msra.mxu0 %v1592
      %1891 = vmatmul.bf16.gmra.mxu0 %v1523
      %v1892 = vpop.f32.mrf.mxu0
      %v1893 = vadd.f32 0.0, %v1892
      %v1894 = vpop.f32.mrf.mxu0
      %1895 = vdwg.mxu0
      %1896 = vmatpush.bf16.msra.mxu0 0
      %1897 = vmatpush.bf16.msra.mxu0 0
      %1898 = vmatpush.bf16.msra.mxu0 0
      %1899 = vmatpush.bf16.msra.mxu0 0
      %1900 = vmatpush.bf16.msra.mxu0 0
      %1901 = vmatpush.bf16.msra.mxu0 0
      %1902 = vmatpush.bf16.msra.mxu0 0
      %1903 = vmatpush.bf16.msra.mxu0 %v1595
      %1904 = vmatmul.bf16.gmra.mxu0 %v1523
      %v1905 = vpop.f32.mrf.mxu0
      %v1906 = vadd.f32 0.0, %v1905
      %v1907 = vpop.f32.mrf.mxu0
      %1908 = vdwg.mxu0
      %1909 = vst [vmem:[#allocation3] sm:$0xff] %v1607
      %1910 = vst [vmem:[#allocation3 + $0x8] sm:$0xff] %v1620
      %1911 = vst [vmem:[#allocation3 + $0x10] sm:$0xff] %v1633
      %1912 = vst [vmem:[#allocation3 + $0x18] sm:$0xff] %v1646
      %1913 = vst [vmem:[#allocation3 + $0x20] sm:$0xff] %v1659
      %1914 = vst [vmem:[#allocation3 + $0x28] sm:$0xff] %v1672
      %1915 = vst [vmem:[#allocation3 + $0x30] sm:$0xff] %v1685
      %1916 = vst [vmem:[#allocation3 + $0x38] sm:$0xff] %v1698
      %1917 = vst [vmem:[#allocation3 + $0x40] sm:$0xff] %v1711
      %1918 = vst [vmem:[#allocation3 + $0x48] sm:$0xff] %v1724
      %1919 = vst [vmem:[#allocation3 + $0x50] sm:$0xff] %v1737
      %1920 = vst [vmem:[#allocation3 + $0x58] sm:$0xff] %v1750
      %1921 = vst [vmem:[#allocation3 + $0x60] sm:$0xff] %v1763
      %1922 = vst [vmem:[#allocation3 + $0x68] sm:$0xff] %v1776
      %1923 = vst [vmem:[#allocation3 + $0x70] sm:$0xff] %v1789
      %1924 = vst [vmem:[#allocation3 + $0x78] sm:$0xff] %v1802
      %1925 = vst [vmem:[#allocation3 + $0x80] sm:$0xff] %v1815
      %1926 = vst [vmem:[#allocation3 + $0x88] sm:$0xff] %v1828
      %1927 = vst [vmem:[#allocation3 + $0x90] sm:$0xff] %v1841
      %1928 = vst [vmem:[#allocation3 + $0x98] sm:$0xff] %v1854
      %1929 = vst [vmem:[#allocation3 + $0xa0] sm:$0xff] %v1867
      %1930 = vst [vmem:[#allocation3 + $0xa8] sm:$0xff] %v1880
      %1931 = vst [vmem:[#allocation3 + $0xb0] sm:$0xff] %v1893
      %1932 = vst [vmem:[#allocation3 + $0xb8] sm:$0xff] %v1906
      %v1933 = vld [vmem:[#allocation3 + $0x18] sm:$0xff]
      %v1934 = vld [vmem:[#allocation3 + $0x20] sm:$0xff]
      %v1935 = vld [vmem:[#allocation3 + $0x28] sm:$0xff]
      %v1936 = vld [vmem:[#allocation3 + $0x30] sm:$0xff]
      %v1937 = vld [vmem:[#allocation3 + $0x38] sm:$0xff]
      %v1938 = vld [vmem:[#allocation3 + $0x40] sm:$0xff]
      %v1939 = vld [vmem:[#allocation3 + $0x48] sm:$0xff]
      %v1940 = vld [vmem:[#allocation3 + $0x50] sm:$0xff]
      %v1941 = vld [vmem:[#allocation3 + $0x58] sm:$0xff]
      %v1942 = vld [vmem:[#allocation3 + $0x60] sm:$0xff]
      %v1943 = vld [vmem:[#allocation3 + $0x68] sm:$0xff]
      %v1944 = vld [vmem:[#allocation3 + $0x70] sm:$0xff]
      %v1945 = vld [vmem:[#allocation3 + $0x78] sm:$0xff]
      %v1946 = vld [vmem:[#allocation3 + $0x80] sm:$0xff]
      %v1947 = vld [vmem:[#allocation3 + $0x88] sm:$0xff]
      %v1948 = vld [vmem:[#allocation3 + $0x90] sm:$0xff]
      %v1949 = vld [vmem:[#allocation3 + $0x98] sm:$0xff]
      %v1950 = vld [vmem:[#allocation3 + $0xa0] sm:$0xff]
      %v1951 = vld [vmem:[#allocation3 + $0xa8] sm:$0xff]
      %v1952 = vld [vmem:[#allocation3 + $0xb0] sm:$0xff]
      %v1953 = vld [vmem:[#allocation3 + $0xb8] sm:$0xff]
      %s1954 = scalar_lea.vmem %s2, 4
      %v1955 = vld [vmem:[%s1954] sm:$0xf]
      %v1957 = vsel %vm366, %v1955, 0
      %1959 = vmatpush.bf16.msra.mxu0 0
      %1960 = vmatpush.bf16.msra.mxu0 0
      %1961 = vmatpush.bf16.msra.mxu0 0
      %1962 = vmatpush.bf16.msra.mxu0 0
      %1963 = vmatpush.bf16.msra.mxu0 0
      %1964 = vmatpush.bf16.msra.mxu0 0
      %1965 = vmatpush.bf16.msra.mxu0 0
      %1966 = vmatpush.bf16.msra.mxu0 %v1526
      %1967 = vmatmul.bf16.gmra.mxu0 %v1957
      %v1968 = vpop.f32.mrf.mxu0
      %v1969 = vadd.f32 0.0, %v1968
      %v1970 = vpop.f32.mrf.mxu0
      %1971 = vdwg.mxu0
      %1972 = vmatpush.bf16.msra.mxu0 0
      %1973 = vmatpush.bf16.msra.mxu0 0
      %1974 = vmatpush.bf16.msra.mxu0 0
      %1975 = vmatpush.bf16.msra.mxu0 0
      %1976 = vmatpush.bf16.msra.mxu0 0
      %1977 = vmatpush.bf16.msra.mxu0 0
      %1978 = vmatpush.bf16.msra.mxu0 0
      %1979 = vmatpush.bf16.msra.mxu0 %v1529
      %1980 = vmatmul.bf16.gmra.mxu0 %v1957
      %v1981 = vpop.f32.mrf.mxu0
      %v1982 = vadd.f32 0.0, %v1981
      %v1983 = vpop.f32.mrf.mxu0
      %1984 = vdwg.mxu0
      %1985 = vmatpush.bf16.msra.mxu0 0
      %1986 = vmatpush.bf16.msra.mxu0 0
      %1987 = vmatpush.bf16.msra.mxu0 0
      %1988 = vmatpush.bf16.msra.mxu0 0
      %1989 = vmatpush.bf16.msra.mxu0 0
      %1990 = vmatpush.bf16.msra.mxu0 0
      %1991 = vmatpush.bf16.msra.mxu0 0
      %1992 = vmatpush.bf16.msra.mxu0 %v1532
      %1993 = vmatmul.bf16.gmra.mxu0 %v1957
      %v1994 = vpop.f32.mrf.mxu0
      %v1995 = vadd.f32 0.0, %v1994
      %v1996 = vpop.f32.mrf.mxu0
      %1997 = vdwg.mxu0
      %1998 = vmatpush.bf16.msra.mxu0 0
      %1999 = vmatpush.bf16.msra.mxu0 0
      %2000 = vmatpush.bf16.msra.mxu0 0
      %2001 = vmatpush.bf16.msra.mxu0 0
      %2002 = vmatpush.bf16.msra.mxu0 0
      %2003 = vmatpush.bf16.msra.mxu0 0
      %2004 = vmatpush.bf16.msra.mxu0 0
      %2005 = vmatpush.bf16.msra.mxu0 %v1535
      %2006 = vmatmul.bf16.gmra.mxu0 %v1957
      %v2007 = vpop.f32.mrf.mxu0
      %v2008 = vadd.f32 0.0, %v2007
      %v2009 = vpop.f32.mrf.mxu0
      %2010 = vdwg.mxu0
      %2011 = vmatpush.bf16.msra.mxu0 0
      %2012 = vmatpush.bf16.msra.mxu0 0
      %2013 = vmatpush.bf16.msra.mxu0 0
      %2014 = vmatpush.bf16.msra.mxu0 0
      %2015 = vmatpush.bf16.msra.mxu0 0
      %2016 = vmatpush.bf16.msra.mxu0 0
      %2017 = vmatpush.bf16.msra.mxu0 0
      %2018 = vmatpush.bf16.msra.mxu0 %v1538
      %2019 = vmatmul.bf16.gmra.mxu0 %v1957
      %v2020 = vpop.f32.mrf.mxu0
      %v2021 = vadd.f32 0.0, %v2020
      %v2022 = vpop.f32.mrf.mxu0
      %2023 = vdwg.mxu0
      %2024 = vmatpush.bf16.msra.mxu0 0
      %2025 = vmatpush.bf16.msra.mxu0 0
      %2026 = vmatpush.bf16.msra.mxu0 0
      %2027 = vmatpush.bf16.msra.mxu0 0
      %2028 = vmatpush.bf16.msra.mxu0 0
      %2029 = vmatpush.bf16.msra.mxu0 0
      %2030 = vmatpush.bf16.msra.mxu0 0
      %2031 = vmatpush.bf16.msra.mxu0 %v1541
      %2032 = vmatmul.bf16.gmra.mxu0 %v1957
      %v2033 = vpop.f32.mrf.mxu0
      %v2034 = vadd.f32 0.0, %v2033
      %v2035 = vpop.f32.mrf.mxu0
      %2036 = vdwg.mxu0
      %2037 = vmatpush.bf16.msra.mxu0 0
      %2038 = vmatpush.bf16.msra.mxu0 0
      %2039 = vmatpush.bf16.msra.mxu0 0
      %2040 = vmatpush.bf16.msra.mxu0 0
      %2041 = vmatpush.bf16.msra.mxu0 0
      %2042 = vmatpush.bf16.msra.mxu0 0
      %2043 = vmatpush.bf16.msra.mxu0 0
      %2044 = vmatpush.bf16.msra.mxu0 %v1544
      %2045 = vmatmul.bf16.gmra.mxu0 %v1957
      %v2046 = vpop.f32.mrf.mxu0
      %v2047 = vadd.f32 0.0, %v2046
      %v2048 = vpop.f32.mrf.mxu0
      %2049 = vdwg.mxu0
      %2050 = vmatpush.bf16.msra.mxu0 0
      %2051 = vmatpush.bf16.msra.mxu0 0
      %2052 = vmatpush.bf16.msra.mxu0 0
      %2053 = vmatpush.bf16.msra.mxu0 0
      %2054 = vmatpush.bf16.msra.mxu0 0
      %2055 = vmatpush.bf16.msra.mxu0 0
      %2056 = vmatpush.bf16.msra.mxu0 0
      %2057 = vmatpush.bf16.msra.mxu0 %v1547
      %2058 = vmatmul.bf16.gmra.mxu0 %v1957
      %v2059 = vpop.f32.mrf.mxu0
      %v2060 = vadd.f32 0.0, %v2059
      %v2061 = vpop.f32.mrf.mxu0
      %2062 = vdwg.mxu0
      %2063 = vmatpush.bf16.msra.mxu0 0
      %2064 = vmatpush.bf16.msra.mxu0 0
      %2065 = vmatpush.bf16.msra.mxu0 0
      %2066 = vmatpush.bf16.msra.mxu0 0
      %2067 = vmatpush.bf16.msra.mxu0 0
      %2068 = vmatpush.bf16.msra.mxu0 0
      %2069 = vmatpush.bf16.msra.mxu0 0
      %2070 = vmatpush.bf16.msra.mxu0 %v1550
      %2071 = vmatmul.bf16.gmra.mxu0 %v1957
      %v2072 = vpop.f32.mrf.mxu0
      %v2073 = vadd.f32 0.0, %v2072
      %v2074 = vpop.f32.mrf.mxu0
      %2075 = vdwg.mxu0
      %2076 = vmatpush.bf16.msra.mxu0 0
      %2077 = vmatpush.bf16.msra.mxu0 0
      %2078 = vmatpush.bf16.msra.mxu0 0
      %2079 = vmatpush.bf16.msra.mxu0 0
      %2080 = vmatpush.bf16.msra.mxu0 0
      %2081 = vmatpush.bf16.msra.mxu0 0
      %2082 = vmatpush.bf16.msra.mxu0 0
      %2083 = vmatpush.bf16.msra.mxu0 %v1553
      %2084 = vmatmul.bf16.gmra.mxu0 %v1957
      %v2085 = vpop.f32.mrf.mxu0
      %v2086 = vadd.f32 0.0, %v2085
      %v2087 = vpop.f32.mrf.mxu0
      %2088 = vdwg.mxu0
      %2089 = vmatpush.bf16.msra.mxu0 0
      %2090 = vmatpush.bf16.msra.mxu0 0
      %2091 = vmatpush.bf16.msra.mxu0 0
      %2092 = vmatpush.bf16.msra.mxu0 0
      %2093 = vmatpush.bf16.msra.mxu0 0
      %2094 = vmatpush.bf16.msra.mxu0 0
      %2095 = vmatpush.bf16.msra.mxu0 0
      %2096 = vmatpush.bf16.msra.mxu0 %v1556
      %2097 = vmatmul.bf16.gmra.mxu0 %v1957
      %v2098 = vpop.f32.mrf.mxu0
      %v2099 = vadd.f32 0.0, %v2098
      %v2100 = vpop.f32.mrf.mxu0
      %2101 = vdwg.mxu0
      %2102 = vmatpush.bf16.msra.mxu0 0
      %2103 = vmatpush.bf16.msra.mxu0 0
      %2104 = vmatpush.bf16.msra.mxu0 0
      %2105 = vmatpush.bf16.msra.mxu0 0
      %2106 = vmatpush.bf16.msra.mxu0 0
      %2107 = vmatpush.bf16.msra.mxu0 0
      %2108 = vmatpush.bf16.msra.mxu0 0
      %2109 = vmatpush.bf16.msra.mxu0 %v1559
      %2110 = vmatmul.bf16.gmra.mxu0 %v1957
      %v2111 = vpop.f32.mrf.mxu0
      %v2112 = vadd.f32 0.0, %v2111
      %v2113 = vpop.f32.mrf.mxu0
      %2114 = vdwg.mxu0
      %2115 = vmatpush.bf16.msra.mxu0 0
      %2116 = vmatpush.bf16.msra.mxu0 0
      %2117 = vmatpush.bf16.msra.mxu0 0
      %2118 = vmatpush.bf16.msra.mxu0 0
      %2119 = vmatpush.bf16.msra.mxu0 0
      %2120 = vmatpush.bf16.msra.mxu0 0
      %2121 = vmatpush.bf16.msra.mxu0 0
      %2122 = vmatpush.bf16.msra.mxu0 %v1562
      %2123 = vmatmul.bf16.gmra.mxu0 %v1957
      %v2124 = vpop.f32.mrf.mxu0
      %v2125 = vadd.f32 0.0, %v2124
      %v2126 = vpop.f32.mrf.mxu0
      %2127 = vdwg.mxu0
      %2128 = vmatpush.bf16.msra.mxu0 0
      %2129 = vmatpush.bf16.msra.mxu0 0
      %2130 = vmatpush.bf16.msra.mxu0 0
      %2131 = vmatpush.bf16.msra.mxu0 0
      %2132 = vmatpush.bf16.msra.mxu0 0
      %2133 = vmatpush.bf16.msra.mxu0 0
      %2134 = vmatpush.bf16.msra.mxu0 0
      %2135 = vmatpush.bf16.msra.mxu0 %v1565
      %2136 = vmatmul.bf16.gmra.mxu0 %v1957
      %v2137 = vpop.f32.mrf.mxu0
      %v2138 = vadd.f32 0.0, %v2137
      %v2139 = vpop.f32.mrf.mxu0
      %2140 = vdwg.mxu0
      %2141 = vmatpush.bf16.msra.mxu0 0
      %2142 = vmatpush.bf16.msra.mxu0 0
      %2143 = vmatpush.bf16.msra.mxu0 0
      %2144 = vmatpush.bf16.msra.mxu0 0
      %2145 = vmatpush.bf16.msra.mxu0 0
      %2146 = vmatpush.bf16.msra.mxu0 0
      %2147 = vmatpush.bf16.msra.mxu0 0
      %2148 = vmatpush.bf16.msra.mxu0 %v1568
      %2149 = vmatmul.bf16.gmra.mxu0 %v1957
      %v2150 = vpop.f32.mrf.mxu0
      %v2151 = vadd.f32 0.0, %v2150
      %v2152 = vpop.f32.mrf.mxu0
      %2153 = vdwg.mxu0
      %2154 = vmatpush.bf16.msra.mxu0 0
      %2155 = vmatpush.bf16.msra.mxu0 0
      %2156 = vmatpush.bf16.msra.mxu0 0
      %2157 = vmatpush.bf16.msra.mxu0 0
      %2158 = vmatpush.bf16.msra.mxu0 0
      %2159 = vmatpush.bf16.msra.mxu0 0
      %2160 = vmatpush.bf16.msra.mxu0 0
      %2161 = vmatpush.bf16.msra.mxu0 %v1571
      %2162 = vmatmul.bf16.gmra.mxu0 %v1957
      %v2163 = vpop.f32.mrf.mxu0
      %v2164 = vadd.f32 0.0, %v2163
      %v2165 = vpop.f32.mrf.mxu0
      %2166 = vdwg.mxu0
      %2167 = vmatpush.bf16.msra.mxu0 0
      %2168 = vmatpush.bf16.msra.mxu0 0
      %2169 = vmatpush.bf16.msra.mxu0 0
      %2170 = vmatpush.bf16.msra.mxu0 0
      %2171 = vmatpush.bf16.msra.mxu0 0
      %2172 = vmatpush.bf16.msra.mxu0 0
      %2173 = vmatpush.bf16.msra.mxu0 0
      %2174 = vmatpush.bf16.msra.mxu0 %v1574
      %2175 = vmatmul.bf16.gmra.mxu0 %v1957
      %v2176 = vpop.f32.mrf.mxu0
      %v2177 = vadd.f32 0.0, %v2176
      %v2178 = vpop.f32.mrf.mxu0
      %2179 = vdwg.mxu0
      %2180 = vmatpush.bf16.msra.mxu0 0
      %2181 = vmatpush.bf16.msra.mxu0 0
      %2182 = vmatpush.bf16.msra.mxu0 0
      %2183 = vmatpush.bf16.msra.mxu0 0
      %2184 = vmatpush.bf16.msra.mxu0 0
      %2185 = vmatpush.bf16.msra.mxu0 0
      %2186 = vmatpush.bf16.msra.mxu0 0
      %2187 = vmatpush.bf16.msra.mxu0 %v1577
      %2188 = vmatmul.bf16.gmra.mxu0 %v1957
      %v2189 = vpop.f32.mrf.mxu0
      %v2190 = vadd.f32 0.0, %v2189
      %v2191 = vpop.f32.mrf.mxu0
      %2192 = vdwg.mxu0
      %2193 = vmatpush.bf16.msra.mxu0 0
      %2194 = vmatpush.bf16.msra.mxu0 0
      %2195 = vmatpush.bf16.msra.mxu0 0
      %2196 = vmatpush.bf16.msra.mxu0 0
      %2197 = vmatpush.bf16.msra.mxu0 0
      %2198 = vmatpush.bf16.msra.mxu0 0
      %2199 = vmatpush.bf16.msra.mxu0 0
      %2200 = vmatpush.bf16.msra.mxu0 %v1580
      %2201 = vmatmul.bf16.gmra.mxu0 %v1957
      %v2202 = vpop.f32.mrf.mxu0
      %v2203 = vadd.f32 0.0, %v2202
      %v2204 = vpop.f32.mrf.mxu0
      %2205 = vdwg.mxu0
      %2206 = vmatpush.bf16.msra.mxu0 0
      %2207 = vmatpush.bf16.msra.mxu0 0
      %2208 = vmatpush.bf16.msra.mxu0 0
      %2209 = vmatpush.bf16.msra.mxu0 0
      %2210 = vmatpush.bf16.msra.mxu0 0
      %2211 = vmatpush.bf16.msra.mxu0 0
      %2212 = vmatpush.bf16.msra.mxu0 0
      %2213 = vmatpush.bf16.msra.mxu0 %v1583
      %2214 = vmatmul.bf16.gmra.mxu0 %v1957
      %v2215 = vpop.f32.mrf.mxu0
      %v2216 = vadd.f32 0.0, %v2215
      %v2217 = vpop.f32.mrf.mxu0
      %2218 = vdwg.mxu0
      %2219 = vmatpush.bf16.msra.mxu0 0
      %2220 = vmatpush.bf16.msra.mxu0 0
      %2221 = vmatpush.bf16.msra.mxu0 0
      %2222 = vmatpush.bf16.msra.mxu0 0
      %2223 = vmatpush.bf16.msra.mxu0 0
      %2224 = vmatpush.bf16.msra.mxu0 0
      %2225 = vmatpush.bf16.msra.mxu0 0
      %2226 = vmatpush.bf16.msra.mxu0 %v1586
      %2227 = vmatmul.bf16.gmra.mxu0 %v1957
      %v2228 = vpop.f32.mrf.mxu0
      %v2229 = vadd.f32 0.0, %v2228
      %v2230 = vpop.f32.mrf.mxu0
      %2231 = vdwg.mxu0
      %v2232 = vadd.f32 %v1933, %v1969
      %v2233 = vadd.f32 %v1934, %v1982
      %v2234 = vadd.f32 %v1935, %v1995
      %v2235 = vadd.f32 %v1936, %v2008
      %v2236 = vadd.f32 %v1937, %v2021
      %v2237 = vadd.f32 %v1938, %v2034
      %v2238 = vadd.f32 %v1939, %v2047
      %v2239 = vadd.f32 %v1940, %v2060
      %v2240 = vadd.f32 %v1941, %v2073
      %v2241 = vadd.f32 %v1942, %v2086
      %v2242 = vadd.f32 %v1943, %v2099
      %v2243 = vadd.f32 %v1944, %v2112
      %v2244 = vadd.f32 %v1945, %v2125
      %v2245 = vadd.f32 %v1946, %v2138
      %v2246 = vadd.f32 %v1947, %v2151
      %v2247 = vadd.f32 %v1948, %v2164
      %v2248 = vadd.f32 %v1949, %v2177
      %v2249 = vadd.f32 %v1950, %v2190
      %v2250 = vadd.f32 %v1951, %v2203
      %v2251 = vadd.f32 %v1952, %v2216
      %v2252 = vadd.f32 %v1953, %v2229
      %2253 = vst [vmem:[#allocation3 + $0x18] sm:$0xff] %v2232
      %2254 = vst [vmem:[#allocation3 + $0x20] sm:$0xff] %v2233
      %2255 = vst [vmem:[#allocation3 + $0x28] sm:$0xff] %v2234
      %2256 = vst [vmem:[#allocation3 + $0x30] sm:$0xff] %v2235
      %2257 = vst [vmem:[#allocation3 + $0x38] sm:$0xff] %v2236
      %2258 = vst [vmem:[#allocation3 + $0x40] sm:$0xff] %v2237
      %2259 = vst [vmem:[#allocation3 + $0x48] sm:$0xff] %v2238
      %2260 = vst [vmem:[#allocation3 + $0x50] sm:$0xff] %v2239
      %2261 = vst [vmem:[#allocation3 + $0x58] sm:$0xff] %v2240
      %2262 = vst [vmem:[#allocation3 + $0x60] sm:$0xff] %v2241
      %2263 = vst [vmem:[#allocation3 + $0x68] sm:$0xff] %v2242
      %2264 = vst [vmem:[#allocation3 + $0x70] sm:$0xff] %v2243
      %2265 = vst [vmem:[#allocation3 + $0x78] sm:$0xff] %v2244
      %2266 = vst [vmem:[#allocation3 + $0x80] sm:$0xff] %v2245
      %2267 = vst [vmem:[#allocation3 + $0x88] sm:$0xff] %v2246
      %2268 = vst [vmem:[#allocation3 + $0x90] sm:$0xff] %v2247
      %2269 = vst [vmem:[#allocation3 + $0x98] sm:$0xff] %v2248
      %2270 = vst [vmem:[#allocation3 + $0xa0] sm:$0xff] %v2249
      %2271 = vst [vmem:[#allocation3 + $0xa8] sm:$0xff] %v2250
      %2272 = vst [vmem:[#allocation3 + $0xb0] sm:$0xff] %v2251
      %2273 = vst [vmem:[#allocation3 + $0xb8] sm:$0xff] %v2252
      %v2274 = vld [vmem:[#allocation3] sm:$0xff]
      %v2275 = vld [vmem:[#allocation3 + $0x8] sm:$0xff]
      %v2276 = vld [vmem:[#allocation3 + $0x10] sm:$0xff]
      %v2277 = vld [vmem:[#allocation3 + $0x18] sm:$0xff]
      %v2278 = vld [vmem:[#allocation3 + $0x20] sm:$0xff]
      %v2279 = vld [vmem:[#allocation3 + $0x28] sm:$0xff]
      %v2280 = vld [vmem:[#allocation3 + $0x30] sm:$0xff]
      %v2281 = vld [vmem:[#allocation3 + $0x38] sm:$0xff]
      %v2282 = vld [vmem:[#allocation3 + $0x40] sm:$0xff]
      %v2283 = vld [vmem:[#allocation3 + $0x48] sm:$0xff]
      %v2284 = vld [vmem:[#allocation3 + $0x50] sm:$0xff]
      %v2285 = vld [vmem:[#allocation3 + $0x58] sm:$0xff]
      %v2286 = vld [vmem:[#allocation3 + $0x60] sm:$0xff]
      %v2287 = vld [vmem:[#allocation3 + $0x68] sm:$0xff]
      %v2288 = vld [vmem:[#allocation3 + $0x70] sm:$0xff]
      %v2289 = vld [vmem:[#allocation3 + $0x78] sm:$0xff]
      %v2290 = vld [vmem:[#allocation3 + $0x80] sm:$0xff]
      %v2291 = vld [vmem:[#allocation3 + $0x88] sm:$0xff]
      %v2292 = vld [vmem:[#allocation3 + $0x90] sm:$0xff]
      %v2293 = vld [vmem:[#allocation3 + $0x98] sm:$0xff]
      %v2294 = vld [vmem:[#allocation3 + $0xa0] sm:$0xff]
      %s2295 = scalar_lea.vmem %s2, 12
      %v2296 = vld [vmem:[%s2295] sm:$0xf]
      %v2298 = vsel %vm366, %v2296, 0
      %2300 = vmatpush.bf16.msra.mxu0 0
      %2301 = vmatpush.bf16.msra.mxu0 0
      %2302 = vmatpush.bf16.msra.mxu0 0
      %2303 = vmatpush.bf16.msra.mxu0 0
      %2304 = vmatpush.bf16.msra.mxu0 0
      %2305 = vmatpush.bf16.msra.mxu0 0
      %2306 = vmatpush.bf16.msra.mxu0 0
      %2307 = vmatpush.bf16.msra.mxu0 %v1535
      %2308 = vmatmul.bf16.gmra.mxu0 %v2298
      %v2309 = vpop.f32.mrf.mxu0
      %v2310 = vadd.f32 0.0, %v2309
      %v2311 = vpop.f32.mrf.mxu0
      %2312 = vdwg.mxu0
      %2313 = vmatpush.bf16.msra.mxu0 0
      %2314 = vmatpush.bf16.msra.mxu0 0
      %2315 = vmatpush.bf16.msra.mxu0 0
      %2316 = vmatpush.bf16.msra.mxu0 0
      %2317 = vmatpush.bf16.msra.mxu0 0
      %2318 = vmatpush.bf16.msra.mxu0 0
      %2319 = vmatpush.bf16.msra.mxu0 0
      %2320 = vmatpush.bf16.msra.mxu0 %v1538
      %2321 = vmatmul.bf16.gmra.mxu0 %v2298
      %v2322 = vpop.f32.mrf.mxu0
      %v2323 = vadd.f32 0.0, %v2322
      %v2324 = vpop.f32.mrf.mxu0
      %2325 = vdwg.mxu0
      %2326 = vmatpush.bf16.msra.mxu0 0
      %2327 = vmatpush.bf16.msra.mxu0 0
      %2328 = vmatpush.bf16.msra.mxu0 0
      %2329 = vmatpush.bf16.msra.mxu0 0
      %2330 = vmatpush.bf16.msra.mxu0 0
      %2331 = vmatpush.bf16.msra.mxu0 0
      %2332 = vmatpush.bf16.msra.mxu0 0
      %2333 = vmatpush.bf16.msra.mxu0 %v1541
      %2334 = vmatmul.bf16.gmra.mxu0 %v2298
      %v2335 = vpop.f32.mrf.mxu0
      %v2336 = vadd.f32 0.0, %v2335
      %v2337 = vpop.f32.mrf.mxu0
      %2338 = vdwg.mxu0
      %2339 = vmatpush.bf16.msra.mxu0 0
      %2340 = vmatpush.bf16.msra.mxu0 0
      %2341 = vmatpush.bf16.msra.mxu0 0
      %2342 = vmatpush.bf16.msra.mxu0 0
      %2343 = vmatpush.bf16.msra.mxu0 0
      %2344 = vmatpush.bf16.msra.mxu0 0
      %2345 = vmatpush.bf16.msra.mxu0 0
      %2346 = vmatpush.bf16.msra.mxu0 %v1544
      %2347 = vmatmul.bf16.gmra.mxu0 %v2298
      %v2348 = vpop.f32.mrf.mxu0
      %v2349 = vadd.f32 0.0, %v2348
      %v2350 = vpop.f32.mrf.mxu0
      %2351 = vdwg.mxu0
      %2352 = vmatpush.bf16.msra.mxu0 0
      %2353 = vmatpush.bf16.msra.mxu0 0
      %2354 = vmatpush.bf16.msra.mxu0 0
      %2355 = vmatpush.bf16.msra.mxu0 0
      %2356 = vmatpush.bf16.msra.mxu0 0
      %2357 = vmatpush.bf16.msra.mxu0 0
      %2358 = vmatpush.bf16.msra.mxu0 0
      %2359 = vmatpush.bf16.msra.mxu0 %v1547
      %2360 = vmatmul.bf16.gmra.mxu0 %v2298
      %v2361 = vpop.f32.mrf.mxu0
      %v2362 = vadd.f32 0.0, %v2361
      %v2363 = vpop.f32.mrf.mxu0
      %2364 = vdwg.mxu0
      %2365 = vmatpush.bf16.msra.mxu0 0
      %2366 = vmatpush.bf16.msra.mxu0 0
      %2367 = vmatpush.bf16.msra.mxu0 0
      %2368 = vmatpush.bf16.msra.mxu0 0
      %2369 = vmatpush.bf16.msra.mxu0 0
      %2370 = vmatpush.bf16.msra.mxu0 0
      %2371 = vmatpush.bf16.msra.mxu0 0
      %2372 = vmatpush.bf16.msra.mxu0 %v1550
      %2373 = vmatmul.bf16.gmra.mxu0 %v2298
      %v2374 = vpop.f32.mrf.mxu0
      %v2375 = vadd.f32 0.0, %v2374
      %v2376 = vpop.f32.mrf.mxu0
      %2377 = vdwg.mxu0
      %2378 = vmatpush.bf16.msra.mxu0 0
      %2379 = vmatpush.bf16.msra.mxu0 0
      %2380 = vmatpush.bf16.msra.mxu0 0
      %2381 = vmatpush.bf16.msra.mxu0 0
      %2382 = vmatpush.bf16.msra.mxu0 0
      %2383 = vmatpush.bf16.msra.mxu0 0
      %2384 = vmatpush.bf16.msra.mxu0 0
      %2385 = vmatpush.bf16.msra.mxu0 %v1553
      %2386 = vmatmul.bf16.gmra.mxu0 %v2298
      %v2387 = vpop.f32.mrf.mxu0
      %v2388 = vadd.f32 0.0, %v2387
      %v2389 = vpop.f32.mrf.mxu0
      %2390 = vdwg.mxu0
      %2391 = vmatpush.bf16.msra.mxu0 0
      %2392 = vmatpush.bf16.msra.mxu0 0
      %2393 = vmatpush.bf16.msra.mxu0 0
      %2394 = vmatpush.bf16.msra.mxu0 0
      %2395 = vmatpush.bf16.msra.mxu0 0
      %2396 = vmatpush.bf16.msra.mxu0 0
      %2397 = vmatpush.bf16.msra.mxu0 0
      %2398 = vmatpush.bf16.msra.mxu0 %v1556
      %2399 = vmatmul.bf16.gmra.mxu0 %v2298
      %v2400 = vpop.f32.mrf.mxu0
      %v2401 = vadd.f32 0.0, %v2400
      %v2402 = vpop.f32.mrf.mxu0
      %2403 = vdwg.mxu0
      %2404 = vmatpush.bf16.msra.mxu0 0
      %2405 = vmatpush.bf16.msra.mxu0 0
      %2406 = vmatpush.bf16.msra.mxu0 0
      %2407 = vmatpush.bf16.msra.mxu0 0
      %2408 = vmatpush.bf16.msra.mxu0 0
      %2409 = vmatpush.bf16.msra.mxu0 0
      %2410 = vmatpush.bf16.msra.mxu0 0
      %2411 = vmatpush.bf16.msra.mxu0 %v1559
      %2412 = vmatmul.bf16.gmra.mxu0 %v2298
      %v2413 = vpop.f32.mrf.mxu0
      %v2414 = vadd.f32 0.0, %v2413
      %v2415 = vpop.f32.mrf.mxu0
      %2416 = vdwg.mxu0
      %2417 = vmatpush.bf16.msra.mxu0 0
      %2418 = vmatpush.bf16.msra.mxu0 0
      %2419 = vmatpush.bf16.msra.mxu0 0
      %2420 = vmatpush.bf16.msra.mxu0 0
      %2421 = vmatpush.bf16.msra.mxu0 0
      %2422 = vmatpush.bf16.msra.mxu0 0
      %2423 = vmatpush.bf16.msra.mxu0 0
      %2424 = vmatpush.bf16.msra.mxu0 %v1562
      %2425 = vmatmul.bf16.gmra.mxu0 %v2298
      %v2426 = vpop.f32.mrf.mxu0
      %v2427 = vadd.f32 0.0, %v2426
      %v2428 = vpop.f32.mrf.mxu0
      %2429 = vdwg.mxu0
      %2430 = vmatpush.bf16.msra.mxu0 0
      %2431 = vmatpush.bf16.msra.mxu0 0
      %2432 = vmatpush.bf16.msra.mxu0 0
      %2433 = vmatpush.bf16.msra.mxu0 0
      %2434 = vmatpush.bf16.msra.mxu0 0
      %2435 = vmatpush.bf16.msra.mxu0 0
      %2436 = vmatpush.bf16.msra.mxu0 0
      %2437 = vmatpush.bf16.msra.mxu0 %v1565
      %2438 = vmatmul.bf16.gmra.mxu0 %v2298
      %v2439 = vpop.f32.mrf.mxu0
      %v2440 = vadd.f32 0.0, %v2439
      %v2441 = vpop.f32.mrf.mxu0
      %2442 = vdwg.mxu0
      %2443 = vmatpush.bf16.msra.mxu0 0
      %2444 = vmatpush.bf16.msra.mxu0 0
      %2445 = vmatpush.bf16.msra.mxu0 0
      %2446 = vmatpush.bf16.msra.mxu0 0
      %2447 = vmatpush.bf16.msra.mxu0 0
      %2448 = vmatpush.bf16.msra.mxu0 0
      %2449 = vmatpush.bf16.msra.mxu0 0
      %2450 = vmatpush.bf16.msra.mxu0 %v1568
      %2451 = vmatmul.bf16.gmra.mxu0 %v2298
      %v2452 = vpop.f32.mrf.mxu0
      %v2453 = vadd.f32 0.0, %v2452
      %v2454 = vpop.f32.mrf.mxu0
      %2455 = vdwg.mxu0
      %2456 = vmatpush.bf16.msra.mxu0 0
      %2457 = vmatpush.bf16.msra.mxu0 0
      %2458 = vmatpush.bf16.msra.mxu0 0
      %2459 = vmatpush.bf16.msra.mxu0 0
      %2460 = vmatpush.bf16.msra.mxu0 0
      %2461 = vmatpush.bf16.msra.mxu0 0
      %2462 = vmatpush.bf16.msra.mxu0 0
      %2463 = vmatpush.bf16.msra.mxu0 %v1571
      %2464 = vmatmul.bf16.gmra.mxu0 %v2298
      %v2465 = vpop.f32.mrf.mxu0
      %v2466 = vadd.f32 0.0, %v2465
      %v2467 = vpop.f32.mrf.mxu0
      %2468 = vdwg.mxu0
      %2469 = vmatpush.bf16.msra.mxu0 0
      %2470 = vmatpush.bf16.msra.mxu0 0
      %2471 = vmatpush.bf16.msra.mxu0 0
      %2472 = vmatpush.bf16.msra.mxu0 0
      %2473 = vmatpush.bf16.msra.mxu0 0
      %2474 = vmatpush.bf16.msra.mxu0 0
      %2475 = vmatpush.bf16.msra.mxu0 0
      %2476 = vmatpush.bf16.msra.mxu0 %v1574
      %2477 = vmatmul.bf16.gmra.mxu0 %v2298
      %v2478 = vpop.f32.mrf.mxu0
      %v2479 = vadd.f32 0.0, %v2478
      %v2480 = vpop.f32.mrf.mxu0
      %2481 = vdwg.mxu0
      %2482 = vmatpush.bf16.msra.mxu0 0
      %2483 = vmatpush.bf16.msra.mxu0 0
      %2484 = vmatpush.bf16.msra.mxu0 0
      %2485 = vmatpush.bf16.msra.mxu0 0
      %2486 = vmatpush.bf16.msra.mxu0 0
      %2487 = vmatpush.bf16.msra.mxu0 0
      %2488 = vmatpush.bf16.msra.mxu0 0
      %2489 = vmatpush.bf16.msra.mxu0 %v1577
      %2490 = vmatmul.bf16.gmra.mxu0 %v2298
      %v2491 = vpop.f32.mrf.mxu0
      %v2492 = vadd.f32 0.0, %v2491
      %v2493 = vpop.f32.mrf.mxu0
      %2494 = vdwg.mxu0
      %2495 = vmatpush.bf16.msra.mxu0 0
      %2496 = vmatpush.bf16.msra.mxu0 0
      %2497 = vmatpush.bf16.msra.mxu0 0
      %2498 = vmatpush.bf16.msra.mxu0 0
      %2499 = vmatpush.bf16.msra.mxu0 0
      %2500 = vmatpush.bf16.msra.mxu0 0
      %2501 = vmatpush.bf16.msra.mxu0 0
      %2502 = vmatpush.bf16.msra.mxu0 %v1580
      %2503 = vmatmul.bf16.gmra.mxu0 %v2298
      %v2504 = vpop.f32.mrf.mxu0
      %v2505 = vadd.f32 0.0, %v2504
      %v2506 = vpop.f32.mrf.mxu0
      %2507 = vdwg.mxu0
      %2508 = vmatpush.bf16.msra.mxu0 0
      %2509 = vmatpush.bf16.msra.mxu0 0
      %2510 = vmatpush.bf16.msra.mxu0 0
      %2511 = vmatpush.bf16.msra.mxu0 0
      %2512 = vmatpush.bf16.msra.mxu0 0
      %2513 = vmatpush.bf16.msra.mxu0 0
      %2514 = vmatpush.bf16.msra.mxu0 0
      %2515 = vmatpush.bf16.msra.mxu0 %v1583
      %2516 = vmatmul.bf16.gmra.mxu0 %v2298
      %v2517 = vpop.f32.mrf.mxu0
      %v2518 = vadd.f32 0.0, %v2517
      %v2519 = vpop.f32.mrf.mxu0
      %2520 = vdwg.mxu0
      %2521 = vmatpush.bf16.msra.mxu0 0
      %2522 = vmatpush.bf16.msra.mxu0 0
      %2523 = vmatpush.bf16.msra.mxu0 0
      %2524 = vmatpush.bf16.msra.mxu0 0
      %2525 = vmatpush.bf16.msra.mxu0 0
      %2526 = vmatpush.bf16.msra.mxu0 0
      %2527 = vmatpush.bf16.msra.mxu0 0
      %2528 = vmatpush.bf16.msra.mxu0 %v1586
      %2529 = vmatmul.bf16.gmra.mxu0 %v2298
      %v2530 = vpop.f32.mrf.mxu0
      %v2531 = vadd.f32 0.0, %v2530
      %v2532 = vpop.f32.mrf.mxu0
      %2533 = vdwg.mxu0
      %2534 = vmatpush.bf16.msra.mxu0 0
      %2535 = vmatpush.bf16.msra.mxu0 0
      %2536 = vmatpush.bf16.msra.mxu0 0
      %2537 = vmatpush.bf16.msra.mxu0 0
      %2538 = vmatpush.bf16.msra.mxu0 0
      %2539 = vmatpush.bf16.msra.mxu0 0
      %2540 = vmatpush.bf16.msra.mxu0 0
      %2541 = vmatpush.bf16.msra.mxu0 %v1589
      %2542 = vmatmul.bf16.gmra.mxu0 %v2298
      %v2543 = vpop.f32.mrf.mxu0
      %v2544 = vadd.f32 0.0, %v2543
      %v2545 = vpop.f32.mrf.mxu0
      %2546 = vdwg.mxu0
      %2547 = vmatpush.bf16.msra.mxu0 0
      %2548 = vmatpush.bf16.msra.mxu0 0
      %2549 = vmatpush.bf16.msra.mxu0 0
      %2550 = vmatpush.bf16.msra.mxu0 0
      %2551 = vmatpush.bf16.msra.mxu0 0
      %2552 = vmatpush.bf16.msra.mxu0 0
      %2553 = vmatpush.bf16.msra.mxu0 0
      %2554 = vmatpush.bf16.msra.mxu0 %v1592
      %2555 = vmatmul.bf16.gmra.mxu0 %v2298
      %v2556 = vpop.f32.mrf.mxu0
      %v2557 = vadd.f32 0.0, %v2556
      %v2558 = vpop.f32.mrf.mxu0
      %2559 = vdwg.mxu0
      %2560 = vmatpush.bf16.msra.mxu0 0
      %2561 = vmatpush.bf16.msra.mxu0 0
      %2562 = vmatpush.bf16.msra.mxu0 0
      %2563 = vmatpush.bf16.msra.mxu0 0
      %2564 = vmatpush.bf16.msra.mxu0 0
      %2565 = vmatpush.bf16.msra.mxu0 0
      %2566 = vmatpush.bf16.msra.mxu0 0
      %2567 = vmatpush.bf16.msra.mxu0 %v1595
      %2568 = vmatmul.bf16.gmra.mxu0 %v2298
      %v2569 = vpop.f32.mrf.mxu0
      %v2570 = vadd.f32 0.0, %v2569
      %v2571 = vpop.f32.mrf.mxu0
      %2572 = vdwg.mxu0
      %v2573 = vadd.f32 %v2274, %v2310
      %v2574 = vadd.f32 %v2275, %v2323
      %v2575 = vadd.f32 %v2276, %v2336
      %v2576 = vadd.f32 %v2277, %v2349
      %v2577 = vadd.f32 %v2278, %v2362
      %v2578 = vadd.f32 %v2279, %v2375
      %v2579 = vadd.f32 %v2280, %v2388
      %v2580 = vadd.f32 %v2281, %v2401
      %v2581 = vadd.f32 %v2282, %v2414
      %v2582 = vadd.f32 %v2283, %v2427
      %v2583 = vadd.f32 %v2284, %v2440
      %v2584 = vadd.f32 %v2285, %v2453
      %v2585 = vadd.f32 %v2286, %v2466
      %v2586 = vadd.f32 %v2287, %v2479
      %v2587 = vadd.f32 %v2288, %v2492
      %v2588 = vadd.f32 %v2289, %v2505
      %v2589 = vadd.f32 %v2290, %v2518
      %v2590 = vadd.f32 %v2291, %v2531
      %v2591 = vadd.f32 %v2292, %v2544
      %v2592 = vadd.f32 %v2293, %v2557
      %v2593 = vadd.f32 %v2294, %v2570
      %2594 = vst [vmem:[#allocation3] sm:$0xff] %v2573
      %2595 = vst [vmem:[#allocation3 + $0x8] sm:$0xff] %v2574
      %2596 = vst [vmem:[#allocation3 + $0x10] sm:$0xff] %v2575
      %2597 = vst [vmem:[#allocation3 + $0x18] sm:$0xff] %v2576
      %2598 = vst [vmem:[#allocation3 + $0x20] sm:$0xff] %v2577
      %2599 = vst [vmem:[#allocation3 + $0x28] sm:$0xff] %v2578
      %2600 = vst [vmem:[#allocation3 + $0x30] sm:$0xff] %v2579
      %2601 = vst [vmem:[#allocation3 + $0x38] sm:$0xff] %v2580
      %2602 = vst [vmem:[#allocation3 + $0x40] sm:$0xff] %v2581
      %2603 = vst [vmem:[#allocation3 + $0x48] sm:$0xff] %v2582
      %2604 = vst [vmem:[#allocation3 + $0x50] sm:$0xff] %v2583
      %2605 = vst [vmem:[#allocation3 + $0x58] sm:$0xff] %v2584
      %2606 = vst [vmem:[#allocation3 + $0x60] sm:$0xff] %v2585
      %2607 = vst [vmem:[#allocation3 + $0x68] sm:$0xff] %v2586
      %2608 = vst [vmem:[#allocation3 + $0x70] sm:$0xff] %v2587
      %2609 = vst [vmem:[#allocation3 + $0x78] sm:$0xff] %v2588
      %2610 = vst [vmem:[#allocation3 + $0x80] sm:$0xff] %v2589
      %2611 = vst [vmem:[#allocation3 + $0x88] sm:$0xff] %v2590
      %2612 = vst [vmem:[#allocation3 + $0x90] sm:$0xff] %v2591
      %2613 = vst [vmem:[#allocation3 + $0x98] sm:$0xff] %v2592
      %2614 = vst [vmem:[#allocation3 + $0xa0] sm:$0xff] %v2593
      %v2615 = vld [vmem:[#allocation3 + $0x30] sm:$0xff]
      %v2616 = vld [vmem:[#allocation3 + $0x38] sm:$0xff]
      %v2617 = vld [vmem:[#allocation3 + $0x40] sm:$0xff]
      %v2618 = vld [vmem:[#allocation3 + $0x48] sm:$0xff]
      %v2619 = vld [vmem:[#allocation3 + $0x50] sm:$0xff]
      %v2620 = vld [vmem:[#allocation3 + $0x58] sm:$0xff]
      %v2621 = vld [vmem:[#allocation3 + $0x60] sm:$0xff]
      %v2622 = vld [vmem:[#allocation3 + $0x68] sm:$0xff]
      %v2623 = vld [vmem:[#allocation3 + $0x70] sm:$0xff]
      %v2624 = vld [vmem:[#allocation3 + $0x78] sm:$0xff]
      %v2625 = vld [vmem:[#allocation3 + $0x80] sm:$0xff]
      %v2626 = vld [vmem:[#allocation3 + $0x88] sm:$0xff]
      %v2627 = vld [vmem:[#allocation3 + $0x90] sm:$0xff]
      %v2628 = vld [vmem:[#allocation3 + $0x98] sm:$0xff]
      %v2629 = vld [vmem:[#allocation3 + $0xa0] sm:$0xff]
      %v2630 = vld [vmem:[#allocation3 + $0xa8] sm:$0xff]
      %v2631 = vld [vmem:[#allocation3 + $0xb0] sm:$0xff]
      %v2632 = vld [vmem:[#allocation3 + $0xb8] sm:$0xff]
      %v2633 = vld [vmem:[%s2] sm:$0xf]
      %v2635 = vsel %vm366, %v2633, 0
      %2637 = vmatpush.bf16.msra.mxu0 0
      %2638 = vmatpush.bf16.msra.mxu0 0
      %2639 = vmatpush.bf16.msra.mxu0 0
      %2640 = vmatpush.bf16.msra.mxu0 0
      %2641 = vmatpush.bf16.msra.mxu0 0
      %2642 = vmatpush.bf16.msra.mxu0 0
      %2643 = vmatpush.bf16.msra.mxu0 0
      %2644 = vmatpush.bf16.msra.mxu0 %v1526
      %2645 = vmatmul.bf16.gmra.mxu0 %v2635
      %v2646 = vpop.f32.mrf.mxu0
      %v2647 = vadd.f32 0.0, %v2646
      %v2648 = vpop.f32.mrf.mxu0
      %2649 = vdwg.mxu0
      %2650 = vmatpush.bf16.msra.mxu0 0
      %2651 = vmatpush.bf16.msra.mxu0 0
      %2652 = vmatpush.bf16.msra.mxu0 0
      %2653 = vmatpush.bf16.msra.mxu0 0
      %2654 = vmatpush.bf16.msra.mxu0 0
      %2655 = vmatpush.bf16.msra.mxu0 0
      %2656 = vmatpush.bf16.msra.mxu0 0
      %2657 = vmatpush.bf16.msra.mxu0 %v1529
      %2658 = vmatmul.bf16.gmra.mxu0 %v2635
      %v2659 = vpop.f32.mrf.mxu0
      %v2660 = vadd.f32 0.0, %v2659
      %v2661 = vpop.f32.mrf.mxu0
      %2662 = vdwg.mxu0
      %2663 = vmatpush.bf16.msra.mxu0 0
      %2664 = vmatpush.bf16.msra.mxu0 0
      %2665 = vmatpush.bf16.msra.mxu0 0
      %2666 = vmatpush.bf16.msra.mxu0 0
      %2667 = vmatpush.bf16.msra.mxu0 0
      %2668 = vmatpush.bf16.msra.mxu0 0
      %2669 = vmatpush.bf16.msra.mxu0 0
      %2670 = vmatpush.bf16.msra.mxu0 %v1532
      %2671 = vmatmul.bf16.gmra.mxu0 %v2635
      %v2672 = vpop.f32.mrf.mxu0
      %v2673 = vadd.f32 0.0, %v2672
      %v2674 = vpop.f32.mrf.mxu0
      %2675 = vdwg.mxu0
      %2676 = vmatpush.bf16.msra.mxu0 0
      %2677 = vmatpush.bf16.msra.mxu0 0
      %2678 = vmatpush.bf16.msra.mxu0 0
      %2679 = vmatpush.bf16.msra.mxu0 0
      %2680 = vmatpush.bf16.msra.mxu0 0
      %2681 = vmatpush.bf16.msra.mxu0 0
      %2682 = vmatpush.bf16.msra.mxu0 0
      %2683 = vmatpush.bf16.msra.mxu0 %v1535
      %2684 = vmatmul.bf16.gmra.mxu0 %v2635
      %v2685 = vpop.f32.mrf.mxu0
      %v2686 = vadd.f32 0.0, %v2685
      %v2687 = vpop.f32.mrf.mxu0
      %2688 = vdwg.mxu0
      %2689 = vmatpush.bf16.msra.mxu0 0
      %2690 = vmatpush.bf16.msra.mxu0 0
      %2691 = vmatpush.bf16.msra.mxu0 0
      %2692 = vmatpush.bf16.msra.mxu0 0
      %2693 = vmatpush.bf16.msra.mxu0 0
      %2694 = vmatpush.bf16.msra.mxu0 0
      %2695 = vmatpush.bf16.msra.mxu0 0
      %2696 = vmatpush.bf16.msra.mxu0 %v1538
      %2697 = vmatmul.bf16.gmra.mxu0 %v2635
      %v2698 = vpop.f32.mrf.mxu0
      %v2699 = vadd.f32 0.0, %v2698
      %v2700 = vpop.f32.mrf.mxu0
      %2701 = vdwg.mxu0
      %2702 = vmatpush.bf16.msra.mxu0 0
      %2703 = vmatpush.bf16.msra.mxu0 0
      %2704 = vmatpush.bf16.msra.mxu0 0
      %2705 = vmatpush.bf16.msra.mxu0 0
      %2706 = vmatpush.bf16.msra.mxu0 0
      %2707 = vmatpush.bf16.msra.mxu0 0
      %2708 = vmatpush.bf16.msra.mxu0 0
      %2709 = vmatpush.bf16.msra.mxu0 %v1541
      %2710 = vmatmul.bf16.gmra.mxu0 %v2635
      %v2711 = vpop.f32.mrf.mxu0
      %v2712 = vadd.f32 0.0, %v2711
      %v2713 = vpop.f32.mrf.mxu0
      %2714 = vdwg.mxu0
      %2715 = vmatpush.bf16.msra.mxu0 0
      %2716 = vmatpush.bf16.msra.mxu0 0
      %2717 = vmatpush.bf16.msra.mxu0 0
      %2718 = vmatpush.bf16.msra.mxu0 0
      %2719 = vmatpush.bf16.msra.mxu0 0
      %2720 = vmatpush.bf16.msra.mxu0 0
      %2721 = vmatpush.bf16.msra.mxu0 0
      %2722 = vmatpush.bf16.msra.mxu0 %v1544
      %2723 = vmatmul.bf16.gmra.mxu0 %v2635
      %v2724 = vpop.f32.mrf.mxu0
      %v2725 = vadd.f32 0.0, %v2724
      %v2726 = vpop.f32.mrf.mxu0
      %2727 = vdwg.mxu0
      %2728 = vmatpush.bf16.msra.mxu0 0
      %2729 = vmatpush.bf16.msra.mxu0 0
      %2730 = vmatpush.bf16.msra.mxu0 0
      %2731 = vmatpush.bf16.msra.mxu0 0
      %2732 = vmatpush.bf16.msra.mxu0 0
      %2733 = vmatpush.bf16.msra.mxu0 0
      %2734 = vmatpush.bf16.msra.mxu0 0
      %2735 = vmatpush.bf16.msra.mxu0 %v1547
      %2736 = vmatmul.bf16.gmra.mxu0 %v2635
      %v2737 = vpop.f32.mrf.mxu0
      %v2738 = vadd.f32 0.0, %v2737
      %v2739 = vpop.f32.mrf.mxu0
      %2740 = vdwg.mxu0
      %2741 = vmatpush.bf16.msra.mxu0 0
      %2742 = vmatpush.bf16.msra.mxu0 0
      %2743 = vmatpush.bf16.msra.mxu0 0
      %2744 = vmatpush.bf16.msra.mxu0 0
      %2745 = vmatpush.bf16.msra.mxu0 0
      %2746 = vmatpush.bf16.msra.mxu0 0
      %2747 = vmatpush.bf16.msra.mxu0 0
      %2748 = vmatpush.bf16.msra.mxu0 %v1550
      %2749 = vmatmul.bf16.gmra.mxu0 %v2635
      %v2750 = vpop.f32.mrf.mxu0
      %v2751 = vadd.f32 0.0, %v2750
      %v2752 = vpop.f32.mrf.mxu0
      %2753 = vdwg.mxu0
      %2754 = vmatpush.bf16.msra.mxu0 0
      %2755 = vmatpush.bf16.msra.mxu0 0
      %2756 = vmatpush.bf16.msra.mxu0 0
      %2757 = vmatpush.bf16.msra.mxu0 0
      %2758 = vmatpush.bf16.msra.mxu0 0
      %2759 = vmatpush.bf16.msra.mxu0 0
      %2760 = vmatpush.bf16.msra.mxu0 0
      %2761 = vmatpush.bf16.msra.mxu0 %v1553
      %2762 = vmatmul.bf16.gmra.mxu0 %v2635
      %v2763 = vpop.f32.mrf.mxu0
      %v2764 = vadd.f32 0.0, %v2763
      %v2765 = vpop.f32.mrf.mxu0
      %2766 = vdwg.mxu0
      %2767 = vmatpush.bf16.msra.mxu0 0
      %2768 = vmatpush.bf16.msra.mxu0 0
      %2769 = vmatpush.bf16.msra.mxu0 0
      %2770 = vmatpush.bf16.msra.mxu0 0
      %2771 = vmatpush.bf16.msra.mxu0 0
      %2772 = vmatpush.bf16.msra.mxu0 0
      %2773 = vmatpush.bf16.msra.mxu0 0
      %2774 = vmatpush.bf16.msra.mxu0 %v1556
      %2775 = vmatmul.bf16.gmra.mxu0 %v2635
      %v2776 = vpop.f32.mrf.mxu0
      %v2777 = vadd.f32 0.0, %v2776
      %v2778 = vpop.f32.mrf.mxu0
      %2779 = vdwg.mxu0
      %2780 = vmatpush.bf16.msra.mxu0 0
      %2781 = vmatpush.bf16.msra.mxu0 0
      %2782 = vmatpush.bf16.msra.mxu0 0
      %2783 = vmatpush.bf16.msra.mxu0 0
      %2784 = vmatpush.bf16.msra.mxu0 0
      %2785 = vmatpush.bf16.msra.mxu0 0
      %2786 = vmatpush.bf16.msra.mxu0 0
      %2787 = vmatpush.bf16.msra.mxu0 %v1559
      %2788 = vmatmul.bf16.gmra.mxu0 %v2635
      %v2789 = vpop.f32.mrf.mxu0
      %v2790 = vadd.f32 0.0, %v2789
      %v2791 = vpop.f32.mrf.mxu0
      %2792 = vdwg.mxu0
      %2793 = vmatpush.bf16.msra.mxu0 0
      %2794 = vmatpush.bf16.msra.mxu0 0
      %2795 = vmatpush.bf16.msra.mxu0 0
      %2796 = vmatpush.bf16.msra.mxu0 0
      %2797 = vmatpush.bf16.msra.mxu0 0
      %2798 = vmatpush.bf16.msra.mxu0 0
      %2799 = vmatpush.bf16.msra.mxu0 0
      %2800 = vmatpush.bf16.msra.mxu0 %v1562
      %2801 = vmatmul.bf16.gmra.mxu0 %v2635
      %v2802 = vpop.f32.mrf.mxu0
      %v2803 = vadd.f32 0.0, %v2802
      %v2804 = vpop.f32.mrf.mxu0
      %2805 = vdwg.mxu0
      %2806 = vmatpush.bf16.msra.mxu0 0
      %2807 = vmatpush.bf16.msra.mxu0 0
      %2808 = vmatpush.bf16.msra.mxu0 0
      %2809 = vmatpush.bf16.msra.mxu0 0
      %2810 = vmatpush.bf16.msra.mxu0 0
      %2811 = vmatpush.bf16.msra.mxu0 0
      %2812 = vmatpush.bf16.msra.mxu0 0
      %2813 = vmatpush.bf16.msra.mxu0 %v1565
      %2814 = vmatmul.bf16.gmra.mxu0 %v2635
      %v2815 = vpop.f32.mrf.mxu0
      %v2816 = vadd.f32 0.0, %v2815
      %v2817 = vpop.f32.mrf.mxu0
      %2818 = vdwg.mxu0
      %2819 = vmatpush.bf16.msra.mxu0 0
      %2820 = vmatpush.bf16.msra.mxu0 0
      %2821 = vmatpush.bf16.msra.mxu0 0
      %2822 = vmatpush.bf16.msra.mxu0 0
      %2823 = vmatpush.bf16.msra.mxu0 0
      %2824 = vmatpush.bf16.msra.mxu0 0
      %2825 = vmatpush.bf16.msra.mxu0 0
      %2826 = vmatpush.bf16.msra.mxu0 %v1568
      %2827 = vmatmul.bf16.gmra.mxu0 %v2635
      %v2828 = vpop.f32.mrf.mxu0
      %v2829 = vadd.f32 0.0, %v2828
      %v2830 = vpop.f32.mrf.mxu0
      %2831 = vdwg.mxu0
      %2832 = vmatpush.bf16.msra.mxu0 0
      %2833 = vmatpush.bf16.msra.mxu0 0
      %2834 = vmatpush.bf16.msra.mxu0 0
      %2835 = vmatpush.bf16.msra.mxu0 0
      %2836 = vmatpush.bf16.msra.mxu0 0
      %2837 = vmatpush.bf16.msra.mxu0 0
      %2838 = vmatpush.bf16.msra.mxu0 0
      %2839 = vmatpush.bf16.msra.mxu0 %v1571
      %2840 = vmatmul.bf16.gmra.mxu0 %v2635
      %v2841 = vpop.f32.mrf.mxu0
      %v2842 = vadd.f32 0.0, %v2841
      %v2843 = vpop.f32.mrf.mxu0
      %2844 = vdwg.mxu0
      %2845 = vmatpush.bf16.msra.mxu0 0
      %2846 = vmatpush.bf16.msra.mxu0 0
      %2847 = vmatpush.bf16.msra.mxu0 0
      %2848 = vmatpush.bf16.msra.mxu0 0
      %2849 = vmatpush.bf16.msra.mxu0 0
      %2850 = vmatpush.bf16.msra.mxu0 0
      %2851 = vmatpush.bf16.msra.mxu0 0
      %2852 = vmatpush.bf16.msra.mxu0 %v1574
      %2853 = vmatmul.bf16.gmra.mxu0 %v2635
      %v2854 = vpop.f32.mrf.mxu0
      %v2855 = vadd.f32 0.0, %v2854
      %v2856 = vpop.f32.mrf.mxu0
      %2857 = vdwg.mxu0
      %2858 = vmatpush.bf16.msra.mxu0 0
      %2859 = vmatpush.bf16.msra.mxu0 0
      %2860 = vmatpush.bf16.msra.mxu0 0
      %2861 = vmatpush.bf16.msra.mxu0 0
      %2862 = vmatpush.bf16.msra.mxu0 0
      %2863 = vmatpush.bf16.msra.mxu0 0
      %2864 = vmatpush.bf16.msra.mxu0 0
      %2865 = vmatpush.bf16.msra.mxu0 %v1577
      %2866 = vmatmul.bf16.gmra.mxu0 %v2635
      %v2867 = vpop.f32.mrf.mxu0
      %v2868 = vadd.f32 0.0, %v2867
      %v2869 = vpop.f32.mrf.mxu0
      %2870 = vdwg.mxu0
      %v2871 = vadd.f32 %v2615, %v2647
      %v2872 = vadd.f32 %v2616, %v2660
      %v2873 = vadd.f32 %v2617, %v2673
      %v2874 = vadd.f32 %v2618, %v2686
      %v2875 = vadd.f32 %v2619, %v2699
      %v2876 = vadd.f32 %v2620, %v2712
      %v2877 = vadd.f32 %v2621, %v2725
      %v2878 = vadd.f32 %v2622, %v2738
      %v2879 = vadd.f32 %v2623, %v2751
      %v2880 = vadd.f32 %v2624, %v2764
      %v2881 = vadd.f32 %v2625, %v2777
      %v2882 = vadd.f32 %v2626, %v2790
      %v2883 = vadd.f32 %v2627, %v2803
      %v2884 = vadd.f32 %v2628, %v2816
      %v2885 = vadd.f32 %v2629, %v2829
      %v2886 = vadd.f32 %v2630, %v2842
      %v2887 = vadd.f32 %v2631, %v2855
      %v2888 = vadd.f32 %v2632, %v2868
      %2889 = vst [vmem:[#allocation3 + $0x30] sm:$0xff] %v2871
      %2890 = vst [vmem:[#allocation3 + $0x38] sm:$0xff] %v2872
      %2891 = vst [vmem:[#allocation3 + $0x40] sm:$0xff] %v2873
      %2892 = vst [vmem:[#allocation3 + $0x48] sm:$0xff] %v2874
      %2893 = vst [vmem:[#allocation3 + $0x50] sm:$0xff] %v2875
      %2894 = vst [vmem:[#allocation3 + $0x58] sm:$0xff] %v2876
      %2895 = vst [vmem:[#allocation3 + $0x60] sm:$0xff] %v2877
      %2896 = vst [vmem:[#allocation3 + $0x68] sm:$0xff] %v2878
      %2897 = vst [vmem:[#allocation3 + $0x70] sm:$0xff] %v2879
      %2898 = vst [vmem:[#allocation3 + $0x78] sm:$0xff] %v2880
      %2899 = vst [vmem:[#allocation3 + $0x80] sm:$0xff] %v2881
      %2900 = vst [vmem:[#allocation3 + $0x88] sm:$0xff] %v2882
      %2901 = vst [vmem:[#allocation3 + $0x90] sm:$0xff] %v2883
      %2902 = vst [vmem:[#allocation3 + $0x98] sm:$0xff] %v2884
      %2903 = vst [vmem:[#allocation3 + $0xa0] sm:$0xff] %v2885
      %2904 = vst [vmem:[#allocation3 + $0xa8] sm:$0xff] %v2886
      %2905 = vst [vmem:[#allocation3 + $0xb0] sm:$0xff] %v2887
      %2906 = vst [vmem:[#allocation3 + $0xb8] sm:$0xff] %v2888
      %v2907 = vld [vmem:[#allocation3] sm:$0xff]
      %v2908 = vld [vmem:[#allocation3 + $0x8] sm:$0xff]
      %v2909 = vld [vmem:[#allocation3 + $0x10] sm:$0xff]
      %v2910 = vld [vmem:[#allocation3 + $0x18] sm:$0xff]
      %v2911 = vld [vmem:[#allocation3 + $0x20] sm:$0xff]
      %v2912 = vld [vmem:[#allocation3 + $0x28] sm:$0xff]
      %v2913 = vld [vmem:[#allocation3 + $0x30] sm:$0xff]
      %v2914 = vld [vmem:[#allocation3 + $0x38] sm:$0xff]
      %v2915 = vld [vmem:[#allocation3 + $0x40] sm:$0xff]
      %v2916 = vld [vmem:[#allocation3 + $0x48] sm:$0xff]
      %v2917 = vld [vmem:[#allocation3 + $0x50] sm:$0xff]
      %v2918 = vld [vmem:[#allocation3 + $0x58] sm:$0xff]
      %v2919 = vld [vmem:[#allocation3 + $0x60] sm:$0xff]
      %v2920 = vld [vmem:[#allocation3 + $0x68] sm:$0xff]
      %v2921 = vld [vmem:[#allocation3 + $0x70] sm:$0xff]
      %v2922 = vld [vmem:[#allocation3 + $0x78] sm:$0xff]
      %v2923 = vld [vmem:[#allocation3 + $0x80] sm:$0xff]
      %v2924 = vld [vmem:[#allocation3 + $0x88] sm:$0xff]
      %s2925 = scalar_lea.vmem %s2, 16
      %v2926 = vld [vmem:[%s2925] sm:$0xf]
      %v2928 = vsel %vm366, %v2926, 0
      %2930 = vmatpush.bf16.msra.mxu0 0
      %2931 = vmatpush.bf16.msra.mxu0 0
      %2932 = vmatpush.bf16.msra.mxu0 0
      %2933 = vmatpush.bf16.msra.mxu0 0
      %2934 = vmatpush.bf16.msra.mxu0 0
      %2935 = vmatpush.bf16.msra.mxu0 0
      %2936 = vmatpush.bf16.msra.mxu0 0
      %2937 = vmatpush.bf16.msra.mxu0 %v1544
      %2938 = vmatmul.bf16.gmra.mxu0 %v2928
      %v2939 = vpop.f32.mrf.mxu0
      %v2940 = vadd.f32 0.0, %v2939
      %v2941 = vpop.f32.mrf.mxu0
      %2942 = vdwg.mxu0
      %2943 = vmatpush.bf16.msra.mxu0 0
      %2944 = vmatpush.bf16.msra.mxu0 0
      %2945 = vmatpush.bf16.msra.mxu0 0
      %2946 = vmatpush.bf16.msra.mxu0 0
      %2947 = vmatpush.bf16.msra.mxu0 0
      %2948 = vmatpush.bf16.msra.mxu0 0
      %2949 = vmatpush.bf16.msra.mxu0 0
      %2950 = vmatpush.bf16.msra.mxu0 %v1547
      %2951 = vmatmul.bf16.gmra.mxu0 %v2928
      %v2952 = vpop.f32.mrf.mxu0
      %v2953 = vadd.f32 0.0, %v2952
      %v2954 = vpop.f32.mrf.mxu0
      %2955 = vdwg.mxu0
      %2956 = vmatpush.bf16.msra.mxu0 0
      %2957 = vmatpush.bf16.msra.mxu0 0
      %2958 = vmatpush.bf16.msra.mxu0 0
      %2959 = vmatpush.bf16.msra.mxu0 0
      %2960 = vmatpush.bf16.msra.mxu0 0
      %2961 = vmatpush.bf16.msra.mxu0 0
      %2962 = vmatpush.bf16.msra.mxu0 0
      %2963 = vmatpush.bf16.msra.mxu0 %v1550
      %2964 = vmatmul.bf16.gmra.mxu0 %v2928
      %v2965 = vpop.f32.mrf.mxu0
      %v2966 = vadd.f32 0.0, %v2965
      %v2967 = vpop.f32.mrf.mxu0
      %2968 = vdwg.mxu0
      %2969 = vmatpush.bf16.msra.mxu0 0
      %2970 = vmatpush.bf16.msra.mxu0 0
      %2971 = vmatpush.bf16.msra.mxu0 0
      %2972 = vmatpush.bf16.msra.mxu0 0
      %2973 = vmatpush.bf16.msra.mxu0 0
      %2974 = vmatpush.bf16.msra.mxu0 0
      %2975 = vmatpush.bf16.msra.mxu0 0
      %2976 = vmatpush.bf16.msra.mxu0 %v1553
      %2977 = vmatmul.bf16.gmra.mxu0 %v2928
      %v2978 = vpop.f32.mrf.mxu0
      %v2979 = vadd.f32 0.0, %v2978
      %v2980 = vpop.f32.mrf.mxu0
      %2981 = vdwg.mxu0
      %2982 = vmatpush.bf16.msra.mxu0 0
      %2983 = vmatpush.bf16.msra.mxu0 0
      %2984 = vmatpush.bf16.msra.mxu0 0
      %2985 = vmatpush.bf16.msra.mxu0 0
      %2986 = vmatpush.bf16.msra.mxu0 0
      %2987 = vmatpush.bf16.msra.mxu0 0
      %2988 = vmatpush.bf16.msra.mxu0 0
      %2989 = vmatpush.bf16.msra.mxu0 %v1556
      %2990 = vmatmul.bf16.gmra.mxu0 %v2928
      %v2991 = vpop.f32.mrf.mxu0
      %v2992 = vadd.f32 0.0, %v2991
      %v2993 = vpop.f32.mrf.mxu0
      %2994 = vdwg.mxu0
      %2995 = vmatpush.bf16.msra.mxu0 0
      %2996 = vmatpush.bf16.msra.mxu0 0
      %2997 = vmatpush.bf16.msra.mxu0 0
      %2998 = vmatpush.bf16.msra.mxu0 0
      %2999 = vmatpush.bf16.msra.mxu0 0
      %3000 = vmatpush.bf16.msra.mxu0 0
      %3001 = vmatpush.bf16.msra.mxu0 0
      %3002 = vmatpush.bf16.msra.mxu0 %v1559
      %3003 = vmatmul.bf16.gmra.mxu0 %v2928
      %v3004 = vpop.f32.mrf.mxu0
      %v3005 = vadd.f32 0.0, %v3004
      %v3006 = vpop.f32.mrf.mxu0
      %3007 = vdwg.mxu0
      %3008 = vmatpush.bf16.msra.mxu0 0
      %3009 = vmatpush.bf16.msra.mxu0 0
      %3010 = vmatpush.bf16.msra.mxu0 0
      %3011 = vmatpush.bf16.msra.mxu0 0
      %3012 = vmatpush.bf16.msra.mxu0 0
      %3013 = vmatpush.bf16.msra.mxu0 0
      %3014 = vmatpush.bf16.msra.mxu0 0
      %3015 = vmatpush.bf16.msra.mxu0 %v1562
      %3016 = vmatmul.bf16.gmra.mxu0 %v2928
      %v3017 = vpop.f32.mrf.mxu0
      %v3018 = vadd.f32 0.0, %v3017
      %v3019 = vpop.f32.mrf.mxu0
      %3020 = vdwg.mxu0
      %3021 = vmatpush.bf16.msra.mxu0 0
      %3022 = vmatpush.bf16.msra.mxu0 0
      %3023 = vmatpush.bf16.msra.mxu0 0
      %3024 = vmatpush.bf16.msra.mxu0 0
      %3025 = vmatpush.bf16.msra.mxu0 0
      %3026 = vmatpush.bf16.msra.mxu0 0
      %3027 = vmatpush.bf16.msra.mxu0 0
      %3028 = vmatpush.bf16.msra.mxu0 %v1565
      %3029 = vmatmul.bf16.gmra.mxu0 %v2928
      %v3030 = vpop.f32.mrf.mxu0
      %v3031 = vadd.f32 0.0, %v3030
      %v3032 = vpop.f32.mrf.mxu0
      %3033 = vdwg.mxu0
      %3034 = vmatpush.bf16.msra.mxu0 0
      %3035 = vmatpush.bf16.msra.mxu0 0
      %3036 = vmatpush.bf16.msra.mxu0 0
      %3037 = vmatpush.bf16.msra.mxu0 0
      %3038 = vmatpush.bf16.msra.mxu0 0
      %3039 = vmatpush.bf16.msra.mxu0 0
      %3040 = vmatpush.bf16.msra.mxu0 0
      %3041 = vmatpush.bf16.msra.mxu0 %v1568
      %3042 = vmatmul.bf16.gmra.mxu0 %v2928
      %v3043 = vpop.f32.mrf.mxu0
      %v3044 = vadd.f32 0.0, %v3043
      %v3045 = vpop.f32.mrf.mxu0
      %3046 = vdwg.mxu0
      %3047 = vmatpush.bf16.msra.mxu0 0
      %3048 = vmatpush.bf16.msra.mxu0 0
      %3049 = vmatpush.bf16.msra.mxu0 0
      %3050 = vmatpush.bf16.msra.mxu0 0
      %3051 = vmatpush.bf16.msra.mxu0 0
      %3052 = vmatpush.bf16.msra.mxu0 0
      %3053 = vmatpush.bf16.msra.mxu0 0
      %3054 = vmatpush.bf16.msra.mxu0 %v1571
      %3055 = vmatmul.bf16.gmra.mxu0 %v2928
      %v3056 = vpop.f32.mrf.mxu0
      %v3057 = vadd.f32 0.0, %v3056
      %v3058 = vpop.f32.mrf.mxu0
      %3059 = vdwg.mxu0
      %3060 = vmatpush.bf16.msra.mxu0 0
      %3061 = vmatpush.bf16.msra.mxu0 0
      %3062 = vmatpush.bf16.msra.mxu0 0
      %3063 = vmatpush.bf16.msra.mxu0 0
      %3064 = vmatpush.bf16.msra.mxu0 0
      %3065 = vmatpush.bf16.msra.mxu0 0
      %3066 = vmatpush.bf16.msra.mxu0 0
      %3067 = vmatpush.bf16.msra.mxu0 %v1574
      %3068 = vmatmul.bf16.gmra.mxu0 %v2928
      %v3069 = vpop.f32.mrf.mxu0
      %v3070 = vadd.f32 0.0, %v3069
      %v3071 = vpop.f32.mrf.mxu0
      %3072 = vdwg.mxu0
      %3073 = vmatpush.bf16.msra.mxu0 0
      %3074 = vmatpush.bf16.msra.mxu0 0
      %3075 = vmatpush.bf16.msra.mxu0 0
      %3076 = vmatpush.bf16.msra.mxu0 0
      %3077 = vmatpush.bf16.msra.mxu0 0
      %3078 = vmatpush.bf16.msra.mxu0 0
      %3079 = vmatpush.bf16.msra.mxu0 0
      %3080 = vmatpush.bf16.msra.mxu0 %v1577
      %3081 = vmatmul.bf16.gmra.mxu0 %v2928
      %v3082 = vpop.f32.mrf.mxu0
      %v3083 = vadd.f32 0.0, %v3082
      %v3084 = vpop.f32.mrf.mxu0
      %3085 = vdwg.mxu0
      %3086 = vmatpush.bf16.msra.mxu0 0
      %3087 = vmatpush.bf16.msra.mxu0 0
      %3088 = vmatpush.bf16.msra.mxu0 0
      %3089 = vmatpush.bf16.msra.mxu0 0
      %3090 = vmatpush.bf16.msra.mxu0 0
      %3091 = vmatpush.bf16.msra.mxu0 0
      %3092 = vmatpush.bf16.msra.mxu0 0
      %3093 = vmatpush.bf16.msra.mxu0 %v1580
      %3094 = vmatmul.bf16.gmra.mxu0 %v2928
      %v3095 = vpop.f32.mrf.mxu0
      %v3096 = vadd.f32 0.0, %v3095
      %v3097 = vpop.f32.mrf.mxu0
      %3098 = vdwg.mxu0
      %3099 = vmatpush.bf16.msra.mxu0 0
      %3100 = vmatpush.bf16.msra.mxu0 0
      %3101 = vmatpush.bf16.msra.mxu0 0
      %3102 = vmatpush.bf16.msra.mxu0 0
      %3103 = vmatpush.bf16.msra.mxu0 0
      %3104 = vmatpush.bf16.msra.mxu0 0
      %3105 = vmatpush.bf16.msra.mxu0 0
      %3106 = vmatpush.bf16.msra.mxu0 %v1583
      %3107 = vmatmul.bf16.gmra.mxu0 %v2928
      %v3108 = vpop.f32.mrf.mxu0
      %v3109 = vadd.f32 0.0, %v3108
      %v3110 = vpop.f32.mrf.mxu0
      %3111 = vdwg.mxu0
      %3112 = vmatpush.bf16.msra.mxu0 0
      %3113 = vmatpush.bf16.msra.mxu0 0
      %3114 = vmatpush.bf16.msra.mxu0 0
      %3115 = vmatpush.bf16.msra.mxu0 0
      %3116 = vmatpush.bf16.msra.mxu0 0
      %3117 = vmatpush.bf16.msra.mxu0 0
      %3118 = vmatpush.bf16.msra.mxu0 0
      %3119 = vmatpush.bf16.msra.mxu0 %v1586
      %3120 = vmatmul.bf16.gmra.mxu0 %v2928
      %v3121 = vpop.f32.mrf.mxu0
      %v3122 = vadd.f32 0.0, %v3121
      %v3123 = vpop.f32.mrf.mxu0
      %3124 = vdwg.mxu0
      %3125 = vmatpush.bf16.msra.mxu0 0
      %3126 = vmatpush.bf16.msra.mxu0 0
      %3127 = vmatpush.bf16.msra.mxu0 0
      %3128 = vmatpush.bf16.msra.mxu0 0
      %3129 = vmatpush.bf16.msra.mxu0 0
      %3130 = vmatpush.bf16.msra.mxu0 0
      %3131 = vmatpush.bf16.msra.mxu0 0
      %3132 = vmatpush.bf16.msra.mxu0 %v1589
      %3133 = vmatmul.bf16.gmra.mxu0 %v2928
      %v3134 = vpop.f32.mrf.mxu0
      %v3135 = vadd.f32 0.0, %v3134
      %v3136 = vpop.f32.mrf.mxu0
      %3137 = vdwg.mxu0
      %3138 = vmatpush.bf16.msra.mxu0 0
      %3139 = vmatpush.bf16.msra.mxu0 0
      %3140 = vmatpush.bf16.msra.mxu0 0
      %3141 = vmatpush.bf16.msra.mxu0 0
      %3142 = vmatpush.bf16.msra.mxu0 0
      %3143 = vmatpush.bf16.msra.mxu0 0
      %3144 = vmatpush.bf16.msra.mxu0 0
      %3145 = vmatpush.bf16.msra.mxu0 %v1592
      %3146 = vmatmul.bf16.gmra.mxu0 %v2928
      %v3147 = vpop.f32.mrf.mxu0
      %v3148 = vadd.f32 0.0, %v3147
      %v3149 = vpop.f32.mrf.mxu0
      %3150 = vdwg.mxu0
      %3151 = vmatpush.bf16.msra.mxu0 0
      %3152 = vmatpush.bf16.msra.mxu0 0
      %3153 = vmatpush.bf16.msra.mxu0 0
      %3154 = vmatpush.bf16.msra.mxu0 0
      %3155 = vmatpush.bf16.msra.mxu0 0
      %3156 = vmatpush.bf16.msra.mxu0 0
      %3157 = vmatpush.bf16.msra.mxu0 0
      %3158 = vmatpush.bf16.msra.mxu0 %v1595
      %3159 = vmatmul.bf16.gmra.mxu0 %v2928
      %v3160 = vpop.f32.mrf.mxu0
      %v3161 = vadd.f32 0.0, %v3160
      %v3162 = vpop.f32.mrf.mxu0
      %3163 = vdwg.mxu0
      %v3164 = vadd.f32 %v2907, %v2940
      %v3165 = vadd.f32 %v2908, %v2953
      %v3166 = vadd.f32 %v2909, %v2966
      %v3167 = vadd.f32 %v2910, %v2979
      %v3168 = vadd.f32 %v2911, %v2992
      %v3169 = vadd.f32 %v2912, %v3005
      %v3170 = vadd.f32 %v2913, %v3018
      %v3171 = vadd.f32 %v2914, %v3031
      %v3172 = vadd.f32 %v2915, %v3044
      %v3173 = vadd.f32 %v2916, %v3057
      %v3174 = vadd.f32 %v2917, %v3070
      %v3175 = vadd.f32 %v2918, %v3083
      %v3176 = vadd.f32 %v2919, %v3096
      %v3177 = vadd.f32 %v2920, %v3109
      %v3178 = vadd.f32 %v2921, %v3122
      %v3179 = vadd.f32 %v2922, %v3135
      %v3180 = vadd.f32 %v2923, %v3148
      %v3181 = vadd.f32 %v2924, %v3161
      %3182 = vst [vmem:[#allocation3] sm:$0xff] %v3164
      %3183 = vst [vmem:[#allocation3 + $0x8] sm:$0xff] %v3165
      %3184 = vst [vmem:[#allocation3 + $0x10] sm:$0xff] %v3166
      %3185 = vst [vmem:[#allocation3 + $0x18] sm:$0xff] %v3167
      %3186 = vst [vmem:[#allocation3 + $0x20] sm:$0xff] %v3168
      %3187 = vst [vmem:[#allocation3 + $0x28] sm:$0xff] %v3169
      %3188 = vst [vmem:[#allocation3 + $0x30] sm:$0xff] %v3170
      %3189 = vst [vmem:[#allocation3 + $0x38] sm:$0xff] %v3171
      %3190 = vst [vmem:[#allocation3 + $0x40] sm:$0xff] %v3172
      %3191 = vst [vmem:[#allocation3 + $0x48] sm:$0xff] %v3173
      %3192 = vst [vmem:[#allocation3 + $0x50] sm:$0xff] %v3174
      %3193 = vst [vmem:[#allocation3 + $0x58] sm:$0xff] %v3175
      %3194 = vst [vmem:[#allocation3 + $0x60] sm:$0xff] %v3176
      %3195 = vst [vmem:[#allocation3 + $0x68] sm:$0xff] %v3177
      %3196 = vst [vmem:[#allocation3 + $0x70] sm:$0xff] %v3178
      %3197 = vst [vmem:[#allocation3 + $0x78] sm:$0xff] %v3179
      %3198 = vst [vmem:[#allocation3 + $0x80] sm:$0xff] %v3180
      %3199 = vst [vmem:[#allocation3 + $0x88] sm:$0xff] %v3181
      %v3200 = vld [vmem:[#allocation2] sm:$0xff]
      %v3201 = vld [vmem:[#allocation2 + $0x8] sm:$0xff]
      %v3202 = vld [vmem:[#allocation2 + $0x10] sm:$0xff]
      %v3203 = vld [vmem:[#allocation2 + $0x18] sm:$0xff]
      %v3204 = vld [vmem:[#allocation2 + $0x20] sm:$0xff]
      %v3205 = vld [vmem:[#allocation2 + $0x28] sm:$0xff]
      %v3206 = vld [vmem:[#allocation2 + $0x30] sm:$0xff]
      %v3207 = vld [vmem:[#allocation2 + $0x38] sm:$0xff]
      %v3208 = vld [vmem:[#allocation2 + $0x40] sm:$0xff]
      %v3209 = vld [vmem:[#allocation2 + $0x48] sm:$0xff]
      %v3210 = vld [vmem:[#allocation2 + $0x50] sm:$0xff]
      %v3211 = vld [vmem:[#allocation2 + $0x58] sm:$0xff]
      %v3212 = vld [vmem:[#allocation2 + $0x60] sm:$0xff]
      %v3213 = vld [vmem:[#allocation2 + $0x68] sm:$0xff]
      %v3214 = vld [vmem:[#allocation2 + $0x70] sm:$0xff]
      %v3215 = vld [vmem:[#allocation2 + $0x78] sm:$0xff]
      %v3216 = vld [vmem:[#allocation2 + $0x80] sm:$0xff]
      %v3217 = vld [vmem:[#allocation2 + $0x88] sm:$0xff]
      %v3218 = vld [vmem:[#allocation2 + $0x90] sm:$0xff]
      %v3219 = vld [vmem:[#allocation2 + $0x98] sm:$0xff]
      %v3220 = vld [vmem:[#allocation2 + $0xa0] sm:$0xff]
      %v3221 = vld [vmem:[#allocation2 + $0xa8] sm:$0xff]
      %v3222 = vld [vmem:[#allocation2 + $0xb0] sm:$0xff]
      %v3223 = vld [vmem:[#allocation2 + $0xb8] sm:$0xff]
      %v3224 = vld [vmem:[%s4] sm:$0xff]
      %3226 = vset.pattern.permute.xlu0 0
      %3227 = vperm.xlu0 %3226, %v3224
      %v3228 = vpop.permute.xlu0 %3227
      %v3230 = vadd.f32 %v3200, %v3228
      %v3231 = vadd.f32 %v3201, %v3228
      %v3232 = vadd.f32 %v3202, %v3228
      %v3233 = vadd.f32 %v3203, %v3228
      %v3234 = vadd.f32 %v3204, %v3228
      %v3235 = vadd.f32 %v3205, %v3228
      %v3236 = vadd.f32 %v3206, %v3228
      %v3237 = vadd.f32 %v3207, %v3228
      %v3238 = vadd.f32 %v3208, %v3228
      %v3239 = vadd.f32 %v3209, %v3228
      %v3240 = vadd.f32 %v3210, %v3228
      %v3241 = vadd.f32 %v3211, %v3228
      %v3242 = vadd.f32 %v3212, %v3228
      %v3243 = vadd.f32 %v3213, %v3228
      %v3244 = vadd.f32 %v3214, %v3228
      %v3245 = vadd.f32 %v3215, %v3228
      %v3246 = vadd.f32 %v3216, %v3228
      %v3247 = vadd.f32 %v3217, %v3228
      %v3248 = vadd.f32 %v3218, %v3228
      %v3249 = vadd.f32 %v3219, %v3228
      %v3250 = vadd.f32 %v3220, %v3228
      %v3251 = vadd.f32 %v3221, %v3228
      %v3252 = vadd.f32 %v3222, %v3228
      %v3253 = vadd.f32 %v3223, %v3228
      %v3254 = vmax.f32 %v3230, 0.0
      %v3255 = vmax.f32 %v3231, 0.0
      %v3256 = vmax.f32 %v3232, 0.0
      %v3257 = vmax.f32 %v3233, 0.0
      %v3258 = vmax.f32 %v3234, 0.0
      %v3259 = vmax.f32 %v3235, 0.0
      %v3260 = vmax.f32 %v3236, 0.0
      %v3261 = vmax.f32 %v3237, 0.0
      %v3262 = vmax.f32 %v3238, 0.0
      %v3263 = vmax.f32 %v3239, 0.0
      %v3264 = vmax.f32 %v3240, 0.0
      %v3265 = vmax.f32 %v3241, 0.0
      %v3266 = vmax.f32 %v3242, 0.0
      %v3267 = vmax.f32 %v3243, 0.0
      %v3268 = vmax.f32 %v3244, 0.0
      %v3269 = vmax.f32 %v3245, 0.0
      %v3270 = vmax.f32 %v3246, 0.0
      %v3271 = vmax.f32 %v3247, 0.0
      %v3272 = vmax.f32 %v3248, 0.0
      %v3273 = vmax.f32 %v3249, 0.0
      %v3274 = vmax.f32 %v3250, 0.0
      %v3275 = vmax.f32 %v3251, 0.0
      %v3276 = vmax.f32 %v3252, 0.0
      %v3277 = vmax.f32 %v3253, 0.0
      %v3278 = vld [vmem:[#allocation3] sm:$0xff]
      %v3279 = vld [vmem:[#allocation3 + $0x8] sm:$0xff]
      %v3280 = vld [vmem:[#allocation3 + $0x10] sm:$0xff]
      %v3281 = vld [vmem:[#allocation3 + $0x18] sm:$0xff]
      %v3282 = vld [vmem:[#allocation3 + $0x20] sm:$0xff]
      %v3283 = vld [vmem:[#allocation3 + $0x28] sm:$0xff]
      %v3284 = vld [vmem:[#allocation3 + $0x30] sm:$0xff]
      %v3285 = vld [vmem:[#allocation3 + $0x38] sm:$0xff]
      %v3286 = vld [vmem:[#allocation3 + $0x40] sm:$0xff]
      %v3287 = vld [vmem:[#allocation3 + $0x48] sm:$0xff]
      %v3288 = vld [vmem:[#allocation3 + $0x50] sm:$0xff]
      %v3289 = vld [vmem:[#allocation3 + $0x58] sm:$0xff]
      %v3290 = vld [vmem:[#allocation3 + $0x60] sm:$0xff]
      %v3291 = vld [vmem:[#allocation3 + $0x68] sm:$0xff]
      %v3292 = vld [vmem:[#allocation3 + $0x70] sm:$0xff]
      %v3293 = vld [vmem:[#allocation3 + $0x78] sm:$0xff]
      %v3294 = vld [vmem:[#allocation3 + $0x80] sm:$0xff]
      %v3295 = vld [vmem:[#allocation3 + $0x88] sm:$0xff]
      %v3296 = vld [vmem:[#allocation3 + $0x90] sm:$0xff]
      %v3297 = vld [vmem:[#allocation3 + $0x98] sm:$0xff]
      %v3298 = vld [vmem:[#allocation3 + $0xa0] sm:$0xff]
      %v3299 = vld [vmem:[#allocation3 + $0xa8] sm:$0xff]
      %v3300 = vld [vmem:[#allocation3 + $0xb0] sm:$0xff]
      %v3301 = vld [vmem:[#allocation3 + $0xb8] sm:$0xff]
      %v3302 = vld [vmem:[%s5] sm:$0xff]
      %3304 = vset.pattern.permute.xlu0 0
      %3305 = vperm.xlu0 %3304, %v3302
      %v3306 = vpop.permute.xlu0 %3305
      %v3308 = vadd.f32 %v3278, %v3306
      %v3309 = vadd.f32 %v3279, %v3306
      %v3310 = vadd.f32 %v3280, %v3306
      %v3311 = vadd.f32 %v3281, %v3306
      %v3312 = vadd.f32 %v3282, %v3306
      %v3313 = vadd.f32 %v3283, %v3306
      %v3314 = vadd.f32 %v3284, %v3306
      %v3315 = vadd.f32 %v3285, %v3306
      %v3316 = vadd.f32 %v3286, %v3306
      %v3317 = vadd.f32 %v3287, %v3306
      %v3318 = vadd.f32 %v3288, %v3306
      %v3319 = vadd.f32 %v3289, %v3306
      %v3320 = vadd.f32 %v3290, %v3306
      %v3321 = vadd.f32 %v3291, %v3306
      %v3322 = vadd.f32 %v3292, %v3306
      %v3323 = vadd.f32 %v3293, %v3306
      %v3324 = vadd.f32 %v3294, %v3306
      %v3325 = vadd.f32 %v3295, %v3306
      %v3326 = vadd.f32 %v3296, %v3306
      %v3327 = vadd.f32 %v3297, %v3306
      %v3328 = vadd.f32 %v3298, %v3306
      %v3329 = vadd.f32 %v3299, %v3306
      %v3330 = vadd.f32 %v3300, %v3306
      %v3331 = vadd.f32 %v3301, %v3306
      %v3332 = vmax.f32 %v3308, 0.0
      %v3333 = vmax.f32 %v3309, 0.0
      %v3334 = vmax.f32 %v3310, 0.0
      %v3335 = vmax.f32 %v3311, 0.0
      %v3336 = vmax.f32 %v3312, 0.0
      %v3337 = vmax.f32 %v3313, 0.0
      %v3338 = vmax.f32 %v3314, 0.0
      %v3339 = vmax.f32 %v3315, 0.0
      %v3340 = vmax.f32 %v3316, 0.0
      %v3341 = vmax.f32 %v3317, 0.0
      %v3342 = vmax.f32 %v3318, 0.0
      %v3343 = vmax.f32 %v3319, 0.0
      %v3344 = vmax.f32 %v3320, 0.0
      %v3345 = vmax.f32 %v3321, 0.0
      %v3346 = vmax.f32 %v3322, 0.0
      %v3347 = vmax.f32 %v3323, 0.0
      %v3348 = vmax.f32 %v3324, 0.0
      %v3349 = vmax.f32 %v3325, 0.0
      %v3350 = vmax.f32 %v3326, 0.0
      %v3351 = vmax.f32 %v3327, 0.0
      %v3352 = vmax.f32 %v3328, 0.0
      %v3353 = vmax.f32 %v3329, 0.0
      %v3354 = vmax.f32 %v3330, 0.0
      %v3355 = vmax.f32 %v3331, 0.0
      %v3356 = vadd.f32 %v3254, %v3332
      %v3357 = vadd.f32 %v3255, %v3333
      %v3358 = vadd.f32 %v3256, %v3334
      %v3359 = vadd.f32 %v3257, %v3335
      %v3360 = vadd.f32 %v3258, %v3336
      %v3361 = vadd.f32 %v3259, %v3337
      %v3362 = vadd.f32 %v3260, %v3338
      %v3363 = vadd.f32 %v3261, %v3339
      %v3364 = vadd.f32 %v3262, %v3340
      %v3365 = vadd.f32 %v3263, %v3341
      %v3366 = vadd.f32 %v3264, %v3342
      %v3367 = vadd.f32 %v3265, %v3343
      %v3368 = vadd.f32 %v3266, %v3344
      %v3369 = vadd.f32 %v3267, %v3345
      %v3370 = vadd.f32 %v3268, %v3346
      %v3371 = vadd.f32 %v3269, %v3347
      %v3372 = vadd.f32 %v3270, %v3348
      %v3373 = vadd.f32 %v3271, %v3349
      %v3374 = vadd.f32 %v3272, %v3350
      %v3375 = vadd.f32 %v3273, %v3351
      %v3376 = vadd.f32 %v3274, %v3352
      %v3377 = vadd.f32 %v3275, %v3353
      %v3378 = vadd.f32 %v3276, %v3354
      %v3379 = vadd.f32 %v3277, %v3355
      %v3380 = vpack.c.bf16 %v3356, %v3356
      %v3381 = vpack.c.bf16 %v3357, %v3357
      %v3382 = vpack.c.bf16 %v3358, %v3358
      %v3383 = vpack.c.bf16 %v3359, %v3359
      %v3384 = vpack.c.bf16 %v3360, %v3360
      %v3385 = vpack.c.bf16 %v3361, %v3361
      %v3386 = vpack.c.bf16 %v3362, %v3362
      %v3387 = vpack.c.bf16 %v3363, %v3363
      %v3388 = vpack.c.bf16 %v3364, %v3364
      %v3389 = vpack.c.bf16 %v3365, %v3365
      %v3390 = vpack.c.bf16 %v3366, %v3366
      %v3391 = vpack.c.bf16 %v3367, %v3367
      %v3392 = vpack.c.bf16 %v3368, %v3368
      %v3393 = vpack.c.bf16 %v3369, %v3369
      %v3394 = vpack.c.bf16 %v3370, %v3370
      %v3395 = vpack.c.bf16 %v3371, %v3371
      %v3396 = vpack.c.bf16 %v3372, %v3372
      %v3397 = vpack.c.bf16 %v3373, %v3373
      %v3398 = vpack.c.bf16 %v3374, %v3374
      %v3399 = vpack.c.bf16 %v3375, %v3375
      %v3400 = vpack.c.bf16 %v3376, %v3376
      %v3401 = vpack.c.bf16 %v3377, %v3377
      %v3402 = vpack.c.bf16 %v3378, %v3378
      %v3403 = vpack.c.bf16 %v3379, %v3379
      %v3404 = vld [vmem:[%s3] sm:$0xf]
      %v3405 = vld [vmem:[%s6] sm:$0xff]
      %3407 = vset.pattern.permute.xlu0 0
      %3408 = vperm.xlu0 %3407, %v3405
      %v3409 = vpop.permute.xlu0 %3408
      %v3412 = vsel %vm366, %v3404, 0
      %v3415 = vsel %vm370, %v3380, 0
      %v3418 = vsel %vm370, %v3381, 0
      %v3421 = vsel %vm370, %v3382, 0
      %v3424 = vsel %vm370, %v3383, 0
      %v3427 = vsel %vm370, %v3384, 0
      %v3430 = vsel %vm370, %v3385, 0
      %v3433 = vsel %vm370, %v3386, 0
      %v3436 = vsel %vm370, %v3387, 0
      %v3439 = vsel %vm370, %v3388, 0
      %v3442 = vsel %vm370, %v3389, 0
      %v3445 = vsel %vm370, %v3390, 0
      %v3448 = vsel %vm370, %v3391, 0
      %v3451 = vsel %vm370, %v3392, 0
      %v3454 = vsel %vm370, %v3393, 0
      %v3457 = vsel %vm370, %v3394, 0
      %v3460 = vsel %vm370, %v3395, 0
      %v3463 = vsel %vm370, %v3396, 0
      %v3466 = vsel %vm370, %v3397, 0
      %v3469 = vsel %vm370, %v3398, 0
      %v3472 = vsel %vm370, %v3399, 0
      %v3475 = vsel %vm370, %v3400, 0
      %v3478 = vsel %vm370, %v3401, 0
      %v3481 = vsel %vm370, %v3402, 0
      %v3484 = vsel %vm370, %v3403, 0
      %3486 = vmatpush.bf16.msra.mxu0 0
      %3487 = vmatpush.bf16.msra.mxu0 0
      %3488 = vmatpush.bf16.msra.mxu0 0
      %3489 = vmatpush.bf16.msra.mxu0 0
      %3490 = vmatpush.bf16.msra.mxu0 0
      %3491 = vmatpush.bf16.msra.mxu0 0
      %3492 = vmatpush.bf16.msra.mxu0 0
      %3493 = vmatpush.bf16.msra.mxu0 %v3415
      %3494 = vmatmul.bf16.gmra.mxu0 %v3412
      %v3495 = vpop.f32.mrf.mxu0
      %v3496 = vadd.f32 %v3409, %v3495
      %v3497 = vpop.f32.mrf.mxu0
      %3498 = vdwg.mxu0
      %3499 = vmatpush.bf16.msra.mxu0 0
      %3500 = vmatpush.bf16.msra.mxu0 0
      %3501 = vmatpush.bf16.msra.mxu0 0
      %3502 = vmatpush.bf16.msra.mxu0 0
      %3503 = vmatpush.bf16.msra.mxu0 0
      %3504 = vmatpush.bf16.msra.mxu0 0
      %3505 = vmatpush.bf16.msra.mxu0 0
      %3506 = vmatpush.bf16.msra.mxu0 %v3418
      %3507 = vmatmul.bf16.gmra.mxu0 %v3412
      %v3508 = vpop.f32.mrf.mxu0
      %v3509 = vadd.f32 %v3409, %v3508
      %v3510 = vpop.f32.mrf.mxu0
      %3511 = vdwg.mxu0
      %3512 = vmatpush.bf16.msra.mxu0 0
      %3513 = vmatpush.bf16.msra.mxu0 0
      %3514 = vmatpush.bf16.msra.mxu0 0
      %3515 = vmatpush.bf16.msra.mxu0 0
      %3516 = vmatpush.bf16.msra.mxu0 0
      %3517 = vmatpush.bf16.msra.mxu0 0
      %3518 = vmatpush.bf16.msra.mxu0 0
      %3519 = vmatpush.bf16.msra.mxu0 %v3421
      %3520 = vmatmul.bf16.gmra.mxu0 %v3412
      %v3521 = vpop.f32.mrf.mxu0
      %v3522 = vadd.f32 %v3409, %v3521
      %v3523 = vpop.f32.mrf.mxu0
      %3524 = vdwg.mxu0
      %3525 = vmatpush.bf16.msra.mxu0 0
      %3526 = vmatpush.bf16.msra.mxu0 0
      %3527 = vmatpush.bf16.msra.mxu0 0
      %3528 = vmatpush.bf16.msra.mxu0 0
      %3529 = vmatpush.bf16.msra.mxu0 0
      %3530 = vmatpush.bf16.msra.mxu0 0
      %3531 = vmatpush.bf16.msra.mxu0 0
      %3532 = vmatpush.bf16.msra.mxu0 %v3424
      %3533 = vmatmul.bf16.gmra.mxu0 %v3412
      %v3534 = vpop.f32.mrf.mxu0
      %v3535 = vadd.f32 %v3409, %v3534
      %v3536 = vpop.f32.mrf.mxu0
      %3537 = vdwg.mxu0
      %3538 = vmatpush.bf16.msra.mxu0 0
      %3539 = vmatpush.bf16.msra.mxu0 0
      %3540 = vmatpush.bf16.msra.mxu0 0
      %3541 = vmatpush.bf16.msra.mxu0 0
      %3542 = vmatpush.bf16.msra.mxu0 0
      %3543 = vmatpush.bf16.msra.mxu0 0
      %3544 = vmatpush.bf16.msra.mxu0 0
      %3545 = vmatpush.bf16.msra.mxu0 %v3427
      %3546 = vmatmul.bf16.gmra.mxu0 %v3412
      %v3547 = vpop.f32.mrf.mxu0
      %v3548 = vadd.f32 %v3409, %v3547
      %v3549 = vpop.f32.mrf.mxu0
      %3550 = vdwg.mxu0
      %3551 = vmatpush.bf16.msra.mxu0 0
      %3552 = vmatpush.bf16.msra.mxu0 0
      %3553 = vmatpush.bf16.msra.mxu0 0
      %3554 = vmatpush.bf16.msra.mxu0 0
      %3555 = vmatpush.bf16.msra.mxu0 0
      %3556 = vmatpush.bf16.msra.mxu0 0
      %3557 = vmatpush.bf16.msra.mxu0 0
      %3558 = vmatpush.bf16.msra.mxu0 %v3430
      %3559 = vmatmul.bf16.gmra.mxu0 %v3412
      %v3560 = vpop.f32.mrf.mxu0
      %v3561 = vadd.f32 %v3409, %v3560
      %v3562 = vpop.f32.mrf.mxu0
      %3563 = vdwg.mxu0
      %3564 = vmatpush.bf16.msra.mxu0 0
      %3565 = vmatpush.bf16.msra.mxu0 0
      %3566 = vmatpush.bf16.msra.mxu0 0
      %3567 = vmatpush.bf16.msra.mxu0 0
      %3568 = vmatpush.bf16.msra.mxu0 0
      %3569 = vmatpush.bf16.msra.mxu0 0
      %3570 = vmatpush.bf16.msra.mxu0 0
      %3571 = vmatpush.bf16.msra.mxu0 %v3433
      %3572 = vmatmul.bf16.gmra.mxu0 %v3412
      %v3573 = vpop.f32.mrf.mxu0
      %v3574 = vadd.f32 %v3409, %v3573
      %v3575 = vpop.f32.mrf.mxu0
      %3576 = vdwg.mxu0
      %3577 = vmatpush.bf16.msra.mxu0 0
      %3578 = vmatpush.bf16.msra.mxu0 0
      %3579 = vmatpush.bf16.msra.mxu0 0
      %3580 = vmatpush.bf16.msra.mxu0 0
      %3581 = vmatpush.bf16.msra.mxu0 0
      %3582 = vmatpush.bf16.msra.mxu0 0
      %3583 = vmatpush.bf16.msra.mxu0 0
      %3584 = vmatpush.bf16.msra.mxu0 %v3436
      %3585 = vmatmul.bf16.gmra.mxu0 %v3412
      %v3586 = vpop.f32.mrf.mxu0
      %v3587 = vadd.f32 %v3409, %v3586
      %v3588 = vpop.f32.mrf.mxu0
      %3589 = vdwg.mxu0
      %3590 = vmatpush.bf16.msra.mxu0 0
      %3591 = vmatpush.bf16.msra.mxu0 0
      %3592 = vmatpush.bf16.msra.mxu0 0
      %3593 = vmatpush.bf16.msra.mxu0 0
      %3594 = vmatpush.bf16.msra.mxu0 0
      %3595 = vmatpush.bf16.msra.mxu0 0
      %3596 = vmatpush.bf16.msra.mxu0 0
      %3597 = vmatpush.bf16.msra.mxu0 %v3439
      %3598 = vmatmul.bf16.gmra.mxu0 %v3412
      %v3599 = vpop.f32.mrf.mxu0
      %v3600 = vadd.f32 %v3409, %v3599
      %v3601 = vpop.f32.mrf.mxu0
      %3602 = vdwg.mxu0
      %3603 = vmatpush.bf16.msra.mxu0 0
      %3604 = vmatpush.bf16.msra.mxu0 0
      %3605 = vmatpush.bf16.msra.mxu0 0
      %3606 = vmatpush.bf16.msra.mxu0 0
      %3607 = vmatpush.bf16.msra.mxu0 0
      %3608 = vmatpush.bf16.msra.mxu0 0
      %3609 = vmatpush.bf16.msra.mxu0 0
      %3610 = vmatpush.bf16.msra.mxu0 %v3442
      %3611 = vmatmul.bf16.gmra.mxu0 %v3412
      %v3612 = vpop.f32.mrf.mxu0
      %v3613 = vadd.f32 %v3409, %v3612
      %v3614 = vpop.f32.mrf.mxu0
      %3615 = vdwg.mxu0
      %3616 = vmatpush.bf16.msra.mxu0 0
      %3617 = vmatpush.bf16.msra.mxu0 0
      %3618 = vmatpush.bf16.msra.mxu0 0
      %3619 = vmatpush.bf16.msra.mxu0 0
      %3620 = vmatpush.bf16.msra.mxu0 0
      %3621 = vmatpush.bf16.msra.mxu0 0
      %3622 = vmatpush.bf16.msra.mxu0 0
      %3623 = vmatpush.bf16.msra.mxu0 %v3445
      %3624 = vmatmul.bf16.gmra.mxu0 %v3412
      %v3625 = vpop.f32.mrf.mxu0
      %v3626 = vadd.f32 %v3409, %v3625
      %v3627 = vpop.f32.mrf.mxu0
      %3628 = vdwg.mxu0
      %3629 = vmatpush.bf16.msra.mxu0 0
      %3630 = vmatpush.bf16.msra.mxu0 0
      %3631 = vmatpush.bf16.msra.mxu0 0
      %3632 = vmatpush.bf16.msra.mxu0 0
      %3633 = vmatpush.bf16.msra.mxu0 0
      %3634 = vmatpush.bf16.msra.mxu0 0
      %3635 = vmatpush.bf16.msra.mxu0 0
      %3636 = vmatpush.bf16.msra.mxu0 %v3448
      %3637 = vmatmul.bf16.gmra.mxu0 %v3412
      %v3638 = vpop.f32.mrf.mxu0
      %v3639 = vadd.f32 %v3409, %v3638
      %v3640 = vpop.f32.mrf.mxu0
      %3641 = vdwg.mxu0
      %3642 = vmatpush.bf16.msra.mxu0 0
      %3643 = vmatpush.bf16.msra.mxu0 0
      %3644 = vmatpush.bf16.msra.mxu0 0
      %3645 = vmatpush.bf16.msra.mxu0 0
      %3646 = vmatpush.bf16.msra.mxu0 0
      %3647 = vmatpush.bf16.msra.mxu0 0
      %3648 = vmatpush.bf16.msra.mxu0 0
      %3649 = vmatpush.bf16.msra.mxu0 %v3451
      %3650 = vmatmul.bf16.gmra.mxu0 %v3412
      %v3651 = vpop.f32.mrf.mxu0
      %v3652 = vadd.f32 %v3409, %v3651
      %v3653 = vpop.f32.mrf.mxu0
      %3654 = vdwg.mxu0
      %3655 = vmatpush.bf16.msra.mxu0 0
      %3656 = vmatpush.bf16.msra.mxu0 0
      %3657 = vmatpush.bf16.msra.mxu0 0
      %3658 = vmatpush.bf16.msra.mxu0 0
      %3659 = vmatpush.bf16.msra.mxu0 0
      %3660 = vmatpush.bf16.msra.mxu0 0
      %3661 = vmatpush.bf16.msra.mxu0 0
      %3662 = vmatpush.bf16.msra.mxu0 %v3454
      %3663 = vmatmul.bf16.gmra.mxu0 %v3412
      %v3664 = vpop.f32.mrf.mxu0
      %v3665 = vadd.f32 %v3409, %v3664
      %v3666 = vpop.f32.mrf.mxu0
      %3667 = vdwg.mxu0
      %3668 = vmatpush.bf16.msra.mxu0 0
      %3669 = vmatpush.bf16.msra.mxu0 0
      %3670 = vmatpush.bf16.msra.mxu0 0
      %3671 = vmatpush.bf16.msra.mxu0 0
      %3672 = vmatpush.bf16.msra.mxu0 0
      %3673 = vmatpush.bf16.msra.mxu0 0
      %3674 = vmatpush.bf16.msra.mxu0 0
      %3675 = vmatpush.bf16.msra.mxu0 %v3457
      %3676 = vmatmul.bf16.gmra.mxu0 %v3412
      %v3677 = vpop.f32.mrf.mxu0
      %v3678 = vadd.f32 %v3409, %v3677
      %v3679 = vpop.f32.mrf.mxu0
      %3680 = vdwg.mxu0
      %3681 = vmatpush.bf16.msra.mxu0 0
      %3682 = vmatpush.bf16.msra.mxu0 0
      %3683 = vmatpush.bf16.msra.mxu0 0
      %3684 = vmatpush.bf16.msra.mxu0 0
      %3685 = vmatpush.bf16.msra.mxu0 0
      %3686 = vmatpush.bf16.msra.mxu0 0
      %3687 = vmatpush.bf16.msra.mxu0 0
      %3688 = vmatpush.bf16.msra.mxu0 %v3460
      %3689 = vmatmul.bf16.gmra.mxu0 %v3412
      %v3690 = vpop.f32.mrf.mxu0
      %v3691 = vadd.f32 %v3409, %v3690
      %v3692 = vpop.f32.mrf.mxu0
      %3693 = vdwg.mxu0
      %3694 = vmatpush.bf16.msra.mxu0 0
      %3695 = vmatpush.bf16.msra.mxu0 0
      %3696 = vmatpush.bf16.msra.mxu0 0
      %3697 = vmatpush.bf16.msra.mxu0 0
      %3698 = vmatpush.bf16.msra.mxu0 0
      %3699 = vmatpush.bf16.msra.mxu0 0
      %3700 = vmatpush.bf16.msra.mxu0 0
      %3701 = vmatpush.bf16.msra.mxu0 %v3463
      %3702 = vmatmul.bf16.gmra.mxu0 %v3412
      %v3703 = vpop.f32.mrf.mxu0
      %v3704 = vadd.f32 %v3409, %v3703
      %v3705 = vpop.f32.mrf.mxu0
      %3706 = vdwg.mxu0
      %3707 = vmatpush.bf16.msra.mxu0 0
      %3708 = vmatpush.bf16.msra.mxu0 0
      %3709 = vmatpush.bf16.msra.mxu0 0
      %3710 = vmatpush.bf16.msra.mxu0 0
      %3711 = vmatpush.bf16.msra.mxu0 0
      %3712 = vmatpush.bf16.msra.mxu0 0
      %3713 = vmatpush.bf16.msra.mxu0 0
      %3714 = vmatpush.bf16.msra.mxu0 %v3466
      %3715 = vmatmul.bf16.gmra.mxu0 %v3412
      %v3716 = vpop.f32.mrf.mxu0
      %v3717 = vadd.f32 %v3409, %v3716
      %v3718 = vpop.f32.mrf.mxu0
      %3719 = vdwg.mxu0
      %3720 = vmatpush.bf16.msra.mxu0 0
      %3721 = vmatpush.bf16.msra.mxu0 0
      %3722 = vmatpush.bf16.msra.mxu0 0
      %3723 = vmatpush.bf16.msra.mxu0 0
      %3724 = vmatpush.bf16.msra.mxu0 0
      %3725 = vmatpush.bf16.msra.mxu0 0
      %3726 = vmatpush.bf16.msra.mxu0 0
      %3727 = vmatpush.bf16.msra.mxu0 %v3469
      %3728 = vmatmul.bf16.gmra.mxu0 %v3412
      %v3729 = vpop.f32.mrf.mxu0
      %v3730 = vadd.f32 %v3409, %v3729
      %v3731 = vpop.f32.mrf.mxu0
      %3732 = vdwg.mxu0
      %3733 = vmatpush.bf16.msra.mxu0 0
      %3734 = vmatpush.bf16.msra.mxu0 0
      %3735 = vmatpush.bf16.msra.mxu0 0
      %3736 = vmatpush.bf16.msra.mxu0 0
      %3737 = vmatpush.bf16.msra.mxu0 0
      %3738 = vmatpush.bf16.msra.mxu0 0
      %3739 = vmatpush.bf16.msra.mxu0 0
      %3740 = vmatpush.bf16.msra.mxu0 %v3472
      %3741 = vmatmul.bf16.gmra.mxu0 %v3412
      %v3742 = vpop.f32.mrf.mxu0
      %v3743 = vadd.f32 %v3409, %v3742
      %v3744 = vpop.f32.mrf.mxu0
      %3745 = vdwg.mxu0
      %3746 = vmatpush.bf16.msra.mxu0 0
      %3747 = vmatpush.bf16.msra.mxu0 0
      %3748 = vmatpush.bf16.msra.mxu0 0
      %3749 = vmatpush.bf16.msra.mxu0 0
      %3750 = vmatpush.bf16.msra.mxu0 0
      %3751 = vmatpush.bf16.msra.mxu0 0
      %3752 = vmatpush.bf16.msra.mxu0 0
      %3753 = vmatpush.bf16.msra.mxu0 %v3475
      %3754 = vmatmul.bf16.gmra.mxu0 %v3412
      %v3755 = vpop.f32.mrf.mxu0
      %v3756 = vadd.f32 %v3409, %v3755
      %v3757 = vpop.f32.mrf.mxu0
      %3758 = vdwg.mxu0
      %3759 = vmatpush.bf16.msra.mxu0 0
      %3760 = vmatpush.bf16.msra.mxu0 0
      %3761 = vmatpush.bf16.msra.mxu0 0
      %3762 = vmatpush.bf16.msra.mxu0 0
      %3763 = vmatpush.bf16.msra.mxu0 0
      %3764 = vmatpush.bf16.msra.mxu0 0
      %3765 = vmatpush.bf16.msra.mxu0 0
      %3766 = vmatpush.bf16.msra.mxu0 %v3478
      %3767 = vmatmul.bf16.gmra.mxu0 %v3412
      %v3768 = vpop.f32.mrf.mxu0
      %v3769 = vadd.f32 %v3409, %v3768
      %v3770 = vpop.f32.mrf.mxu0
      %3771 = vdwg.mxu0
      %3772 = vmatpush.bf16.msra.mxu0 0
      %3773 = vmatpush.bf16.msra.mxu0 0
      %3774 = vmatpush.bf16.msra.mxu0 0
      %3775 = vmatpush.bf16.msra.mxu0 0
      %3776 = vmatpush.bf16.msra.mxu0 0
      %3777 = vmatpush.bf16.msra.mxu0 0
      %3778 = vmatpush.bf16.msra.mxu0 0
      %3779 = vmatpush.bf16.msra.mxu0 %v3481
      %3780 = vmatmul.bf16.gmra.mxu0 %v3412
      %v3781 = vpop.f32.mrf.mxu0
      %v3782 = vadd.f32 %v3409, %v3781
      %v3783 = vpop.f32.mrf.mxu0
      %3784 = vdwg.mxu0
      %3785 = vmatpush.bf16.msra.mxu0 0
      %3786 = vmatpush.bf16.msra.mxu0 0
      %3787 = vmatpush.bf16.msra.mxu0 0
      %3788 = vmatpush.bf16.msra.mxu0 0
      %3789 = vmatpush.bf16.msra.mxu0 0
      %3790 = vmatpush.bf16.msra.mxu0 0
      %3791 = vmatpush.bf16.msra.mxu0 0
      %3792 = vmatpush.bf16.msra.mxu0 %v3484
      %3793 = vmatmul.bf16.gmra.mxu0 %v3412
      %v3794 = vpop.f32.mrf.mxu0
      %v3795 = vadd.f32 %v3409, %v3794
      %v3796 = vpop.f32.mrf.mxu0
      %3797 = vdwg.mxu0
      %v3798 = vmax.f32 %v3496, 0.0
      %v3799 = vmax.f32 %v3509, 0.0
      %v3800 = vmax.f32 %v3522, 0.0
      %v3801 = vmax.f32 %v3535, 0.0
      %v3802 = vmax.f32 %v3548, 0.0
      %v3803 = vmax.f32 %v3561, 0.0
      %v3804 = vmax.f32 %v3574, 0.0
      %v3805 = vmax.f32 %v3587, 0.0
      %v3806 = vmax.f32 %v3600, 0.0
      %v3807 = vmax.f32 %v3613, 0.0
      %v3808 = vmax.f32 %v3626, 0.0
      %v3809 = vmax.f32 %v3639, 0.0
      %v3810 = vmax.f32 %v3652, 0.0
      %v3811 = vmax.f32 %v3665, 0.0
      %v3812 = vmax.f32 %v3678, 0.0
      %v3813 = vmax.f32 %v3691, 0.0
      %v3814 = vmax.f32 %v3704, 0.0
      %v3815 = vmax.f32 %v3717, 0.0
      %v3816 = vmax.f32 %v3730, 0.0
      %v3817 = vmax.f32 %v3743, 0.0
      %v3818 = vmax.f32 %v3756, 0.0
      %v3819 = vmax.f32 %v3769, 0.0
      %v3820 = vmax.f32 %v3782, 0.0
      %v3821 = vmax.f32 %v3795, 0.0
      %v3822 = vpack.c.bf16 %v3799, %v3798
      %v3823 = vpack.c.bf16 %v3801, %v3800
      %v3824 = vpack.c.bf16 %v3803, %v3802
      %v3825 = vpack.c.bf16 %v3805, %v3804
      %v3826 = vpack.c.bf16 %v3807, %v3806
      %v3827 = vpack.c.bf16 %v3809, %v3808
      %v3828 = vpack.c.bf16 %v3811, %v3810
      %v3829 = vpack.c.bf16 %v3813, %v3812
      %v3830 = vpack.c.bf16 %v3815, %v3814
      %v3831 = vpack.c.bf16 %v3817, %v3816
      %v3832 = vpack.c.bf16 %v3819, %v3818
      %v3833 = vpack.c.bf16 %v3821, %v3820
      %3834 = vst [vmem:[%s278] sm:$0xff] %v3822
      %3835 = vst [vmem:[%s278 + $0x8] sm:$0xff] %v3823
      %3836 = vst [vmem:[%s278 + $0x10] sm:$0xff] %v3824
      %3837 = vst [vmem:[%s278 + $0x18] sm:$0xff] %v3825
      %3838 = vst [vmem:[%s278 + $0x20] sm:$0xff] %v3826
      %3839 = vst [vmem:[%s278 + $0x28] sm:$0xff] %v3827
      %3840 = vst [vmem:[%s278 + $0x30] sm:$0xff] %v3828
      %3841 = vst [vmem:[%s278 + $0x38] sm:$0xff] %v3829
      %3842 = vst [vmem:[%s278 + $0x40] sm:$0xff] %v3830
      %3843 = vst [vmem:[%s278 + $0x48] sm:$0xff] %v3831
      %3844 = vst [vmem:[%s278 + $0x50] sm:$0xff] %v3832
      %3845 = vst [vmem:[%s278 + $0x58] sm:$0xff] %v3833
      %p3846 = scmp.lt.s32.totalorder %s18, 1
      %s3847 = scalar_select %p3846, %s18, 1
      %s3848 = smul.addr %s3847, 24
      %s3849 = smul.addr %s3848, 4
      %s3850 = scalar_lea.vmem %s7, %s3849
      // Predicated region
      $region49: #{visual_block_forward.3} parent=47 // pred_check
        %p3851 = pneg %p188
      $region50: #{visual_block_forward.3} parent=47 // pred_check_branch
        %3853 = sbr.rel (%p3851) target = $region52
      $region51: #{visual_block_forward.3} parent=47 // pred_region
        _
      $region52: #{visual_block_forward.3} parent=47 // pred_fallthru
        _
    $region48: #{visual_block_forward.3} parent=5 // pred_fallthru
      _
    %p3854 = scmp.le.s32.totalorder 2, %s13
    // Predicated region
    $region53: #{visual_block_forward.3} parent=5 // pred_check
      %p3855 = pneg %p3854
    $region54: #{visual_block_forward.3} parent=5 // pred_check_branch
      %3857 = sbr.rel (%p3855) target = $region56
    $region55: #{visual_block_forward.3} parent=5 // pred_region
      %s3858 = ssub.s32 %s13, 2
      // Predicated region
      $region57: #{visual_block_forward.3} parent=55 // pred_check
        %p3859 = pneg %p194
      $region58: #{visual_block_forward.3} parent=55 // pred_check_branch
        %3861 = sbr.rel (%p3859) target = $region60
      $region59: #{visual_block_forward.3} parent=55 // pred_region
        %p3862 = scmp.lt.s32.totalorder %s19, 1
        %s3863 = scalar_select %p3862, %s19, 1
        %s3864 = smul.addr %s3863, 24
        %s3865 = smul.addr %s3864, 4
        %s3866 = scalar_lea.vmem %s7, %s3865
      $region60: #{visual_block_forward.3} parent=55 // pred_fallthru
        _
    $region56: #{visual_block_forward.3} parent=5 // pred_fallthru
      _
  $region6: #{visual_block_forward.3} parent=0 // loop_footer
    %s17 = sadd.s32 1, %s13
  $region7: #{visual_block_forward.3} parent=0 // loop_footer_branch
    %12 = sbr.rel target = $region3
  $region8: #{visual_block_forward.3} parent=0 // loop_exit
    _

// kernel: visual_block_forward.2
$region0: #{visual_block_forward.2}
  #allocation0 [shape = 'u32[]', space=smem, size = 0x4, offset = 0x4, fixed_abs, tag = 'smem constant byte address 0x4 - core index']
  #allocation1 [shape = 'u32[72,128]{1,0:T(1,128)}', space=vmem, size = 0x9000, scoped, tag = 'internal scratch']
  %s0 = inlined_call_operand.vmem [shape: bf16[2,8,4,512], index: 0, kind: input, shape index: {}]
  %s1 = inlined_call_operand.vmem [shape: bf16[5,16,20], index: 1, kind: input, shape index: {}]
  %s2 = inlined_call_operand.vmem [shape: f32[16,1], index: 2, kind: input, shape index: {}]
  %s3 = inlined_call_operand.vmem [shape: bf16[2,16,3072], index: 3, kind: output, shape index: {}]
  %s4 = sld [smem:[#allocation0]]
  $region64: #{visual_block_forward.2} parent=0
    _
  %s6 = ssub.s32 1, %s4
  %s7 = scalar_select 0, %s6, %s4
  $region1: #{visual_block_forward.2} parent=0
    #allocation2 [shape = 'u8[98304]{0}', space=vmem, size = 0x18000, scoped, tag = 'output window, operand 0']
    loop: start=0, step=1, limit=6
    $region2: #{visual_block_forward.2} parent=1 // loop_pre_header
      _
    $region3: #{visual_block_forward.2} parent=1 // loop_header
      %s9 = sphi 0, %s13
      %p10 = scmp.ge.s32.totalorder %s9, 6
      %s16 = sphi 0, %s28
      %s17 = sphi 0, %s24
      %s18 = sphi 0, %s16
      %s19 = sphi 0, %s17
      %s20 = sphi 0, %s18
      %s21 = sphi 0, %s19
      %s33 = sphi 0, %s35
      %s36 = sphi 0, %s33
      %s37 = sphi 0, %s36
      %s53 = sphi 0, %s37
      %s57 = sphi 0, %s57
      %s59 = sphi 0, %s57
      %s60 = sphi 0, %s59
      %s74 = sphi 0, %s60
      %s78 = sphi 0, %s78
      %s80 = sphi 0, %s78
      %s81 = sphi 0, %s80
      %s95 = sphi 0, %s81
      %s103 = sphi 0, %s105
      %s106 = sphi 0, %s103
      %s107 = sphi 0, %s106
      %s123 = sphi 0, %s107
    $region4: #{visual_block_forward.2} parent=1 // loop_header_branch
      %12 = sbr.rel (%p10) target = $region8
    $region5: #{visual_block_forward.2} parent=1 // loop_body
      %s14 = ssub.s32 %s9, 1
      %s15 = ssub.s32 %s9, 2
      %s22 = sadd.s32 1, %s17
      %p23 = scmp.ge.s32.totalorder %s22, 2
      %s24 = scalar_select %p23, 0, %s22
      %s25 = sadd.s32 1, %s16
      %s26 = scalar_select %p23, %s25, %s16
      %p27 = scmp.ge.s32.totalorder %s26, 2
      %s28 = scalar_select %p27, 0, %s26
      %s29 = ssub.s32 %s16, %s28
      %s30 = ssub.s32 %s17, %s24
      %s31 = sor.u32 %s29, %s30
      %p32 = scmp.eq.s32.totalorder %s31, 0
      %s34 = sadd.s32 %s33, 1
      %s35 = scalar_select %p32, %s33, %s34
      %p38 = pneg %p32
      %p39 = scmp.eq.s32.totalorder %s9, 3
      %p40 = por %p38, %p39
      %p41 = scmp.ne.s32.totalorder %s33, %s36
      %p42 = scmp.eq.s32.totalorder %s9, 0
      %p43 = por %p41, %p42
      %p44 = scmp.ne.s32.totalorder %s33, %s36
      %p45 = scmp.eq.s32.totalorder %s14, 3
      %p46 = por %p44, %p45
      %p47 = scmp.ne.s32.totalorder %s36, %s37
      %p48 = scmp.eq.s32.totalorder %s14, 0
      %p49 = por %p47, %p48
      %p50 = scmp.ne.s32.totalorder %s36, %s37
      %p51 = scmp.eq.s32.totalorder %s15, 3
      %p52 = por %p50, %p51
      %p54 = scmp.ne.s32.totalorder %s37, %s53
      %p55 = scmp.eq.s32.totalorder %s15, 0
      %p56 = por %p54, %p55
      %s58 = sadd.s32 %s57, 1
      %p61 = scmp.eq.s32.totalorder %s9, 3
      %p62 = scmp.ne.s32.totalorder %s57, %s59
      %p63 = scmp.eq.s32.totalorder %s9, 0
      %p64 = por %p62, %p63
      %p65 = scmp.ne.s32.totalorder %s57, %s59
      %p66 = scmp.eq.s32.totalorder %s14, 3
      %p67 = por %p65, %p66
      %p68 = scmp.ne.s32.totalorder %s59, %s60
      %p69 = scmp.eq.s32.totalorder %s14, 0
      %p70 = por %p68, %p69
      %p71 = scmp.ne.s32.totalorder %s59, %s60
      %p72 = scmp.eq.s32.totalorder %s15, 3
      %p73 = por %p71, %p72
      %p75 = scmp.ne.s32.totalorder %s60, %s74
      %p76 = scmp.eq.s32.totalorder %s15, 0
      %p77 = por %p75, %p76
      %s79 = sadd.s32 %s78, 1
      %p82 = scmp.eq.s32.totalorder %s9, 3
      %p83 = scmp.ne.s32.totalorder %s78, %s80
      %p84 = scmp.eq.s32.totalorder %s9, 0
      %p85 = por %p83, %p84
      %p86 = scmp.ne.s32.totalorder %s78, %s80
      %p87 = scmp.eq.s32.totalorder %s14, 3
      %p88 = por %p86, %p87
      %p89 = scmp.ne.s32.totalorder %s80, %s81
      %p90 = scmp.eq.s32.totalorder %s14, 0
      %p91 = por %p89, %p90
      %p92 = scmp.ne.s32.totalorder %s80, %s81
      %p93 = scmp.eq.s32.totalorder %s15, 3
      %p94 = por %p92, %p93
      %p96 = scmp.ne.s32.totalorder %s81, %s95
      %p97 = scmp.eq.s32.totalorder %s15, 0
      %p98 = por %p96, %p97
      %s99 = ssub.s32 %s16, %s28
      %s100 = ssub.s32 %s17, %s24
      %s101 = sor.u32 %s99, %s100
      %p102 = scmp.eq.s32.totalorder %s101, 0
      %s104 = sadd.s32 %s103, 1
      %s105 = scalar_select %p102, %s103, %s104
      %p108 = pneg %p102
      %p109 = scmp.eq.s32.totalorder %s9, 3
      %p110 = por %p108, %p109
      %p111 = scmp.ne.s32.totalorder %s103, %s106
      %p112 = scmp.eq.s32.totalorder %s9, 0
      %p113 = por %p111, %p112
      %p114 = scmp.ne.s32.totalorder %s103, %s106
      %p115 = scmp.eq.s32.totalorder %s14, 3
      %p116 = por %p114, %p115
      %p117 = scmp.ne.s32.totalorder %s106, %s107
      %p118 = scmp.eq.s32.totalorder %s14, 0
      %p119 = por %p117, %p118
      %p120 = scmp.ne.s32.totalorder %s106, %s107
      %p121 = scmp.eq.s32.totalorder %s15, 3
      %p122 = por %p120, %p121
      %p124 = scmp.ne.s32.totalorder %s107, %s123
      %p125 = scmp.eq.s32.totalorder %s15, 0
      %p126 = por %p124, %p125
      %p127 = scmp.le.s32.totalorder 1, %s9
      %p128 = scmp.lt.s32.totalorder %s9, 5
      %p129 = pnand %p127, %p128
      %p130 = pneg %p129
      // Predicated region
      $region9: #{visual_block_forward.2} parent=5 // pred_check
        _
      $region10: #{visual_block_forward.2} parent=5 // pred_check_branch
        %132 = sbr.rel (%p129) target = $region12
      $region11: #{visual_block_forward.2} parent=5 // pred_region
        %s133 = ssub.s32 %s9, 1
        // Predicated region
        $region13: #{visual_block_forward.2} parent=11 // pred_check
          %p134 = pneg %p70
        $region14: #{visual_block_forward.2} parent=11 // pred_check_branch
          %136 = sbr.rel (%p134) target = $region16
        $region15: #{visual_block_forward.2} parent=11 // pred_region
          _
        $region16: #{visual_block_forward.2} parent=11 // pred_fallthru
          _
        // Predicated region
        $region17: #{visual_block_forward.2} parent=11 // pred_check
          %p137 = pneg %p91
        $region18: #{visual_block_forward.2} parent=11 // pred_check_branch
          %139 = sbr.rel (%p137) target = $region20
        $region19: #{visual_block_forward.2} parent=11 // pred_region
          _
        $region20: #{visual_block_forward.2} parent=11 // pred_fallthru
          _
      $region12: #{visual_block_forward.2} parent=5 // pred_fallthru
        _
      %p140 = scmp.lt.s32.totalorder %s9, 4
      // Predicated region
      $region21: #{visual_block_forward.2} parent=5 // pred_check
        %p141 = pneg %p140
      $region22: #{visual_block_forward.2} parent=5 // pred_check_branch
        %143 = sbr.rel (%p141) target = $region24
      $region23: #{visual_block_forward.2} parent=5 // pred_region
        // Predicated region
        $region25: #{visual_block_forward.2} parent=23 // pred_check
          %p144 = pneg %p43
        $region26: #{visual_block_forward.2} parent=23 // pred_check_branch
          %146 = sbr.rel (%p144) target = $region28
        $region27: #{visual_block_forward.2} parent=23 // pred_region
          %s147 = smul.u32 4, %s17
          %p148 = scmp.lt.s32.totalorder %s16, 1
          %s149 = scalar_select %p148, %s16, 1
          %p150 = scmp.lt.s32.totalorder %s147, 7
          %s151 = scalar_select %p150, %s147, 7
          %s152 = smul.addr %s151, 4
          %s153 = smul.addr %s149, 32
          %s154 = sadd.s32 %s152, %s153
          %s155 = smul.addr %s154, 2
          %s156 = scalar_lea.vmem %s0, %s155
          %s157 = smul.u32 4, %s17
        $region28: #{visual_block_forward.2} parent=23 // pred_fallthru
          _
      $region24: #{visual_block_forward.2} parent=5 // pred_fallthru
        _
      %p158 = scmp.le.s32.totalorder 1, %s9
      %p159 = scmp.lt.s32.totalorder %s9, 5
      %p160 = pnand %p158, %p159
      %p161 = pneg %p160
      // Predicated region
      $region29: #{visual_block_forward.2} parent=5 // pred_check
        _
      $region30: #{visual_block_forward.2} parent=5 // pred_check_branch
        %163 = sbr.rel (%p160) target = $region32
      $region31: #{visual_block_forward.2} parent=5 // pred_region
        %s164 = ssub.s32 %s9, 1
        %s165 = smul.u32 4, %s19
        %p166 = scmp.lt.s32.totalorder %s18, 1
        %s167 = scalar_select %p166, %s18, 1
        %p168 = scmp.lt.s32.totalorder %s165, 7
        %s169 = scalar_select %p168, %s165, 7
        %s170 = smul.addr %s169, 4
        %s171 = smul.addr %s167, 32
        %s172 = sadd.s32 %s170, %s171
        %s173 = smul.addr %s172, 2
        %s174 = scalar_lea.vmem %s0, %s173
        %p175 = pneg %p49
        %p176 = pneg %p46
        %p177 = pneg %p70
        %p178 = pneg %p67
        %p179 = pneg %p91
        %p180 = pneg %p88
        %p181 = pneg %p119
        %p182 = pneg %p116
        %s183 = sand.u32 %s106, 1
        %s184 = sand.u32 %s106, 1
        %s185 = smul.addr %s184, 96
        %s186 = scalar_lea.vmem [#allocation2], %s185
        %s187 = smul.u32 4, %s19
        %p188 = scmp.lt.s32.totalorder %s18, 1
        %s189 = scalar_select %p188, %s18, 1
        %p190 = scmp.lt.s32.totalorder %s187, 7
        %s191 = scalar_select %p190, %s187, 7
        %s192 = smul.addr %s191, 4
        %s193 = smul.addr %s189, 32
        %s194 = sadd.s32 %s192, %s193
        %s195 = smul.addr %s194, 2
        %s196 = scalar_lea.vmem %s0, %s195
        %s197 = smul.u32 4, %s19
        %s198 = smul.u32 12, %s19
        %v200 = vld [vmem:[%s196] sm:$0xff]
        %202 = vst [vmem:[#allocation1] ss:$4 sm:$0xff] %v200
        %v203 = vld.sshfl [vmem:[#allocation1] sm:$0xff pattern:$0x73625140]
        %v204 = vld.sshfl [vmem:[#allocation1 + $0x8] sm:$0xff pattern:$0x73625140]
        %v205 = vld.sshfl [vmem:[#allocation1 + $0x10] sm:$0xff pattern:$0x73625140]
        %s206 = scalar_lea.vmem [#allocation1], 1
        %207 = vst [vmem:[%s206] ss:$4 sm:$0xff] %v200
        %v208 = vld.sshfl [vmem:[#allocation1] sm:$0xff pattern:$0x73625140]
        %v210 = vld.sshfl [vmem:[#allocation1 + $0x8] sm:$0xff pattern:$0x73625140]
        %v212 = vld.sshfl [vmem:[#allocation1 + $0x10] sm:$0xff pattern:$0x73625140]
        %v214 = vld.sshfl [vmem:[#allocation1 + $0x18] sm:$0xff pattern:$0x73625140]
        %216 = vrot.lane.b32.xlu0 %v208, 127
        %v217 = vpop.permute.xlu0 %216
        %218 = vrot.lane.b32.xlu0 %v210, 127
        %v219 = vpop.permute.xlu0 %218
        %220 = vrot.lane.b32.xlu0 %v212, 127
        %v221 = vpop.permute.xlu0 %220
        %222 = vrot.lane.b32.xlu0 %v214, 127
        %v223 = vpop.permute.xlu0 %222
        %vm224 = vcmask 1039360
        %v225 = vsel %vm224, %v217, %v219
        %v226 = vsel %vm224, %v219, %v221
        %v227 = vsel %vm224, %v221, %v223
        %s228 = scalar_lea.vmem [#allocation1], 2
        %229 = vst [vmem:[%s228] ss:$4 sm:$0xff] %v200
        %v230 = vld.sshfl [vmem:[#allocation1] sm:$0xff pattern:$0x73625140]
        %v232 = vld.sshfl [vmem:[#allocation1 + $0x8] sm:$0xff pattern:$0x73625140]
        %v234 = vld.sshfl [vmem:[#allocation1 + $0x10] sm:$0xff pattern:$0x73625140]
        %v236 = vld.sshfl [vmem:[#allocation1 + $0x18] sm:$0xff pattern:$0x73625140]
        %238 = vrot.lane.b32.xlu0 %v230, 126
        %v239 = vpop.permute.xlu0 %238
        %240 = vrot.lane.b32.xlu0 %v232, 126
        %v241 = vpop.permute.xlu0 %240
        %242 = vrot.lane.b32.xlu0 %v234, 126
        %v243 = vpop.permute.xlu0 %242
        %244 = vrot.lane.b32.xlu0 %v236, 126
        %v245 = vpop.permute.xlu0 %244
        %vm246 = vcmask 1031168
        %v247 = vsel %vm246, %v239, %v241
        %v248 = vsel %vm246, %v241, %v243
        %v249 = vsel %vm246, %v243, %v245
        %s250 = scalar_lea.vmem [#allocation1], 3
        %251 = vst [vmem:[%s250] ss:$4 sm:$0xff] %v200
        %v252 = vld.sshfl [vmem:[#allocation1] sm:$0xff pattern:$0x73625140]
        %v254 = vld.sshfl [vmem:[#allocation1 + $0x8] sm:$0xff pattern:$0x73625140]
        %v256 = vld.sshfl [vmem:[#allocation1 + $0x10] sm:$0xff pattern:$0x73625140]
        %v258 = vld.sshfl [vmem:[#allocation1 + $0x18] sm:$0xff pattern:$0x73625140]
        %260 = vrot.lane.b32.xlu0 %v252, 125
        %v261 = vpop.permute.xlu0 %260
        %262 = vrot.lane.b32.xlu0 %v254, 125
        %v263 = vpop.permute.xlu0 %262
        %264 = vrot.lane.b32.xlu0 %v256, 125
        %v265 = vpop.permute.xlu0 %264
        %266 = vrot.lane.b32.xlu0 %v258, 125
        %v267 = vpop.permute.xlu0 %266
        %vm268 = vcmask 1022976
        %v269 = vsel %vm268, %v261, %v263
        %v270 = vsel %vm268, %v263, %v265
        %v271 = vsel %vm268, %v265, %v267
        %272 = vst [vmem:[#allocation1] ss:$4 sm:$0xff] %v200
        %v273 = vld.sshfl [vmem:[#allocation1] sm:$0xff pattern:$0x73625140]
        %v275 = vld.sshfl [vmem:[#allocation1 + $0x8] sm:$0xff pattern:$0x73625140]
        %v277 = vld.sshfl [vmem:[#allocation1 + $0x10] sm:$0xff pattern:$0x73625140]
        %v279 = vld.sshfl [vmem:[#allocation1 + $0x18] sm:$0xff pattern:$0x73625140]
        %281 = vrot.lane.b32.xlu0 %v273, 124
        %v282 = vpop.permute.xlu0 %281
        %283 = vrot.lane.b32.xlu0 %v275, 124
        %v284 = vpop.permute.xlu0 %283
        %285 = vrot.lane.b32.xlu0 %v277, 124
        %v286 = vpop.permute.xlu0 %285
        %287 = vrot.lane.b32.xlu0 %v279, 124
        %v288 = vpop.permute.xlu0 %287
        %vm289 = vcmask 1014784
        %v290 = vsel %vm289, %v282, %v284
        %v291 = vsel %vm289, %v284, %v286
        %v292 = vsel %vm289, %v286, %v288
        %vm293 = vcmask 1041408
        %v295 = vsel %vm293, %v203, %v225
        %v297 = vsel %vm293, %v204, %v226
        %v299 = vsel %vm293, %v205, %v227
        %vm300 = vcmask 1043456
        %v302 = vsel %vm300, %v295, %v247
        %v304 = vsel %vm300, %v297, %v248
        %v306 = vsel %vm300, %v299, %v249
        %vm307 = vcmask 1045504
        %v309 = vsel %vm307, %v302, %v269
        %v312 = vsel %vm307, %v304, %v270
        %v315 = vsel %vm307, %v306, %v271
        %v317 = vld [vmem:[%s1] sm:$0xf]
        %v318 = vld [vmem:[%s1 + $0x4] sm:$0xf]
        %319 = vst [vmem:[#allocation1] ss:$4 sm:$0xff] %v200
        %v320 = vld.sshfl [vmem:[#allocation1] sm:$0xff pattern:$0x73625140]
        %v321 = vld.sshfl [vmem:[#allocation1 + $0x8] sm:$0xff pattern:$0x73625140]
        %v322 = vld.sshfl [vmem:[#allocation1 + $0x10] sm:$0xff pattern:$0x73625140]
        %v323 = vld.sshfl [vmem:[#allocation1 + $0x18] sm:$0xff pattern:$0x73625140]
        %s324 = scalar_lea.vmem [#allocation1], 1
        %325 = vst [vmem:[%s324] ss:$4 sm:$0xff] %v200
        %v326 = vld.sshfl [vmem:[#allocation1] sm:$0xff pattern:$0x73625140]
        %v328 = vld.sshfl [vmem:[#allocation1 + $0x8] sm:$0xff pattern:$0x73625140]
        %v330 = vld.sshfl [vmem:[#allocation1 + $0x10] sm:$0xff pattern:$0x73625140]
        %v332 = vld.sshfl [vmem:[#allocation1 + $0x18] sm:$0xff pattern:$0x73625140]
        %334 = vrot.lane.b32.xlu0 %v326, 127
        %v335 = vpop.permute.xlu0 %334
        %336 = vrot.lane.b32.xlu0 %v328, 127
        %v337 = vpop.permute.xlu0 %336
        %338 = vrot.lane.b32.xlu0 %v330, 127
        %v339 = vpop.permute.xlu0 %338
        %340 = vrot.lane.b32.xlu0 %v332, 127
        %v341 = vpop.permute.xlu0 %340
        %v342 = vsel %vm224, %v335, %v337
        %v343 = vsel %vm224, %v337, %v339
        %v344 = vsel %vm224, %v339, %v341
        %s345 = scalar_lea.vmem [#allocation1], 2
        %346 = vst [vmem:[%s345] ss:$4 sm:$0xff] %v200
        %v347 = vld.sshfl [vmem:[#allocation1] sm:$0xff pattern:$0x73625140]
        %v349 = vld.sshfl [vmem:[#allocation1 + $0x8] sm:$0xff pattern:$0x73625140]
        %v351 = vld.sshfl [vmem:[#allocation1 + $0x10] sm:$0xff pattern:$0x73625140]
        %v353 = vld.sshfl [vmem:[#allocation1 + $0x18] sm:$0xff pattern:$0x73625140]
        %355 = vrot.lane.b32.xlu0 %v347, 126
        %v356 = vpop.permute.xlu0 %355
        %357 = vrot.lane.b32.xlu0 %v349, 126
        %v358 = vpop.permute.xlu0 %357
        %359 = vrot.lane.b32.xlu0 %v351, 126
        %v360 = vpop.permute.xlu0 %359
        %361 = vrot.lane.b32.xlu0 %v353, 126
        %v362 = vpop.permute.xlu0 %361
        %v363 = vsel %vm246, %v356, %v358
        %v364 = vsel %vm246, %v358, %v360
        %v365 = vsel %vm246, %v360, %v362
        %s366 = scalar_lea.vmem [#allocation1], 3
        %367 = vst [vmem:[%s366] ss:$4 sm:$0xff] %v200
        %v368 = vld.sshfl [vmem:[#allocation1] sm:$0xff pattern:$0x73625140]
        %v370 = vld.sshfl [vmem:[#allocation1 + $0x8] sm:$0xff pattern:$0x73625140]
        %v372 = vld.sshfl [vmem:[#allocation1 + $0x10] sm:$0xff pattern:$0x73625140]
        %v374 = vld.sshfl [vmem:[#allocation1 + $0x18] sm:$0xff pattern:$0x73625140]
        %376 = vrot.lane.b32.xlu0 %v368, 125
        %v377 = vpop.permute.xlu0 %376
        %378 = vrot.lane.b32.xlu0 %v370, 125
        %v379 = vpop.permute.xlu0 %378
        %380 = vrot.lane.b32.xlu0 %v372, 125
        %v381 = vpop.permute.xlu0 %380
        %382 = vrot.lane.b32.xlu0 %v374, 125
        %v383 = vpop.permute.xlu0 %382
        %v384 = vsel %vm268, %v377, %v379
        %v385 = vsel %vm268, %v379, %v381
        %v386 = vsel %vm268, %v381, %v383
        %387 = vst [vmem:[#allocation1] ss:$4 sm:$0xff] %v200
        %v388 = vld.sshfl [vmem:[#allocation1] sm:$0xff pattern:$0x73625140]
        %v390 = vld.sshfl [vmem:[#allocation1 + $0x8] sm:$0xff pattern:$0x73625140]
        %v392 = vld.sshfl [vmem:[#allocation1 + $0x10] sm:$0xff pattern:$0x73625140]
        %v394 = vld.sshfl [vmem:[#allocation1 + $0x18] sm:$0xff pattern:$0x73625140]
        %396 = vrot.lane.b32.xlu0 %v388, 124
        %v397 = vpop.permute.xlu0 %396
        %398 = vrot.lane.b32.xlu0 %v390, 124
        %v399 = vpop.permute.xlu0 %398
        %400 = vrot.lane.b32.xlu0 %v392, 124
        %v401 = vpop.permute.xlu0 %400
        %402 = vrot.lane.b32.xlu0 %v394, 124
        %v403 = vpop.permute.xlu0 %402
        %v404 = vsel %vm289, %v397, %v399
        %v405 = vsel %vm289, %v399, %v401
        %v406 = vsel %vm289, %v401, %v403
        %v408 = vsel %vm293, %v320, %v342
        %v410 = vsel %vm293, %v321, %v343
        %v412 = vsel %vm293, %v322, %v344
        %v414 = vsel %vm293, %v323, %v341
        %v416 = vsel %vm300, %v408, %v363
        %v418 = vsel %vm300, %v410, %v364
        %v420 = vsel %vm300, %v412, %v365
        %v422 = vsel %vm300, %v414, %v362
        %v424 = vsel %vm307, %v416, %v384
        %v426 = vsel %vm307, %v418, %v385
        %v428 = vsel %vm307, %v420, %v386
        %v430 = vsel %vm307, %v422, %v383
        %s431 = scalar_lea.vmem %s1, 8
        %v432 = vld [vmem:[%s431] sm:$0xf]
        %v433 = vld [vmem:[%s431 + $0x4] sm:$0xf]
        %v436 = vunpack.c.l.b16 %v432
        %v437 = vunpack.c.l.b16 %v433
        %v438 = vpack.c.b16 %v437, %v436
        %443 = vrot.lane.b32.xlu0 %v424, 108
        %v444 = vpop.permute.xlu0 %443
        %445 = vrot.lane.b32.xlu0 %v426, 108
        %v446 = vpop.permute.xlu0 %445
        %447 = vrot.lane.b32.xlu0 %v428, 108
        %v448 = vpop.permute.xlu0 %447
        %449 = vrot.lane.b32.xlu0 %v430, 108
        %v450 = vpop.permute.xlu0 %449
        %451 = vrot.lane.b32.xlu0 %v404, 108
        %v452 = vpop.permute.xlu0 %451
        %453 = vrot.lane.b32.xlu0 %v405, 108
        %v454 = vpop.permute.xlu0 %453
        %455 = vrot.lane.b32.xlu0 %v406, 108
        %v456 = vpop.permute.xlu0 %455
        %457 = vrot.lane.b32.xlu0 %v403, 108
        %v458 = vpop.permute.xlu0 %457
        %vm459 = vcmask 883712
        %v460 = vsel %vm459, %v444, %v446
        %v461 = vsel %vm459, %v446, %v448
        %v462 = vsel %vm459, %v448, %v450
        %v463 = vsel %vm459, %v452, %v454
        %v464 = vsel %vm459, %v454, %v456
        %v465 = vsel %vm459, %v456, %v458
        %vm469 = vcmask 162816
        %v471 = vsel %vm469, %v438, 0
        %v474 = vsel %vm293, %v463, 0
        %v477 = vsel %vm293, %v464, 0
        %v480 = vsel %vm293, %v465, 0
        %482 = vmatpush.bf16.msra.mxu0 0
        %483 = vmatpush.bf16.msra.mxu0 0
        %484 = vmatpush.bf16.msra.mxu0 0
        %485 = vmatpush.bf16.msra.mxu0 0
        %486 = vmatpush.bf16.msra.mxu0 0
        %487 = vmatpush.bf16.msra.mxu0 0
        %488 = vmatpush.bf16.msra.mxu0 %v474
        %489 = vmatpush.bf16.msra.mxu0 %v460
        %490 = vmatmul.bf16.gmra.mxu0 %v471
        %v491 = vpop.f32.mrf.mxu0
        %v492 = vadd.f32 0.0, %v491
        %v493 = vpop.f32.mrf.mxu0
        %v494 = vadd.f32 0.0, %v493
        %495 = vdwg.mxu0
        %496 = vmatpush.bf16.msra.mxu0 0
        %497 = vmatpush.bf16.msra.mxu0 0
        %498 = vmatpush.bf16.msra.mxu0 0
        %499 = vmatpush.bf16.msra.mxu0 0
        %500 = vmatpush.bf16.msra.mxu0 0
        %501 = vmatpush.bf16.msra.mxu0 0
        %502 = vmatpush.bf16.msra.mxu0 %v477
        %503 = vmatpush.bf16.msra.mxu0 %v461
        %504 = vmatmul.bf16.gmra.mxu0 %v471
        %v505 = vpop.f32.mrf.mxu0
        %v506 = vadd.f32 0.0, %v505
        %v507 = vpop.f32.mrf.mxu0
        %v508 = vadd.f32 0.0, %v507
        %509 = vdwg.mxu0
        %510 = vmatpush.bf16.msra.mxu0 0
        %511 = vmatpush.bf16.msra.mxu0 0
        %512 = vmatpush.bf16.msra.mxu0 0
        %513 = vmatpush.bf16.msra.mxu0 0
        %514 = vmatpush.bf16.msra.mxu0 0
        %515 = vmatpush.bf16.msra.mxu0 0
        %516 = vmatpush.bf16.msra.mxu0 %v480
        %517 = vmatpush.bf16.msra.mxu0 %v462
        %518 = vmatmul.bf16.gmra.mxu0 %v471
        %v519 = vpop.f32.mrf.mxu0
        %v520 = vadd.f32 0.0, %v519
        %v521 = vpop.f32.mrf.mxu0
        %v522 = vadd.f32 0.0, %v521
        %523 = vdwg.mxu0
        %v526 = vunpack.c.l.b16 %v317
        %v527 = vunpack.c.l.b16 %v318
        %v528 = vpack.c.b16 %v527, %v526
        %v530 = vsel %vm469, %v528, 0
        %v533 = vsel %vm293, %v290, 0
        %v536 = vsel %vm293, %v291, 0
        %v539 = vsel %vm293, %v292, 0
        %541 = vmatpush.bf16.msra.mxu0 0
        %542 = vmatpush.bf16.msra.mxu0 0
        %543 = vmatpush.bf16.msra.mxu0 0
        %544 = vmatpush.bf16.msra.mxu0 0
        %545 = vmatpush.bf16.msra.mxu0 0
        %546 = vmatpush.bf16.msra.mxu0 0
        %547 = vmatpush.bf16.msra.mxu0 %v533
        %548 = vmatpush.bf16.msra.mxu0 %v309
        %549 = vmatmul.bf16.gmra.mxu0 %v530
        %v550 = vpop.f32.mrf.mxu0
        %v551 = vadd.f32 %v492, %v550
        %v552 = vpop.f32.mrf.mxu0
        %v553 = vadd.f32 %v494, %v552
        %554 = vdwg.mxu0
        %555 = vmatpush.bf16.msra.mxu0 0
        %556 = vmatpush.bf16.msra.mxu0 0
        %557 = vmatpush.bf16.msra.mxu0 0
        %558 = vmatpush.bf16.msra.mxu0 0
        %559 = vmatpush.bf16.msra.mxu0 0
        %560 = vmatpush.bf16.msra.mxu0 0
        %561 = vmatpush.bf16.msra.mxu0 %v536
        %562 = vmatpush.bf16.msra.mxu0 %v312
        %563 = vmatmul.bf16.gmra.mxu0 %v530
        %v564 = vpop.f32.mrf.mxu0
        %v565 = vadd.f32 %v506, %v564
        %v566 = vpop.f32.mrf.mxu0
        %v567 = vadd.f32 %v508, %v566
        %568 = vdwg.mxu0
        %569 = vmatpush.bf16.msra.mxu0 0
        %570 = vmatpush.bf16.msra.mxu0 0
        %571 = vmatpush.bf16.msra.mxu0 0
        %572 = vmatpush.bf16.msra.mxu0 0
        %573 = vmatpush.bf16.msra.mxu0 0
        %574 = vmatpush.bf16.msra.mxu0 0
        %575 = vmatpush.bf16.msra.mxu0 %v539
        %576 = vmatpush.bf16.msra.mxu0 %v315
        %577 = vmatmul.bf16.gmra.mxu0 %v530
        %v578 = vpop.f32.mrf.mxu0
        %v579 = vadd.f32 %v520, %v578
        %v580 = vpop.f32.mrf.mxu0
        %v581 = vadd.f32 %v522, %v580
        %582 = vdwg.mxu0
        %583 = vst [vmem:[#allocation1] ss:$4 sm:$0xff] %v200
        %v584 = vld.sshfl [vmem:[#allocation1] sm:$0xff pattern:$0x73625140]
        %v585 = vld.sshfl [vmem:[#allocation1 + $0x8] sm:$0xff pattern:$0x73625140]
        %v586 = vld.sshfl [vmem:[#allocation1 + $0x10] sm:$0xff pattern:$0x73625140]
        %v587 = vld.sshfl [vmem:[#allocation1 + $0x18] sm:$0xff pattern:$0x73625140]
        %s588 = scalar_lea.vmem [#allocation1], 1
        %589 = vst [vmem:[%s588] ss:$4 sm:$0xff] %v200
        %v590 = vld.sshfl [vmem:[#allocation1] sm:$0xff pattern:$0x73625140]
        %v592 = vld.sshfl [vmem:[#allocation1 + $0x8] sm:$0xff pattern:$0x73625140]
        %v594 = vld.sshfl [vmem:[#allocation1 + $0x10] sm:$0xff pattern:$0x73625140]
        %v596 = vld.sshfl [vmem:[#allocation1 + $0x18] sm:$0xff pattern:$0x73625140]
        %598 = vrot.lane.b32.xlu0 %v590, 127
        %v599 = vpop.permute.xlu0 %598
        %600 = vrot.lane.b32.xlu0 %v592, 127
        %v601 = vpop.permute.xlu0 %600
        %602 = vrot.lane.b32.xlu0 %v594, 127
        %v603 = vpop.permute.xlu0 %602
        %604 = vrot.lane.b32.xlu0 %v596, 127
        %v605 = vpop.permute.xlu0 %604
        %v606 = vsel %vm224, %v599, %v601
        %v607 = vsel %vm224, %v601, %v603
        %v608 = vsel %vm224, %v603, %v605
        %s609 = scalar_lea.vmem [#allocation1], 2
        %610 = vst [vmem:[%s609] ss:$4 sm:$0xff] %v200
        %v611 = vld.sshfl [vmem:[#allocation1] sm:$0xff pattern:$0x73625140]
        %v613 = vld.sshfl [vmem:[#allocation1 + $0x8] sm:$0xff pattern:$0x73625140]
        %v615 = vld.sshfl [vmem:[#allocation1 + $0x10] sm:$0xff pattern:$0x73625140]
        %v617 = vld.sshfl [vmem:[#allocation1 + $0x18] sm:$0xff pattern:$0x73625140]
        %619 = vrot.lane.b32.xlu0 %v611, 126
        %v620 = vpop.permute.xlu0 %619
        %621 = vrot.lane.b32.xlu0 %v613, 126
        %v622 = vpop.permute.xlu0 %621
        %623 = vrot.lane.b32.xlu0 %v615, 126
        %v624 = vpop.permute.xlu0 %623
        %625 = vrot.lane.b32.xlu0 %v617, 126
        %v626 = vpop.permute.xlu0 %625
        %v627 = vsel %vm246, %v620, %v622
        %v628 = vsel %vm246, %v622, %v624
        %v629 = vsel %vm246, %v624, %v626
        %s630 = scalar_lea.vmem [#allocation1], 3
        %631 = vst [vmem:[%s630] ss:$4 sm:$0xff] %v200
        %v632 = vld.sshfl [vmem:[#allocation1] sm:$0xff pattern:$0x73625140]
        %v634 = vld.sshfl [vmem:[#allocation1 + $0x8] sm:$0xff pattern:$0x73625140]
        %v636 = vld.sshfl [vmem:[#allocation1 + $0x10] sm:$0xff pattern:$0x73625140]
        %v638 = vld.sshfl [vmem:[#allocation1 + $0x18] sm:$0xff pattern:$0x73625140]
        %640 = vrot.lane.b32.xlu0 %v632, 125
        %v641 = vpop.permute.xlu0 %640
        %642 = vrot.lane.b32.xlu0 %v634, 125
        %v643 = vpop.permute.xlu0 %642
        %644 = vrot.lane.b32.xlu0 %v636, 125
        %v645 = vpop.permute.xlu0 %644
        %646 = vrot.lane.b32.xlu0 %v638, 125
        %v647 = vpop.permute.xlu0 %646
        %v648 = vsel %vm268, %v641, %v643
        %v649 = vsel %vm268, %v643, %v645
        %v650 = vsel %vm268, %v645, %v647
        %651 = vst [vmem:[#allocation1] ss:$4 sm:$0xff] %v200
        %v652 = vld.sshfl [vmem:[#allocation1] sm:$0xff pattern:$0x73625140]
        %v654 = vld.sshfl [vmem:[#allocation1 + $0x8] sm:$0xff pattern:$0x73625140]
        %v656 = vld.sshfl [vmem:[#allocation1 + $0x10] sm:$0xff pattern:$0x73625140]
        %v658 = vld.sshfl [vmem:[#allocation1 + $0x18] sm:$0xff pattern:$0x73625140]
        %660 = vrot.lane.b32.xlu0 %v652, 124
        %v661 = vpop.permute.xlu0 %660
        %662 = vrot.lane.b32.xlu0 %v654, 124
        %v663 = vpop.permute.xlu0 %662
        %664 = vrot.lane.b32.xlu0 %v656, 124
        %v665 = vpop.permute.xlu0 %664
        %666 = vrot.lane.b32.xlu0 %v658, 124
        %v667 = vpop.permute.xlu0 %666
        %v668 = vsel %vm289, %v661, %v663
        %v669 = vsel %vm289, %v663, %v665
        %v670 = vsel %vm289, %v665, %v667
        %v672 = vsel %vm293, %v584, %v606
        %v674 = vsel %vm293, %v585, %v607
        %v676 = vsel %vm293, %v586, %v608
        %v678 = vsel %vm293, %v587, %v605
        %v680 = vsel %vm300, %v672, %v627
        %v682 = vsel %vm300, %v674, %v628
        %v684 = vsel %vm300, %v676, %v629
        %v686 = vsel %vm300, %v678, %v626
        %v688 = vsel %vm307, %v680, %v648
        %v690 = vsel %vm307, %v682, %v649
        %v692 = vsel %vm307, %v684, %v650
        %v694 = vsel %vm307, %v686, %v647
        %s695 = scalar_lea.vmem %s1, 16
        %v696 = vld [vmem:[%s695] sm:$0xf]
        %v697 = vld [vmem:[%s695 + $0x4] sm:$0xf]
        %v700 = vunpack.c.l.b16 %v696
        %v701 = vunpack.c.l.b16 %v697
        %v702 = vpack.c.b16 %v701, %v700
        %707 = vrot.lane.b32.xlu0 %v688, 88
        %v708 = vpop.permute.xlu0 %707
        %709 = vrot.lane.b32.xlu0 %v690, 88
        %v710 = vpop.permute.xlu0 %709
        %711 = vrot.lane.b32.xlu0 %v692, 88
        %v712 = vpop.permute.xlu0 %711
        %713 = vrot.lane.b32.xlu0 %v694, 88
        %v714 = vpop.permute.xlu0 %713
        %715 = vrot.lane.b32.xlu0 %v668, 88
        %v716 = vpop.permute.xlu0 %715
        %717 = vrot.lane.b32.xlu0 %v669, 88
        %v718 = vpop.permute.xlu0 %717
        %719 = vrot.lane.b32.xlu0 %v670, 88
        %v720 = vpop.permute.xlu0 %719
        %721 = vrot.lane.b32.xlu0 %v667, 88
        %v722 = vpop.permute.xlu0 %721
        %vm723 = vcmask 719872
        %v724 = vsel %vm723, %v708, %v710
        %v725 = vsel %vm723, %v710, %v712
        %v726 = vsel %vm723, %v712, %v714
        %v727 = vsel %vm723, %v716, %v718
        %v728 = vsel %vm723, %v718, %v720
        %v729 = vsel %vm723, %v720, %v722
        %v734 = vsel %vm469, %v702, 0
        %v737 = vsel %vm293, %v727, 0
        %v740 = vsel %vm293, %v728, 0
        %v743 = vsel %vm293, %v729, 0
        %745 = vmatpush.bf16.msra.mxu0 0
        %746 = vmatpush.bf16.msra.mxu0 0
        %747 = vmatpush.bf16.msra.mxu0 0
        %748 = vmatpush.bf16.msra.mxu0 0
        %749 = vmatpush.bf16.msra.mxu0 0
        %750 = vmatpush.bf16.msra.mxu0 0
        %751 = vmatpush.bf16.msra.mxu0 %v737
        %752 = vmatpush.bf16.msra.mxu0 %v724
        %753 = vmatmul.bf16.gmra.mxu0 %v734
        %v754 = vpop.f32.mrf.mxu0
        %v755 = vadd.f32 0.0, %v754
        %v756 = vpop.f32.mrf.mxu0
        %v757 = vadd.f32 0.0, %v756
        %758 = vdwg.mxu0
        %759 = vmatpush.bf16.msra.mxu0 0
        %760 = vmatpush.bf16.msra.mxu0 0
        %761 = vmatpush.bf16.msra.mxu0 0
        %762 = vmatpush.bf16.msra.mxu0 0
        %763 = vmatpush.bf16.msra.mxu0 0
        %764 = vmatpush.bf16.msra.mxu0 0
        %765 = vmatpush.bf16.msra.mxu0 %v740
        %766 = vmatpush.bf16.msra.mxu0 %v725
        %767 = vmatmul.bf16.gmra.mxu0 %v734
        %v768 = vpop.f32.mrf.mxu0
        %v769 = vadd.f32 0.0, %v768
        %v770 = vpop.f32.mrf.mxu0
        %v771 = vadd.f32 0.0, %v770
        %772 = vdwg.mxu0
        %773 = vmatpush.bf16.msra.mxu0 0
        %774 = vmatpush.bf16.msra.mxu0 0
        %775 = vmatpush.bf16.msra.mxu0 0
        %776 = vmatpush.bf16.msra.mxu0 0
        %777 = vmatpush.bf16.msra.mxu0 0
        %778 = vmatpush.bf16.msra.mxu0 0
        %779 = vmatpush.bf16.msra.mxu0 %v743
        %780 = vmatpush.bf16.msra.mxu0 %v726
        %781 = vmatmul.bf16.gmra.mxu0 %v734
        %v782 = vpop.f32.mrf.mxu0
        %v783 = vadd.f32 0.0, %v782
        %v784 = vpop.f32.mrf.mxu0
        %v785 = vadd.f32 0.0, %v784
        %786 = vdwg.mxu0
        %v787 = vadd.f32 %v551, %v755
        %v788 = vadd.f32 %v565, %v769
        %v789 = vadd.f32 %v579, %v783
        %v790 = vadd.f32 %v553, %v757
        %v791 = vadd.f32 %v567, %v771
        %v792 = vadd.f32 %v581, %v785
        %793 = vst [vmem:[#allocation1] ss:$4 sm:$0xff] %v200
        %v794 = vld.sshfl [vmem:[#allocation1] sm:$0xff pattern:$0x73625140]
        %v795 = vld.sshfl [vmem:[#allocation1 + $0x8] sm:$0xff pattern:$0x73625140]
        %v796 = vld.sshfl [vmem:[#allocation1 + $0x10] sm:$0xff pattern:$0x73625140]
        %v797 = vld.sshfl [vmem:[#allocation1 + $0x18] sm:$0xff pattern:$0x73625140]
        %s798 = scalar_lea.vmem [#allocation1], 1
        %799 = vst [vmem:[%s798] ss:$4 sm:$0xff] %v200
        %v800 = vld.sshfl [vmem:[#allocation1] sm:$0xff pattern:$0x73625140]
        %v802 = vld.sshfl [vmem:[#allocation1 + $0x8] sm:$0xff pattern:$0x73625140]
        %v804 = vld.sshfl [vmem:[#allocation1 + $0x10] sm:$0xff pattern:$0x73625140]
        %v806 = vld.sshfl [vmem:[#allocation1 + $0x18] sm:$0xff pattern:$0x73625140]
        %808 = vrot.lane.b32.xlu0 %v800, 127
        %v809 = vpop.permute.xlu0 %808
        %810 = vrot.lane.b32.xlu0 %v802, 127
        %v811 = vpop.permute.xlu0 %810
        %812 = vrot.lane.b32.xlu0 %v804, 127
        %v813 = vpop.permute.xlu0 %812
        %814 = vrot.lane.b32.xlu0 %v806, 127
        %v815 = vpop.permute.xlu0 %814
        %v816 = vsel %vm224, %v809, %v811
        %v817 = vsel %vm224, %v811, %v813
        %v818 = vsel %vm224, %v813, %v815
        %s819 = scalar_lea.vmem [#allocation1], 2
        %820 = vst [vmem:[%s819] ss:$4 sm:$0xff] %v200
        %v821 = vld.sshfl [vmem:[#allocation1] sm:$0xff pattern:$0x73625140]
        %v823 = vld.sshfl [vmem:[#allocation1 + $0x8] sm:$0xff pattern:$0x73625140]
        %v825 = vld.sshfl [vmem:[#allocation1 + $0x10] sm:$0xff pattern:$0x73625140]
        %v827 = vld.sshfl [vmem:[#allocation1 + $0x18] sm:$0xff pattern:$0x73625140]
        %829 = vrot.lane.b32.xlu0 %v821, 126
        %v830 = vpop.permute.xlu0 %829
        %831 = vrot.lane.b32.xlu0 %v823, 126
        %v832 = vpop.permute.xlu0 %831
        %833 = vrot.lane.b32.xlu0 %v825, 126
        %v834 = vpop.permute.xlu0 %833
        %835 = vrot.lane.b32.xlu0 %v827, 126
        %v836 = vpop.permute.xlu0 %835
        %v837 = vsel %vm246, %v830, %v832
        %v838 = vsel %vm246, %v832, %v834
        %v839 = vsel %vm246, %v834, %v836
        %s840 = scalar_lea.vmem [#allocation1], 3
        %841 = vst [vmem:[%s840] ss:$4 sm:$0xff] %v200
        %v842 = vld.sshfl [vmem:[#allocation1] sm:$0xff pattern:$0x73625140]
        %v844 = vld.sshfl [vmem:[#allocation1 + $0x8] sm:$0xff pattern:$0x73625140]
        %v846 = vld.sshfl [vmem:[#allocation1 + $0x10] sm:$0xff pattern:$0x73625140]
        %v848 = vld.sshfl [vmem:[#allocation1 + $0x18] sm:$0xff pattern:$0x73625140]
        %850 = vrot.lane.b32.xlu0 %v842, 125
        %v851 = vpop.permute.xlu0 %850
        %852 = vrot.lane.b32.xlu0 %v844, 125
        %v853 = vpop.permute.xlu0 %852
        %854 = vrot.lane.b32.xlu0 %v846, 125
        %v855 = vpop.permute.xlu0 %854
        %856 = vrot.lane.b32.xlu0 %v848, 125
        %v857 = vpop.permute.xlu0 %856
        %v858 = vsel %vm268, %v851, %v853
        %v859 = vsel %vm268, %v853, %v855
        %v860 = vsel %vm268, %v855, %v857
        %861 = vst [vmem:[#allocation1] ss:$4 sm:$0xff] %v200
        %v862 = vld.sshfl [vmem:[#allocation1] sm:$0xff pattern:$0x73625140]
        %v864 = vld.sshfl [vmem:[#allocation1 + $0x8] sm:$0xff pattern:$0x73625140]
        %v866 = vld.sshfl [vmem:[#allocation1 + $0x10] sm:$0xff pattern:$0x73625140]
        %v868 = vld.sshfl [vmem:[#allocation1 + $0x18] sm:$0xff pattern:$0x73625140]
        %870 = vrot.lane.b32.xlu0 %v862, 124
        %v871 = vpop.permute.xlu0 %870
        %872 = vrot.lane.b32.xlu0 %v864, 124
        %v873 = vpop.permute.xlu0 %872
        %874 = vrot.lane.b32.xlu0 %v866, 124
        %v875 = vpop.permute.xlu0 %874
        %876 = vrot.lane.b32.xlu0 %v868, 124
        %v877 = vpop.permute.xlu0 %876
        %v878 = vsel %vm289, %v871, %v873
        %v879 = vsel %vm289, %v873, %v875
        %v880 = vsel %vm289, %v875, %v877
        %v882 = vsel %vm293, %v794, %v816
        %v884 = vsel %vm293, %v795, %v817
        %v886 = vsel %vm293, %v796, %v818
        %v888 = vsel %vm293, %v797, %v815
        %v890 = vsel %vm300, %v882, %v837
        %v892 = vsel %vm300, %v884, %v838
        %v894 = vsel %vm300, %v886, %v839
        %v896 = vsel %vm300, %v888, %v836
        %v898 = vsel %vm307, %v890, %v858
        %v900 = vsel %vm307, %v892, %v859
        %v902 = vsel %vm307, %v894, %v860
        %v904 = vsel %vm307, %v896, %v857
        %s905 = scalar_lea.vmem %s1, 24
        %v906 = vld [vmem:[%s905] sm:$0xf]
        %v907 = vld [vmem:[%s905 + $0x4] sm:$0xf]
        %v910 = vunpack.c.l.b16 %v906
        %v911 = vunpack.c.l.b16 %v907
        %v912 = vpack.c.b16 %v911, %v910
        %917 = vrot.lane.b32.xlu0 %v898, 68
        %v918 = vpop.permute.xlu0 %917
        %919 = vrot.lane.b32.xlu0 %v900, 68
        %v920 = vpop.permute.xlu0 %919
        %921 = vrot.lane.b32.xlu0 %v902, 68
        %v922 = vpop.permute.xlu0 %921
        %923 = vrot.lane.b32.xlu0 %v904, 68
        %v924 = vpop.permute.xlu0 %923
        %925 = vrot.lane.b32.xlu0 %v878, 68
        %v926 = vpop.permute.xlu0 %925
        %927 = vrot.lane.b32.xlu0 %v879, 68
        %v928 = vpop.permute.xlu0 %927
        %929 = vrot.lane.b32.xlu0 %v880, 68
        %v930 = vpop.permute.xlu0 %929
        %931 = vrot.lane.b32.xlu0 %v877, 68
        %v932 = vpop.permute.xlu0 %931
        %vm933 = vcmask 556032
        %v934 = vsel %vm933, %v918, %v920
        %v935 = vsel %vm933, %v920, %v922
        %v936 = vsel %vm933, %v922, %v924
        %v937 = vsel %vm933, %v926, %v928
        %v938 = vsel %vm933, %v928, %v930
        %v939 = vsel %vm933, %v930, %v932
        %v944 = vsel %vm469, %v912, 0
        %v947 = vsel %vm293, %v937, 0
        %v950 = vsel %vm293, %v938, 0
        %v953 = vsel %vm293, %v939, 0
        %955 = vmatpush.bf16.msra.mxu0 0
        %956 = vmatpush.bf16.msra.mxu0 0
        %957 = vmatpush.bf16.msra.mxu0 0
        %958 = vmatpush.bf16.msra.mxu0 0
        %959 = vmatpush.bf16.msra.mxu0 0
        %960 = vmatpush.bf16.msra.mxu0 0
        %961 = vmatpush.bf16.msra.mxu0 %v947
        %962 = vmatpush.bf16.msra.mxu0 %v934
        %963 = vmatmul.bf16.gmra.mxu0 %v944
        %v964 = vpop.f32.mrf.mxu0
        %v965 = vadd.f32 0.0, %v964
        %v966 = vpop.f32.mrf.mxu0
        %v967 = vadd.f32 0.0, %v966
        %968 = vdwg.mxu0
        %969 = vmatpush.bf16.msra.mxu0 0
        %970 = vmatpush.bf16.msra.mxu0 0
        %971 = vmatpush.bf16.msra.mxu0 0
        %972 = vmatpush.bf16.msra.mxu0 0
        %973 = vmatpush.bf16.msra.mxu0 0
        %974 = vmatpush.bf16.msra.mxu0 0
        %975 = vmatpush.bf16.msra.mxu0 %v950
        %976 = vmatpush.bf16.msra.mxu0 %v935
        %977 = vmatmul.bf16.gmra.mxu0 %v944
        %v978 = vpop.f32.mrf.mxu0
        %v979 = vadd.f32 0.0, %v978
        %v980 = vpop.f32.mrf.mxu0
        %v981 = vadd.f32 0.0, %v980
        %982 = vdwg.mxu0
        %983 = vmatpush.bf16.msra.mxu0 0
        %984 = vmatpush.bf16.msra.mxu0 0
        %985 = vmatpush.bf16.msra.mxu0 0
        %986 = vmatpush.bf16.msra.mxu0 0
        %987 = vmatpush.bf16.msra.mxu0 0
        %988 = vmatpush.bf16.msra.mxu0 0
        %989 = vmatpush.bf16.msra.mxu0 %v953
        %990 = vmatpush.bf16.msra.mxu0 %v936
        %991 = vmatmul.bf16.gmra.mxu0 %v944
        %v992 = vpop.f32.mrf.mxu0
        %v993 = vadd.f32 0.0, %v992
        %v994 = vpop.f32.mrf.mxu0
        %v995 = vadd.f32 0.0, %v994
        %996 = vdwg.mxu0
        %v997 = vadd.f32 %v787, %v965
        %v998 = vadd.f32 %v788, %v979
        %v999 = vadd.f32 %v789, %v993
        %v1000 = vadd.f32 %v790, %v967
        %v1001 = vadd.f32 %v791, %v981
        %v1002 = vadd.f32 %v792, %v995
        %1003 = vst [vmem:[#allocation1] ss:$4 sm:$0xff] %v200
        %v1004 = vld.sshfl [vmem:[#allocation1] sm:$0xff pattern:$0x73625140]
        %v1005 = vld.sshfl [vmem:[#allocation1 + $0x8] sm:$0xff pattern:$0x73625140]
        %v1006 = vld.sshfl [vmem:[#allocation1 + $0x10] sm:$0xff pattern:$0x73625140]
        %v1007 = vld.sshfl [vmem:[#allocation1 + $0x18] sm:$0xff pattern:$0x73625140]
        %s1008 = scalar_lea.vmem [#allocation1], 1
        %1009 = vst [vmem:[%s1008] ss:$4 sm:$0xff] %v200
        %v1010 = vld.sshfl [vmem:[#allocation1] sm:$0xff pattern:$0x73625140]
        %v1012 = vld.sshfl [vmem:[#allocation1 + $0x8] sm:$0xff pattern:$0x73625140]
        %v1014 = vld.sshfl [vmem:[#allocation1 + $0x10] sm:$0xff pattern:$0x73625140]
        %v1016 = vld.sshfl [vmem:[#allocation1 + $0x18] sm:$0xff pattern:$0x73625140]
        %1018 = vrot.lane.b32.xlu0 %v1010, 127
        %v1019 = vpop.permute.xlu0 %1018
        %1020 = vrot.lane.b32.xlu0 %v1012, 127
        %v1021 = vpop.permute.xlu0 %1020
        %1022 = vrot.lane.b32.xlu0 %v1014, 127
        %v1023 = vpop.permute.xlu0 %1022
        %1024 = vrot.lane.b32.xlu0 %v1016, 127
        %v1025 = vpop.permute.xlu0 %1024
        %v1026 = vsel %vm224, %v1019, %v1021
        %v1027 = vsel %vm224, %v1021, %v1023
        %v1028 = vsel %vm224, %v1023, %v1025
        %s1029 = scalar_lea.vmem [#allocation1], 2
        %1030 = vst [vmem:[%s1029] ss:$4 sm:$0xff] %v200
        %v1031 = vld.sshfl [vmem:[#allocation1] sm:$0xff pattern:$0x73625140]
        %v1033 = vld.sshfl [vmem:[#allocation1 + $0x8] sm:$0xff pattern:$0x73625140]
        %v1035 = vld.sshfl [vmem:[#allocation1 + $0x10] sm:$0xff pattern:$0x73625140]
        %v1037 = vld.sshfl [vmem:[#allocation1 + $0x18] sm:$0xff pattern:$0x73625140]
        %1039 = vrot.lane.b32.xlu0 %v1031, 126
        %v1040 = vpop.permute.xlu0 %1039
        %1041 = vrot.lane.b32.xlu0 %v1033, 126
        %v1042 = vpop.permute.xlu0 %1041
        %1043 = vrot.lane.b32.xlu0 %v1035, 126
        %v1044 = vpop.permute.xlu0 %1043
        %1045 = vrot.lane.b32.xlu0 %v1037, 126
        %v1046 = vpop.permute.xlu0 %1045
        %v1047 = vsel %vm246, %v1040, %v1042
        %v1048 = vsel %vm246, %v1042, %v1044
        %v1049 = vsel %vm246, %v1044, %v1046
        %s1050 = scalar_lea.vmem [#allocation1], 3
        %1051 = vst [vmem:[%s1050] ss:$4 sm:$0xff] %v200
        %v1052 = vld.sshfl [vmem:[#allocation1] sm:$0xff pattern:$0x73625140]
        %v1054 = vld.sshfl [vmem:[#allocation1 + $0x8] sm:$0xff pattern:$0x73625140]
        %v1056 = vld.sshfl [vmem:[#allocation1 + $0x10] sm:$0xff pattern:$0x73625140]
        %v1058 = vld.sshfl [vmem:[#allocation1 + $0x18] sm:$0xff pattern:$0x73625140]
        %1060 = vrot.lane.b32.xlu0 %v1052, 125
        %v1061 = vpop.permute.xlu0 %1060
        %1062 = vrot.lane.b32.xlu0 %v1054, 125
        %v1063 = vpop.permute.xlu0 %1062
        %1064 = vrot.lane.b32.xlu0 %v1056, 125
        %v1065 = vpop.permute.xlu0 %1064
        %1066 = vrot.lane.b32.xlu0 %v1058, 125
        %v1067 = vpop.permute.xlu0 %1066
        %v1068 = vsel %vm268, %v1061, %v1063
        %v1069 = vsel %vm268, %v1063, %v1065
        %v1070 = vsel %vm268, %v1065, %v1067
        %1071 = vst [vmem:[#allocation1] ss:$4 sm:$0xff] %v200
        %v1072 = vld.sshfl [vmem:[#allocation1] sm:$0xff pattern:$0x73625140]
        %v1074 = vld.sshfl [vmem:[#allocation1 + $0x8] sm:$0xff pattern:$0x73625140]
        %v1076 = vld.sshfl [vmem:[#allocation1 + $0x10] sm:$0xff pattern:$0x73625140]
        %v1078 = vld.sshfl [vmem:[#allocation1 + $0x18] sm:$0xff pattern:$0x73625140]
        %1080 = vrot.lane.b32.xlu0 %v1072, 124
        %v1081 = vpop.permute.xlu0 %1080
        %1082 = vrot.lane.b32.xlu0 %v1074, 124
        %v1083 = vpop.permute.xlu0 %1082
        %1084 = vrot.lane.b32.xlu0 %v1076, 124
        %v1085 = vpop.permute.xlu0 %1084
        %1086 = vrot.lane.b32.xlu0 %v1078, 124
        %v1087 = vpop.permute.xlu0 %1086
        %v1088 = vsel %vm289, %v1081, %v1083
        %v1089 = vsel %vm289, %v1083, %v1085
        %v1090 = vsel %vm289, %v1085, %v1087
        %v1092 = vsel %vm293, %v1004, %v1026
        %v1094 = vsel %vm293, %v1005, %v1027
        %v1096 = vsel %vm293, %v1006, %v1028
        %v1098 = vsel %vm293, %v1007, %v1025
        %v1100 = vsel %vm300, %v1092, %v1047
        %v1102 = vsel %vm300, %v1094, %v1048
        %v1104 = vsel %vm300, %v1096, %v1049
        %v1106 = vsel %vm300, %v1098, %v1046
        %v1108 = vsel %vm307, %v1100, %v1068
        %v1110 = vsel %vm307, %v1102, %v1069
        %v1112 = vsel %vm307, %v1104, %v1070
        %v1114 = vsel %vm307, %v1106, %v1067
        %s1115 = scalar_lea.vmem %s1, 32
        %v1116 = vld [vmem:[%s1115] sm:$0xf]
        %v1117 = vld [vmem:[%s1115 + $0x4] sm:$0xf]
        %v1120 = vunpack.c.l.b16 %v1116
        %v1121 = vunpack.c.l.b16 %v1117
        %v1122 = vpack.c.b16 %v1121, %v1120
        %1127 = vrot.lane.b32.xlu0 %v1108, 48
        %v1128 = vpop.permute.xlu0 %1127
        %1129 = vrot.lane.b32.xlu0 %v1110, 48
        %v1130 = vpop.permute.xlu0 %1129
        %1131 = vrot.lane.b32.xlu0 %v1112, 48
        %v1132 = vpop.permute.xlu0 %1131
        %1133 = vrot.lane.b32.xlu0 %v1114, 48
        %v1134 = vpop.permute.xlu0 %1133
        %1135 = vrot.lane.b32.xlu0 %v1088, 48
        %v1136 = vpop.permute.xlu0 %1135
        %1137 = vrot.lane.b32.xlu0 %v1089, 48
        %v1138 = vpop.permute.xlu0 %1137
        %1139 = vrot.lane.b32.xlu0 %v1090, 48
        %v1140 = vpop.permute.xlu0 %1139
        %1141 = vrot.lane.b32.xlu0 %v1087, 48
        %v1142 = vpop.permute.xlu0 %1141
        %vm1143 = vcmask 392192
        %v1144 = vsel %vm1143, %v1128, %v1130
        %v1145 = vsel %vm1143, %v1130, %v1132
        %v1146 = vsel %vm1143, %v1132, %v1134
        %v1147 = vsel %vm1143, %v1136, %v1138
        %v1148 = vsel %vm1143, %v1138, %v1140
        %v1149 = vsel %vm1143, %v1140, %v1142
        %v1154 = vsel %vm469, %v1122, 0
        %v1157 = vsel %vm293, %v1147, 0
        %v1160 = vsel %vm293, %v1148, 0
        %v1163 = vsel %vm293, %v1149, 0
        %1165 = vmatpush.bf16.msra.mxu0 0
        %1166 = vmatpush.bf16.msra.mxu0 0
        %1167 = vmatpush.bf16.msra.mxu0 0
        %1168 = vmatpush.bf16.msra.mxu0 0
        %1169 = vmatpush.bf16.msra.mxu0 0
        %1170 = vmatpush.bf16.msra.mxu0 0
        %1171 = vmatpush.bf16.msra.mxu0 %v1157
        %1172 = vmatpush.bf16.msra.mxu0 %v1144
        %1173 = vmatmul.bf16.gmra.mxu0 %v1154
        %v1174 = vpop.f32.mrf.mxu0
        %v1175 = vadd.f32 0.0, %v1174
        %v1176 = vpop.f32.mrf.mxu0
        %v1177 = vadd.f32 0.0, %v1176
        %1178 = vdwg.mxu0
        %1179 = vmatpush.bf16.msra.mxu0 0
        %1180 = vmatpush.bf16.msra.mxu0 0
        %1181 = vmatpush.bf16.msra.mxu0 0
        %1182 = vmatpush.bf16.msra.mxu0 0
        %1183 = vmatpush.bf16.msra.mxu0 0
        %1184 = vmatpush.bf16.msra.mxu0 0
        %1185 = vmatpush.bf16.msra.mxu0 %v1160
        %1186 = vmatpush.bf16.msra.mxu0 %v1145
        %1187 = vmatmul.bf16.gmra.mxu0 %v1154
        %v1188 = vpop.f32.mrf.mxu0
        %v1189 = vadd.f32 0.0, %v1188
        %v1190 = vpop.f32.mrf.mxu0
        %v1191 = vadd.f32 0.0, %v1190
        %1192 = vdwg.mxu0
        %1193 = vmatpush.bf16.msra.mxu0 0
        %1194 = vmatpush.bf16.msra.mxu0 0
        %1195 = vmatpush.bf16.msra.mxu0 0
        %1196 = vmatpush.bf16.msra.mxu0 0
        %1197 = vmatpush.bf16.msra.mxu0 0
        %1198 = vmatpush.bf16.msra.mxu0 0
        %1199 = vmatpush.bf16.msra.mxu0 %v1163
        %1200 = vmatpush.bf16.msra.mxu0 %v1146
        %1201 = vmatmul.bf16.gmra.mxu0 %v1154
        %v1202 = vpop.f32.mrf.mxu0
        %v1203 = vadd.f32 0.0, %v1202
        %v1204 = vpop.f32.mrf.mxu0
        %v1205 = vadd.f32 0.0, %v1204
        %1206 = vdwg.mxu0
        %v1207 = vadd.f32 %v997, %v1175
        %v1208 = vadd.f32 %v998, %v1189
        %v1209 = vadd.f32 %v999, %v1203
        %v1210 = vadd.f32 %v1000, %v1177
        %v1211 = vadd.f32 %v1001, %v1191
        %v1212 = vadd.f32 %v1002, %v1205
        %v1213 = vld [vmem:[%s2] sm:$0xff]
        %v1214 = vld [vmem:[%s2 + $0x8] sm:$0xff]
        %1216 = vset.pattern.permute.xlu0 0
        %1217 = vperm.xlu0 %1216, %v1213
        %v1218 = vpop.permute.xlu0 %1217
        %1221 = vset.pattern.permute.xlu0 0
        %1222 = vperm.xlu0 %1221, %v1214
        %v1223 = vpop.permute.xlu0 %1222
        %v1225 = vadd.f32 %v1207, %v1218
        %v1226 = vadd.f32 %v1208, %v1218
        %v1227 = vadd.f32 %v1209, %v1218
        %v1228 = vadd.f32 %v1210, %v1223
        %v1229 = vadd.f32 %v1211, %v1223
        %v1230 = vadd.f32 %v1212, %v1223
        %v1231 = vmax.f32 %v1225, 0.0
        %v1232 = vmax.f32 %v1226, 0.0
        %v1233 = vmax.f32 %v1227, 0.0
        %v1234 = vmax.f32 %v1228, 0.0
        %v1235 = vmax.f32 %v1229, 0.0
        %v1236 = vmax.f32 %v1230, 0.0
        %v1237 = vpack.c.bf16 %v1232, %v1231
        %v1238 = vpack.c.bf16 %v1233, %v1233
        %v1239 = vpack.c.bf16 %v1235, %v1234
        %v1240 = vpack.c.bf16 %v1236, %v1236
        %1241 = vst [vmem:[%s186] sm:$0xff] %v1237
        %1242 = vst [vmem:[%s186 + $0x8] sm:$0xf] %v1238
        %1243 = vst [vmem:[%s186 + $0x30] sm:$0xff] %v1239
        %1244 = vst [vmem:[%s186 + $0x38] sm:$0xf] %v1240
        %s1245 = scalar_lea.vmem %s196, 8
        %v1246 = vld [vmem:[%s1245] sm:$0xff]
        %1248 = vst [vmem:[#allocation1] ss:$4 sm:$0xff] %v1246
        %v1249 = vld.sshfl [vmem:[#allocation1] sm:$0xff pattern:$0x73625140]
        %v1250 = vld.sshfl [vmem:[#allocation1 + $0x8] sm:$0xff pattern:$0x73625140]
        %v1251 = vld.sshfl [vmem:[#allocation1 + $0x10] sm:$0xff pattern:$0x73625140]
        %s1252 = scalar_lea.vmem [#allocation1], 1
        %1253 = vst [vmem:[%s1252] ss:$4 sm:$0xff] %v1246
        %v1254 = vld.sshfl [vmem:[#allocation1] sm:$0xff pattern:$0x73625140]
        %v1256 = vld.sshfl [vmem:[#allocation1 + $0x8] sm:$0xff pattern:$0x73625140]
        %v1258 = vld.sshfl [vmem:[#allocation1 + $0x10] sm:$0xff pattern:$0x73625140]
        %v1260 = vld.sshfl [vmem:[#allocation1 + $0x18] sm:$0xff pattern:$0x73625140]
        %1262 = vrot.lane.b32.xlu0 %v1254, 127
        %v1263 = vpop.permute.xlu0 %1262
        %1264 = vrot.lane.b32.xlu0 %v1256, 127
        %v1265 = vpop.permute.xlu0 %1264
        %1266 = vrot.lane.b32.xlu0 %v1258, 127
        %v1267 = vpop.permute.xlu0 %1266
        %1268 = vrot.lane.b32.xlu0 %v1260, 127
        %v1269 = vpop.permute.xlu0 %1268
        %v1270 = vsel %vm224, %v1263, %v1265
        %v1271 = vsel %vm224, %v1265, %v1267
        %v1272 = vsel %vm224, %v1267, %v1269
        %s1273 = scalar_lea.vmem [#allocation1], 2
        %1274 = vst [vmem:[%s1273] ss:$4 sm:$0xff] %v1246
        %v1275 = vld.sshfl [vmem:[#allocation1] sm:$0xff pattern:$0x73625140]
        %v1277 = vld.sshfl [vmem:[#allocation1 + $0x8] sm:$0xff pattern:$0x73625140]
        %v1279 = vld.sshfl [vmem:[#allocation1 + $0x10] sm:$0xff pattern:$0x73625140]
        %v1281 = vld.sshfl [vmem:[#allocation1 + $0x18] sm:$0xff pattern:$0x73625140]
        %1283 = vrot.lane.b32.xlu0 %v1275, 126
        %v1284 = vpop.permute.xlu0 %1283
        %1285 = vrot.lane.b32.xlu0 %v1277, 126
        %v1286 = vpop.permute.xlu0 %1285
        %1287 = vrot.lane.b32.xlu0 %v1279, 126
        %v1288 = vpop.permute.xlu0 %1287
        %1289 = vrot.lane.b32.xlu0 %v1281, 126
        %v1290 = vpop.permute.xlu0 %1289
        %v1291 = vsel %vm246, %v1284, %v1286
        %v1292 = vsel %vm246, %v1286, %v1288
        %v1293 = vsel %vm246, %v1288, %v1290
        %s1294 = scalar_lea.vmem [#allocation1], 3
        %1295 = vst [vmem:[%s1294] ss:$4 sm:$0xff] %v1246
        %v1296 = vld.sshfl [vmem:[#allocation1] sm:$0xff pattern:$0x73625140]
        %v1298 = vld.sshfl [vmem:[#allocation1 + $0x8] sm:$0xff pattern:$0x73625140]
        %v1300 = vld.sshfl [vmem:[#allocation1 + $0x10] sm:$0xff pattern:$0x73625140]
        %v1302 = vld.sshfl [vmem:[#allocation1 + $0x18] sm:$0xff pattern:$0x73625140]
        %1304 = vrot.lane.b32.xlu0 %v1296, 125
        %v1305 = vpop.permute.xlu0 %1304
        %1306 = vrot.lane.b32.xlu0 %v1298, 125
        %v1307 = vpop.permute.xlu0 %1306
        %1308 = vrot.lane.b32.xlu0 %v1300, 125
        %v1309 = vpop.permute.xlu0 %1308
        %1310 = vrot.lane.b32.xlu0 %v1302, 125
        %v1311 = vpop.permute.xlu0 %1310
        %v1312 = vsel %vm268, %v1305, %v1307
        %v1313 = vsel %vm268, %v1307, %v1309
        %v1314 = vsel %vm268, %v1309, %v1311
        %1315 = vst [vmem:[#allocation1] ss:$4 sm:$0xff] %v1246
        %v1316 = vld.sshfl [vmem:[#allocation1] sm:$0xff pattern:$0x73625140]
        %v1318 = vld.sshfl [vmem:[#allocation1 + $0x8] sm:$0xff pattern:$0x73625140]
        %v1320 = vld.sshfl [vmem:[#allocation1 + $0x10] sm:$0xff pattern:$0x73625140]
        %v1322 = vld.sshfl [vmem:[#allocation1 + $0x18] sm:$0xff pattern:$0x73625140]
        %1324 = vrot.lane.b32.xlu0 %v1316, 124
        %v1325 = vpop.permute.xlu0 %1324
        %1326 = vrot.lane.b32.xlu0 %v1318, 124
        %v1327 = vpop.permute.xlu0 %1326
        %1328 = vrot.lane.b32.xlu0 %v1320, 124
        %v1329 = vpop.permute.xlu0 %1328
        %1330 = vrot.lane.b32.xlu0 %v1322, 124
        %v1331 = vpop.permute.xlu0 %1330
        %v1332 = vsel %vm289, %v1325, %v1327
        %v1333 = vsel %vm289, %v1327, %v1329
        %v1334 = vsel %vm289, %v1329, %v1331
        %v1336 = vsel %vm293, %v1249, %v1270
        %v1338 = vsel %vm293, %v1250, %v1271
        %v1340 = vsel %vm293, %v1251, %v1272
        %v1342 = vsel %vm300, %v1336, %v1291
        %v1344 = vsel %vm300, %v1338, %v1292
        %v1346 = vsel %vm300, %v1340, %v1293
        %v1348 = vsel %vm307, %v1342, %v1312
        %v1351 = vsel %vm307, %v1344, %v1313
        %v1354 = vsel %vm307, %v1346, %v1314
        %v1356 = vld [vmem:[%s1] sm:$0xf]
        %v1357 = vld [vmem:[%s1 + $0x4] sm:$0xf]
        %1358 = vst [vmem:[#allocation1] ss:$4 sm:$0xff] %v1246
        %v1359 = vld.sshfl [vmem:[#allocation1] sm:$0xff pattern:$0x73625140]
        %v1360 = vld.sshfl [vmem:[#allocation1 + $0x8] sm:$0xff pattern:$0x73625140]
        %v1361 = vld.sshfl [vmem:[#allocation1 + $0x10] sm:$0xff pattern:$0x73625140]
        %v1362 = vld.sshfl [vmem:[#allocation1 + $0x18] sm:$0xff pattern:$0x73625140]
        %s1363 = scalar_lea.vmem [#allocation1], 1
        %1364 = vst [vmem:[%s1363] ss:$4 sm:$0xff] %v1246
        %v1365 = vld.sshfl [vmem:[#allocation1] sm:$0xff pattern:$0x73625140]
        %v1367 = vld.sshfl [vmem:[#allocation1 + $0x8] sm:$0xff pattern:$0x73625140]
        %v1369 = vld.sshfl [vmem:[#allocation1 + $0x10] sm:$0xff pattern:$0x73625140]
        %v1371 = vld.sshfl [vmem:[#allocation1 + $0x18] sm:$0xff pattern:$0x73625140]
        %1373 = vrot.lane.b32.xlu0 %v1365, 127
        %v1374 = vpop.permute.xlu0 %1373
        %1375 = vrot.lane.b32.xlu0 %v1367, 127
        %v1376 = vpop.permute.xlu0 %1375
        %1377 = vrot.lane.b32.xlu0 %v1369, 127
        %v1378 = vpop.permute.xlu0 %1377
        %1379 = vrot.lane.b32.xlu0 %v1371, 127
        %v1380 = vpop.permute.xlu0 %1379
        %v1381 = vsel %vm224, %v1374, %v1376
        %v1382 = vsel %vm224, %v1376, %v1378
        %v1383 = vsel %vm224, %v1378, %v1380
        %s1384 = scalar_lea.vmem [#allocation1], 2
        %1385 = vst [vmem:[%s1384] ss:$4 sm:$0xff] %v1246
        %v1386 = vld.sshfl [vmem:[#allocation1] sm:$0xff pattern:$0x73625140]
        %v1388 = vld.sshfl [vmem:[#allocation1 + $0x8] sm:$0xff pattern:$0x73625140]
        %v1390 = vld.sshfl [vmem:[#allocation1 + $0x10] sm:$0xff pattern:$0x73625140]
        %v1392 = vld.sshfl [vmem:[#allocation1 + $0x18] sm:$0xff pattern:$0x73625140]
        %1394 = vrot.lane.b32.xlu0 %v1386, 126
        %v1395 = vpop.permute.xlu0 %1394
        %1396 = vrot.lane.b32.xlu0 %v1388, 126
        %v1397 = vpop.permute.xlu0 %1396
        %1398 = vrot.lane.b32.xlu0 %v1390, 126
        %v1399 = vpop.permute.xlu0 %1398
        %1400 = vrot.lane.b32.xlu0 %v1392, 126
        %v1401 = vpop.permute.xlu0 %1400
        %v1402 = vsel %vm246, %v1395, %v1397
        %v1403 = vsel %vm246, %v1397, %v1399
        %v1404 = vsel %vm246, %v1399, %v1401
        %s1405 = scalar_lea.vmem [#allocation1], 3
        %1406 = vst [vmem:[%s1405] ss:$4 sm:$0xff] %v1246
        %v1407 = vld.sshfl [vmem:[#allocation1] sm:$0xff pattern:$0x73625140]
        %v1409 = vld.sshfl [vmem:[#allocation1 + $0x8] sm:$0xff pattern:$0x73625140]
        %v1411 = vld.sshfl [vmem:[#allocation1 + $0x10] sm:$0xff pattern:$0x73625140]
        %v1413 = vld.sshfl [vmem:[#allocation1 + $0x18] sm:$0xff pattern:$0x73625140]
        %1415 = vrot.lane.b32.xlu0 %v1407, 125
        %v1416 = vpop.permute.xlu0 %1415
        %1417 = vrot.lane.b32.xlu0 %v1409, 125
        %v1418 = vpop.permute.xlu0 %1417
        %1419 = vrot.lane.b32.xlu0 %v1411, 125
        %v1420 = vpop.permute.xlu0 %1419
        %1421 = vrot.lane.b32.xlu0 %v1413, 125
        %v1422 = vpop.permute.xlu0 %1421
        %v1423 = vsel %vm268, %v1416, %v1418
        %v1424 = vsel %vm268, %v1418, %v1420
        %v1425 = vsel %vm268, %v1420, %v1422
        %1426 = vst [vmem:[#allocation1] ss:$4 sm:$0xff] %v1246
        %v1427 = vld.sshfl [vmem:[#allocation1] sm:$0xff pattern:$0x73625140]
        %v1429 = vld.sshfl [vmem:[#allocation1 + $0x8] sm:$0xff pattern:$0x73625140]
        %v1431 = vld.sshfl [vmem:[#allocation1 + $0x10] sm:$0xff pattern:$0x73625140]
        %v1433 = vld.sshfl [vmem:[#allocation1 + $0x18] sm:$0xff pattern:$0x73625140]
        %1435 = vrot.lane.b32.xlu0 %v1427, 124
        %v1436 = vpop.permute.xlu0 %1435
        %1437 = vrot.lane.b32.xlu0 %v1429, 124
        %v1438 = vpop.permute.xlu0 %1437
        %1439 = vrot.lane.b32.xlu0 %v1431, 124
        %v1440 = vpop.permute.xlu0 %1439
        %1441 = vrot.lane.b32.xlu0 %v1433, 124
        %v1442 = vpop.permute.xlu0 %1441
        %v1443 = vsel %vm289, %v1436, %v1438
        %v1444 = vsel %vm289, %v1438, %v1440
        %v1445 = vsel %vm289, %v1440, %v1442
        %v1447 = vsel %vm293, %v1359, %v1381
        %v1449 = vsel %vm293, %v1360, %v1382
        %v1451 = vsel %vm293, %v1361, %v1383
        %v1453 = vsel %vm293, %v1362, %v1380
        %v1455 = vsel %vm300, %v1447, %v1402
        %v1457 = vsel %vm300, %v1449, %v1403
        %v1459 = vsel %vm300, %v1451, %v1404
        %v1461 = vsel %vm300, %v1453, %v1401
        %v1463 = vsel %vm307, %v1455, %v1423
        %v1465 = vsel %vm307, %v1457, %v1424
        %v1467 = vsel %vm307, %v1459, %v1425
        %v1469 = vsel %vm307, %v1461, %v1422
        %v1470 = vld [vmem:[%s431] sm:$0xf]
        %v1471 = vld [vmem:[%s431 + $0x4] sm:$0xf]
        %v1474 = vunpack.c.l.b16 %v1470
        %v1475 = vunpack.c.l.b16 %v1471
        %v1476 = vpack.c.b16 %v1475, %v1474
        %1481 = vrot.lane.b32.xlu0 %v1463, 108
        %v1482 = vpop.permute.xlu0 %1481
        %1483 = vrot.lane.b32.xlu0 %v1465, 108
        %v1484 = vpop.permute.xlu0 %1483
        %1485 = vrot.lane.b32.xlu0 %v1467, 108
        %v1486 = vpop.permute.xlu0 %1485
        %1487 = vrot.lane.b32.xlu0 %v1469, 108
        %v1488 = vpop.permute.xlu0 %1487
        %1489 = vrot.lane.b32.xlu0 %v1443, 108
        %v1490 = vpop.permute.xlu0 %1489
        %1491 = vrot.lane.b32.xlu0 %v1444, 108
        %v1492 = vpop.permute.xlu0 %1491
        %1493 = vrot.lane.b32.xlu0 %v1445, 108
        %v1494 = vpop.permute.xlu0 %1493
        %1495 = vrot.lane.b32.xlu0 %v1442, 108
        %v1496 = vpop.permute.xlu0 %1495
        %v1497 = vsel %vm459, %v1482, %v1484
        %v1498 = vsel %vm459, %v1484, %v1486
        %v1499 = vsel %vm459, %v1486, %v1488
        %v1500 = vsel %vm459, %v1490, %v1492
        %v1501 = vsel %vm459, %v1492, %v1494
        %v1502 = vsel %vm459, %v1494, %v1496
        %v1507 = vsel %vm469, %v1476, 0
        %v1510 = vsel %vm293, %v1500, 0
        %v1513 = vsel %vm293, %v1501, 0
        %v1516 = vsel %vm293, %v1502, 0
        %1518 = vmatpush.bf16.msra.mxu0 0
        %1519 = vmatpush.bf16.msra.mxu0 0
        %1520 = vmatpush.bf16.msra.mxu0 0
        %1521 = vmatpush.bf16.msra.mxu0 0
        %1522 = vmatpush.bf16.msra.mxu0 0
        %1523 = vmatpush.bf16.msra.mxu0 0
        %1524 = vmatpush.bf16.msra.mxu0 %v1510
        %1525 = vmatpush.bf16.msra.mxu0 %v1497
        %1526 = vmatmul.bf16.gmra.mxu0 %v1507
        %v1527 = vpop.f32.mrf.mxu0
        %v1528 = vadd.f32 0.0, %v1527
        %v1529 = vpop.f32.mrf.mxu0
        %v1530 = vadd.f32 0.0, %v1529
        %1531 = vdwg.mxu0
        %1532 = vmatpush.bf16.msra.mxu0 0
        %1533 = vmatpush.bf16.msra.mxu0 0
        %1534 = vmatpush.bf16.msra.mxu0 0
        %1535 = vmatpush.bf16.msra.mxu0 0
        %1536 = vmatpush.bf16.msra.mxu0 0
        %1537 = vmatpush.bf16.msra.mxu0 0
        %1538 = vmatpush.bf16.msra.mxu0 %v1513
        %1539 = vmatpush.bf16.msra.mxu0 %v1498
        %1540 = vmatmul.bf16.gmra.mxu0 %v1507
        %v1541 = vpop.f32.mrf.mxu0
        %v1542 = vadd.f32 0.0, %v1541
        %v1543 = vpop.f32.mrf.mxu0
        %v1544 = vadd.f32 0.0, %v1543
        %1545 = vdwg.mxu0
        %1546 = vmatpush.bf16.msra.mxu0 0
        %1547 = vmatpush.bf16.msra.mxu0 0
        %1548 = vmatpush.bf16.msra.mxu0 0
        %1549 = vmatpush.bf16.msra.mxu0 0
        %1550 = vmatpush.bf16.msra.mxu0 0
        %1551 = vmatpush.bf16.msra.mxu0 0
        %1552 = vmatpush.bf16.msra.mxu0 %v1516
        %1553 = vmatpush.bf16.msra.mxu0 %v1499
        %1554 = vmatmul.bf16.gmra.mxu0 %v1507
        %v1555 = vpop.f32.mrf.mxu0
        %v1556 = vadd.f32 0.0, %v1555
        %v1557 = vpop.f32.mrf.mxu0
        %v1558 = vadd.f32 0.0, %v1557
        %1559 = vdwg.mxu0
        %v1562 = vunpack.c.l.b16 %v1356
        %v1563 = vunpack.c.l.b16 %v1357
        %v1564 = vpack.c.b16 %v1563, %v1562
        %v1566 = vsel %vm469, %v1564, 0
        %v1569 = vsel %vm293, %v1332, 0
        %v1572 = vsel %vm293, %v1333, 0
        %v1575 = vsel %vm293, %v1334, 0
        %1577 = vmatpush.bf16.msra.mxu0 0
        %1578 = vmatpush.bf16.msra.mxu0 0
        %1579 = vmatpush.bf16.msra.mxu0 0
        %1580 = vmatpush.bf16.msra.mxu0 0
        %1581 = vmatpush.bf16.msra.mxu0 0
        %1582 = vmatpush.bf16.msra.mxu0 0
        %1583 = vmatpush.bf16.msra.mxu0 %v1569
        %1584 = vmatpush.bf16.msra.mxu0 %v1348
        %1585 = vmatmul.bf16.gmra.mxu0 %v1566
        %v1586 = vpop.f32.mrf.mxu0
        %v1587 = vadd.f32 %v1528, %v1586
        %v1588 = vpop.f32.mrf.mxu0
        %v1589 = vadd.f32 %v1530, %v1588
        %1590 = vdwg.mxu0
        %1591 = vmatpush.bf16.msra.mxu0 0
        %1592 = vmatpush.bf16.msra.mxu0 0
        %1593 = vmatpush.bf16.msra.mxu0 0
        %1594 = vmatpush.bf16.msra.mxu0 0
        %1595 = vmatpush.bf16.msra.mxu0 0
        %1596 = vmatpush.bf16.msra.mxu0 0
        %1597 = vmatpush.bf16.msra.mxu0 %v1572
        %1598 = vmatpush.bf16.msra.mxu0 %v1351
        %1599 = vmatmul.bf16.gmra.mxu0 %v1566
        %v1600 = vpop.f32.mrf.mxu0
        %v1601 = vadd.f32 %v1542, %v1600
        %v1602 = vpop.f32.mrf.mxu0
        %v1603 = vadd.f32 %v1544, %v1602
        %1604 = vdwg.mxu0
        %1605 = vmatpush.bf16.msra.mxu0 0
        %1606 = vmatpush.bf16.msra.mxu0 0
        %1607 = vmatpush.bf16.msra.mxu0 0
        %1608 = vmatpush.bf16.msra.mxu0 0
        %1609 = vmatpush.bf16.msra.mxu0 0
        %1610 = vmatpush.bf16.msra.mxu0 0
        %1611 = vmatpush.bf16.msra.mxu0 %v1575
        %1612 = vmatpush.bf16.msra.mxu0 %v1354
        %1613 = vmatmul.bf16.gmra.mxu0 %v1566
        %v1614 = vpop.f32.mrf.mxu0
        %v1615 = vadd.f32 %v1556, %v1614
        %v1616 = vpop.f32.mrf.mxu0
        %v1617 = vadd.f32 %v1558, %v1616
        %1618 = vdwg.mxu0
        %1619 = vst [vmem:[#allocation1] ss:$4 sm:$0xff] %v1246
        %v1620 = vld.sshfl [vmem:[#allocation1] sm:$0xff pattern:$0x73625140]
        %v1621 = vld.sshfl [vmem:[#allocation1 + $0x8] sm:$0xff pattern:$0x73625140]
        %v1622 = vld.sshfl [vmem:[#allocation1 + $0x10] sm:$0xff pattern:$0x73625140]
        %v1623 = vld.sshfl [vmem:[#allocation1 + $0x18] sm:$0xff pattern:$0x73625140]
        %s1624 = scalar_lea.vmem [#allocation1], 1
        %1625 = vst [vmem:[%s1624] ss:$4 sm:$0xff] %v1246
        %v1626 = vld.sshfl [vmem:[#allocation1] sm:$0xff pattern:$0x73625140]
        %v1628 = vld.sshfl [vmem:[#allocation1 + $0x8] sm:$0xff pattern:$0x73625140]
        %v1630 = vld.sshfl [vmem:[#allocation1 + $0x10] sm:$0xff pattern:$0x73625140]
        %v1632 = vld.sshfl [vmem:[#allocation1 + $0x18] sm:$0xff pattern:$0x73625140]
        %1634 = vrot.lane.b32.xlu0 %v1626, 127
        %v1635 = vpop.permute.xlu0 %1634
        %1636 = vrot.lane.b32.xlu0 %v1628, 127
        %v1637 = vpop.permute.xlu0 %1636
        %1638 = vrot.lane.b32.xlu0 %v1630, 127
        %v1639 = vpop.permute.xlu0 %1638
        %1640 = vrot.lane.b32.xlu0 %v1632, 127
        %v1641 = vpop.permute.xlu0 %1640
        %v1642 = vsel %vm224, %v1635, %v1637
        %v1643 = vsel %vm224, %v1637, %v1639
        %v1644 = vsel %vm224, %v1639, %v1641
        %s1645 = scalar_lea.vmem [#allocation1], 2
        %1646 = vst [vmem:[%s1645] ss:$4 sm:$0xff] %v1246
        %v1647 = vld.sshfl [vmem:[#allocation1] sm:$0xff pattern:$0x73625140]
        %v1649 = vld.sshfl [vmem:[#allocation1 + $0x8] sm:$0xff pattern:$0x73625140]
        %v1651 = vld.sshfl [vmem:[#allocation1 + $0x10] sm:$0xff pattern:$0x73625140]
        %v1653 = vld.sshfl [vmem:[#allocation1 + $0x18] sm:$0xff pattern:$0x73625140]
        %1655 = vrot.lane.b32.xlu0 %v1647, 126
        %v1656 = vpop.permute.xlu0 %1655
        %1657 = vrot.lane.b32.xlu0 %v1649, 126
        %v1658 = vpop.permute.xlu0 %1657
        %1659 = vrot.lane.b32.xlu0 %v1651, 126
        %v1660 = vpop.permute.xlu0 %1659
        %1661 = vrot.lane.b32.xlu0 %v1653, 126
        %v1662 = vpop.permute.xlu0 %1661
        %v1663 = vsel %vm246, %v1656, %v1658
        %v1664 = vsel %vm246, %v1658, %v1660
        %v1665 = vsel %vm246, %v1660, %v1662
        %s1666 = scalar_lea.vmem [#allocation1], 3
        %1667 = vst [vmem:[%s1666] ss:$4 sm:$0xff] %v1246
        %v1668 = vld.sshfl [vmem:[#allocation1] sm:$0xff pattern:$0x73625140]
        %v1670 = vld.sshfl [vmem:[#allocation1 + $0x8] sm:$0xff pattern:$0x73625140]
        %v1672 = vld.sshfl [vmem:[#allocation1 + $0x10] sm:$0xff pattern:$0x73625140]
        %v1674 = vld.sshfl [vmem:[#allocation1 + $0x18] sm:$0xff pattern:$0x73625140]
        %1676 = vrot.lane.b32.xlu0 %v1668, 125
        %v1677 = vpop.permute.xlu0 %1676
        %1678 = vrot.lane.b32.xlu0 %v1670, 125
        %v1679 = vpop.permute.xlu0 %1678
        %1680 = vrot.lane.b32.xlu0 %v1672, 125
        %v1681 = vpop.permute.xlu0 %1680
        %1682 = vrot.lane.b32.xlu0 %v1674, 125
        %v1683 = vpop.permute.xlu0 %1682
        %v1684 = vsel %vm268, %v1677, %v1679
        %v1685 = vsel %vm268, %v1679, %v1681
        %v1686 = vsel %vm268, %v1681, %v1683
        %1687 = vst [vmem:[#allocation1] ss:$4 sm:$0xff] %v1246
        %v1688 = vld.sshfl [vmem:[#allocation1] sm:$0xff pattern:$0x73625140]
        %v1690 = vld.sshfl [vmem:[#allocation1 + $0x8] sm:$0xff pattern:$0x73625140]
        %v1692 = vld.sshfl [vmem:[#allocation1 + $0x10] sm:$0xff pattern:$0x73625140]
        %v1694 = vld.sshfl [vmem:[#allocation1 + $0x18] sm:$0xff pattern:$0x73625140]
        %1696 = vrot.lane.b32.xlu0 %v1688, 124
        %v1697 = vpop.permute.xlu0 %1696
        %1698 = vrot.lane.b32.xlu0 %v1690, 124
        %v1699 = vpop.permute.xlu0 %1698
        %1700 = vrot.lane.b32.xlu0 %v1692, 124
        %v1701 = vpop.permute.xlu0 %1700
        %1702 = vrot.lane.b32.xlu0 %v1694, 124
        %v1703 = vpop.permute.xlu0 %1702
        %v1704 = vsel %vm289, %v1697, %v1699
        %v1705 = vsel %vm289, %v1699, %v1701
        %v1706 = vsel %vm289, %v1701, %v1703
        %v1708 = vsel %vm293, %v1620, %v1642
        %v1710 = vsel %vm293, %v1621, %v1643
        %v1712 = vsel %vm293, %v1622, %v1644
        %v1714 = vsel %vm293, %v1623, %v1641
        %v1716 = vsel %vm300, %v1708, %v1663
        %v1718 = vsel %vm300, %v1710, %v1664
        %v1720 = vsel %vm300, %v1712, %v1665
        %v1722 = vsel %vm300, %v1714, %v1662
        %v1724 = vsel %vm307, %v1716, %v1684
        %v1726 = vsel %vm307, %v1718, %v1685
        %v1728 = vsel %vm307, %v1720, %v1686
        %v1730 = vsel %vm307, %v1722, %v1683
        %v1731 = vld [vmem:[%s695] sm:$0xf]
        %v1732 = vld [vmem:[%s695 + $0x4] sm:$0xf]
        %v1735 = vunpack.c.l.b16 %v1731
        %v1736 = vunpack.c.l.b16 %v1732
        %v1737 = vpack.c.b16 %v1736, %v1735
        %1742 = vrot.lane.b32.xlu0 %v1724, 88
        %v1743 = vpop.permute.xlu0 %1742
        %1744 = vrot.lane.b32.xlu0 %v1726, 88
        %v1745 = vpop.permute.xlu0 %1744
        %1746 = vrot.lane.b32.xlu0 %v1728, 88
        %v1747 = vpop.permute.xlu0 %1746
        %1748 = vrot.lane.b32.xlu0 %v1730, 88
        %v1749 = vpop.permute.xlu0 %1748
        %1750 = vrot.lane.b32.xlu0 %v1704, 88
        %v1751 = vpop.permute.xlu0 %1750
        %1752 = vrot.lane.b32.xlu0 %v1705, 88
        %v1753 = vpop.permute.xlu0 %1752
        %1754 = vrot.lane.b32.xlu0 %v1706, 88
        %v1755 = vpop.permute.xlu0 %1754
        %1756 = vrot.lane.b32.xlu0 %v1703, 88
        %v1757 = vpop.permute.xlu0 %1756
        %v1758 = vsel %vm723, %v1743, %v1745
        %v1759 = vsel %vm723, %v1745, %v1747
        %v1760 = vsel %vm723, %v1747, %v1749
        %v1761 = vsel %vm723, %v1751, %v1753
        %v1762 = vsel %vm723, %v1753, %v1755
        %v1763 = vsel %vm723, %v1755, %v1757
        %v1768 = vsel %vm469, %v1737, 0
        %v1771 = vsel %vm293, %v1761, 0
        %v1774 = vsel %vm293, %v1762, 0
        %v1777 = vsel %vm293, %v1763, 0
        %1779 = vmatpush.bf16.msra.mxu0 0
        %1780 = vmatpush.bf16.msra.mxu0 0
        %1781 = vmatpush.bf16.msra.mxu0 0
        %1782 = vmatpush.bf16.msra.mxu0 0
        %1783 = vmatpush.bf16.msra.mxu0 0
        %1784 = vmatpush.bf16.msra.mxu0 0
        %1785 = vmatpush.bf16.msra.mxu0 %v1771
        %1786 = vmatpush.bf16.msra.mxu0 %v1758
        %1787 = vmatmul.bf16.gmra.mxu0 %v1768
        %v1788 = vpop.f32.mrf.mxu0
        %v1789 = vadd.f32 0.0, %v1788
        %v1790 = vpop.f32.mrf.mxu0
        %v1791 = vadd.f32 0.0, %v1790
        %1792 = vdwg.mxu0
        %1793 = vmatpush.bf16.msra.mxu0 0
        %1794 = vmatpush.bf16.msra.mxu0 0
        %1795 = vmatpush.bf16.msra.mxu0 0
        %1796 = vmatpush.bf16.msra.mxu0 0
        %1797 = vmatpush.bf16.msra.mxu0 0
        %1798 = vmatpush.bf16.msra.mxu0 0
        %1799 = vmatpush.bf16.msra.mxu0 %v1774
        %1800 = vmatpush.bf16.msra.mxu0 %v1759
        %1801 = vmatmul.bf16.gmra.mxu0 %v1768
        %v1802 = vpop.f32.mrf.mxu0
        %v1803 = vadd.f32 0.0, %v1802
        %v1804 = vpop.f32.mrf.mxu0
        %v1805 = vadd.f32 0.0, %v1804
        %1806 = vdwg.mxu0
        %1807 = vmatpush.bf16.msra.mxu0 0
        %1808 = vmatpush.bf16.msra.mxu0 0
        %1809 = vmatpush.bf16.msra.mxu0 0
        %1810 = vmatpush.bf16.msra.mxu0 0
        %1811 = vmatpush.bf16.msra.mxu0 0
        %1812 = vmatpush.bf16.msra.mxu0 0
        %1813 = vmatpush.bf16.msra.mxu0 %v1777
        %1814 = vmatpush.bf16.msra.mxu0 %v1760
        %1815 = vmatmul.bf16.gmra.mxu0 %v1768
        %v1816 = vpop.f32.mrf.mxu0
        %v1817 = vadd.f32 0.0, %v1816
        %v1818 = vpop.f32.mrf.mxu0
        %v1819 = vadd.f32 0.0, %v1818
        %1820 = vdwg.mxu0
        %v1821 = vadd.f32 %v1587, %v1789
        %v1822 = vadd.f32 %v1601, %v1803
        %v1823 = vadd.f32 %v1615, %v1817
        %v1824 = vadd.f32 %v1589, %v1791
        %v1825 = vadd.f32 %v1603, %v1805
        %v1826 = vadd.f32 %v1617, %v1819
        %1827 = vst [vmem:[#allocation1] ss:$4 sm:$0xff] %v1246
        %v1828 = vld.sshfl [vmem:[#allocation1] sm:$0xff pattern:$0x73625140]
        %v1829 = vld.sshfl [vmem:[#allocation1 + $0x8] sm:$0xff pattern:$0x73625140]
        %v1830 = vld.sshfl [vmem:[#allocation1 + $0x10] sm:$0xff pattern:$0x73625140]
        %v1831 = vld.sshfl [vmem:[#allocation1 + $0x18] sm:$0xff pattern:$0x73625140]
        %s1832 = scalar_lea.vmem [#allocation1], 1
        %1833 = vst [vmem:[%s1832] ss:$4 sm:$0xff] %v1246
        %v1834 = vld.sshfl [vmem:[#allocation1] sm:$0xff pattern:$0x73625140]
        %v1836 = vld.sshfl [vmem:[#allocation1 + $0x8] sm:$0xff pattern:$0x73625140]
        %v1838 = vld.sshfl [vmem:[#allocation1 + $0x10] sm:$0xff pattern:$0x73625140]
        %v1840 = vld.sshfl [vmem:[#allocation1 + $0x18] sm:$0xff pattern:$0x73625140]
        %1842 = vrot.lane.b32.xlu0 %v1834, 127
        %v1843 = vpop.permute.xlu0 %1842
        %1844 = vrot.lane.b32.xlu0 %v1836, 127
        %v1845 = vpop.permute.xlu0 %1844
        %1846 = vrot.lane.b32.xlu0 %v1838, 127
        %v1847 = vpop.permute.xlu0 %1846
        %1848 = vrot.lane.b32.xlu0 %v1840, 127
        %v1849 = vpop.permute.xlu0 %1848
        %v1850 = vsel %vm224, %v1843, %v1845
        %v1851 = vsel %vm224, %v1845, %v1847
        %v1852 = vsel %vm224, %v1847, %v1849
        %s1853 = scalar_lea.vmem [#allocation1], 2
        %1854 = vst [vmem:[%s1853] ss:$4 sm:$0xff] %v1246
        %v1855 = vld.sshfl [vmem:[#allocation1] sm:$0xff pattern:$0x73625140]
        %v1857 = vld.sshfl [vmem:[#allocation1 + $0x8] sm:$0xff pattern:$0x73625140]
        %v1859 = vld.sshfl [vmem:[#allocation1 + $0x10] sm:$0xff pattern:$0x73625140]
        %v1861 = vld.sshfl [vmem:[#allocation1 + $0x18] sm:$0xff pattern:$0x73625140]
        %1863 = vrot.lane.b32.xlu0 %v1855, 126
        %v1864 = vpop.permute.xlu0 %1863
        %1865 = vrot.lane.b32.xlu0 %v1857, 126
        %v1866 = vpop.permute.xlu0 %1865
        %1867 = vrot.lane.b32.xlu0 %v1859, 126
        %v1868 = vpop.permute.xlu0 %1867
        %1869 = vrot.lane.b32.xlu0 %v1861, 126
        %v1870 = vpop.permute.xlu0 %1869
        %v1871 = vsel %vm246, %v1864, %v1866
        %v1872 = vsel %vm246, %v1866, %v1868
        %v1873 = vsel %vm246, %v1868, %v1870
        %s1874 = scalar_lea.vmem [#allocation1], 3
        %1875 = vst [vmem:[%s1874] ss:$4 sm:$0xff] %v1246
        %v1876 = vld.sshfl [vmem:[#allocation1] sm:$0xff pattern:$0x73625140]
        %v1878 = vld.sshfl [vmem:[#allocation1 + $0x8] sm:$0xff pattern:$0x73625140]
        %v1880 = vld.sshfl [vmem:[#allocation1 + $0x10] sm:$0xff pattern:$0x73625140]
        %v1882 = vld.sshfl [vmem:[#allocation1 + $0x18] sm:$0xff pattern:$0x73625140]
        %1884 = vrot.lane.b32.xlu0 %v1876, 125
        %v1885 = vpop.permute.xlu0 %1884
        %1886 = vrot.lane.b32.xlu0 %v1878, 125
        %v1887 = vpop.permute.xlu0 %1886
        %1888 = vrot.lane.b32.xlu0 %v1880, 125
        %v1889 = vpop.permute.xlu0 %1888
        %1890 = vrot.lane.b32.xlu0 %v1882, 125
        %v1891 = vpop.permute.xlu0 %1890
        %v1892 = vsel %vm268, %v1885, %v1887
        %v1893 = vsel %vm268, %v1887, %v1889
        %v1894 = vsel %vm268, %v1889, %v1891
        %1895 = vst [vmem:[#allocation1] ss:$4 sm:$0xff] %v1246
        %v1896 = vld.sshfl [vmem:[#allocation1] sm:$0xff pattern:$0x73625140]
        %v1898 = vld.sshfl [vmem:[#allocation1 + $0x8] sm:$0xff pattern:$0x73625140]
        %v1900 = vld.sshfl [vmem:[#allocation1 + $0x10] sm:$0xff pattern:$0x73625140]
        %v1902 = vld.sshfl [vmem:[#allocation1 + $0x18] sm:$0xff pattern:$0x73625140]
        %1904 = vrot.lane.b32.xlu0 %v1896, 124
        %v1905 = vpop.permute.xlu0 %1904
        %1906 = vrot.lane.b32.xlu0 %v1898, 124
        %v1907 = vpop.permute.xlu0 %1906
        %1908 = vrot.lane.b32.xlu0 %v1900, 124
        %v1909 = vpop.permute.xlu0 %1908
        %1910 = vrot.lane.b32.xlu0 %v1902, 124
        %v1911 = vpop.permute.xlu0 %1910
        %v1912 = vsel %vm289, %v1905, %v1907
        %v1913 = vsel %vm289, %v1907, %v1909
        %v1914 = vsel %vm289, %v1909, %v1911
        %v1916 = vsel %vm293, %v1828, %v1850
        %v1918 = vsel %vm293, %v1829, %v1851
        %v1920 = vsel %vm293, %v1830, %v1852
        %v1922 = vsel %vm293, %v1831, %v1849
        %v1924 = vsel %vm300, %v1916, %v1871
        %v1926 = vsel %vm300, %v1918, %v1872
        %v1928 = vsel %vm300, %v1920, %v1873
        %v1930 = vsel %vm300, %v1922, %v1870
        %v1932 = vsel %vm307, %v1924, %v1892
        %v1934 = vsel %vm307, %v1926, %v1893
        %v1936 = vsel %vm307, %v1928, %v1894
        %v1938 = vsel %vm307, %v1930, %v1891
        %v1939 = vld [vmem:[%s905] sm:$0xf]
        %v1940 = vld [vmem:[%s905 + $0x4] sm:$0xf]
        %v1943 = vunpack.c.l.b16 %v1939
        %v1944 = vunpack.c.l.b16 %v1940
        %v1945 = vpack.c.b16 %v1944, %v1943
        %1950 = vrot.lane.b32.xlu0 %v1932, 68
        %v1951 = vpop.permute.xlu0 %1950
        %1952 = vrot.lane.b32.xlu0 %v1934, 68
        %v1953 = vpop.permute.xlu0 %1952
        %1954 = vrot.lane.b32.xlu0 %v1936, 68
        %v1955 = vpop.permute.xlu0 %1954
        %1956 = vrot.lane.b32.xlu0 %v1938, 68
        %v1957 = vpop.permute.xlu0 %1956
        %1958 = vrot.lane.b32.xlu0 %v1912, 68
        %v1959 = vpop.permute.xlu0 %1958
        %1960 = vrot.lane.b32.xlu0 %v1913, 68
        %v1961 = vpop.permute.xlu0 %1960
        %1962 = vrot.lane.b32.xlu0 %v1914, 68
        %v1963 = vpop.permute.xlu0 %1962
        %1964 = vrot.lane.b32.xlu0 %v1911, 68
        %v1965 = vpop.permute.xlu0 %1964
        %v1966 = vsel %vm933, %v1951, %v1953
        %v1967 = vsel %vm933, %v1953, %v1955
        %v1968 = vsel %vm933, %v1955, %v1957
        %v1969 = vsel %vm933, %v1959, %v1961
        %v1970 = vsel %vm933, %v1961, %v1963
        %v1971 = vsel %vm933, %v1963, %v1965
        %v1976 = vsel %vm469, %v1945, 0
        %v1979 = vsel %vm293, %v1969, 0
        %v1982 = vsel %vm293, %v1970, 0
        %v1985 = vsel %vm293, %v1971, 0
        %1987 = vmatpush.bf16.msra.mxu0 0
        %1988 = vmatpush.bf16.msra.mxu0 0
        %1989 = vmatpush.bf16.msra.mxu0 0
        %1990 = vmatpush.bf16.msra.mxu0 0
        %1991 = vmatpush.bf16.msra.mxu0 0
        %1992 = vmatpush.bf16.msra.mxu0 0
        %1993 = vmatpush.bf16.msra.mxu0 %v1979
        %1994 = vmatpush.bf16.msra.mxu0 %v1966
        %1995 = vmatmul.bf16.gmra.mxu0 %v1976
        %v1996 = vpop.f32.mrf.mxu0
        %v1997 = vadd.f32 0.0, %v1996
        %v1998 = vpop.f32.mrf.mxu0
        %v1999 = vadd.f32 0.0, %v1998
        %2000 = vdwg.mxu0
        %2001 = vmatpush.bf16.msra.mxu0 0
        %2002 = vmatpush.bf16.msra.mxu0 0
        %2003 = vmatpush.bf16.msra.mxu0 0
        %2004 = vmatpush.bf16.msra.mxu0 0
        %2005 = vmatpush.bf16.msra.mxu0 0
        %2006 = vmatpush.bf16.msra.mxu0 0
        %2007 = vmatpush.bf16.msra.mxu0 %v1982
        %2008 = vmatpush.bf16.msra.mxu0 %v1967
        %2009 = vmatmul.bf16.gmra.mxu0 %v1976
        %v2010 = vpop.f32.mrf.mxu0
        %v2011 = vadd.f32 0.0, %v2010
        %v2012 = vpop.f32.mrf.mxu0
        %v2013 = vadd.f32 0.0, %v2012
        %2014 = vdwg.mxu0
        %2015 = vmatpush.bf16.msra.mxu0 0
        %2016 = vmatpush.bf16.msra.mxu0 0
        %2017 = vmatpush.bf16.msra.mxu0 0
        %2018 = vmatpush.bf16.msra.mxu0 0
        %2019 = vmatpush.bf16.msra.mxu0 0
        %2020 = vmatpush.bf16.msra.mxu0 0
        %2021 = vmatpush.bf16.msra.mxu0 %v1985
        %2022 = vmatpush.bf16.msra.mxu0 %v1968
        %2023 = vmatmul.bf16.gmra.mxu0 %v1976
        %v2024 = vpop.f32.mrf.mxu0
        %v2025 = vadd.f32 0.0, %v2024
        %v2026 = vpop.f32.mrf.mxu0
        %v2027 = vadd.f32 0.0, %v2026
        %2028 = vdwg.mxu0
        %v2029 = vadd.f32 %v1821, %v1997
        %v2030 = vadd.f32 %v1822, %v2011
        %v2031 = vadd.f32 %v1823, %v2025
        %v2032 = vadd.f32 %v1824, %v1999
        %v2033 = vadd.f32 %v1825, %v2013
        %v2034 = vadd.f32 %v1826, %v2027
        %2035 = vst [vmem:[#allocation1] ss:$4 sm:$0xff] %v1246
        %v2036 = vld.sshfl [vmem:[#allocation1] sm:$0xff pattern:$0x73625140]
        %v2037 = vld.sshfl [vmem:[#allocation1 + $0x8] sm:$0xff pattern:$0x73625140]
        %v2038 = vld.sshfl [vmem:[#allocation1 + $0x10] sm:$0xff pattern:$0x73625140]
        %v2039 = vld.sshfl [vmem:[#allocation1 + $0x18] sm:$0xff pattern:$0x73625140]
        %s2040 = scalar_lea.vmem [#allocation1], 1
        %2041 = vst [vmem:[%s2040] ss:$4 sm:$0xff] %v1246
        %v2042 = vld.sshfl [vmem:[#allocation1] sm:$0xff pattern:$0x73625140]
        %v2044 = vld.sshfl [vmem:[#allocation1 + $0x8] sm:$0xff pattern:$0x73625140]
        %v2046 = vld.sshfl [vmem:[#allocation1 + $0x10] sm:$0xff pattern:$0x73625140]
        %v2048 = vld.sshfl [vmem:[#allocation1 + $0x18] sm:$0xff pattern:$0x73625140]
        %2050 = vrot.lane.b32.xlu0 %v2042, 127
        %v2051 = vpop.permute.xlu0 %2050
        %2052 = vrot.lane.b32.xlu0 %v2044, 127
        %v2053 = vpop.permute.xlu0 %2052
        %2054 = vrot.lane.b32.xlu0 %v2046, 127
        %v2055 = vpop.permute.xlu0 %2054
        %2056 = vrot.lane.b32.xlu0 %v2048, 127
        %v2057 = vpop.permute.xlu0 %2056
        %v2058 = vsel %vm224, %v2051, %v2053
        %v2059 = vsel %vm224, %v2053, %v2055
        %v2060 = vsel %vm224, %v2055, %v2057
        %s2061 = scalar_lea.vmem [#allocation1], 2
        %2062 = vst [vmem:[%s2061] ss:$4 sm:$0xff] %v1246
        %v2063 = vld.sshfl [vmem:[#allocation1] sm:$0xff pattern:$0x73625140]
        %v2065 = vld.sshfl [vmem:[#allocation1 + $0x8] sm:$0xff pattern:$0x73625140]
        %v2067 = vld.sshfl [vmem:[#allocation1 + $0x10] sm:$0xff pattern:$0x73625140]
        %v2069 = vld.sshfl [vmem:[#allocation1 + $0x18] sm:$0xff pattern:$0x73625140]
        %2071 = vrot.lane.b32.xlu0 %v2063, 126
        %v2072 = vpop.permute.xlu0 %2071
        %2073 = vrot.lane.b32.xlu0 %v2065, 126
        %v2074 = vpop.permute.xlu0 %2073
        %2075 = vrot.lane.b32.xlu0 %v2067, 126
        %v2076 = vpop.permute.xlu0 %2075
        %2077 = vrot.lane.b32.xlu0 %v2069, 126
        %v2078 = vpop.permute.xlu0 %2077
        %v2079 = vsel %vm246, %v2072, %v2074
        %v2080 = vsel %vm246, %v2074, %v2076
        %v2081 = vsel %vm246, %v2076, %v2078
        %s2082 = scalar_lea.vmem [#allocation1], 3
        %2083 = vst [vmem:[%s2082] ss:$4 sm:$0xff] %v1246
        %v2084 = vld.sshfl [vmem:[#allocation1] sm:$0xff pattern:$0x73625140]
        %v2086 = vld.sshfl [vmem:[#allocation1 + $0x8] sm:$0xff pattern:$0x73625140]
        %v2088 = vld.sshfl [vmem:[#allocation1 + $0x10] sm:$0xff pattern:$0x73625140]
        %v2090 = vld.sshfl [vmem:[#allocation1 + $0x18] sm:$0xff pattern:$0x73625140]
        %2092 = vrot.lane.b32.xlu0 %v2084, 125
        %v2093 = vpop.permute.xlu0 %2092
        %2094 = vrot.lane.b32.xlu0 %v2086, 125
        %v2095 = vpop.permute.xlu0 %2094
        %2096 = vrot.lane.b32.xlu0 %v2088, 125
        %v2097 = vpop.permute.xlu0 %2096
        %2098 = vrot.lane.b32.xlu0 %v2090, 125
        %v2099 = vpop.permute.xlu0 %2098
        %v2100 = vsel %vm268, %v2093, %v2095
        %v2101 = vsel %vm268, %v2095, %v2097
        %v2102 = vsel %vm268, %v2097, %v2099
        %2103 = vst [vmem:[#allocation1] ss:$4 sm:$0xff] %v1246
        %v2104 = vld.sshfl [vmem:[#allocation1] sm:$0xff pattern:$0x73625140]
        %v2106 = vld.sshfl [vmem:[#allocation1 + $0x8] sm:$0xff pattern:$0x73625140]
        %v2108 = vld.sshfl [vmem:[#allocation1 + $0x10] sm:$0xff pattern:$0x73625140]
        %v2110 = vld.sshfl [vmem:[#allocation1 + $0x18] sm:$0xff pattern:$0x73625140]
        %2112 = vrot.lane.b32.xlu0 %v2104, 124
        %v2113 = vpop.permute.xlu0 %2112
        %2114 = vrot.lane.b32.xlu0 %v2106, 124
        %v2115 = vpop.permute.xlu0 %2114
        %2116 = vrot.lane.b32.xlu0 %v2108, 124
        %v2117 = vpop.permute.xlu0 %2116
        %2118 = vrot.lane.b32.xlu0 %v2110, 124
        %v2119 = vpop.permute.xlu0 %2118
        %v2120 = vsel %vm289, %v2113, %v2115
        %v2121 = vsel %vm289, %v2115, %v2117
        %v2122 = vsel %vm289, %v2117, %v2119
        %v2124 = vsel %vm293, %v2036, %v2058
        %v2126 = vsel %vm293, %v2037, %v2059
        %v2128 = vsel %vm293, %v2038, %v2060
        %v2130 = vsel %vm293, %v2039, %v2057
        %v2132 = vsel %vm300, %v2124, %v2079
        %v2134 = vsel %vm300, %v2126, %v2080
        %v2136 = vsel %vm300, %v2128, %v2081
        %v2138 = vsel %vm300, %v2130, %v2078
        %v2140 = vsel %vm307, %v2132, %v2100
        %v2142 = vsel %vm307, %v2134, %v2101
        %v2144 = vsel %vm307, %v2136, %v2102
        %v2146 = vsel %vm307, %v2138, %v2099
        %v2147 = vld [vmem:[%s1115] sm:$0xf]
        %v2148 = vld [vmem:[%s1115 + $0x4] sm:$0xf]
        %v2151 = vunpack.c.l.b16 %v2147
        %v2152 = vunpack.c.l.b16 %v2148
        %v2153 = vpack.c.b16 %v2152, %v2151
        %2158 = vrot.lane.b32.xlu0 %v2140, 48
        %v2159 = vpop.permute.xlu0 %2158
        %2160 = vrot.lane.b32.xlu0 %v2142, 48
        %v2161 = vpop.permute.xlu0 %2160
        %2162 = vrot.lane.b32.xlu0 %v2144, 48
        %v2163 = vpop.permute.xlu0 %2162
        %2164 = vrot.lane.b32.xlu0 %v2146, 48
        %v2165 = vpop.permute.xlu0 %2164
        %2166 = vrot.lane.b32.xlu0 %v2120, 48
        %v2167 = vpop.permute.xlu0 %2166
        %2168 = vrot.lane.b32.xlu0 %v2121, 48
        %v2169 = vpop.permute.xlu0 %2168
        %2170 = vrot.lane.b32.xlu0 %v2122, 48
        %v2171 = vpop.permute.xlu0 %2170
        %2172 = vrot.lane.b32.xlu0 %v2119, 48
        %v2173 = vpop.permute.xlu0 %2172
        %v2174 = vsel %vm1143, %v2159, %v2161
        %v2175 = vsel %vm1143, %v2161, %v2163
        %v2176 = vsel %vm1143, %v2163, %v2165
        %v2177 = vsel %vm1143, %v2167, %v2169
        %v2178 = vsel %vm1143, %v2169, %v2171
        %v2179 = vsel %vm1143, %v2171, %v2173
        %v2184 = vsel %vm469, %v2153, 0
        %v2187 = vsel %vm293, %v2177, 0
        %v2190 = vsel %vm293, %v2178, 0
        %v2193 = vsel %vm293, %v2179, 0
        %2195 = vmatpush.bf16.msra.mxu0 0
        %2196 = vmatpush.bf16.msra.mxu0 0
        %2197 = vmatpush.bf16.msra.mxu0 0
        %2198 = vmatpush.bf16.msra.mxu0 0
        %2199 = vmatpush.bf16.msra.mxu0 0
        %2200 = vmatpush.bf16.msra.mxu0 0
        %2201 = vmatpush.bf16.msra.mxu0 %v2187
        %2202 = vmatpush.bf16.msra.mxu0 %v2174
        %2203 = vmatmul.bf16.gmra.mxu0 %v2184
        %v2204 = vpop.f32.mrf.mxu0
        %v2205 = vadd.f32 0.0, %v2204
        %v2206 = vpop.f32.mrf.mxu0
        %v2207 = vadd.f32 0.0, %v2206
        %2208 = vdwg.mxu0
        %2209 = vmatpush.bf16.msra.mxu0 0
        %2210 = vmatpush.bf16.msra.mxu0 0
        %2211 = vmatpush.bf16.msra.mxu0 0
        %2212 = vmatpush.bf16.msra.mxu0 0
        %2213 = vmatpush.bf16.msra.mxu0 0
        %2214 = vmatpush.bf16.msra.mxu0 0
        %2215 = vmatpush.bf16.msra.mxu0 %v2190
        %2216 = vmatpush.bf16.msra.mxu0 %v2175
        %2217 = vmatmul.bf16.gmra.mxu0 %v2184
        %v2218 = vpop.f32.mrf.mxu0
        %v2219 = vadd.f32 0.0, %v2218
        %v2220 = vpop.f32.mrf.mxu0
        %v2221 = vadd.f32 0.0, %v2220
        %2222 = vdwg.mxu0
        %2223 = vmatpush.bf16.msra.mxu0 0
        %2224 = vmatpush.bf16.msra.mxu0 0
        %2225 = vmatpush.bf16.msra.mxu0 0
        %2226 = vmatpush.bf16.msra.mxu0 0
        %2227 = vmatpush.bf16.msra.mxu0 0
        %2228 = vmatpush.bf16.msra.mxu0 0
        %2229 = vmatpush.bf16.msra.mxu0 %v2193
        %2230 = vmatpush.bf16.msra.mxu0 %v2176
        %2231 = vmatmul.bf16.gmra.mxu0 %v2184
        %v2232 = vpop.f32.mrf.mxu0
        %v2233 = vadd.f32 0.0, %v2232
        %v2234 = vpop.f32.mrf.mxu0
        %v2235 = vadd.f32 0.0, %v2234
        %2236 = vdwg.mxu0
        %v2237 = vadd.f32 %v2029, %v2205
        %v2238 = vadd.f32 %v2030, %v2219
        %v2239 = vadd.f32 %v2031, %v2233
        %v2240 = vadd.f32 %v2032, %v2207
        %v2241 = vadd.f32 %v2033, %v2221
        %v2242 = vadd.f32 %v2034, %v2235
        %v2243 = vld [vmem:[%s2] sm:$0xff]
        %v2244 = vld [vmem:[%s2 + $0x8] sm:$0xff]
        %2246 = vset.pattern.permute.xlu0 0
        %2247 = vperm.xlu0 %2246, %v2243
        %v2248 = vpop.permute.xlu0 %2247
        %2251 = vset.pattern.permute.xlu0 0
        %2252 = vperm.xlu0 %2251, %v2244
        %v2253 = vpop.permute.xlu0 %2252
        %v2255 = vadd.f32 %v2237, %v2248
        %v2256 = vadd.f32 %v2238, %v2248
        %v2257 = vadd.f32 %v2239, %v2248
        %v2258 = vadd.f32 %v2240, %v2253
        %v2259 = vadd.f32 %v2241, %v2253
        %v2260 = vadd.f32 %v2242, %v2253
        %v2261 = vmax.f32 %v2255, 0.0
        %v2262 = vmax.f32 %v2256, 0.0
        %v2263 = vmax.f32 %v2257, 0.0
        %v2264 = vmax.f32 %v2258, 0.0
        %v2265 = vmax.f32 %v2259, 0.0
        %v2266 = vmax.f32 %v2260, 0.0
        %v2267 = vpack.c.bf16 %v2262, %v2261
        %v2268 = vpack.c.bf16 %v2263, %v2263
        %v2269 = vpack.c.bf16 %v2265, %v2264
        %v2270 = vpack.c.bf16 %v2266, %v2266
        %2271 = vst [vmem:[%s186 + $0xc] sm:$0xff] %v2267
        %2272 = vst [vmem:[%s186 + $0x14] sm:$0xf] %v2268
        %2273 = vst [vmem:[%s186 + $0x3c] sm:$0xff] %v2269
        %2274 = vst [vmem:[%s186 + $0x44] sm:$0xf] %v2270
        %s2275 = scalar_lea.vmem %s196, 16
        %v2276 = vld [vmem:[%s2275] sm:$0xff]
        %2278 = vst [vmem:[#allocation1] ss:$4 sm:$0xff] %v2276
        %v2279 = vld.sshfl [vmem:[#allocation1] sm:$0xff pattern:$0x73625140]
        %v2280 = vld.sshfl [vmem:[#allocation1 + $0x8] sm:$0xff pattern:$0x73625140]
        %v2281 = vld.sshfl [vmem:[#allocation1 + $0x10] sm:$0xff pattern:$0x73625140]
        %s2282 = scalar_lea.vmem [#allocation1], 1
        %2283 = vst [vmem:[%s2282] ss:$4 sm:$0xff] %v2276
        %v2284 = vld.sshfl [vmem:[#allocation1] sm:$0xff pattern:$0x73625140]
        %v2286 = vld.sshfl [vmem:[#allocation1 + $0x8] sm:$0xff pattern:$0x73625140]
        %v2288 = vld.sshfl [vmem:[#allocation1 + $0x10] sm:$0xff pattern:$0x73625140]
        %v2290 = vld.sshfl [vmem:[#allocation1 + $0x18] sm:$0xff pattern:$0x73625140]
        %2292 = vrot.lane.b32.xlu0 %v2284, 127
        %v2293 = vpop.permute.xlu0 %2292
        %2294 = vrot.lane.b32.xlu0 %v2286, 127
        %v2295 = vpop.permute.xlu0 %2294
        %2296 = vrot.lane.b32.xlu0 %v2288, 127
        %v2297 = vpop.permute.xlu0 %2296
        %2298 = vrot.lane.b32.xlu0 %v2290, 127
        %v2299 = vpop.permute.xlu0 %2298
        %v2300 = vsel %vm224, %v2293, %v2295
        %v2301 = vsel %vm224, %v2295, %v2297
        %v2302 = vsel %vm224, %v2297, %v2299
        %s2303 = scalar_lea.vmem [#allocation1], 2
        %2304 = vst [vmem:[%s2303] ss:$4 sm:$0xff] %v2276
        %v2305 = vld.sshfl [vmem:[#allocation1] sm:$0xff pattern:$0x73625140]
        %v2307 = vld.sshfl [vmem:[#allocation1 + $0x8] sm:$0xff pattern:$0x73625140]
        %v2309 = vld.sshfl [vmem:[#allocation1 + $0x10] sm:$0xff pattern:$0x73625140]
        %v2311 = vld.sshfl [vmem:[#allocation1 + $0x18] sm:$0xff pattern:$0x73625140]
        %2313 = vrot.lane.b32.xlu0 %v2305, 126
        %v2314 = vpop.permute.xlu0 %2313
        %2315 = vrot.lane.b32.xlu0 %v2307, 126
        %v2316 = vpop.permute.xlu0 %2315
        %2317 = vrot.lane.b32.xlu0 %v2309, 126
        %v2318 = vpop.permute.xlu0 %2317
        %2319 = vrot.lane.b32.xlu0 %v2311, 126
        %v2320 = vpop.permute.xlu0 %2319
        %v2321 = vsel %vm246, %v2314, %v2316
        %v2322 = vsel %vm246, %v2316, %v2318
        %v2323 = vsel %vm246, %v2318, %v2320
        %s2324 = scalar_lea.vmem [#allocation1], 3
        %2325 = vst [vmem:[%s2324] ss:$4 sm:$0xff] %v2276
        %v2326 = vld.sshfl [vmem:[#allocation1] sm:$0xff pattern:$0x73625140]
        %v2328 = vld.sshfl [vmem:[#allocation1 + $0x8] sm:$0xff pattern:$0x73625140]
        %v2330 = vld.sshfl [vmem:[#allocation1 + $0x10] sm:$0xff pattern:$0x73625140]
        %v2332 = vld.sshfl [vmem:[#allocation1 + $0x18] sm:$0xff pattern:$0x73625140]
        %2334 = vrot.lane.b32.xlu0 %v2326, 125
        %v2335 = vpop.permute.xlu0 %2334
        %2336 = vrot.lane.b32.xlu0 %v2328, 125
        %v2337 = vpop.permute.xlu0 %2336
        %2338 = vrot.lane.b32.xlu0 %v2330, 125
        %v2339 = vpop.permute.xlu0 %2338
        %2340 = vrot.lane.b32.xlu0 %v2332, 125
        %v2341 = vpop.permute.xlu0 %2340
        %v2342 = vsel %vm268, %v2335, %v2337
        %v2343 = vsel %vm268, %v2337, %v2339
        %v2344 = vsel %vm268, %v2339, %v2341
        %2345 = vst [vmem:[#allocation1] ss:$4 sm:$0xff] %v2276
        %v2346 = vld.sshfl [vmem:[#allocation1] sm:$0xff pattern:$0x73625140]
        %v2348 = vld.sshfl [vmem:[#allocation1 + $0x8] sm:$0xff pattern:$0x73625140]
        %v2350 = vld.sshfl [vmem:[#allocation1 + $0x10] sm:$0xff pattern:$0x73625140]
        %v2352 = vld.sshfl [vmem:[#allocation1 + $0x18] sm:$0xff pattern:$0x73625140]
        %2354 = vrot.lane.b32.xlu0 %v2346, 124
        %v2355 = vpop.permute.xlu0 %2354
        %2356 = vrot.lane.b32.xlu0 %v2348, 124
        %v2357 = vpop.permute.xlu0 %2356
        %2358 = vrot.lane.b32.xlu0 %v2350, 124
        %v2359 = vpop.permute.xlu0 %2358
        %2360 = vrot.lane.b32.xlu0 %v2352, 124
        %v2361 = vpop.permute.xlu0 %2360
        %v2362 = vsel %vm289, %v2355, %v2357
        %v2363 = vsel %vm289, %v2357, %v2359
        %v2364 = vsel %vm289, %v2359, %v2361
        %v2366 = vsel %vm293, %v2279, %v2300
        %v2368 = vsel %vm293, %v2280, %v2301
        %v2370 = vsel %vm293, %v2281, %v2302
        %v2372 = vsel %vm300, %v2366, %v2321
        %v2374 = vsel %vm300, %v2368, %v2322
        %v2376 = vsel %vm300, %v2370, %v2323
        %v2378 = vsel %vm307, %v2372, %v2342
        %v2381 = vsel %vm307, %v2374, %v2343
        %v2384 = vsel %vm307, %v2376, %v2344
        %v2386 = vld [vmem:[%s1] sm:$0xf]
        %v2387 = vld [vmem:[%s1 + $0x4] sm:$0xf]
        %2388 = vst [vmem:[#allocation1] ss:$4 sm:$0xff] %v2276
        %v2389 = vld.sshfl [vmem:[#allocation1] sm:$0xff pattern:$0x73625140]
        %v2390 = vld.sshfl [vmem:[#allocation1 + $0x8] sm:$0xff pattern:$0x73625140]
        %v2391 = vld.sshfl [vmem:[#allocation1 + $0x10] sm:$0xff pattern:$0x73625140]
        %v2392 = vld.sshfl [vmem:[#allocation1 + $0x18] sm:$0xff pattern:$0x73625140]
        %s2393 = scalar_lea.vmem [#allocation1], 1
        %2394 = vst [vmem:[%s2393] ss:$4 sm:$0xff] %v2276
        %v2395 = vld.sshfl [vmem:[#allocation1] sm:$0xff pattern:$0x73625140]
        %v2397 = vld.sshfl [vmem:[#allocation1 + $0x8] sm:$0xff pattern:$0x73625140]
        %v2399 = vld.sshfl [vmem:[#allocation1 + $0x10] sm:$0xff pattern:$0x73625140]
        %v2401 = vld.sshfl [vmem:[#allocation1 + $0x18] sm:$0xff pattern:$0x73625140]
        %2403 = vrot.lane.b32.xlu0 %v2395, 127
        %v2404 = vpop.permute.xlu0 %2403
        %2405 = vrot.lane.b32.xlu0 %v2397, 127
        %v2406 = vpop.permute.xlu0 %2405
        %2407 = vrot.lane.b32.xlu0 %v2399, 127
        %v2408 = vpop.permute.xlu0 %2407
        %2409 = vrot.lane.b32.xlu0 %v2401, 127
        %v2410 = vpop.permute.xlu0 %2409
        %v2411 = vsel %vm224, %v2404, %v2406
        %v2412 = vsel %vm224, %v2406, %v2408
        %v2413 = vsel %vm224, %v2408, %v2410
        %s2414 = scalar_lea.vmem [#allocation1], 2
        %2415 = vst [vmem:[%s2414] ss:$4 sm:$0xff] %v2276
        %v2416 = vld.sshfl [vmem:[#allocation1] sm:$0xff pattern:$0x73625140]
        %v2418 = vld.sshfl [vmem:[#allocation1 + $0x8] sm:$0xff pattern:$0x73625140]
        %v2420 = vld.sshfl [vmem:[#allocation1 + $0x10] sm:$0xff pattern:$0x73625140]
        %v2422 = vld.sshfl [vmem:[#allocation1 + $0x18] sm:$0xff pattern:$0x73625140]
        %2424 = vrot.lane.b32.xlu0 %v2416, 126
        %v2425 = vpop.permute.xlu0 %2424
        %2426 = vrot.lane.b32.xlu0 %v2418, 126
        %v2427 = vpop.permute.xlu0 %2426
        %2428 = vrot.lane.b32.xlu0 %v2420, 126
        %v2429 = vpop.permute.xlu0 %2428
        %2430 = vrot.lane.b32.xlu0 %v2422, 126
        %v2431 = vpop.permute.xlu0 %2430
        %v2432 = vsel %vm246, %v2425, %v2427
        %v2433 = vsel %vm246, %v2427, %v2429
        %v2434 = vsel %vm246, %v2429, %v2431
        %s2435 = scalar_lea.vmem [#allocation1], 3
        %2436 = vst [vmem:[%s2435] ss:$4 sm:$0xff] %v2276
        %v2437 = vld.sshfl [vmem:[#allocation1] sm:$0xff pattern:$0x73625140]
        %v2439 = vld.sshfl [vmem:[#allocation1 + $0x8] sm:$0xff pattern:$0x73625140]
        %v2441 = vld.sshfl [vmem:[#allocation1 + $0x10] sm:$0xff pattern:$0x73625140]
        %v2443 = vld.sshfl [vmem:[#allocation1 + $0x18] sm:$0xff pattern:$0x73625140]
        %2445 = vrot.lane.b32.xlu0 %v2437, 125
        %v2446 = vpop.permute.xlu0 %2445
        %2447 = vrot.lane.b32.xlu0 %v2439, 125
        %v2448 = vpop.permute.xlu0 %2447
        %2449 = vrot.lane.b32.xlu0 %v2441, 125
        %v2450 = vpop.permute.xlu0 %2449
        %2451 = vrot.lane.b32.xlu0 %v2443, 125
        %v2452 = vpop.permute.xlu0 %2451
        %v2453 = vsel %vm268, %v2446, %v2448
        %v2454 = vsel %vm268, %v2448, %v2450
        %v2455 = vsel %vm268, %v2450, %v2452
        %2456 = vst [vmem:[#allocation1] ss:$4 sm:$0xff] %v2276
        %v2457 = vld.sshfl [vmem:[#allocation1] sm:$0xff pattern:$0x73625140]
        %v2459 = vld.sshfl [vmem:[#allocation1 + $0x8] sm:$0xff pattern:$0x73625140]
        %v2461 = vld.sshfl [vmem:[#allocation1 + $0x10] sm:$0xff pattern:$0x73625140]
        %v2463 = vld.sshfl [vmem:[#allocation1 + $0x18] sm:$0xff pattern:$0x73625140]
        %2465 = vrot.lane.b32.xlu0 %v2457, 124
        %v2466 = vpop.permute.xlu0 %2465
        %2467 = vrot.lane.b32.xlu0 %v2459, 124
        %v2468 = vpop.permute.xlu0 %2467
        %2469 = vrot.lane.b32.xlu0 %v2461, 124
        %v2470 = vpop.permute.xlu0 %2469
        %2471 = vrot.lane.b32.xlu0 %v2463, 124
        %v2472 = vpop.permute.xlu0 %2471
        %v2473 = vsel %vm289, %v2466, %v2468
        %v2474 = vsel %vm289, %v2468, %v2470
        %v2475 = vsel %vm289, %v2470, %v2472
        %v2477 = vsel %vm293, %v2389, %v2411
        %v2479 = vsel %vm293, %v2390, %v2412
        %v2481 = vsel %vm293, %v2391, %v2413
        %v2483 = vsel %vm293, %v2392, %v2410
        %v2485 = vsel %vm300, %v2477, %v2432
        %v2487 = vsel %vm300, %v2479, %v2433
        %v2489 = vsel %vm300, %v2481, %v2434
        %v2491 = vsel %vm300, %v2483, %v2431
        %v2493 = vsel %vm307, %v2485, %v2453
        %v2495 = vsel %vm307, %v2487, %v2454
        %v2497 = vsel %vm307, %v2489, %v2455
        %v2499 = vsel %vm307, %v2491, %v2452
        %v2500 = vld [vmem:[%s431] sm:$0xf]
        %v2501 = vld [vmem:[%s431 + $0x4] sm:$0xf]
        %v2504 = vunpack.c.l.b16 %v2500
        %v2505 = vunpack.c.l.b16 %v2501
        %v2506 = vpack.c.b16 %v2505, %v2504
        %2511 = vrot.lane.b32.xlu0 %v2493, 108
        %v2512 = vpop.permute.xlu0 %2511
        %2513 = vrot.lane.b32.xlu0 %v2495, 108
        %v2514 = vpop.permute.xlu0 %2513
        %2515 = vrot.lane.b32.xlu0 %v2497, 108
        %v2516 = vpop.permute.xlu0 %2515
        %2517 = vrot.lane.b32.xlu0 %v2499, 108
        %v2518 = vpop.permute.xlu0 %2517
        %2519 = vrot.lane.b32.xlu0 %v2473, 108
        %v2520 = vpop.permute.xlu0 %2519
        %2521 = vrot.lane.b32.xlu0 %v2474, 108
        %v2522 = vpop.permute.xlu0 %2521
        %2523 = vrot.lane.b32.xlu0 %v2475, 108
        %v2524 = vpop.permute.xlu0 %2523
        %2525 = vrot.lane.b32.xlu0 %v2472, 108
        %v2526 = vpop.permute.xlu0 %2525
        %v2527 = vsel %vm459, %v2512, %v2514
        %v2528 = vsel %vm459, %v2514, %v2516
        %v2529 = vsel %vm459, %v2516, %v2518
        %v2530 = vsel %vm459, %v2520, %v2522
        %v2531 = vsel %vm459, %v2522, %v2524
        %v2532 = vsel %vm459, %v2524, %v2526
        %v2537 = vsel %vm469, %v2506, 0
        %v2540 = vsel %vm293, %v2530, 0
        %v2543 = vsel %vm293, %v2531, 0
        %v2546 = vsel %vm293, %v2532, 0
        %2548 = vmatpush.bf16.msra.mxu0 0
        %2549 = vmatpush.bf16.msra.mxu0 0
        %2550 = vmatpush.bf16.msra.mxu0 0
        %2551 = vmatpush.bf16.msra.mxu0 0
        %2552 = vmatpush.bf16.msra.mxu0 0
        %2553 = vmatpush.bf16.msra.mxu0 0
        %2554 = vmatpush.bf16.msra.mxu0 %v2540
        %2555 = vmatpush.bf16.msra.mxu0 %v2527
        %2556 = vmatmul.bf16.gmra.mxu0 %v2537
        %v2557 = vpop.f32.mrf.mxu0
        %v2558 = vadd.f32 0.0, %v2557
        %v2559 = vpop.f32.mrf.mxu0
        %v2560 = vadd.f32 0.0, %v2559
        %2561 = vdwg.mxu0
        %2562 = vmatpush.bf16.msra.mxu0 0
        %2563 = vmatpush.bf16.msra.mxu0 0
        %2564 = vmatpush.bf16.msra.mxu0 0
        %2565 = vmatpush.bf16.msra.mxu0 0
        %2566 = vmatpush.bf16.msra.mxu0 0
        %2567 = vmatpush.bf16.msra.mxu0 0
        %2568 = vmatpush.bf16.msra.mxu0 %v2543
        %2569 = vmatpush.bf16.msra.mxu0 %v2528
        %2570 = vmatmul.bf16.gmra.mxu0 %v2537
        %v2571 = vpop.f32.mrf.mxu0
        %v2572 = vadd.f32 0.0, %v2571
        %v2573 = vpop.f32.mrf.mxu0
        %v2574 = vadd.f32 0.0, %v2573
        %2575 = vdwg.mxu0
        %2576 = vmatpush.bf16.msra.mxu0 0
        %2577 = vmatpush.bf16.msra.mxu0 0
        %2578 = vmatpush.bf16.msra.mxu0 0
        %2579 = vmatpush.bf16.msra.mxu0 0
        %2580 = vmatpush.bf16.msra.mxu0 0
        %2581 = vmatpush.bf16.msra.mxu0 0
        %2582 = vmatpush.bf16.msra.mxu0 %v2546
        %2583 = vmatpush.bf16.msra.mxu0 %v2529
        %2584 = vmatmul.bf16.gmra.mxu0 %v2537
        %v2585 = vpop.f32.mrf.mxu0
        %v2586 = vadd.f32 0.0, %v2585
        %v2587 = vpop.f32.mrf.mxu0
        %v2588 = vadd.f32 0.0, %v2587
        %2589 = vdwg.mxu0
        %v2592 = vunpack.c.l.b16 %v2386
        %v2593 = vunpack.c.l.b16 %v2387
        %v2594 = vpack.c.b16 %v2593, %v2592
        %v2596 = vsel %vm469, %v2594, 0
        %v2599 = vsel %vm293, %v2362, 0
        %v2602 = vsel %vm293, %v2363, 0
        %v2605 = vsel %vm293, %v2364, 0
        %2607 = vmatpush.bf16.msra.mxu0 0
        %2608 = vmatpush.bf16.msra.mxu0 0
        %2609 = vmatpush.bf16.msra.mxu0 0
        %2610 = vmatpush.bf16.msra.mxu0 0
        %2611 = vmatpush.bf16.msra.mxu0 0
        %2612 = vmatpush.bf16.msra.mxu0 0
        %2613 = vmatpush.bf16.msra.mxu0 %v2599
        %2614 = vmatpush.bf16.msra.mxu0 %v2378
        %2615 = vmatmul.bf16.gmra.mxu0 %v2596
        %v2616 = vpop.f32.mrf.mxu0
        %v2617 = vadd.f32 %v2558, %v2616
        %v2618 = vpop.f32.mrf.mxu0
        %v2619 = vadd.f32 %v2560, %v2618
        %2620 = vdwg.mxu0
        %2621 = vmatpush.bf16.msra.mxu0 0
        %2622 = vmatpush.bf16.msra.mxu0 0
        %2623 = vmatpush.bf16.msra.mxu0 0
        %2624 = vmatpush.bf16.msra.mxu0 0
        %2625 = vmatpush.bf16.msra.mxu0 0
        %2626 = vmatpush.bf16.msra.mxu0 0
        %2627 = vmatpush.bf16.msra.mxu0 %v2602
        %2628 = vmatpush.bf16.msra.mxu0 %v2381
        %2629 = vmatmul.bf16.gmra.mxu0 %v2596
        %v2630 = vpop.f32.mrf.mxu0
        %v2631 = vadd.f32 %v2572, %v2630
        %v2632 = vpop.f32.mrf.mxu0
        %v2633 = vadd.f32 %v2574, %v2632
        %2634 = vdwg.mxu0
        %2635 = vmatpush.bf16.msra.mxu0 0
        %2636 = vmatpush.bf16.msra.mxu0 0
        %2637 = vmatpush.bf16.msra.mxu0 0
        %2638 = vmatpush.bf16.msra.mxu0 0
        %2639 = vmatpush.bf16.msra.mxu0 0
        %2640 = vmatpush.bf16.msra.mxu0 0
        %2641 = vmatpush.bf16.msra.mxu0 %v2605
        %2642 = vmatpush.bf16.msra.mxu0 %v2384
        %2643 = vmatmul.bf16.gmra.mxu0 %v2596
        %v2644 = vpop.f32.mrf.mxu0
        %v2645 = vadd.f32 %v2586, %v2644
        %v2646 = vpop.f32.mrf.mxu0
        %v2647 = vadd.f32 %v2588, %v2646
        %2648 = vdwg.mxu0
        %2649 = vst [vmem:[#allocation1] ss:$4 sm:$0xff] %v2276
        %v2650 = vld.sshfl [vmem:[#allocation1] sm:$0xff pattern:$0x73625140]
        %v2651 = vld.sshfl [vmem:[#allocation1 + $0x8] sm:$0xff pattern:$0x73625140]
        %v2652 = vld.sshfl [vmem:[#allocation1 + $0x10] sm:$0xff pattern:$0x73625140]
        %v2653 = vld.sshfl [vmem:[#allocation1 + $0x18] sm:$0xff pattern:$0x73625140]
        %s2654 = scalar_lea.vmem [#allocation1], 1
        %2655 = vst [vmem:[%s2654] ss:$4 sm:$0xff] %v2276
        %v2656 = vld.sshfl [vmem:[#allocation1] sm:$0xff pattern:$0x73625140]
        %v2658 = vld.sshfl [vmem:[#allocation1 + $0x8] sm:$0xff pattern:$0x73625140]
        %v2660 = vld.sshfl [vmem:[#allocation1 + $0x10] sm:$0xff pattern:$0x73625140]
        %v2662 = vld.sshfl [vmem:[#allocation1 + $0x18] sm:$0xff pattern:$0x73625140]
        %2664 = vrot.lane.b32.xlu0 %v2656, 127
        %v2665 = vpop.permute.xlu0 %2664
        %2666 = vrot.lane.b32.xlu0 %v2658, 127
        %v2667 = vpop.permute.xlu0 %2666
        %2668 = vrot.lane.b32.xlu0 %v2660, 127
        %v2669 = vpop.permute.xlu0 %2668
        %2670 = vrot.lane.b32.xlu0 %v2662, 127
        %v2671 = vpop.permute.xlu0 %2670
        %v2672 = vsel %vm224, %v2665, %v2667
        %v2673 = vsel %vm224, %v2667, %v2669
        %v2674 = vsel %vm224, %v2669, %v2671
        %s2675 = scalar_lea.vmem [#allocation1], 2
        %2676 = vst [vmem:[%s2675] ss:$4 sm:$0xff] %v2276
        %v2677 = vld.sshfl [vmem:[#allocation1] sm:$0xff pattern:$0x73625140]
        %v2679 = vld.sshfl [vmem:[#allocation1 + $0x8] sm:$0xff pattern:$0x73625140]
        %v2681 = vld.sshfl [vmem:[#allocation1 + $0x10] sm:$0xff pattern:$0x73625140]
        %v2683 = vld.sshfl [vmem:[#allocation1 + $0x18] sm:$0xff pattern:$0x73625140]
        %2685 = vrot.lane.b32.xlu0 %v2677, 126
        %v2686 = vpop.permute.xlu0 %2685
        %2687 = vrot.lane.b32.xlu0 %v2679, 126
        %v2688 = vpop.permute.xlu0 %2687
        %2689 = vrot.lane.b32.xlu0 %v2681, 126
        %v2690 = vpop.permute.xlu0 %2689
        %2691 = vrot.lane.b32.xlu0 %v2683, 126
        %v2692 = vpop.permute.xlu0 %2691
        %v2693 = vsel %vm246, %v2686, %v2688
        %v2694 = vsel %vm246, %v2688, %v2690
        %v2695 = vsel %vm246, %v2690, %v2692
        %s2696 = scalar_lea.vmem [#allocation1], 3
        %2697 = vst [vmem:[%s2696] ss:$4 sm:$0xff] %v2276
        %v2698 = vld.sshfl [vmem:[#allocation1] sm:$0xff pattern:$0x73625140]
        %v2700 = vld.sshfl [vmem:[#allocation1 + $0x8] sm:$0xff pattern:$0x73625140]
        %v2702 = vld.sshfl [vmem:[#allocation1 + $0x10] sm:$0xff pattern:$0x73625140]
        %v2704 = vld.sshfl [vmem:[#allocation1 + $0x18] sm:$0xff pattern:$0x73625140]
        %2706 = vrot.lane.b32.xlu0 %v2698, 125
        %v2707 = vpop.permute.xlu0 %2706
        %2708 = vrot.lane.b32.xlu0 %v2700, 125
        %v2709 = vpop.permute.xlu0 %2708
        %2710 = vrot.lane.b32.xlu0 %v2702, 125
        %v2711 = vpop.permute.xlu0 %2710
        %2712 = vrot.lane.b32.xlu0 %v2704, 125
        %v2713 = vpop.permute.xlu0 %2712
        %v2714 = vsel %vm268, %v2707, %v2709
        %v2715 = vsel %vm268, %v2709, %v2711
        %v2716 = vsel %vm268, %v2711, %v2713
        %2717 = vst [vmem:[#allocation1] ss:$4 sm:$0xff] %v2276
        %v2718 = vld.sshfl [vmem:[#allocation1] sm:$0xff pattern:$0x73625140]
        %v2720 = vld.sshfl [vmem:[#allocation1 + $0x8] sm:$0xff pattern:$0x73625140]
        %v2722 = vld.sshfl [vmem:[#allocation1 + $0x10] sm:$0xff pattern:$0x73625140]
        %v2724 = vld.sshfl [vmem:[#allocation1 + $0x18] sm:$0xff pattern:$0x73625140]
        %2726 = vrot.lane.b32.xlu0 %v2718, 124
        %v2727 = vpop.permute.xlu0 %2726
        %2728 = vrot.lane.b32.xlu0 %v2720, 124
        %v2729 = vpop.permute.xlu0 %2728
        %2730 = vrot.lane.b32.xlu0 %v2722, 124
        %v2731 = vpop.permute.xlu0 %2730
        %2732 = vrot.lane.b32.xlu0 %v2724, 124
        %v2733 = vpop.permute.xlu0 %2732
        %v2734 = vsel %vm289, %v2727, %v2729
        %v2735 = vsel %vm289, %v2729, %v2731
        %v2736 = vsel %vm289, %v2731, %v2733
        %v2738 = vsel %vm293, %v2650, %v2672
        %v2740 = vsel %vm293, %v2651, %v2673
        %v2742 = vsel %vm293, %v2652, %v2674
        %v2744 = vsel %vm293, %v2653, %v2671
        %v2746 = vsel %vm300, %v2738, %v2693
        %v2748 = vsel %vm300, %v2740, %v2694
        %v2750 = vsel %vm300, %v2742, %v2695
        %v2752 = vsel %vm300, %v2744, %v2692
        %v2754 = vsel %vm307, %v2746, %v2714
        %v2756 = vsel %vm307, %v2748, %v2715
        %v2758 = vsel %vm307, %v2750, %v2716
        %v2760 = vsel %vm307, %v2752, %v2713
        %v2761 = vld [vmem:[%s695] sm:$0xf]
        %v2762 = vld [vmem:[%s695 + $0x4] sm:$0xf]
        %v2765 = vunpack.c.l.b16 %v2761
        %v2766 = vunpack.c.l.b16 %v2762
        %v2767 = vpack.c.b16 %v2766, %v2765
        %2772 = vrot.lane.b32.xlu0 %v2754, 88
        %v2773 = vpop.permute.xlu0 %2772
        %2774 = vrot.lane.b32.xlu0 %v2756, 88
        %v2775 = vpop.permute.xlu0 %2774
        %2776 = vrot.lane.b32.xlu0 %v2758, 88
        %v2777 = vpop.permute.xlu0 %2776
        %2778 = vrot.lane.b32.xlu0 %v2760, 88
        %v2779 = vpop.permute.xlu0 %2778
        %2780 = vrot.lane.b32.xlu0 %v2734, 88
        %v2781 = vpop.permute.xlu0 %2780
        %2782 = vrot.lane.b32.xlu0 %v2735, 88
        %v2783 = vpop.permute.xlu0 %2782
        %2784 = vrot.lane.b32.xlu0 %v2736, 88
        %v2785 = vpop.permute.xlu0 %2784
        %2786 = vrot.lane.b32.xlu0 %v2733, 88
        %v2787 = vpop.permute.xlu0 %2786
        %v2788 = vsel %vm723, %v2773, %v2775
        %v2789 = vsel %vm723, %v2775, %v2777
        %v2790 = vsel %vm723, %v2777, %v2779
        %v2791 = vsel %vm723, %v2781, %v2783
        %v2792 = vsel %vm723, %v2783, %v2785
        %v2793 = vsel %vm723, %v2785, %v2787
        %v2798 = vsel %vm469, %v2767, 0
        %v2801 = vsel %vm293, %v2791, 0
        %v2804 = vsel %vm293, %v2792, 0
        %v2807 = vsel %vm293, %v2793, 0
        %2809 = vmatpush.bf16.msra.mxu0 0
        %2810 = vmatpush.bf16.msra.mxu0 0
        %2811 = vmatpush.bf16.msra.mxu0 0
        %2812 = vmatpush.bf16.msra.mxu0 0
        %2813 = vmatpush.bf16.msra.mxu0 0
        %2814 = vmatpush.bf16.msra.mxu0 0
        %2815 = vmatpush.bf16.msra.mxu0 %v2801
        %2816 = vmatpush.bf16.msra.mxu0 %v2788
        %2817 = vmatmul.bf16.gmra.mxu0 %v2798
        %v2818 = vpop.f32.mrf.mxu0
        %v2819 = vadd.f32 0.0, %v2818
        %v2820 = vpop.f32.mrf.mxu0
        %v2821 = vadd.f32 0.0, %v2820
        %2822 = vdwg.mxu0
        %2823 = vmatpush.bf16.msra.mxu0 0
        %2824 = vmatpush.bf16.msra.mxu0 0
        %2825 = vmatpush.bf16.msra.mxu0 0
        %2826 = vmatpush.bf16.msra.mxu0 0
        %2827 = vmatpush.bf16.msra.mxu0 0
        %2828 = vmatpush.bf16.msra.mxu0 0
        %2829 = vmatpush.bf16.msra.mxu0 %v2804
        %2830 = vmatpush.bf16.msra.mxu0 %v2789
        %2831 = vmatmul.bf16.gmra.mxu0 %v2798
        %v2832 = vpop.f32.mrf.mxu0
        %v2833 = vadd.f32 0.0, %v2832
        %v2834 = vpop.f32.mrf.mxu0
        %v2835 = vadd.f32 0.0, %v2834
        %2836 = vdwg.mxu0
        %2837 = vmatpush.bf16.msra.mxu0 0
        %2838 = vmatpush.bf16.msra.mxu0 0
        %2839 = vmatpush.bf16.msra.mxu0 0
        %2840 = vmatpush.bf16.msra.mxu0 0
        %2841 = vmatpush.bf16.msra.mxu0 0
        %2842 = vmatpush.bf16.msra.mxu0 0
        %2843 = vmatpush.bf16.msra.mxu0 %v2807
        %2844 = vmatpush.bf16.msra.mxu0 %v2790
        %2845 = vmatmul.bf16.gmra.mxu0 %v2798
        %v2846 = vpop.f32.mrf.mxu0
        %v2847 = vadd.f32 0.0, %v2846
        %v2848 = vpop.f32.mrf.mxu0
        %v2849 = vadd.f32 0.0, %v2848
        %2850 = vdwg.mxu0
        %v2851 = vadd.f32 %v2617, %v2819
        %v2852 = vadd.f32 %v2631, %v2833
        %v2853 = vadd.f32 %v2645, %v2847
        %v2854 = vadd.f32 %v2619, %v2821
        %v2855 = vadd.f32 %v2633, %v2835
        %v2856 = vadd.f32 %v2647, %v2849
        %2857 = vst [vmem:[#allocation1] ss:$4 sm:$0xff] %v2276
        %v2858 = vld.sshfl [vmem:[#allocation1] sm:$0xff pattern:$0x73625140]
        %v2859 = vld.sshfl [vmem:[#allocation1 + $0x8] sm:$0xff pattern:$0x73625140]
        %v2860 = vld.sshfl [vmem:[#allocation1 + $0x10] sm:$0xff pattern:$0x73625140]
        %v2861 = vld.sshfl [vmem:[#allocation1 + $0x18] sm:$0xff pattern:$0x73625140]
        %s2862 = scalar_lea.vmem [#allocation1], 1
        %2863 = vst [vmem:[%s2862] ss:$4 sm:$0xff] %v2276
        %v2864 = vld.sshfl [vmem:[#allocation1] sm:$0xff pattern:$0x73625140]
        %v2866 = vld.sshfl [vmem:[#allocation1 + $0x8] sm:$0xff pattern:$0x73625140]
        %v2868 = vld.sshfl [vmem:[#allocation1 + $0x10] sm:$0xff pattern:$0x73625140]
        %v2870 = vld.sshfl [vmem:[#allocation1 + $0x18] sm:$0xff pattern:$0x73625140]
        %2872 = vrot.lane.b32.xlu0 %v2864, 127
        %v2873 = vpop.permute.xlu0 %2872
        %2874 = vrot.lane.b32.xlu0 %v2866, 127
        %v2875 = vpop.permute.xlu0 %2874
        %2876 = vrot.lane.b32.xlu0 %v2868, 127
        %v2877 = vpop.permute.xlu0 %2876
        %2878 = vrot.lane.b32.xlu0 %v2870, 127
        %v2879 = vpop.permute.xlu0 %2878
        %v2880 = vsel %vm224, %v2873, %v2875
        %v2881 = vsel %vm224, %v2875, %v2877
        %v2882 = vsel %vm224, %v2877, %v2879
        %s2883 = scalar_lea.vmem [#allocation1], 2
        %2884 = vst [vmem:[%s2883] ss:$4 sm:$0xff] %v2276
        %v2885 = vld.sshfl [vmem:[#allocation1] sm:$0xff pattern:$0x73625140]
        %v2887 = vld.sshfl [vmem:[#allocation1 + $0x8] sm:$0xff pattern:$0x73625140]
        %v2889 = vld.sshfl [vmem:[#allocation1 + $0x10] sm:$0xff pattern:$0x73625140]
        %v2891 = vld.sshfl [vmem:[#allocation1 + $0x18] sm:$0xff pattern:$0x73625140]
        %2893 = vrot.lane.b32.xlu0 %v2885, 126
        %v2894 = vpop.permute.xlu0 %2893
        %2895 = vrot.lane.b32.xlu0 %v2887, 126
        %v2896 = vpop.permute.xlu0 %2895
        %2897 = vrot.lane.b32.xlu0 %v2889, 126
        %v2898 = vpop.permute.xlu0 %2897
        %2899 = vrot.lane.b32.xlu0 %v2891, 126
        %v2900 = vpop.permute.xlu0 %2899
        %v2901 = vsel %vm246, %v2894, %v2896
        %v2902 = vsel %vm246, %v2896, %v2898
        %v2903 = vsel %vm246, %v2898, %v2900
        %s2904 = scalar_lea.vmem [#allocation1], 3
        %2905 = vst [vmem:[%s2904] ss:$4 sm:$0xff] %v2276
        %v2906 = vld.sshfl [vmem:[#allocation1] sm:$0xff pattern:$0x73625140]
        %v2908 = vld.sshfl [vmem:[#allocation1 + $0x8] sm:$0xff pattern:$0x73625140]
        %v2910 = vld.sshfl [vmem:[#allocation1 + $0x10] sm:$0xff pattern:$0x73625140]
        %v2912 = vld.sshfl [vmem:[#allocation1 + $0x18] sm:$0xff pattern:$0x73625140]
        %2914 = vrot.lane.b32.xlu0 %v2906, 125
        %v2915 = vpop.permute.xlu0 %2914
        %2916 = vrot.lane.b32.xlu0 %v2908, 125
        %v2917 = vpop.permute.xlu0 %2916
        %2918 = vrot.lane.b32.xlu0 %v2910, 125
        %v2919 = vpop.permute.xlu0 %2918
        %2920 = vrot.lane.b32.xlu0 %v2912, 125
        %v2921 = vpop.permute.xlu0 %2920
        %v2922 = vsel %vm268, %v2915, %v2917
        %v2923 = vsel %vm268, %v2917, %v2919
        %v2924 = vsel %vm268, %v2919, %v2921
        %2925 = vst [vmem:[#allocation1] ss:$4 sm:$0xff] %v2276
        %v2926 = vld.sshfl [vmem:[#allocation1] sm:$0xff pattern:$0x73625140]
        %v2928 = vld.sshfl [vmem:[#allocation1 + $0x8] sm:$0xff pattern:$0x73625140]
        %v2930 = vld.sshfl [vmem:[#allocation1 + $0x10] sm:$0xff pattern:$0x73625140]
        %v2932 = vld.sshfl [vmem:[#allocation1 + $0x18] sm:$0xff pattern:$0x73625140]
        %2934 = vrot.lane.b32.xlu0 %v2926, 124
        %v2935 = vpop.permute.xlu0 %2934
        %2936 = vrot.lane.b32.xlu0 %v2928, 124
        %v2937 = vpop.permute.xlu0 %2936
        %2938 = vrot.lane.b32.xlu0 %v2930, 124
        %v2939 = vpop.permute.xlu0 %2938
        %2940 = vrot.lane.b32.xlu0 %v2932, 124
        %v2941 = vpop.permute.xlu0 %2940
        %v2942 = vsel %vm289, %v2935, %v2937
        %v2943 = vsel %vm289, %v2937, %v2939
        %v2944 = vsel %vm289, %v2939, %v2941
        %v2946 = vsel %vm293, %v2858, %v2880
        %v2948 = vsel %vm293, %v2859, %v2881
        %v2950 = vsel %vm293, %v2860, %v2882
        %v2952 = vsel %vm293, %v2861, %v2879
        %v2954 = vsel %vm300, %v2946, %v2901
        %v2956 = vsel %vm300, %v2948, %v2902
        %v2958 = vsel %vm300, %v2950, %v2903
        %v2960 = vsel %vm300, %v2952, %v2900
        %v2962 = vsel %vm307, %v2954, %v2922
        %v2964 = vsel %vm307, %v2956, %v2923
        %v2966 = vsel %vm307, %v2958, %v2924
        %v2968 = vsel %vm307, %v2960, %v2921
        %v2969 = vld [vmem:[%s905] sm:$0xf]
        %v2970 = vld [vmem:[%s905 + $0x4] sm:$0xf]
        %v2973 = vunpack.c.l.b16 %v2969
        %v2974 = vunpack.c.l.b16 %v2970
        %v2975 = vpack.c.b16 %v2974, %v2973
        %2980 = vrot.lane.b32.xlu0 %v2962, 68
        %v2981 = vpop.permute.xlu0 %2980
        %2982 = vrot.lane.b32.xlu0 %v2964, 68
        %v2983 = vpop.permute.xlu0 %2982
        %2984 = vrot.lane.b32.xlu0 %v2966, 68
        %v2985 = vpop.permute.xlu0 %2984
        %2986 = vrot.lane.b32.xlu0 %v2968, 68
        %v2987 = vpop.permute.xlu0 %2986
        %2988 = vrot.lane.b32.xlu0 %v2942, 68
        %v2989 = vpop.permute.xlu0 %2988
        %2990 = vrot.lane.b32.xlu0 %v2943, 68
        %v2991 = vpop.permute.xlu0 %2990
        %2992 = vrot.lane.b32.xlu0 %v2944, 68
        %v2993 = vpop.permute.xlu0 %2992
        %2994 = vrot.lane.b32.xlu0 %v2941, 68
        %v2995 = vpop.permute.xlu0 %2994
        %v2996 = vsel %vm933, %v2981, %v2983
        %v2997 = vsel %vm933, %v2983, %v2985
        %v2998 = vsel %vm933, %v2985, %v2987
        %v2999 = vsel %vm933, %v2989, %v2991
        %v3000 = vsel %vm933, %v2991, %v2993
        %v3001 = vsel %vm933, %v2993, %v2995
        %v3006 = vsel %vm469, %v2975, 0
        %v3009 = vsel %vm293, %v2999, 0
        %v3012 = vsel %vm293, %v3000, 0
        %v3015 = vsel %vm293, %v3001, 0
        %3017 = vmatpush.bf16.msra.mxu0 0
        %3018 = vmatpush.bf16.msra.mxu0 0
        %3019 = vmatpush.bf16.msra.mxu0 0
        %3020 = vmatpush.bf16.msra.mxu0 0
        %3021 = vmatpush.bf16.msra.mxu0 0
        %3022 = vmatpush.bf16.msra.mxu0 0
        %3023 = vmatpush.bf16.msra.mxu0 %v3009
        %3024 = vmatpush.bf16.msra.mxu0 %v2996
        %3025 = vmatmul.bf16.gmra.mxu0 %v3006
        %v3026 = vpop.f32.mrf.mxu0
        %v3027 = vadd.f32 0.0, %v3026
        %v3028 = vpop.f32.mrf.mxu0
        %v3029 = vadd.f32 0.0, %v3028
        %3030 = vdwg.mxu0
        %3031 = vmatpush.bf16.msra.mxu0 0
        %3032 = vmatpush.bf16.msra.mxu0 0
        %3033 = vmatpush.bf16.msra.mxu0 0
        %3034 = vmatpush.bf16.msra.mxu0 0
        %3035 = vmatpush.bf16.msra.mxu0 0
        %3036 = vmatpush.bf16.msra.mxu0 0
        %3037 = vmatpush.bf16.msra.mxu0 %v3012
        %3038 = vmatpush.bf16.msra.mxu0 %v2997
        %3039 = vmatmul.bf16.gmra.mxu0 %v3006
        %v3040 = vpop.f32.mrf.mxu0
        %v3041 = vadd.f32 0.0, %v3040
        %v3042 = vpop.f32.mrf.mxu0
        %v3043 = vadd.f32 0.0, %v3042
        %3044 = vdwg.mxu0
        %3045 = vmatpush.bf16.msra.mxu0 0
        %3046 = vmatpush.bf16.msra.mxu0 0
        %3047 = vmatpush.bf16.msra.mxu0 0
        %3048 = vmatpush.bf16.msra.mxu0 0
        %3049 = vmatpush.bf16.msra.mxu0 0
        %3050 = vmatpush.bf16.msra.mxu0 0
        %3051 = vmatpush.bf16.msra.mxu0 %v3015
        %3052 = vmatpush.bf16.msra.mxu0 %v2998
        %3053 = vmatmul.bf16.gmra.mxu0 %v3006
        %v3054 = vpop.f32.mrf.mxu0
        %v3055 = vadd.f32 0.0, %v3054
        %v3056 = vpop.f32.mrf.mxu0
        %v3057 = vadd.f32 0.0, %v3056
        %3058 = vdwg.mxu0
        %v3059 = vadd.f32 %v2851, %v3027
        %v3060 = vadd.f32 %v2852, %v3041
        %v3061 = vadd.f32 %v2853, %v3055
        %v3062 = vadd.f32 %v2854, %v3029
        %v3063 = vadd.f32 %v2855, %v3043
        %v3064 = vadd.f32 %v2856, %v3057
        %3065 = vst [vmem:[#allocation1] ss:$4 sm:$0xff] %v2276
        %v3066 = vld.sshfl [vmem:[#allocation1] sm:$0xff pattern:$0x73625140]
        %v3067 = vld.sshfl [vmem:[#allocation1 + $0x8] sm:$0xff pattern:$0x73625140]
        %v3068 = vld.sshfl [vmem:[#allocation1 + $0x10] sm:$0xff pattern:$0x73625140]
        %v3069 = vld.sshfl [vmem:[#allocation1 + $0x18] sm:$0xff pattern:$0x73625140]
        %s3070 = scalar_lea.vmem [#allocation1], 1
        %3071 = vst [vmem:[%s3070] ss:$4 sm:$0xff] %v2276
        %v3072 = vld.sshfl [vmem:[#allocation1] sm:$0xff pattern:$0x73625140]
        %v3074 = vld.sshfl [vmem:[#allocation1 + $0x8] sm:$0xff pattern:$0x73625140]
        %v3076 = vld.sshfl [vmem:[#allocation1 + $0x10] sm:$0xff pattern:$0x73625140]
        %v3078 = vld.sshfl [vmem:[#allocation1 + $0x18] sm:$0xff pattern:$0x73625140]
        %3080 = vrot.lane.b32.xlu0 %v3072, 127
        %v3081 = vpop.permute.xlu0 %3080
        %3082 = vrot.lane.b32.xlu0 %v3074, 127
        %v3083 = vpop.permute.xlu0 %3082
        %3084 = vrot.lane.b32.xlu0 %v3076, 127
        %v3085 = vpop.permute.xlu0 %3084
        %3086 = vrot.lane.b32.xlu0 %v3078, 127
        %v3087 = vpop.permute.xlu0 %3086
        %v3088 = vsel %vm224, %v3081, %v3083
        %v3089 = vsel %vm224, %v3083, %v3085
        %v3090 = vsel %vm224, %v3085, %v3087
        %s3091 = scalar_lea.vmem [#allocation1], 2
        %3092 = vst [vmem:[%s3091] ss:$4 sm:$0xff] %v2276
        %v3093 = vld.sshfl [vmem:[#allocation1] sm:$0xff pattern:$0x73625140]
        %v3095 = vld.sshfl [vmem:[#allocation1 + $0x8] sm:$0xff pattern:$0x73625140]
        %v3097 = vld.sshfl [vmem:[#allocation1 + $0x10] sm:$0xff pattern:$0x73625140]
        %v3099 = vld.sshfl [vmem:[#allocation1 + $0x18] sm:$0xff pattern:$0x73625140]
        %3101 = vrot.lane.b32.xlu0 %v3093, 126
        %v3102 = vpop.permute.xlu0 %3101
        %3103 = vrot.lane.b32.xlu0 %v3095, 126
        %v3104 = vpop.permute.xlu0 %3103
        %3105 = vrot.lane.b32.xlu0 %v3097, 126
        %v3106 = vpop.permute.xlu0 %3105
        %3107 = vrot.lane.b32.xlu0 %v3099, 126
        %v3108 = vpop.permute.xlu0 %3107
        %v3109 = vsel %vm246, %v3102, %v3104
        %v3110 = vsel %vm246, %v3104, %v3106
        %v3111 = vsel %vm246, %v3106, %v3108
        %s3112 = scalar_lea.vmem [#allocation1], 3
        %3113 = vst [vmem:[%s3112] ss:$4 sm:$0xff] %v2276
        %v3114 = vld.sshfl [vmem:[#allocation1] sm:$0xff pattern:$0x73625140]
        %v3116 = vld.sshfl [vmem:[#allocation1 + $0x8] sm:$0xff pattern:$0x73625140]
        %v3118 = vld.sshfl [vmem:[#allocation1 + $0x10] sm:$0xff pattern:$0x73625140]
        %v3120 = vld.sshfl [vmem:[#allocation1 + $0x18] sm:$0xff pattern:$0x73625140]
        %3122 = vrot.lane.b32.xlu0 %v3114, 125
        %v3123 = vpop.permute.xlu0 %3122
        %3124 = vrot.lane.b32.xlu0 %v3116, 125
        %v3125 = vpop.permute.xlu0 %3124
        %3126 = vrot.lane.b32.xlu0 %v3118, 125
        %v3127 = vpop.permute.xlu0 %3126
        %3128 = vrot.lane.b32.xlu0 %v3120, 125
        %v3129 = vpop.permute.xlu0 %3128
        %v3130 = vsel %vm268, %v3123, %v3125
        %v3131 = vsel %vm268, %v3125, %v3127
        %v3132 = vsel %vm268, %v3127, %v3129
        %3133 = vst [vmem:[#allocation1] ss:$4 sm:$0xff] %v2276
        %v3134 = vld.sshfl [vmem:[#allocation1] sm:$0xff pattern:$0x73625140]
        %v3136 = vld.sshfl [vmem:[#allocation1 + $0x8] sm:$0xff pattern:$0x73625140]
        %v3138 = vld.sshfl [vmem:[#allocation1 + $0x10] sm:$0xff pattern:$0x73625140]
        %v3140 = vld.sshfl [vmem:[#allocation1 + $0x18] sm:$0xff pattern:$0x73625140]
        %3142 = vrot.lane.b32.xlu0 %v3134, 124
        %v3143 = vpop.permute.xlu0 %3142
        %3144 = vrot.lane.b32.xlu0 %v3136, 124
        %v3145 = vpop.permute.xlu0 %3144
        %3146 = vrot.lane.b32.xlu0 %v3138, 124
        %v3147 = vpop.permute.xlu0 %3146
        %3148 = vrot.lane.b32.xlu0 %v3140, 124
        %v3149 = vpop.permute.xlu0 %3148
        %v3150 = vsel %vm289, %v3143, %v3145
        %v3151 = vsel %vm289, %v3145, %v3147
        %v3152 = vsel %vm289, %v3147, %v3149
        %v3154 = vsel %vm293, %v3066, %v3088
        %v3156 = vsel %vm293, %v3067, %v3089
        %v3158 = vsel %vm293, %v3068, %v3090
        %v3160 = vsel %vm293, %v3069, %v3087
        %v3162 = vsel %vm300, %v3154, %v3109
        %v3164 = vsel %vm300, %v3156, %v3110
        %v3166 = vsel %vm300, %v3158, %v3111
        %v3168 = vsel %vm300, %v3160, %v3108
        %v3170 = vsel %vm307, %v3162, %v3130
        %v3172 = vsel %vm307, %v3164, %v3131
        %v3174 = vsel %vm307, %v3166, %v3132
        %v3176 = vsel %vm307, %v3168, %v3129
        %v3177 = vld [vmem:[%s1115] sm:$0xf]
        %v3178 = vld [vmem:[%s1115 + $0x4] sm:$0xf]
        %v3181 = vunpack.c.l.b16 %v3177
        %v3182 = vunpack.c.l.b16 %v3178
        %v3183 = vpack.c.b16 %v3182, %v3181
        %3188 = vrot.lane.b32.xlu0 %v3170, 48
        %v3189 = vpop.permute.xlu0 %3188
        %3190 = vrot.lane.b32.xlu0 %v3172, 48
        %v3191 = vpop.permute.xlu0 %3190
        %3192 = vrot.lane.b32.xlu0 %v3174, 48
        %v3193 = vpop.permute.xlu0 %3192
        %3194 = vrot.lane.b32.xlu0 %v3176, 48
        %v3195 = vpop.permute.xlu0 %3194
        %3196 = vrot.lane.b32.xlu0 %v3150, 48
        %v3197 = vpop.permute.xlu0 %3196
        %3198 = vrot.lane.b32.xlu0 %v3151, 48
        %v3199 = vpop.permute.xlu0 %3198
        %3200 = vrot.lane.b32.xlu0 %v3152, 48
        %v3201 = vpop.permute.xlu0 %3200
        %3202 = vrot.lane.b32.xlu0 %v3149, 48
        %v3203 = vpop.permute.xlu0 %3202
        %v3204 = vsel %vm1143, %v3189, %v3191
        %v3205 = vsel %vm1143, %v3191, %v3193
        %v3206 = vsel %vm1143, %v3193, %v3195
        %v3207 = vsel %vm1143, %v3197, %v3199
        %v3208 = vsel %vm1143, %v3199, %v3201
        %v3209 = vsel %vm1143, %v3201, %v3203
        %v3214 = vsel %vm469, %v3183, 0
        %v3217 = vsel %vm293, %v3207, 0
        %v3220 = vsel %vm293, %v3208, 0
        %v3223 = vsel %vm293, %v3209, 0
        %3225 = vmatpush.bf16.msra.mxu0 0
        %3226 = vmatpush.bf16.msra.mxu0 0
        %3227 = vmatpush.bf16.msra.mxu0 0
        %3228 = vmatpush.bf16.msra.mxu0 0
        %3229 = vmatpush.bf16.msra.mxu0 0
        %3230 = vmatpush.bf16.msra.mxu0 0
        %3231 = vmatpush.bf16.msra.mxu0 %v3217
        %3232 = vmatpush.bf16.msra.mxu0 %v3204
        %3233 = vmatmul.bf16.gmra.mxu0 %v3214
        %v3234 = vpop.f32.mrf.mxu0
        %v3235 = vadd.f32 0.0, %v3234
        %v3236 = vpop.f32.mrf.mxu0
        %v3237 = vadd.f32 0.0, %v3236
        %3238 = vdwg.mxu0
        %3239 = vmatpush.bf16.msra.mxu0 0
        %3240 = vmatpush.bf16.msra.mxu0 0
        %3241 = vmatpush.bf16.msra.mxu0 0
        %3242 = vmatpush.bf16.msra.mxu0 0
        %3243 = vmatpush.bf16.msra.mxu0 0
        %3244 = vmatpush.bf16.msra.mxu0 0
        %3245 = vmatpush.bf16.msra.mxu0 %v3220
        %3246 = vmatpush.bf16.msra.mxu0 %v3205
        %3247 = vmatmul.bf16.gmra.mxu0 %v3214
        %v3248 = vpop.f32.mrf.mxu0
        %v3249 = vadd.f32 0.0, %v3248
        %v3250 = vpop.f32.mrf.mxu0
        %v3251 = vadd.f32 0.0, %v3250
        %3252 = vdwg.mxu0
        %3253 = vmatpush.bf16.msra.mxu0 0
        %3254 = vmatpush.bf16.msra.mxu0 0
        %3255 = vmatpush.bf16.msra.mxu0 0
        %3256 = vmatpush.bf16.msra.mxu0 0
        %3257 = vmatpush.bf16.msra.mxu0 0
        %3258 = vmatpush.bf16.msra.mxu0 0
        %3259 = vmatpush.bf16.msra.mxu0 %v3223
        %3260 = vmatpush.bf16.msra.mxu0 %v3206
        %3261 = vmatmul.bf16.gmra.mxu0 %v3214
        %v3262 = vpop.f32.mrf.mxu0
        %v3263 = vadd.f32 0.0, %v3262
        %v3264 = vpop.f32.mrf.mxu0
        %v3265 = vadd.f32 0.0, %v3264
        %3266 = vdwg.mxu0
        %v3267 = vadd.f32 %v3059, %v3235
        %v3268 = vadd.f32 %v3060, %v3249
        %v3269 = vadd.f32 %v3061, %v3263
        %v3270 = vadd.f32 %v3062, %v3237
        %v3271 = vadd.f32 %v3063, %v3251
        %v3272 = vadd.f32 %v3064, %v3265
        %v3273 = vld [vmem:[%s2] sm:$0xff]
        %v3274 = vld [vmem:[%s2 + $0x8] sm:$0xff]
        %3276 = vset.pattern.permute.xlu0 0
        %3277 = vperm.xlu0 %3276, %v3273
        %v3278 = vpop.permute.xlu0 %3277
        %3281 = vset.pattern.permute.xlu0 0
        %3282 = vperm.xlu0 %3281, %v3274
        %v3283 = vpop.permute.xlu0 %3282
        %v3285 = vadd.f32 %v3267, %v3278
        %v3286 = vadd.f32 %v3268, %v3278
        %v3287 = vadd.f32 %v3269, %v3278
        %v3288 = vadd.f32 %v3270, %v3283
        %v3289 = vadd.f32 %v3271, %v3283
        %v3290 = vadd.f32 %v3272, %v3283
        %v3291 = vmax.f32 %v3285, 0.0
        %v3292 = vmax.f32 %v3286, 0.0
        %v3293 = vmax.f32 %v3287, 0.0
        %v3294 = vmax.f32 %v3288, 0.0
        %v3295 = vmax.f32 %v3289, 0.0
        %v3296 = vmax.f32 %v3290, 0.0
        %v3297 = vpack.c.bf16 %v3292, %v3291
        %v3298 = vpack.c.bf16 %v3293, %v3293
        %v3299 = vpack.c.bf16 %v3295, %v3294
        %v3300 = vpack.c.bf16 %v3296, %v3296
        %3301 = vst [vmem:[%s186 + $0x18] sm:$0xff] %v3297
        %3302 = vst [vmem:[%s186 + $0x20] sm:$0xf] %v3298
        %3303 = vst [vmem:[%s186 + $0x48] sm:$0xff] %v3299
        %3304 = vst [vmem:[%s186 + $0x50] sm:$0xf] %v3300
        %s3305 = scalar_lea.vmem %s196, 24
        %v3306 = vld [vmem:[%s3305] sm:$0xff]
        %3308 = vst [vmem:[#allocation1] ss:$4 sm:$0xff] %v3306
        %v3309 = vld.sshfl [vmem:[#allocation1] sm:$0xff pattern:$0x73625140]
        %v3310 = vld.sshfl [vmem:[#allocation1 + $0x8] sm:$0xff pattern:$0x73625140]
        %v3311 = vld.sshfl [vmem:[#allocation1 + $0x10] sm:$0xff pattern:$0x73625140]
        %s3312 = scalar_lea.vmem [#allocation1], 1
        %3313 = vst [vmem:[%s3312] ss:$4 sm:$0xff] %v3306
        %v3314 = vld.sshfl [vmem:[#allocation1] sm:$0xff pattern:$0x73625140]
        %v3316 = vld.sshfl [vmem:[#allocation1 + $0x8] sm:$0xff pattern:$0x73625140]
        %v3318 = vld.sshfl [vmem:[#allocation1 + $0x10] sm:$0xff pattern:$0x73625140]
        %v3320 = vld.sshfl [vmem:[#allocation1 + $0x18] sm:$0xff pattern:$0x73625140]
        %3322 = vrot.lane.b32.xlu0 %v3314, 127
        %v3323 = vpop.permute.xlu0 %3322
        %3324 = vrot.lane.b32.xlu0 %v3316, 127
        %v3325 = vpop.permute.xlu0 %3324
        %3326 = vrot.lane.b32.xlu0 %v3318, 127
        %v3327 = vpop.permute.xlu0 %3326
        %3328 = vrot.lane.b32.xlu0 %v3320, 127
        %v3329 = vpop.permute.xlu0 %3328
        %v3330 = vsel %vm224, %v3323, %v3325
        %v3331 = vsel %vm224, %v3325, %v3327
        %v3332 = vsel %vm224, %v3327, %v3329
        %s3333 = scalar_lea.vmem [#allocation1], 2
        %3334 = vst [vmem:[%s3333] ss:$4 sm:$0xff] %v3306
        %v3335 = vld.sshfl [vmem:[#allocation1] sm:$0xff pattern:$0x73625140]
        %v3337 = vld.sshfl [vmem:[#allocation1 + $0x8] sm:$0xff pattern:$0x73625140]
        %v3339 = vld.sshfl [vmem:[#allocation1 + $0x10] sm:$0xff pattern:$0x73625140]
        %v3341 = vld.sshfl [vmem:[#allocation1 + $0x18] sm:$0xff pattern:$0x73625140]
        %3343 = vrot.lane.b32.xlu0 %v3335, 126
        %v3344 = vpop.permute.xlu0 %3343
        %3345 = vrot.lane.b32.xlu0 %v3337, 126
        %v3346 = vpop.permute.xlu0 %3345
        %3347 = vrot.lane.b32.xlu0 %v3339, 126
        %v3348 = vpop.permute.xlu0 %3347
        %3349 = vrot.lane.b32.xlu0 %v3341, 126
        %v3350 = vpop.permute.xlu0 %3349
        %v3351 = vsel %vm246, %v3344, %v3346
        %v3352 = vsel %vm246, %v3346, %v3348
        %v3353 = vsel %vm246, %v3348, %v3350
        %s3354 = scalar_lea.vmem [#allocation1], 3
        %3355 = vst [vmem:[%s3354] ss:$4 sm:$0xff] %v3306
        %v3356 = vld.sshfl [vmem:[#allocation1] sm:$0xff pattern:$0x73625140]
        %v3358 = vld.sshfl [vmem:[#allocation1 + $0x8] sm:$0xff pattern:$0x73625140]
        %v3360 = vld.sshfl [vmem:[#allocation1 + $0x10] sm:$0xff pattern:$0x73625140]
        %v3362 = vld.sshfl [vmem:[#allocation1 + $0x18] sm:$0xff pattern:$0x73625140]
        %3364 = vrot.lane.b32.xlu0 %v3356, 125
        %v3365 = vpop.permute.xlu0 %3364
        %3366 = vrot.lane.b32.xlu0 %v3358, 125
        %v3367 = vpop.permute.xlu0 %3366
        %3368 = vrot.lane.b32.xlu0 %v3360, 125
        %v3369 = vpop.permute.xlu0 %3368
        %3370 = vrot.lane.b32.xlu0 %v3362, 125
        %v3371 = vpop.permute.xlu0 %3370
        %v3372 = vsel %vm268, %v3365, %v3367
        %v3373 = vsel %vm268, %v3367, %v3369
        %v3374 = vsel %vm268, %v3369, %v3371
        %3375 = vst [vmem:[#allocation1] ss:$4 sm:$0xff] %v3306
        %v3376 = vld.sshfl [vmem:[#allocation1] sm:$0xff pattern:$0x73625140]
        %v3378 = vld.sshfl [vmem:[#allocation1 + $0x8] sm:$0xff pattern:$0x73625140]
        %v3380 = vld.sshfl [vmem:[#allocation1 + $0x10] sm:$0xff pattern:$0x73625140]
        %v3382 = vld.sshfl [vmem:[#allocation1 + $0x18] sm:$0xff pattern:$0x73625140]
        %3384 = vrot.lane.b32.xlu0 %v3376, 124
        %v3385 = vpop.permute.xlu0 %3384
        %3386 = vrot.lane.b32.xlu0 %v3378, 124
        %v3387 = vpop.permute.xlu0 %3386
        %3388 = vrot.lane.b32.xlu0 %v3380, 124
        %v3389 = vpop.permute.xlu0 %3388
        %3390 = vrot.lane.b32.xlu0 %v3382, 124
        %v3391 = vpop.permute.xlu0 %3390
        %v3392 = vsel %vm289, %v3385, %v3387
        %v3393 = vsel %vm289, %v3387, %v3389
        %v3394 = vsel %vm289, %v3389, %v3391
        %v3396 = vsel %vm293, %v3309, %v3330
        %v3398 = vsel %vm293, %v3310, %v3331
        %v3400 = vsel %vm293, %v3311, %v3332
        %v3402 = vsel %vm300, %v3396, %v3351
        %v3404 = vsel %vm300, %v3398, %v3352
        %v3406 = vsel %vm300, %v3400, %v3353
        %v3408 = vsel %vm307, %v3402, %v3372
        %v3411 = vsel %vm307, %v3404, %v3373
        %v3414 = vsel %vm307, %v3406, %v3374
        %v3416 = vld [vmem:[%s1] sm:$0xf]
        %v3417 = vld [vmem:[%s1 + $0x4] sm:$0xf]
        %3418 = vst [vmem:[#allocation1] ss:$4 sm:$0xff] %v3306
        %v3419 = vld.sshfl [vmem:[#allocation1] sm:$0xff pattern:$0x73625140]
        %v3420 = vld.sshfl [vmem:[#allocation1 + $0x8] sm:$0xff pattern:$0x73625140]
        %v3421 = vld.sshfl [vmem:[#allocation1 + $0x10] sm:$0xff pattern:$0x73625140]
        %v3422 = vld.sshfl [vmem:[#allocation1 + $0x18] sm:$0xff pattern:$0x73625140]
        %s3423 = scalar_lea.vmem [#allocation1], 1
        %3424 = vst [vmem:[%s3423] ss:$4 sm:$0xff] %v3306
        %v3425 = vld.sshfl [vmem:[#allocation1] sm:$0xff pattern:$0x73625140]
        %v3427 = vld.sshfl [vmem:[#allocation1 + $0x8] sm:$0xff pattern:$0x73625140]
        %v3429 = vld.sshfl [vmem:[#allocation1 + $0x10] sm:$0xff pattern:$0x73625140]
        %v3431 = vld.sshfl [vmem:[#allocation1 + $0x18] sm:$0xff pattern:$0x73625140]
        %3433 = vrot.lane.b32.xlu0 %v3425, 127
        %v3434 = vpop.permute.xlu0 %3433
        %3435 = vrot.lane.b32.xlu0 %v3427, 127
        %v3436 = vpop.permute.xlu0 %3435
        %3437 = vrot.lane.b32.xlu0 %v3429, 127
        %v3438 = vpop.permute.xlu0 %3437
        %3439 = vrot.lane.b32.xlu0 %v3431, 127
        %v3440 = vpop.permute.xlu0 %3439
        %v3441 = vsel %vm224, %v3434, %v3436
        %v3442 = vsel %vm224, %v3436, %v3438
        %v3443 = vsel %vm224, %v3438, %v3440
        %s3444 = scalar_lea.vmem [#allocation1], 2
        %3445 = vst [vmem:[%s3444] ss:$4 sm:$0xff] %v3306
        %v3446 = vld.sshfl [vmem:[#allocation1] sm:$0xff pattern:$0x73625140]
        %v3448 = vld.sshfl [vmem:[#allocation1 + $0x8] sm:$0xff pattern:$0x73625140]
        %v3450 = vld.sshfl [vmem:[#allocation1 + $0x10] sm:$0xff pattern:$0x73625140]
        %v3452 = vld.sshfl [vmem:[#allocation1 + $0x18] sm:$0xff pattern:$0x73625140]
        %3454 = vrot.lane.b32.xlu0 %v3446, 126
        %v3455 = vpop.permute.xlu0 %3454
        %3456 = vrot.lane.b32.xlu0 %v3448, 126
        %v3457 = vpop.permute.xlu0 %3456
        %3458 = vrot.lane.b32.xlu0 %v3450, 126
        %v3459 = vpop.permute.xlu0 %3458
        %3460 = vrot.lane.b32.xlu0 %v3452, 126
        %v3461 = vpop.permute.xlu0 %3460
        %v3462 = vsel %vm246, %v3455, %v3457
        %v3463 = vsel %vm246, %v3457, %v3459
        %v3464 = vsel %vm246, %v3459, %v3461
        %s3465 = scalar_lea.vmem [#allocation1], 3
        %3466 = vst [vmem:[%s3465] ss:$4 sm:$0xff] %v3306
        %v3467 = vld.sshfl [vmem:[#allocation1] sm:$0xff pattern:$0x73625140]
        %v3469 = vld.sshfl [vmem:[#allocation1 + $0x8] sm:$0xff pattern:$0x73625140]
        %v3471 = vld.sshfl [vmem:[#allocation1 + $0x10] sm:$0xff pattern:$0x73625140]
        %v3473 = vld.sshfl [vmem:[#allocation1 + $0x18] sm:$0xff pattern:$0x73625140]
        %3475 = vrot.lane.b32.xlu0 %v3467, 125
        %v3476 = vpop.permute.xlu0 %3475
        %3477 = vrot.lane.b32.xlu0 %v3469, 125
        %v3478 = vpop.permute.xlu0 %3477
        %3479 = vrot.lane.b32.xlu0 %v3471, 125
        %v3480 = vpop.permute.xlu0 %3479
        %3481 = vrot.lane.b32.xlu0 %v3473, 125
        %v3482 = vpop.permute.xlu0 %3481
        %v3483 = vsel %vm268, %v3476, %v3478
        %v3484 = vsel %vm268, %v3478, %v3480
        %v3485 = vsel %vm268, %v3480, %v3482
        %3486 = vst [vmem:[#allocation1] ss:$4 sm:$0xff] %v3306
        %v3487 = vld.sshfl [vmem:[#allocation1] sm:$0xff pattern:$0x73625140]
        %v3489 = vld.sshfl [vmem:[#allocation1 + $0x8] sm:$0xff pattern:$0x73625140]
        %v3491 = vld.sshfl [vmem:[#allocation1 + $0x10] sm:$0xff pattern:$0x73625140]
        %v3493 = vld.sshfl [vmem:[#allocation1 + $0x18] sm:$0xff pattern:$0x73625140]
        %3495 = vrot.lane.b32.xlu0 %v3487, 124
        %v3496 = vpop.permute.xlu0 %3495
        %3497 = vrot.lane.b32.xlu0 %v3489, 124
        %v3498 = vpop.permute.xlu0 %3497
        %3499 = vrot.lane.b32.xlu0 %v3491, 124
        %v3500 = vpop.permute.xlu0 %3499
        %3501 = vrot.lane.b32.xlu0 %v3493, 124
        %v3502 = vpop.permute.xlu0 %3501
        %v3503 = vsel %vm289, %v3496, %v3498
        %v3504 = vsel %vm289, %v3498, %v3500
        %v3505 = vsel %vm289, %v3500, %v3502
        %v3507 = vsel %vm293, %v3419, %v3441
        %v3509 = vsel %vm293, %v3420, %v3442
        %v3511 = vsel %vm293, %v3421, %v3443
        %v3513 = vsel %vm293, %v3422, %v3440
        %v3515 = vsel %vm300, %v3507, %v3462
        %v3517 = vsel %vm300, %v3509, %v3463
        %v3519 = vsel %vm300, %v3511, %v3464
        %v3521 = vsel %vm300, %v3513, %v3461
        %v3523 = vsel %vm307, %v3515, %v3483
        %v3525 = vsel %vm307, %v3517, %v3484
        %v3527 = vsel %vm307, %v3519, %v3485
        %v3529 = vsel %vm307, %v3521, %v3482
        %v3530 = vld [vmem:[%s431] sm:$0xf]
        %v3531 = vld [vmem:[%s431 + $0x4] sm:$0xf]
        %v3534 = vunpack.c.l.b16 %v3530
        %v3535 = vunpack.c.l.b16 %v3531
        %v3536 = vpack.c.b16 %v3535, %v3534
        %3541 = vrot.lane.b32.xlu0 %v3523, 108
        %v3542 = vpop.permute.xlu0 %3541
        %3543 = vrot.lane.b32.xlu0 %v3525, 108
        %v3544 = vpop.permute.xlu0 %3543
        %3545 = vrot.lane.b32.xlu0 %v3527, 108
        %v3546 = vpop.permute.xlu0 %3545
        %3547 = vrot.lane.b32.xlu0 %v3529, 108
        %v3548 = vpop.permute.xlu0 %3547
        %3549 = vrot.lane.b32.xlu0 %v3503, 108
        %v3550 = vpop.permute.xlu0 %3549
        %3551 = vrot.lane.b32.xlu0 %v3504, 108
        %v3552 = vpop.permute.xlu0 %3551
        %3553 = vrot.lane.b32.xlu0 %v3505, 108
        %v3554 = vpop.permute.xlu0 %3553
        %3555 = vrot.lane.b32.xlu0 %v3502, 108
        %v3556 = vpop.permute.xlu0 %3555
        %v3557 = vsel %vm459, %v3542, %v3544
        %v3558 = vsel %vm459, %v3544, %v3546
        %v3559 = vsel %vm459, %v3546, %v3548
        %v3560 = vsel %vm459, %v3550, %v3552
        %v3561 = vsel %vm459, %v3552, %v3554
        %v3562 = vsel %vm459, %v3554, %v3556
        %v3567 = vsel %vm469, %v3536, 0
        %v3570 = vsel %vm293, %v3560, 0
        %v3573 = vsel %vm293, %v3561, 0
        %v3576 = vsel %vm293, %v3562, 0
        %3578 = vmatpush.bf16.msra.mxu0 0
        %3579 = vmatpush.bf16.msra.mxu0 0
        %3580 = vmatpush.bf16.msra.mxu0 0
        %3581 = vmatpush.bf16.msra.mxu0 0
        %3582 = vmatpush.bf16.msra.mxu0 0
        %3583 = vmatpush.bf16.msra.mxu0 0
        %3584 = vmatpush.bf16.msra.mxu0 %v3570
        %3585 = vmatpush.bf16.msra.mxu0 %v3557
        %3586 = vmatmul.bf16.gmra.mxu0 %v3567
        %v3587 = vpop.f32.mrf.mxu0
        %v3588 = vadd.f32 0.0, %v3587
        %v3589 = vpop.f32.mrf.mxu0
        %v3590 = vadd.f32 0.0, %v3589
        %3591 = vdwg.mxu0
        %3592 = vmatpush.bf16.msra.mxu0 0
        %3593 = vmatpush.bf16.msra.mxu0 0
        %3594 = vmatpush.bf16.msra.mxu0 0
        %3595 = vmatpush.bf16.msra.mxu0 0
        %3596 = vmatpush.bf16.msra.mxu0 0
        %3597 = vmatpush.bf16.msra.mxu0 0
        %3598 = vmatpush.bf16.msra.mxu0 %v3573
        %3599 = vmatpush.bf16.msra.mxu0 %v3558
        %3600 = vmatmul.bf16.gmra.mxu0 %v3567
        %v3601 = vpop.f32.mrf.mxu0
        %v3602 = vadd.f32 0.0, %v3601
        %v3603 = vpop.f32.mrf.mxu0
        %v3604 = vadd.f32 0.0, %v3603
        %3605 = vdwg.mxu0
        %3606 = vmatpush.bf16.msra.mxu0 0
        %3607 = vmatpush.bf16.msra.mxu0 0
        %3608 = vmatpush.bf16.msra.mxu0 0
        %3609 = vmatpush.bf16.msra.mxu0 0
        %3610 = vmatpush.bf16.msra.mxu0 0
        %3611 = vmatpush.bf16.msra.mxu0 0
        %3612 = vmatpush.bf16.msra.mxu0 %v3576
        %3613 = vmatpush.bf16.msra.mxu0 %v3559
        %3614 = vmatmul.bf16.gmra.mxu0 %v3567
        %v3615 = vpop.f32.mrf.mxu0
        %v3616 = vadd.f32 0.0, %v3615
        %v3617 = vpop.f32.mrf.mxu0
        %v3618 = vadd.f32 0.0, %v3617
        %3619 = vdwg.mxu0
        %v3622 = vunpack.c.l.b16 %v3416
        %v3623 = vunpack.c.l.b16 %v3417
        %v3624 = vpack.c.b16 %v3623, %v3622
        %v3626 = vsel %vm469, %v3624, 0
        %v3629 = vsel %vm293, %v3392, 0
        %v3632 = vsel %vm293, %v3393, 0
        %v3635 = vsel %vm293, %v3394, 0
        %3637 = vmatpush.bf16.msra.mxu0 0
        %3638 = vmatpush.bf16.msra.mxu0 0
        %3639 = vmatpush.bf16.msra.mxu0 0
        %3640 = vmatpush.bf16.msra.mxu0 0
        %3641 = vmatpush.bf16.msra.mxu0 0
        %3642 = vmatpush.bf16.msra.mxu0 0
        %3643 = vmatpush.bf16.msra.mxu0 %v3629
        %3644 = vmatpush.bf16.msra.mxu0 %v3408
        %3645 = vmatmul.bf16.gmra.mxu0 %v3626
        %v3646 = vpop.f32.mrf.mxu0
        %v3647 = vadd.f32 %v3588, %v3646
        %v3648 = vpop.f32.mrf.mxu0
        %v3649 = vadd.f32 %v3590, %v3648
        %3650 = vdwg.mxu0
        %3651 = vmatpush.bf16.msra.mxu0 0
        %3652 = vmatpush.bf16.msra.mxu0 0
        %3653 = vmatpush.bf16.msra.mxu0 0
        %3654 = vmatpush.bf16.msra.mxu0 0
        %3655 = vmatpush.bf16.msra.mxu0 0
        %3656 = vmatpush.bf16.msra.mxu0 0
        %3657 = vmatpush.bf16.msra.mxu0 %v3632
        %3658 = vmatpush.bf16.msra.mxu0 %v3411
        %3659 = vmatmul.bf16.gmra.mxu0 %v3626
        %v3660 = vpop.f32.mrf.mxu0
        %v3661 = vadd.f32 %v3602, %v3660
        %v3662 = vpop.f32.mrf.mxu0
        %v3663 = vadd.f32 %v3604, %v3662
        %3664 = vdwg.mxu0
        %3665 = vmatpush.bf16.msra.mxu0 0
        %3666 = vmatpush.bf16.msra.mxu0 0
        %3667 = vmatpush.bf16.msra.mxu0 0
        %3668 = vmatpush.bf16.msra.mxu0 0
        %3669 = vmatpush.bf16.msra.mxu0 0
        %3670 = vmatpush.bf16.msra.mxu0 0
        %3671 = vmatpush.bf16.msra.mxu0 %v3635
        %3672 = vmatpush.bf16.msra.mxu0 %v3414
        %3673 = vmatmul.bf16.gmra.mxu0 %v3626
        %v3674 = vpop.f32.mrf.mxu0
        %v3675 = vadd.f32 %v3616, %v3674
        %v3676 = vpop.f32.mrf.mxu0
        %v3677 = vadd.f32 %v3618, %v3676
        %3678 = vdwg.mxu0
        %3679 = vst [vmem:[#allocation1] ss:$4 sm:$0xff] %v3306
        %v3680 = vld.sshfl [vmem:[#allocation1] sm:$0xff pattern:$0x73625140]
        %v3681 = vld.sshfl [vmem:[#allocation1 + $0x8] sm:$0xff pattern:$0x73625140]
        %v3682 = vld.sshfl [vmem:[#allocation1 + $0x10] sm:$0xff pattern:$0x73625140]
        %v3683 = vld.sshfl [vmem:[#allocation1 + $0x18] sm:$0xff pattern:$0x73625140]
        %s3684 = scalar_lea.vmem [#allocation1], 1
        %3685 = vst [vmem:[%s3684] ss:$4 sm:$0xff] %v3306
        %v3686 = vld.sshfl [vmem:[#allocation1] sm:$0xff pattern:$0x73625140]
        %v3688 = vld.sshfl [vmem:[#allocation1 + $0x8] sm:$0xff pattern:$0x73625140]
        %v3690 = vld.sshfl [vmem:[#allocation1 + $0x10] sm:$0xff pattern:$0x73625140]
        %v3692 = vld.sshfl [vmem:[#allocation1 + $0x18] sm:$0xff pattern:$0x73625140]
        %3694 = vrot.lane.b32.xlu0 %v3686, 127
        %v3695 = vpop.permute.xlu0 %3694
        %3696 = vrot.lane.b32.xlu0 %v3688, 127
        %v3697 = vpop.permute.xlu0 %3696
        %3698 = vrot.lane.b32.xlu0 %v3690, 127
        %v3699 = vpop.permute.xlu0 %3698
        %3700 = vrot.lane.b32.xlu0 %v3692, 127
        %v3701 = vpop.permute.xlu0 %3700
        %v3702 = vsel %vm224, %v3695, %v3697
        %v3703 = vsel %vm224, %v3697, %v3699
        %v3704 = vsel %vm224, %v3699, %v3701
        %s3705 = scalar_lea.vmem [#allocation1], 2
        %3706 = vst [vmem:[%s3705] ss:$4 sm:$0xff] %v3306
        %v3707 = vld.sshfl [vmem:[#allocation1] sm:$0xff pattern:$0x73625140]
        %v3709 = vld.sshfl [vmem:[#allocation1 + $0x8] sm:$0xff pattern:$0x73625140]
        %v3711 = vld.sshfl [vmem:[#allocation1 + $0x10] sm:$0xff pattern:$0x73625140]
        %v3713 = vld.sshfl [vmem:[#allocation1 + $0x18] sm:$0xff pattern:$0x73625140]
        %3715 = vrot.lane.b32.xlu0 %v3707, 126
        %v3716 = vpop.permute.xlu0 %3715
        %3717 = vrot.lane.b32.xlu0 %v3709, 126
        %v3718 = vpop.permute.xlu0 %3717
        %3719 = vrot.lane.b32.xlu0 %v3711, 126
        %v3720 = vpop.permute.xlu0 %3719
        %3721 = vrot.lane.b32.xlu0 %v3713, 126
        %v3722 = vpop.permute.xlu0 %3721
        %v3723 = vsel %vm246, %v3716, %v3718
        %v3724 = vsel %vm246, %v3718, %v3720
        %v3725 = vsel %vm246, %v3720, %v3722
        %s3726 = scalar_lea.vmem [#allocation1], 3
        %3727 = vst [vmem:[%s3726] ss:$4 sm:$0xff] %v3306
        %v3728 = vld.sshfl [vmem:[#allocation1] sm:$0xff pattern:$0x73625140]
        %v3730 = vld.sshfl [vmem:[#allocation1 + $0x8] sm:$0xff pattern:$0x73625140]
        %v3732 = vld.sshfl [vmem:[#allocation1 + $0x10] sm:$0xff pattern:$0x73625140]
        %v3734 = vld.sshfl [vmem:[#allocation1 + $0x18] sm:$0xff pattern:$0x73625140]
        %3736 = vrot.lane.b32.xlu0 %v3728, 125
        %v3737 = vpop.permute.xlu0 %3736
        %3738 = vrot.lane.b32.xlu0 %v3730, 125
        %v3739 = vpop.permute.xlu0 %3738
        %3740 = vrot.lane.b32.xlu0 %v3732, 125
        %v3741 = vpop.permute.xlu0 %3740
        %3742 = vrot.lane.b32.xlu0 %v3734, 125
        %v3743 = vpop.permute.xlu0 %3742
        %v3744 = vsel %vm268, %v3737, %v3739
        %v3745 = vsel %vm268, %v3739, %v3741
        %v3746 = vsel %vm268, %v3741, %v3743
        %3747 = vst [vmem:[#allocation1] ss:$4 sm:$0xff] %v3306
        %v3748 = vld.sshfl [vmem:[#allocation1] sm:$0xff pattern:$0x73625140]
        %v3750 = vld.sshfl [vmem:[#allocation1 + $0x8] sm:$0xff pattern:$0x73625140]
        %v3752 = vld.sshfl [vmem:[#allocation1 + $0x10] sm:$0xff pattern:$0x73625140]
        %v3754 = vld.sshfl [vmem:[#allocation1 + $0x18] sm:$0xff pattern:$0x73625140]
        %3756 = vrot.lane.b32.xlu0 %v3748, 124
        %v3757 = vpop.permute.xlu0 %3756
        %3758 = vrot.lane.b32.xlu0 %v3750, 124
        %v3759 = vpop.permute.xlu0 %3758
        %3760 = vrot.lane.b32.xlu0 %v3752, 124
        %v3761 = vpop.permute.xlu0 %3760
        %3762 = vrot.lane.b32.xlu0 %v3754, 124
        %v3763 = vpop.permute.xlu0 %3762
        %v3764 = vsel %vm289, %v3757, %v3759
        %v3765 = vsel %vm289, %v3759, %v3761
        %v3766 = vsel %vm289, %v3761, %v3763
        %v3768 = vsel %vm293, %v3680, %v3702
        %v3770 = vsel %vm293, %v3681, %v3703
        %v3772 = vsel %vm293, %v3682, %v3704
        %v3774 = vsel %vm293, %v3683, %v3701
        %v3776 = vsel %vm300, %v3768, %v3723
        %v3778 = vsel %vm300, %v3770, %v3724
        %v3780 = vsel %vm300, %v3772, %v3725
        %v3782 = vsel %vm300, %v3774, %v3722
        %v3784 = vsel %vm307, %v3776, %v3744
        %v3786 = vsel %vm307, %v3778, %v3745
        %v3788 = vsel %vm307, %v3780, %v3746
        %v3790 = vsel %vm307, %v3782, %v3743
        %v3791 = vld [vmem:[%s695] sm:$0xf]
        %v3792 = vld [vmem:[%s695 + $0x4] sm:$0xf]
        %v3795 = vunpack.c.l.b16 %v3791
        %v3796 = vunpack.c.l.b16 %v3792
        %v3797 = vpack.c.b16 %v3796, %v3795
        %3802 = vrot.lane.b32.xlu0 %v3784, 88
        %v3803 = vpop.permute.xlu0 %3802
        %3804 = vrot.lane.b32.xlu0 %v3786, 88
        %v3805 = vpop.permute.xlu0 %3804
        %3806 = vrot.lane.b32.xlu0 %v3788, 88
        %v3807 = vpop.permute.xlu0 %3806
        %3808 = vrot.lane.b32.xlu0 %v3790, 88
        %v3809 = vpop.permute.xlu0 %3808
        %3810 = vrot.lane.b32.xlu0 %v3764, 88
        %v3811 = vpop.permute.xlu0 %3810
        %3812 = vrot.lane.b32.xlu0 %v3765, 88
        %v3813 = vpop.permute.xlu0 %3812
        %3814 = vrot.lane.b32.xlu0 %v3766, 88
        %v3815 = vpop.permute.xlu0 %3814
        %3816 = vrot.lane.b32.xlu0 %v3763, 88
        %v3817 = vpop.permute.xlu0 %3816
        %v3818 = vsel %vm723, %v3803, %v3805
        %v3819 = vsel %vm723, %v3805, %v3807
        %v3820 = vsel %vm723, %v3807, %v3809
        %v3821 = vsel %vm723, %v3811, %v3813
        %v3822 = vsel %vm723, %v3813, %v3815
        %v3823 = vsel %vm723, %v3815, %v3817
        %v3828 = vsel %vm469, %v3797, 0
        %v3831 = vsel %vm293, %v3821, 0
        %v3834 = vsel %vm293, %v3822, 0
        %v3837 = vsel %vm293, %v3823, 0
        %3839 = vmatpush.bf16.msra.mxu0 0
        %3840 = vmatpush.bf16.msra.mxu0 0
        %3841 = vmatpush.bf16.msra.mxu0 0
        %3842 = vmatpush.bf16.msra.mxu0 0
        %3843 = vmatpush.bf16.msra.mxu0 0
        %3844 = vmatpush.bf16.msra.mxu0 0
        %3845 = vmatpush.bf16.msra.mxu0 %v3831
        %3846 = vmatpush.bf16.msra.mxu0 %v3818
        %3847 = vmatmul.bf16.gmra.mxu0 %v3828
        %v3848 = vpop.f32.mrf.mxu0
        %v3849 = vadd.f32 0.0, %v3848
        %v3850 = vpop.f32.mrf.mxu0
        %v3851 = vadd.f32 0.0, %v3850
        %3852 = vdwg.mxu0
        %3853 = vmatpush.bf16.msra.mxu0 0
        %3854 = vmatpush.bf16.msra.mxu0 0
        %3855 = vmatpush.bf16.msra.mxu0 0
        %3856 = vmatpush.bf16.msra.mxu0 0
        %3857 = vmatpush.bf16.msra.mxu0 0
        %3858 = vmatpush.bf16.msra.mxu0 0
        %3859 = vmatpush.bf16.msra.mxu0 %v3834
        %3860 = vmatpush.bf16.msra.mxu0 %v3819
        %3861 = vmatmul.bf16.gmra.mxu0 %v3828
        %v3862 = vpop.f32.mrf.mxu0
        %v3863 = vadd.f32 0.0, %v3862
        %v3864 = vpop.f32.mrf.mxu0
        %v3865 = vadd.f32 0.0, %v3864
        %3866 = vdwg.mxu0
        %3867 = vmatpush.bf16.msra.mxu0 0
        %3868 = vmatpush.bf16.msra.mxu0 0
        %3869 = vmatpush.bf16.msra.mxu0 0
        %3870 = vmatpush.bf16.msra.mxu0 0
        %3871 = vmatpush.bf16.msra.mxu0 0
        %3872 = vmatpush.bf16.msra.mxu0 0
        %3873 = vmatpush.bf16.msra.mxu0 %v3837
        %3874 = vmatpush.bf16.msra.mxu0 %v3820
        %3875 = vmatmul.bf16.gmra.mxu0 %v3828
        %v3876 = vpop.f32.mrf.mxu0
        %v3877 = vadd.f32 0.0, %v3876
        %v3878 = vpop.f32.mrf.mxu0
        %v3879 = vadd.f32 0.0, %v3878
        %3880 = vdwg.mxu0
        %v3881 = vadd.f32 %v3647, %v3849
        %v3882 = vadd.f32 %v3661, %v3863
        %v3883 = vadd.f32 %v3675, %v3877
        %v3884 = vadd.f32 %v3649, %v3851
        %v3885 = vadd.f32 %v3663, %v3865
        %v3886 = vadd.f32 %v3677, %v3879
        %3887 = vst [vmem:[#allocation1] ss:$4 sm:$0xff] %v3306
        %v3888 = vld.sshfl [vmem:[#allocation1] sm:$0xff pattern:$0x73625140]
        %v3889 = vld.sshfl [vmem:[#allocation1 + $0x8] sm:$0xff pattern:$0x73625140]
        %v3890 = vld.sshfl [vmem:[#allocation1 + $0x10] sm:$0xff pattern:$0x73625140]
        %v3891 = vld.sshfl [vmem:[#allocation1 + $0x18] sm:$0xff pattern:$0x73625140]
        %s3892 = scalar_lea.vmem [#allocation1], 1
        %3893 = vst [vmem:[%s3892] ss:$4 sm:$0xff] %v3306
        %v3894 = vld.sshfl [vmem:[#allocation1] sm:$0xff pattern:$0x73625140]
        %v3896 = vld.sshfl [vmem:[#allocation1 + $0x8] sm:$0xff pattern:$0x73625140]
        %v3898 = vld.sshfl [vmem:[#allocation1 + $0x10] sm:$0xff pattern:$0x73625140]
        %v3900 = vld.sshfl [vmem:[#allocation1 + $0x18] sm:$0xff pattern:$0x73625140]
        %3902 = vrot.lane.b32.xlu0 %v3894, 127
        %v3903 = vpop.permute.xlu0 %3902
        %3904 = vrot.lane.b32.xlu0 %v3896, 127
        %v3905 = vpop.permute.xlu0 %3904
        %3906 = vrot.lane.b32.xlu0 %v3898, 127
        %v3907 = vpop.permute.xlu0 %3906
        %3908 = vrot.lane.b32.xlu0 %v3900, 127
        %v3909 = vpop.permute.xlu0 %3908
        %v3910 = vsel %vm224, %v3903, %v3905
        %v3911 = vsel %vm224, %v3905, %v3907
        %v3912 = vsel %vm224, %v3907, %v3909
        %s3913 = scalar_lea.vmem [#allocation1], 2
        %3914 = vst [vmem:[%s3913] ss:$4 sm:$0xff] %v3306
        %v3915 = vld.sshfl [vmem:[#allocation1] sm:$0xff pattern:$0x73625140]
        %v3917 = vld.sshfl [vmem:[#allocation1 + $0x8] sm:$0xff pattern:$0x73625140]
        %v3919 = vld.sshfl [vmem:[#allocation1 + $0x10] sm:$0xff pattern:$0x73625140]
        %v3921 = vld.sshfl [vmem:[#allocation1 + $0x18] sm:$0xff pattern:$0x73625140]
        %3923 = vrot.lane.b32.xlu0 %v3915, 126
        %v3924 = vpop.permute.xlu0 %3923
        %3925 = vrot.lane.b32.xlu0 %v3917, 126
        %v3926 = vpop.permute.xlu0 %3925
        %3927 = vrot.lane.b32.xlu0 %v3919, 126
        %v3928 = vpop.permute.xlu0 %3927
        %3929 = vrot.lane.b32.xlu0 %v3921, 126
        %v3930 = vpop.permute.xlu0 %3929
        %v3931 = vsel %vm246, %v3924, %v3926
        %v3932 = vsel %vm246, %v3926, %v3928
        %v3933 = vsel %vm246, %v3928, %v3930
        %s3934 = scalar_lea.vmem [#allocation1], 3
        %3935 = vst [vmem:[%s3934] ss:$4 sm:$0xff] %v3306
        %v3936 = vld.sshfl [vmem:[#allocation1] sm:$0xff pattern:$0x73625140]
        %v3938 = vld.sshfl [vmem:[#allocation1 + $0x8] sm:$0xff pattern:$0x73625140]
        %v3940 = vld.sshfl [vmem:[#allocation1 + $0x10] sm:$0xff pattern:$0x73625140]
        %v3942 = vld.sshfl [vmem:[#allocation1 + $0x18] sm:$0xff pattern:$0x73625140]
        %3944 = vrot.lane.b32.xlu0 %v3936, 125
        %v3945 = vpop.permute.xlu0 %3944
        %3946 = vrot.lane.b32.xlu0 %v3938, 125
        %v3947 = vpop.permute.xlu0 %3946
        %3948 = vrot.lane.b32.xlu0 %v3940, 125
        %v3949 = vpop.permute.xlu0 %3948
        %3950 = vrot.lane.b32.xlu0 %v3942, 125
        %v3951 = vpop.permute.xlu0 %3950
        %v3952 = vsel %vm268, %v3945, %v3947
        %v3953 = vsel %vm268, %v3947, %v3949
        %v3954 = vsel %vm268, %v3949, %v3951
        %3955 = vst [vmem:[#allocation1] ss:$4 sm:$0xff] %v3306
        %v3956 = vld.sshfl [vmem:[#allocation1] sm:$0xff pattern:$0x73625140]
        %v3958 = vld.sshfl [vmem:[#allocation1 + $0x8] sm:$0xff pattern:$0x73625140]
        %v3960 = vld.sshfl [vmem:[#allocation1 + $0x10] sm:$0xff pattern:$0x73625140]
        %v3962 = vld.sshfl [vmem:[#allocation1 + $0x18] sm:$0xff pattern:$0x73625140]
        %3964 = vrot.lane.b32.xlu0 %v3956, 124
        %v3965 = vpop.permute.xlu0 %3964
        %3966 = vrot.lane.b32.xlu0 %v3958, 124
        %v3967 = vpop.permute.xlu0 %3966
        %3968 = vrot.lane.b32.xlu0 %v3960, 124
        %v3969 = vpop.permute.xlu0 %3968
        %3970 = vrot.lane.b32.xlu0 %v3962, 124
        %v3971 = vpop.permute.xlu0 %3970
        %v3972 = vsel %vm289, %v3965, %v3967
        %v3973 = vsel %vm289, %v3967, %v3969
        %v3974 = vsel %vm289, %v3969, %v3971
        %v3976 = vsel %vm293, %v3888, %v3910
        %v3978 = vsel %vm293, %v3889, %v3911
        %v3980 = vsel %vm293, %v3890, %v3912
        %v3982 = vsel %vm293, %v3891, %v3909
        %v3984 = vsel %vm300, %v3976, %v3931
        %v3986 = vsel %vm300, %v3978, %v3932
        %v3988 = vsel %vm300, %v3980, %v3933
        %v3990 = vsel %vm300, %v3982, %v3930
        %v3992 = vsel %vm307, %v3984, %v3952
        %v3994 = vsel %vm307, %v3986, %v3953
        %v3996 = vsel %vm307, %v3988, %v3954
        %v3998 = vsel %vm307, %v3990, %v3951
        %v3999 = vld [vmem:[%s905] sm:$0xf]
        %v4000 = vld [vmem:[%s905 + $0x4] sm:$0xf]
        %v4003 = vunpack.c.l.b16 %v3999
        %v4004 = vunpack.c.l.b16 %v4000
        %v4005 = vpack.c.b16 %v4004, %v4003
        %4010 = vrot.lane.b32.xlu0 %v3992, 68
        %v4011 = vpop.permute.xlu0 %4010
        %4012 = vrot.lane.b32.xlu0 %v3994, 68
        %v4013 = vpop.permute.xlu0 %4012
        %4014 = vrot.lane.b32.xlu0 %v3996, 68
        %v4015 = vpop.permute.xlu0 %4014
        %4016 = vrot.lane.b32.xlu0 %v3998, 68
        %v4017 = vpop.permute.xlu0 %4016
        %4018 = vrot.lane.b32.xlu0 %v3972, 68
        %v4019 = vpop.permute.xlu0 %4018
        %4020 = vrot.lane.b32.xlu0 %v3973, 68
        %v4021 = vpop.permute.xlu0 %4020
        %4022 = vrot.lane.b32.xlu0 %v3974, 68
        %v4023 = vpop.permute.xlu0 %4022
        %4024 = vrot.lane.b32.xlu0 %v3971, 68
        %v4025 = vpop.permute.xlu0 %4024
        %v4026 = vsel %vm933, %v4011, %v4013
        %v4027 = vsel %vm933, %v4013, %v4015
        %v4028 = vsel %vm933, %v4015, %v4017
        %v4029 = vsel %vm933, %v4019, %v4021
        %v4030 = vsel %vm933, %v4021, %v4023
        %v4031 = vsel %vm933, %v4023, %v4025
        %v4036 = vsel %vm469, %v4005, 0
        %v4039 = vsel %vm293, %v4029, 0
        %v4042 = vsel %vm293, %v4030, 0
        %v4045 = vsel %vm293, %v4031, 0
        %4047 = vmatpush.bf16.msra.mxu0 0
        %4048 = vmatpush.bf16.msra.mxu0 0
        %4049 = vmatpush.bf16.msra.mxu0 0
        %4050 = vmatpush.bf16.msra.mxu0 0
        %4051 = vmatpush.bf16.msra.mxu0 0
        %4052 = vmatpush.bf16.msra.mxu0 0
        %4053 = vmatpush.bf16.msra.mxu0 %v4039
        %4054 = vmatpush.bf16.msra.mxu0 %v4026
        %4055 = vmatmul.bf16.gmra.mxu0 %v4036
        %v4056 = vpop.f32.mrf.mxu0
        %v4057 = vadd.f32 0.0, %v4056
        %v4058 = vpop.f32.mrf.mxu0
        %v4059 = vadd.f32 0.0, %v4058
        %4060 = vdwg.mxu0
        %4061 = vmatpush.bf16.msra.mxu0 0
        %4062 = vmatpush.bf16.msra.mxu0 0
        %4063 = vmatpush.bf16.msra.mxu0 0
        %4064 = vmatpush.bf16.msra.mxu0 0
        %4065 = vmatpush.bf16.msra.mxu0 0
        %4066 = vmatpush.bf16.msra.mxu0 0
        %4067 = vmatpush.bf16.msra.mxu0 %v4042
        %4068 = vmatpush.bf16.msra.mxu0 %v4027
        %4069 = vmatmul.bf16.gmra.mxu0 %v4036
        %v4070 = vpop.f32.mrf.mxu0
        %v4071 = vadd.f32 0.0, %v4070
        %v4072 = vpop.f32.mrf.mxu0
        %v4073 = vadd.f32 0.0, %v4072
        %4074 = vdwg.mxu0
        %4075 = vmatpush.bf16.msra.mxu0 0
        %4076 = vmatpush.bf16.msra.mxu0 0
        %4077 = vmatpush.bf16.msra.mxu0 0
        %4078 = vmatpush.bf16.msra.mxu0 0
        %4079 = vmatpush.bf16.msra.mxu0 0
        %4080 = vmatpush.bf16.msra.mxu0 0
        %4081 = vmatpush.bf16.msra.mxu0 %v4045
        %4082 = vmatpush.bf16.msra.mxu0 %v4028
        %4083 = vmatmul.bf16.gmra.mxu0 %v4036
        %v4084 = vpop.f32.mrf.mxu0
        %v4085 = vadd.f32 0.0, %v4084
        %v4086 = vpop.f32.mrf.mxu0
        %v4087 = vadd.f32 0.0, %v4086
        %4088 = vdwg.mxu0
        %v4089 = vadd.f32 %v3881, %v4057
        %v4090 = vadd.f32 %v3882, %v4071
        %v4091 = vadd.f32 %v3883, %v4085
        %v4092 = vadd.f32 %v3884, %v4059
        %v4093 = vadd.f32 %v3885, %v4073
        %v4094 = vadd.f32 %v3886, %v4087
        %4095 = vst [vmem:[#allocation1] ss:$4 sm:$0xff] %v3306
        %v4096 = vld.sshfl [vmem:[#allocation1] sm:$0xff pattern:$0x73625140]
        %v4097 = vld.sshfl [vmem:[#allocation1 + $0x8] sm:$0xff pattern:$0x73625140]
        %v4098 = vld.sshfl [vmem:[#allocation1 + $0x10] sm:$0xff pattern:$0x73625140]
        %v4099 = vld.sshfl [vmem:[#allocation1 + $0x18] sm:$0xff pattern:$0x73625140]
        %s4100 = scalar_lea.vmem [#allocation1], 1
        %4101 = vst [vmem:[%s4100] ss:$4 sm:$0xff] %v3306
        %v4102 = vld.sshfl [vmem:[#allocation1] sm:$0xff pattern:$0x73625140]
        %v4104 = vld.sshfl [vmem:[#allocation1 + $0x8] sm:$0xff pattern:$0x73625140]
        %v4106 = vld.sshfl [vmem:[#allocation1 + $0x10] sm:$0xff pattern:$0x73625140]
        %v4108 = vld.sshfl [vmem:[#allocation1 + $0x18] sm:$0xff pattern:$0x73625140]
        %4110 = vrot.lane.b32.xlu0 %v4102, 127
        %v4111 = vpop.permute.xlu0 %4110
        %4112 = vrot.lane.b32.xlu0 %v4104, 127
        %v4113 = vpop.permute.xlu0 %4112
        %4114 = vrot.lane.b32.xlu0 %v4106, 127
        %v4115 = vpop.permute.xlu0 %4114
        %4116 = vrot.lane.b32.xlu0 %v4108, 127
        %v4117 = vpop.permute.xlu0 %4116
        %v4118 = vsel %vm224, %v4111, %v4113
        %v4119 = vsel %vm224, %v4113, %v4115
        %v4120 = vsel %vm224, %v4115, %v4117
        %s4121 = scalar_lea.vmem [#allocation1], 2
        %4122 = vst [vmem:[%s4121] ss:$4 sm:$0xff] %v3306
        %v4123 = vld.sshfl [vmem:[#allocation1] sm:$0xff pattern:$0x73625140]
        %v4125 = vld.sshfl [vmem:[#allocation1 + $0x8] sm:$0xff pattern:$0x73625140]
        %v4127 = vld.sshfl [vmem:[#allocation1 + $0x10] sm:$0xff pattern:$0x73625140]
        %v4129 = vld.sshfl [vmem:[#allocation1 + $0x18] sm:$0xff pattern:$0x73625140]
        %4131 = vrot.lane.b32.xlu0 %v4123, 126
        %v4132 = vpop.permute.xlu0 %4131
        %4133 = vrot.lane.b32.xlu0 %v4125, 126
        %v4134 = vpop.permute.xlu0 %4133
        %4135 = vrot.lane.b32.xlu0 %v4127, 126
        %v4136 = vpop.permute.xlu0 %4135
        %4137 = vrot.lane.b32.xlu0 %v4129, 126
        %v4138 = vpop.permute.xlu0 %4137
        %v4139 = vsel %vm246, %v4132, %v4134
        %v4140 = vsel %vm246, %v4134, %v4136
        %v4141 = vsel %vm246, %v4136, %v4138
        %s4142 = scalar_lea.vmem [#allocation1], 3
        %4143 = vst [vmem:[%s4142] ss:$4 sm:$0xff] %v3306
        %v4144 = vld.sshfl [vmem:[#allocation1] sm:$0xff pattern:$0x73625140]
        %v4146 = vld.sshfl [vmem:[#allocation1 + $0x8] sm:$0xff pattern:$0x73625140]
        %v4148 = vld.sshfl [vmem:[#allocation1 + $0x10] sm:$0xff pattern:$0x73625140]
        %v4150 = vld.sshfl [vmem:[#allocation1 + $0x18] sm:$0xff pattern:$0x73625140]
        %4152 = vrot.lane.b32.xlu0 %v4144, 125
        %v4153 = vpop.permute.xlu0 %4152
        %4154 = vrot.lane.b32.xlu0 %v4146, 125
        %v4155 = vpop.permute.xlu0 %4154
        %4156 = vrot.lane.b32.xlu0 %v4148, 125
        %v4157 = vpop.permute.xlu0 %4156
        %4158 = vrot.lane.b32.xlu0 %v4150, 125
        %v4159 = vpop.permute.xlu0 %4158
        %v4160 = vsel %vm268, %v4153, %v4155
        %v4161 = vsel %vm268, %v4155, %v4157
        %v4162 = vsel %vm268, %v4157, %v4159
        %4163 = vst [vmem:[#allocation1] ss:$4 sm:$0xff] %v3306
        %v4164 = vld.sshfl [vmem:[#allocation1] sm:$0xff pattern:$0x73625140]
        %v4166 = vld.sshfl [vmem:[#allocation1 + $0x8] sm:$0xff pattern:$0x73625140]
        %v4168 = vld.sshfl [vmem:[#allocation1 + $0x10] sm:$0xff pattern:$0x73625140]
        %v4170 = vld.sshfl [vmem:[#allocation1 + $0x18] sm:$0xff pattern:$0x73625140]
        %4172 = vrot.lane.b32.xlu0 %v4164, 124
        %v4173 = vpop.permute.xlu0 %4172
        %4174 = vrot.lane.b32.xlu0 %v4166, 124
        %v4175 = vpop.permute.xlu0 %4174
        %4176 = vrot.lane.b32.xlu0 %v4168, 124
        %v4177 = vpop.permute.xlu0 %4176
        %4178 = vrot.lane.b32.xlu0 %v4170, 124
        %v4179 = vpop.permute.xlu0 %4178
        %v4180 = vsel %vm289, %v4173, %v4175
        %v4181 = vsel %vm289, %v4175, %v4177
        %v4182 = vsel %vm289, %v4177, %v4179
        %v4184 = vsel %vm293, %v4096, %v4118
        %v4186 = vsel %vm293, %v4097, %v4119
        %v4188 = vsel %vm293, %v4098, %v4120
        %v4190 = vsel %vm293, %v4099, %v4117
        %v4192 = vsel %vm300, %v4184, %v4139
        %v4194 = vsel %vm300, %v4186, %v4140
        %v4196 = vsel %vm300, %v4188, %v4141
        %v4198 = vsel %vm300, %v4190, %v4138
        %v4200 = vsel %vm307, %v4192, %v4160
        %v4202 = vsel %vm307, %v4194, %v4161
        %v4204 = vsel %vm307, %v4196, %v4162
        %v4206 = vsel %vm307, %v4198, %v4159
        %v4207 = vld [vmem:[%s1115] sm:$0xf]
        %v4208 = vld [vmem:[%s1115 + $0x4] sm:$0xf]
        %v4211 = vunpack.c.l.b16 %v4207
        %v4212 = vunpack.c.l.b16 %v4208
        %v4213 = vpack.c.b16 %v4212, %v4211
        %4218 = vrot.lane.b32.xlu0 %v4200, 48
        %v4219 = vpop.permute.xlu0 %4218
        %4220 = vrot.lane.b32.xlu0 %v4202, 48
        %v4221 = vpop.permute.xlu0 %4220
        %4222 = vrot.lane.b32.xlu0 %v4204, 48
        %v4223 = vpop.permute.xlu0 %4222
        %4224 = vrot.lane.b32.xlu0 %v4206, 48
        %v4225 = vpop.permute.xlu0 %4224
        %4226 = vrot.lane.b32.xlu0 %v4180, 48
        %v4227 = vpop.permute.xlu0 %4226
        %4228 = vrot.lane.b32.xlu0 %v4181, 48
        %v4229 = vpop.permute.xlu0 %4228
        %4230 = vrot.lane.b32.xlu0 %v4182, 48
        %v4231 = vpop.permute.xlu0 %4230
        %4232 = vrot.lane.b32.xlu0 %v4179, 48
        %v4233 = vpop.permute.xlu0 %4232
        %v4234 = vsel %vm1143, %v4219, %v4221
        %v4235 = vsel %vm1143, %v4221, %v4223
        %v4236 = vsel %vm1143, %v4223, %v4225
        %v4237 = vsel %vm1143, %v4227, %v4229
        %v4238 = vsel %vm1143, %v4229, %v4231
        %v4239 = vsel %vm1143, %v4231, %v4233
        %v4244 = vsel %vm469, %v4213, 0
        %v4247 = vsel %vm293, %v4237, 0
        %v4250 = vsel %vm293, %v4238, 0
        %v4253 = vsel %vm293, %v4239, 0
        %4255 = vmatpush.bf16.msra.mxu0 0
        %4256 = vmatpush.bf16.msra.mxu0 0
        %4257 = vmatpush.bf16.msra.mxu0 0
        %4258 = vmatpush.bf16.msra.mxu0 0
        %4259 = vmatpush.bf16.msra.mxu0 0
        %4260 = vmatpush.bf16.msra.mxu0 0
        %4261 = vmatpush.bf16.msra.mxu0 %v4247
        %4262 = vmatpush.bf16.msra.mxu0 %v4234
        %4263 = vmatmul.bf16.gmra.mxu0 %v4244
        %v4264 = vpop.f32.mrf.mxu0
        %v4265 = vadd.f32 0.0, %v4264
        %v4266 = vpop.f32.mrf.mxu0
        %v4267 = vadd.f32 0.0, %v4266
        %4268 = vdwg.mxu0
        %4269 = vmatpush.bf16.msra.mxu0 0
        %4270 = vmatpush.bf16.msra.mxu0 0
        %4271 = vmatpush.bf16.msra.mxu0 0
        %4272 = vmatpush.bf16.msra.mxu0 0
        %4273 = vmatpush.bf16.msra.mxu0 0
        %4274 = vmatpush.bf16.msra.mxu0 0
        %4275 = vmatpush.bf16.msra.mxu0 %v4250
        %4276 = vmatpush.bf16.msra.mxu0 %v4235
        %4277 = vmatmul.bf16.gmra.mxu0 %v4244
        %v4278 = vpop.f32.mrf.mxu0
        %v4279 = vadd.f32 0.0, %v4278
        %v4280 = vpop.f32.mrf.mxu0
        %v4281 = vadd.f32 0.0, %v4280
        %4282 = vdwg.mxu0
        %4283 = vmatpush.bf16.msra.mxu0 0
        %4284 = vmatpush.bf16.msra.mxu0 0
        %4285 = vmatpush.bf16.msra.mxu0 0
        %4286 = vmatpush.bf16.msra.mxu0 0
        %4287 = vmatpush.bf16.msra.mxu0 0
        %4288 = vmatpush.bf16.msra.mxu0 0
        %4289 = vmatpush.bf16.msra.mxu0 %v4253
        %4290 = vmatpush.bf16.msra.mxu0 %v4236
        %4291 = vmatmul.bf16.gmra.mxu0 %v4244
        %v4292 = vpop.f32.mrf.mxu0
        %v4293 = vadd.f32 0.0, %v4292
        %v4294 = vpop.f32.mrf.mxu0
        %v4295 = vadd.f32 0.0, %v4294
        %4296 = vdwg.mxu0
        %v4297 = vadd.f32 %v4089, %v4265
        %v4298 = vadd.f32 %v4090, %v4279
        %v4299 = vadd.f32 %v4091, %v4293
        %v4300 = vadd.f32 %v4092, %v4267
        %v4301 = vadd.f32 %v4093, %v4281
        %v4302 = vadd.f32 %v4094, %v4295
        %v4303 = vld [vmem:[%s2] sm:$0xff]
        %v4304 = vld [vmem:[%s2 + $0x8] sm:$0xff]
        %4306 = vset.pattern.permute.xlu0 0
        %4307 = vperm.xlu0 %4306, %v4303
        %v4308 = vpop.permute.xlu0 %4307
        %4311 = vset.pattern.permute.xlu0 0
        %4312 = vperm.xlu0 %4311, %v4304
        %v4313 = vpop.permute.xlu0 %4312
        %v4315 = vadd.f32 %v4297, %v4308
        %v4316 = vadd.f32 %v4298, %v4308
        %v4317 = vadd.f32 %v4299, %v4308
        %v4318 = vadd.f32 %v4300, %v4313
        %v4319 = vadd.f32 %v4301, %v4313
        %v4320 = vadd.f32 %v4302, %v4313
        %v4321 = vmax.f32 %v4315, 0.0
        %v4322 = vmax.f32 %v4316, 0.0
        %v4323 = vmax.f32 %v4317, 0.0
        %v4324 = vmax.f32 %v4318, 0.0
        %v4325 = vmax.f32 %v4319, 0.0
        %v4326 = vmax.f32 %v4320, 0.0
        %v4327 = vpack.c.bf16 %v4322, %v4321
        %v4328 = vpack.c.bf16 %v4323, %v4323
        %v4329 = vpack.c.bf16 %v4325, %v4324
        %v4330 = vpack.c.bf16 %v4326, %v4326
        %4331 = vst [vmem:[%s186 + $0x24] sm:$0xff] %v4327
        %4332 = vst [vmem:[%s186 + $0x2c] sm:$0xf] %v4328
        %4333 = vst [vmem:[%s186 + $0x54] sm:$0xff] %v4329
        %4334 = vst [vmem:[%s186 + $0x5c] sm:$0xf] %v4330
        %s4335 = sand.u32 %s106, 1
        %s4336 = sand.u32 %s106, 1
        %s4337 = smul.addr %s4336, 96
        %s4338 = scalar_lea.vmem [#allocation2], %s4337
        // Predicated region
        $region33: #{visual_block_forward.2} parent=31 // pred_check
          %p4339 = pneg %p116
        $region34: #{visual_block_forward.2} parent=31 // pred_check_branch
          %4341 = sbr.rel (%p4339) target = $region36
        $region35: #{visual_block_forward.2} parent=31 // pred_region
          %s4342 = smul.u32 12, %s19
          %s4343 = smul.addr %s18, 48
          %s4344 = sadd.s32 %s4342, %s4343
          %s4345 = smul.addr %s4344, 4
          %s4346 = scalar_lea.vmem %s3, %s4345
          // Predicated region
          $region37: #{visual_block_forward.2} parent=35 // pred_check
            _
          $region38: #{visual_block_forward.2} parent=35 // pred_check_branch
            %4348 = sbr.rel (0) target = $region40
          $region39: #{visual_block_forward.2} parent=35 // pred_region
            // Predicated region
            $region41: #{visual_block_forward.2} parent=39 // pred_check
              _
            $region42: #{visual_block_forward.2} parent=39 // pred_check_branch
              %4350 = sbr.rel (0) target = $region44
            $region43: #{visual_block_forward.2} parent=39 // pred_region
              loop: start=0, step=1, limit=1
              $region45: #{visual_block_forward.2} parent=43 // loop_pre_header
                _
              $region46: #{visual_block_forward.2} parent=43 // loop_header
                %s4352 = sphi 0, %s4356
                %p4353 = scmp.ge.s32.totalorder %s4352, 1
                %s4357 = sphi %s4338, %s4338
                %s4358 = sphi %s4346, %s4346
              $region47: #{visual_block_forward.2} parent=43 // loop_header_branch
                %4355 = sbr.rel (%p4353) target = $region51
              $region48: #{visual_block_forward.2} parent=43 // loop_body
                %v4359 = vld [vmem:[%s4357] sm:$0xff]
                %4360 = vst [vmem:[%s4358] sm:$0xff] %v4359
                %v4361 = vld [vmem:[%s4357 + $0x8] sm:$0xff]
                %4362 = vst [vmem:[%s4358 + $0x8] sm:$0xff] %v4361
                %v4363 = vld [vmem:[%s4357 + $0x10] sm:$0xff]
                %4364 = vst [vmem:[%s4358 + $0x10] sm:$0xff] %v4363
                %v4365 = vld [vmem:[%s4357 + $0x18] sm:$0xff]
                %4366 = vst [vmem:[%s4358 + $0x18] sm:$0xff] %v4365
                %v4367 = vld [vmem:[%s4357 + $0x20] sm:$0xff]
                %4368 = vst [vmem:[%s4358 + $0x20] sm:$0xff] %v4367
                %v4369 = vld [vmem:[%s4357 + $0x28] sm:$0xff]
                %4370 = vst [vmem:[%s4358 + $0x28] sm:$0xff] %v4369
                %v4371 = vld [vmem:[%s4357 + $0x30] sm:$0xff]
                %4372 = vst [vmem:[%s4358 + $0x60] sm:$0xff] %v4371
                %v4373 = vld [vmem:[%s4357 + $0x38] sm:$0xff]
                %4374 = vst [vmem:[%s4358 + $0x68] sm:$0xff] %v4373
                %v4375 = vld [vmem:[%s4357 + $0x40] sm:$0xff]
                %4376 = vst [vmem:[%s4358 + $0x70] sm:$0xff] %v4375
                %v4377 = vld [vmem:[%s4357 + $0x48] sm:$0xff]
                %4378 = vst [vmem:[%s4358 + $0x78] sm:$0xff] %v4377
                %v4379 = vld [vmem:[%s4357 + $0x50] sm:$0xff]
                %4380 = vst [vmem:[%s4358 + $0x80] sm:$0xff] %v4379
                %v4381 = vld [vmem:[%s4357 + $0x58] sm:$0xff]
                %4382 = vst [vmem:[%s4358 + $0x88] sm:$0xff] %v4381
              $region49: #{visual_block_forward.2} parent=43 // loop_footer
                %s4356 = sadd.s32 1, %s4352
              $region50: #{visual_block_forward.2} parent=43 // loop_footer_branch
                %4351 = sbr.rel target = $region46
              $region51: #{visual_block_forward.2} parent=43 // loop_exit
                _
            $region44: #{visual_block_forward.2} parent=39 // pred_fallthru
              _
            // Predicated region
            $region52: #{visual_block_forward.2} parent=39 // pred_check
              _
            $region53: #{visual_block_forward.2} parent=39 // pred_check_branch
              %4384 = sbr.rel target = $region55
            $region54: #{visual_block_forward.2} parent=39 // pred_region
              _
            $region55: #{visual_block_forward.2} parent=39 // pred_fallthru
              _
          $region40: #{visual_block_forward.2} parent=35 // pred_fallthru
            _
          %4385 = vnop
        $region36: #{visual_block_forward.2} parent=31 // pred_fallthru
          _
      $region32: #{visual_block_forward.2} parent=5 // pred_fallthru
        _
      %p4386 = scmp.le.s32.totalorder 2, %s9
      // Predicated region
      $region56: #{visual_block_forward.2} parent=5 // pred_check
        %p4387 = pneg %p4386
      $region57: #{visual_block_forward.2} parent=5 // pred_check_branch
        %4389 = sbr.rel (%p4387) target = $region59
      $region58: #{visual_block_forward.2} parent=5 // pred_region
        %s4390 = ssub.s32 %s9, 2
        // Predicated region
        $region60: #{visual_block_forward.2} parent=58 // pred_check
          %p4391 = pneg %p122
        $region61: #{visual_block_forward.2} parent=58 // pred_check_branch
          %4393 = sbr.rel (%p4391) target = $region63
        $region62: #{visual_block_forward.2} parent=58 // pred_region
          %s4394 = sand.u32 %s107, 1
          %s4395 = sand.u32 %s107, 1
          %s4396 = smul.addr %s4395, 96
          %s4397 = scalar_lea.vmem [#allocation2], %s4396
        $region63: #{visual_block_forward.2} parent=58 // pred_fallthru
          _
      $region59: #{visual_block_forward.2} parent=5 // pred_fallthru
        _
    $region6: #{visual_block_forward.2} parent=1 // loop_footer
      %s13 = sadd.s32 1, %s9
    $region7: #{visual_block_forward.2} parent=1 // loop_footer_branch
      %8 = sbr.rel target = $region3
    $region8: #{visual_block_forward.2} parent=1 // loop_exit
      _

</llo_original>
